<compile_context>
chip_gen: v7x
topology: tpu7x:2x2x1
jax: 0.10.0
libtpu: 0.0.40
codegen_flags: <defaults>
</compile_context>

<pallas_src>
import jax
import jax.numpy as jnp
from jax.experimental import pallas as pl
from jax.experimental.pallas import tpu as pltpu

SENTENCE_NUM = 50          # sequence length L
L = SENTENCE_NUM
D_IN = 768                 # conv in_channels (BERT hidden)
MAIR_DIM = 83
B = 2
EPS = 1e-5                 # PyTorch BatchNorm1d default eps
N_STACK1 = 640             # 600 stacked stage-1 out-channels, padded to 640
VMEM_LIMIT = 32 * 1024 * 1024


# --------------------------- conv-stack kernel -----------------------------
def conv_stack_kernel(x_ref,
                      wc1_ref, b1_ref,
                      b2a_ref, bn2s_ref, bn2t_ref,
                      b3a_ref, bn3s_ref, bn3t_ref,
                      b4_ref,
                      wc2_ref, b2b_ref,
                      wc3_ref, b3b_ref,
                      out_ref):
    f32 = jnp.float32
    bf16 = jnp.bfloat16
    wc1 = wc1_ref[...]                 # (768, 640) bf16, stacked stage-1
    wc2 = wc2_ref[...]                 # (100, 150) bf16, conv2b taps
    wc3 = wc3_ref[...]                 # (100, 250) bf16, conv3b taps

    nb = x_ref.shape[0]
    for b in range(nb):                # static unroll over batch (B=2)
        xb = x_ref[b].astype(bf16)     # (50, 768)
        # Single stacked stage-1 matmul: channels for all four branches.
        y = jnp.dot(xb, wc1, preferred_element_type=f32)       # (50, 640)

        # --- conv1: k=1, 768 -> 50 -----------------------------------------
        x1 = y[:, 0:50] + b1_ref[...]

        # --- conv2 stage 1: k=1, 768 -> 100, BN, ReLU -----------------------
        h2 = y[:, 50:150] + b2a_ref[...]
        h2 = jnp.maximum(h2 * bn2s_ref[...] + bn2t_ref[...], 0.0)

        # --- conv3 stage 1: k=3 pad=1, 768 -> 100 (shift-add taps), BN, ReLU
        z100 = jnp.zeros((1, 100), f32)
        h3 = (jnp.concatenate([z100, y[0:L - 1, 150:250]], axis=0)   # tap 0
              + y[:, 250:350]                                        # tap 1
              + jnp.concatenate([y[1:L, 350:450], z100], axis=0)     # tap 2
              + b3a_ref[...])
        h3 = jnp.maximum(h3 * bn3s_ref[...] + bn3t_ref[...], 0.0)

        # --- conv4: k=3 pad=1, 768 -> 50 (shift-add taps) -------------------
        z50 = jnp.zeros((1, 50), f32)
        x4 = (jnp.concatenate([z50, y[0:L - 1, 450:500]], axis=0)
              + y[:, 500:550]
              + jnp.concatenate([y[1:L, 550:600], z50], axis=0)
              + b4_ref[...])

        # --- conv2 stage 2: k=3 pad=1, 100 -> 50 ----------------------------
        h2p = jnp.concatenate([z100, h2, z100], axis=0).astype(bf16)  # (52,100)
        y2 = jnp.dot(h2p, wc2, preferred_element_type=f32)            # (52,150)
        x2 = (y2[0:L, 0:50] + y2[1:L + 1, 50:100] + y2[2:L + 2, 100:150]
              + b2b_ref[...])

        # --- conv3 stage 2: k=5 pad=2, 100 -> 50 ----------------------------
        z2x100 = jnp.zeros((2, 100), f32)
        h3p = jnp.concatenate([z2x100, h3, z2x100], axis=0).astype(bf16)  # (54,100)
        y3 = jnp.dot(h3p, wc3, preferred_element_type=f32)                # (54,250)
        x3 = y3[0:L, 0:50] + b3b_ref[...]
        for t in range(1, 5):
            x3 = x3 + y3[t:t + L, 50 * t:50 * (t + 1)]

        # Lane-dense feature slab: (50, 200), m = branch*50 + channel.
        out_ref[b] = jnp.concatenate([x1, x2, x3, x4], axis=1)


def conv_stack(x, p):
    bsz = x.shape[0]
    names = ["wc1", "b1", "b2a", "bn2s", "bn2t", "b3a", "bn3s", "bn3t",
             "b4", "wc2", "b2b", "wc3", "b3b"]
    weights = [p[n] for n in names]
    in_specs = ([pl.BlockSpec((bsz, L, D_IN), lambda i: (0, 0, 0))]
                + [pl.BlockSpec(w.shape, lambda i, _n=w.ndim: (0,) * _n)
                   for w in weights])
    out_specs = pl.BlockSpec((bsz, L, 200), lambda i: (0, 0, 0))
    return pl.pallas_call(
        conv_stack_kernel,
        out_shape=jax.ShapeDtypeStruct((bsz, L, 200), jnp.float32),
        grid_spec=pltpu.PrefetchScalarGridSpec(
            num_scalar_prefetch=0,
            grid=(1,),
            in_specs=in_specs,
            out_specs=out_specs),
        compiler_params=pltpu.CompilerParams(
            dimension_semantics=("arbitrary",),
            vmem_limit_bytes=VMEM_LIMIT),
    )(x, *weights)


# ------------------------------ MLP head kernel -----------------------------
def head_kernel(feat_ref, xm_ref,
                wl1_ref, bl1_ref, s1_ref, t1_ref,
                wl2_ref, bl2_ref, s2_ref, t2_ref,
                wl4_ref, bl4_ref, s4_ref, t4_ref,
                wl3a_ref, wl3b_ref, bl3_ref,
                out_ref):
    f32 = jnp.float32
    bf16 = jnp.bfloat16
    # line1: Linear(10000->100) -> Dropout(id) -> BN -> ReLU
    h1 = jnp.dot(feat_ref[...].astype(bf16), wl1_ref[...],
                 preferred_element_type=f32) + bl1_ref[...]
    h1 = jnp.maximum(h1 * s1_ref[...] + t1_ref[...], 0.0)
    # line2: Linear(100->50) -> Dropout(id) -> BN -> ReLU
    h2 = jnp.dot(h1.astype(bf16), wl2_ref[...],
                 preferred_element_type=f32) + bl2_ref[...]
    h2 = jnp.maximum(h2 * s2_ref[...] + t2_ref[...], 0.0)
    # line4: Linear(83->50) -> Dropout(id) -> BN -> ReLU (MAIR branch)
    hm = jnp.dot(xm_ref[...].astype(bf16), wl4_ref[...],
                 preferred_element_type=f32) + bl4_ref[...]
    hm = jnp.maximum(hm * s4_ref[...] + t4_ref[...], 0.0)
    # line3 on cat([h2, hm], dim=1): weight split so no in-kernel concat needed
    logits = (jnp.dot(h2.astype(bf16), wl3a_ref[...], preferred_element_type=f32)
              + jnp.dot(hm.astype(bf16), wl3b_ref[...], preferred_element_type=f32)
              + bl3_ref[...])
    # F.softmax(x, dim=1) in f32
    m = jnp.max(logits, axis=1, keepdims=True)
    e = jnp.exp(logits - m)
    out_ref[...] = e / jnp.sum(e, axis=1, keepdims=True)


def head(feat, xm, p):
    bsz = feat.shape[0]
    names = ["wl1", "bl1", "s1", "t1", "wl2", "bl2", "s2", "t2",
             "wl4", "bl4", "s4", "t4", "wl3a", "wl3b", "bl3"]
    args = [feat, xm] + [p[n] for n in names]
    in_specs = [pl.BlockSpec(a.shape, lambda i, _n=a.ndim: (0,) * _n)
                for a in args]
    out_specs = pl.BlockSpec((bsz, 2), lambda i: (0, 0))
    return pl.pallas_call(
        head_kernel,
        out_shape=jax.ShapeDtypeStruct((bsz, 2), jnp.float32),
        grid_spec=pltpu.PrefetchScalarGridSpec(
            num_scalar_prefetch=0,
            grid=(1,),
            in_specs=in_specs,
            out_specs=out_specs),
        compiler_params=pltpu.CompilerParams(
            dimension_semantics=("arbitrary",),
            vmem_limit_bytes=VMEM_LIMIT),
    )(*args)


# ------------------------------- full forward -------------------------------
def bert_net_forward(x, x_mair, p):
    # No wrapper-side permute/pad: x is consumed as (B, L, 768) directly.
    conv_out = conv_stack(x.astype(jnp.float32), p)       # (B, 50, 200) f32
    # Row-major bitcast; feature index f = l*200 + branch*50 + c
    # (wl1 rows were permuted at init to match this ordering).
    feat = conv_out.reshape(conv_out.shape[0], -1)         # (B, 10000)
    return head(feat, x_mair.astype(jnp.float32), p)       # (B, 2) softmax


# ------------------------------ parameter init -------------------------------
def init_params(key):
    keys = iter(jax.random.split(key, 48))
    f32 = jnp.float32
    bf16 = jnp.bfloat16

    def nrm(shape, scale=0.05):
        return scale * jax.random.normal(next(keys), shape, dtype=f32)

    def bn_fold(c):
        gamma = 1.0 + 0.1 * jax.random.normal(next(keys), (c,), dtype=f32)
        beta = 0.1 * jax.random.normal(next(keys), (c,), dtype=f32)
        mean = 0.1 * jax.random.normal(next(keys), (c,), dtype=f32)
        var = 1.0 + 0.1 * jax.random.uniform(next(keys), (c,), dtype=f32)
        scale = gamma / jnp.sqrt(var + EPS)
        shift = beta - mean * scale
        return scale, shift

    p = {}
    # ---- conv weights, generated in PyTorch layout, then stacked/transposed
    w1 = nrm((50, D_IN));          b1 = nrm((50,))
    w2a = nrm((100, D_IN));        b2a = nrm((100,))
    bn2s, bn2t = bn_fold(100)
    w2b = nrm((50, 100, 3));       b2b = nrm((50,))
    w3a = nrm((100, D_IN, 3));     b3a = nrm((100,))
    bn3s, bn3t = bn_fold(100)
    w3b = nrm((50, 100, 5));       b3b = nrm((50,))
    w4 = nrm((50, D_IN, 3));       b4 = nrm((50,))

    # stage-1 stacked weight: [w1 | w2a | w3a t0..t2 | w4 t0..t2] -> (768, 600)
    wc1 = jnp.concatenate(
        [w1.T, w2a.T,
         w3a[:, :, 0].T, w3a[:, :, 1].T, w3a[:, :, 2].T,
         w4[:, :, 0].T, w4[:, :, 1].T, w4[:, :, 2].T], axis=1)
    wc1 = jnp.pad(wc1, ((0, 0), (0, N_STACK1 - wc1.shape[1])))     # pad to 640
    p["wc1"] = wc1.astype(bf16)
    p["b1"] = b1.reshape(1, 50)
    p["b2a"] = b2a.reshape(1, 100)
    p["bn2s"] = bn2s.reshape(1, 100); p["bn2t"] = bn2t.reshape(1, 100)
    p["b3a"] = b3a.reshape(1, 100)
    p["bn3s"] = bn3s.reshape(1, 100); p["bn3t"] = bn3t.reshape(1, 100)
    p["b4"] = b4.reshape(1, 50)
    # stage-2 stacked weights (taps along the output/lane axis)
    p["wc2"] = jnp.concatenate([w2b[:, :, t].T for t in range(3)],
                               axis=1).astype(bf16)                 # (100, 150)
    p["b2b"] = b2b.reshape(1, 50)
    p["wc3"] = jnp.concatenate([w3b[:, :, t].T for t in range(5)],
                               axis=1).astype(bf16)                 # (100, 250)
    p["b3b"] = b3b.reshape(1, 50)

    # ---- head ----
    # line1 in torch feature order f_pt = (branch*50 + c)*50 + l,
    # permuted to kernel feature order f = l*200 + (branch*50 + c).
    wl1_t = nrm((SENTENCE_NUM * 200, 100), 0.01)
    wl1_p = wl1_t.reshape(200, 50, 100).transpose(1, 0, 2).reshape(
        SENTENCE_NUM * 200, 100)
    p["wl1"] = wl1_p.astype(bf16)
    p["bl1"] = nrm((1, 100))
    s, t = bn_fold(100); p["s1"] = s.reshape(1, 100); p["t1"] = t.reshape(1, 100)
    p["wl2"] = nrm((100, 50)).astype(bf16); p["bl2"] = nrm((1, 50))
    s, t = bn_fold(50);  p["s2"] = s.reshape(1, 50);  p["t2"] = t.reshape(1, 50)
    p["wl4"] = nrm((MAIR_DIM, 50)).astype(bf16); p["bl4"] = nrm((1, 50))
    s, t = bn_fold(50);  p["s4"] = s.reshape(1, 50);  p["t4"] = t.reshape(1, 50)
    # line3: Linear(100 -> 2), split across the cat([line2_out, line4_out])
    wl3 = nrm((2, 100))
    p["wl3a"] = wl3[:, :50].T.astype(bf16)     # (50, 2)
    p["wl3b"] = wl3[:, 50:].T.astype(bf16)     # (50, 2)
    p["bl3"] = nrm((1, 2))
    return p


if __name__ == "__main__":
    key = jax.random.PRNGKey(0)
    kx, km, kp = jax.random.split(key, 3)
    # USE_MAIR=True input: (x: [B, SENTENCE_NUM, 768], x_mair: [B, 83])
    x = jax.random.normal(kx, (B, SENTENCE_NUM, D_IN), dtype=jnp.float32)
    x_mair = jax.random.normal(km, (B, MAIR_DIM), dtype=jnp.float32)
    params = init_params(kp)

    fwd = jax.jit(bert_net_forward)
    out = jax.block_until_ready(fwd(x, x_mair, params))
    assert out.shape == (B, 2)
    assert bool(jnp.all(jnp.isfinite(out)))
    assert bool(jnp.allclose(jnp.sum(out, axis=1), 1.0, atol=1e-5))
    print("KERNEL_OK")
</pallas_src>

<mosaic_0001>
module attributes {stable_mosaic.version = 11 : i64} {
  func.func @conv_stack_kernel(%arg0: i32, %arg1: memref<2x50x768xf32, #tpu.memory_space<vmem>>, %arg2: memref<768x640xbf16, #tpu.memory_space<vmem>>, %arg3: memref<1x50xf32, #tpu.memory_space<vmem>>, %arg4: memref<1x100xf32, #tpu.memory_space<vmem>>, %arg5: memref<1x100xf32, #tpu.memory_space<vmem>>, %arg6: memref<1x100xf32, #tpu.memory_space<vmem>>, %arg7: memref<1x100xf32, #tpu.memory_space<vmem>>, %arg8: memref<1x100xf32, #tpu.memory_space<vmem>>, %arg9: memref<1x100xf32, #tpu.memory_space<vmem>>, %arg10: memref<1x50xf32, #tpu.memory_space<vmem>>, %arg11: memref<100x150xbf16, #tpu.memory_space<vmem>>, %arg12: memref<1x50xf32, #tpu.memory_space<vmem>>, %arg13: memref<100x250xbf16, #tpu.memory_space<vmem>>, %arg14: memref<1x50xf32, #tpu.memory_space<vmem>>, %arg15: memref<2x50x200xf32, #tpu.memory_space<vmem>>) attributes {dimension_semantics = [#tpu.dimension_semantics<arbitrary>], iteration_bounds = array<i64: 1>, scalar_prefetch = 0 : i64, scratch_operands = 0 : i64, tpu.core_type = #tpu.core_type<tc>, window_params = [{pipeline_mode = #tpu.pipeline_mode<synchronous>, transform_indices = @transform_0, window_bounds = array<i64: 2, 50, 768>}, {pipeline_mode = #tpu.pipeline_mode<synchronous>, transform_indices = @transform_1, window_bounds = array<i64: 768, 640>}, {pipeline_mode = #tpu.pipeline_mode<synchronous>, transform_indices = @transform_2, window_bounds = array<i64: 1, 50>}, {pipeline_mode = #tpu.pipeline_mode<synchronous>, transform_indices = @transform_3, window_bounds = array<i64: 1, 100>}, {pipeline_mode = #tpu.pipeline_mode<synchronous>, transform_indices = @transform_4, window_bounds = array<i64: 1, 100>}, {pipeline_mode = #tpu.pipeline_mode<synchronous>, transform_indices = @transform_5, window_bounds = array<i64: 1, 100>}, {pipeline_mode = #tpu.pipeline_mode<synchronous>, transform_indices = @transform_6, window_bounds = array<i64: 1, 100>}, {pipeline_mode = #tpu.pipeline_mode<synchronous>, transform_indices = @transform_7, window_bounds = array<i64: 1, 100>}, {pipeline_mode = #tpu.pipeline_mode<synchronous>, transform_indices = @transform_8, window_bounds = array<i64: 1, 100>}, {pipeline_mode = #tpu.pipeline_mode<synchronous>, transform_indices = @transform_9, window_bounds = array<i64: 1, 50>}, {pipeline_mode = #tpu.pipeline_mode<synchronous>, transform_indices = @transform_10, window_bounds = array<i64: 100, 150>}, {pipeline_mode = #tpu.pipeline_mode<synchronous>, transform_indices = @transform_11, window_bounds = array<i64: 1, 50>}, {pipeline_mode = #tpu.pipeline_mode<synchronous>, transform_indices = @transform_12, window_bounds = array<i64: 100, 250>}, {pipeline_mode = #tpu.pipeline_mode<synchronous>, transform_indices = @transform_13, window_bounds = array<i64: 1, 50>}, {pipeline_mode = #tpu.pipeline_mode<synchronous>, transform_indices = @transform_14, window_bounds = array<i64: 2, 50, 200>}]} {
    %c0 = arith.constant 0 : index
    %c0_0 = arith.constant 0 : index
    %0 = vector.load %arg2[%c0, %c0_0] : memref<768x640xbf16, #tpu.memory_space<vmem>>, vector<768x640xbf16>
    %c0_1 = arith.constant 0 : index
    %c0_2 = arith.constant 0 : index
    %1 = vector.load %arg11[%c0_1, %c0_2] : memref<100x150xbf16, #tpu.memory_space<vmem>>, vector<100x150xbf16>
    %c0_3 = arith.constant 0 : index
    %c0_4 = arith.constant 0 : index
    %2 = vector.load %arg13[%c0_3, %c0_4] : memref<100x250xbf16, #tpu.memory_space<vmem>>, vector<100x250xbf16>
    %c0_5 = arith.constant 0 : index
    %c0_6 = arith.constant 0 : index
    %c0_7 = arith.constant 0 : index
    %3 = vector.load %arg1[%c0_5, %c0_6, %c0_7] : memref<2x50x768xf32, #tpu.memory_space<vmem>>, vector<1x50x768xf32>
    %4 = vector.shape_cast %3 : vector<1x50x768xf32> to vector<50x768xf32>
    %5 = arith.truncf %4 : vector<50x768xf32> to vector<50x768xbf16>
    %cst = arith.constant dense<0.000000e+00> : vector<50x640xf32>
    %6 = tpu.matmul %5, %0, %cst {dimension_numbers = #tpu.dot_dimension_numbers<[1], [0], [0], [1], [0, 0, 1, 1], [], []>} : vector<50x768xbf16>, vector<768x640xbf16>, vector<50x640xf32> -> vector<50x640xf32>
    %7 = vector.extract_strided_slice %6 {offsets = [0, 0], sizes = [50, 50], strides = [1, 1]} : vector<50x640xf32> to vector<50x50xf32>
    %c0_8 = arith.constant 0 : index
    %c0_9 = arith.constant 0 : index
    %8 = vector.load %arg3[%c0_8, %c0_9] : memref<1x50xf32, #tpu.memory_space<vmem>>, vector<1x50xf32>
    %9 = vector.broadcast %8 : vector<1x50xf32> to vector<50x50xf32>
    %10 = arith.addf %7, %9 : vector<50x50xf32>
    %11 = vector.extract_strided_slice %6 {offsets = [0, 50], sizes = [50, 100], strides = [1, 1]} : vector<50x640xf32> to vector<50x100xf32>
    %c0_10 = arith.constant 0 : index
    %c0_11 = arith.constant 0 : index
    %12 = vector.load %arg4[%c0_10, %c0_11] : memref<1x100xf32, #tpu.memory_space<vmem>>, vector<1x100xf32>
    %13 = vector.broadcast %12 : vector<1x100xf32> to vector<50x100xf32>
    %14 = arith.addf %11, %13 : vector<50x100xf32>
    %c0_12 = arith.constant 0 : index
    %c0_13 = arith.constant 0 : index
    %15 = vector.load %arg5[%c0_12, %c0_13] : memref<1x100xf32, #tpu.memory_space<vmem>>, vector<1x100xf32>
    %16 = vector.broadcast %15 : vector<1x100xf32> to vector<50x100xf32>
    %17 = arith.mulf %14, %16 : vector<50x100xf32>
    %c0_14 = arith.constant 0 : index
    %c0_15 = arith.constant 0 : index
    %18 = vector.load %arg6[%c0_14, %c0_15] : memref<1x100xf32, #tpu.memory_space<vmem>>, vector<1x100xf32>
    %19 = vector.broadcast %18 : vector<1x100xf32> to vector<50x100xf32>
    %20 = arith.addf %17, %19 : vector<50x100xf32>
    %cst_16 = arith.constant 0.000000e+00 : f32
    %21 = vector.broadcast %cst_16 : f32 to vector<50x100xf32>
    %22 = arith.maximumf %20, %21 : vector<50x100xf32>
    %cst_17 = arith.constant 0.000000e+00 : f32
    %23 = vector.broadcast %cst_17 : f32 to vector<1x100xf32>
    %24 = vector.extract_strided_slice %6 {offsets = [0, 150], sizes = [49, 100], strides = [1, 1]} : vector<50x640xf32> to vector<49x100xf32>
    %25 = tpu.concatenate %23, %24 in 0 : vector<1x100xf32>, vector<49x100xf32> -> vector<50x100xf32>
    %26 = vector.extract_strided_slice %6 {offsets = [0, 250], sizes = [50, 100], strides = [1, 1]} : vector<50x640xf32> to vector<50x100xf32>
    %27 = arith.addf %25, %26 : vector<50x100xf32>
    %28 = vector.extract_strided_slice %6 {offsets = [1, 350], sizes = [49, 100], strides = [1, 1]} : vector<50x640xf32> to vector<49x100xf32>
    %29 = tpu.concatenate %28, %23 in 0 : vector<49x100xf32>, vector<1x100xf32> -> vector<50x100xf32>
    %30 = arith.addf %27, %29 : vector<50x100xf32>
    %c0_18 = arith.constant 0 : index
    %c0_19 = arith.constant 0 : index
    %31 = vector.load %arg7[%c0_18, %c0_19] : memref<1x100xf32, #tpu.memory_space<vmem>>, vector<1x100xf32>
    %32 = vector.broadcast %31 : vector<1x100xf32> to vector<50x100xf32>
    %33 = arith.addf %30, %32 : vector<50x100xf32>
    %c0_20 = arith.constant 0 : index
    %c0_21 = arith.constant 0 : index
    %34 = vector.load %arg8[%c0_20, %c0_21] : memref<1x100xf32, #tpu.memory_space<vmem>>, vector<1x100xf32>
    %35 = vector.broadcast %34 : vector<1x100xf32> to vector<50x100xf32>
    %36 = arith.mulf %33, %35 : vector<50x100xf32>
    %c0_22 = arith.constant 0 : index
    %c0_23 = arith.constant 0 : index
    %37 = vector.load %arg9[%c0_22, %c0_23] : memref<1x100xf32, #tpu.memory_space<vmem>>, vector<1x100xf32>
    %38 = vector.broadcast %37 : vector<1x100xf32> to vector<50x100xf32>
    %39 = arith.addf %36, %38 : vector<50x100xf32>
    %cst_24 = arith.constant 0.000000e+00 : f32
    %40 = vector.broadcast %cst_24 : f32 to vector<50x100xf32>
    %41 = arith.maximumf %39, %40 : vector<50x100xf32>
    %cst_25 = arith.constant 0.000000e+00 : f32
    %42 = vector.broadcast %cst_25 : f32 to vector<1x50xf32>
    %43 = vector.extract_strided_slice %6 {offsets = [0, 450], sizes = [49, 50], strides = [1, 1]} : vector<50x640xf32> to vector<49x50xf32>
    %44 = tpu.concatenate %42, %43 in 0 : vector<1x50xf32>, vector<49x50xf32> -> vector<50x50xf32>
    %45 = vector.extract_strided_slice %6 {offsets = [0, 500], sizes = [50, 50], strides = [1, 1]} : vector<50x640xf32> to vector<50x50xf32>
    %46 = arith.addf %44, %45 : vector<50x50xf32>
    %47 = vector.extract_strided_slice %6 {offsets = [1, 550], sizes = [49, 50], strides = [1, 1]} : vector<50x640xf32> to vector<49x50xf32>
    %48 = tpu.concatenate %47, %42 in 0 : vector<49x50xf32>, vector<1x50xf32> -> vector<50x50xf32>
    %49 = arith.addf %46, %48 : vector<50x50xf32>
    %c0_26 = arith.constant 0 : index
    %c0_27 = arith.constant 0 : index
    %50 = vector.load %arg10[%c0_26, %c0_27] : memref<1x50xf32, #tpu.memory_space<vmem>>, vector<1x50xf32>
    %51 = vector.broadcast %50 : vector<1x50xf32> to vector<50x50xf32>
    %52 = arith.addf %49, %51 : vector<50x50xf32>
    %53 = tpu.concatenate %23, %22, %23 in 0 : vector<1x100xf32>, vector<50x100xf32>, vector<1x100xf32> -> vector<52x100xf32>
    %54 = arith.truncf %53 : vector<52x100xf32> to vector<52x100xbf16>
    %cst_28 = arith.constant dense<0.000000e+00> : vector<52x150xf32>
    %55 = tpu.matmul %54, %1, %cst_28 {dimension_numbers = #tpu.dot_dimension_numbers<[1], [0], [0], [1], [0, 0, 1, 1], [], []>} : vector<52x100xbf16>, vector<100x150xbf16>, vector<52x150xf32> -> vector<52x150xf32>
    %56 = vector.extract_strided_slice %55 {offsets = [0, 0], sizes = [50, 50], strides = [1, 1]} : vector<52x150xf32> to vector<50x50xf32>
    %57 = vector.extract_strided_slice %55 {offsets = [1, 50], sizes = [50, 50], strides = [1, 1]} : vector<52x150xf32> to vector<50x50xf32>
    %58 = arith.addf %56, %57 : vector<50x50xf32>
    %59 = vector.extract_strided_slice %55 {offsets = [2, 100], sizes = [50, 50], strides = [1, 1]} : vector<52x150xf32> to vector<50x50xf32>
    %60 = arith.addf %58, %59 : vector<50x50xf32>
    %c0_29 = arith.constant 0 : index
    %c0_30 = arith.constant 0 : index
    %61 = vector.load %arg12[%c0_29, %c0_30] : memref<1x50xf32, #tpu.memory_space<vmem>>, vector<1x50xf32>
    %62 = vector.broadcast %61 : vector<1x50xf32> to vector<50x50xf32>
    %63 = arith.addf %60, %62 : vector<50x50xf32>
    %cst_31 = arith.constant 0.000000e+00 : f32
    %64 = vector.broadcast %cst_31 : f32 to vector<2x100xf32>
    %65 = tpu.concatenate %64, %41, %64 in 0 : vector<2x100xf32>, vector<50x100xf32>, vector<2x100xf32> -> vector<54x100xf32>
    %66 = arith.truncf %65 : vector<54x100xf32> to vector<54x100xbf16>
    %cst_32 = arith.constant dense<0.000000e+00> : vector<54x250xf32>
    %67 = tpu.matmul %66, %2, %cst_32 {dimension_numbers = #tpu.dot_dimension_numbers<[1], [0], [0], [1], [0, 0, 1, 1], [], []>} : vector<54x100xbf16>, vector<100x250xbf16>, vector<54x250xf32> -> vector<54x250xf32>
    %68 = vector.extract_strided_slice %67 {offsets = [0, 0], sizes = [50, 50], strides = [1, 1]} : vector<54x250xf32> to vector<50x50xf32>
    %c0_33 = arith.constant 0 : index
    %c0_34 = arith.constant 0 : index
    %69 = vector.load %arg14[%c0_33, %c0_34] : memref<1x50xf32, #tpu.memory_space<vmem>>, vector<1x50xf32>
    %70 = vector.broadcast %69 : vector<1x50xf32> to vector<50x50xf32>
    %71 = arith.addf %68, %70 : vector<50x50xf32>
    %72 = vector.extract_strided_slice %67 {offsets = [1, 50], sizes = [50, 50], strides = [1, 1]} : vector<54x250xf32> to vector<50x50xf32>
    %73 = arith.addf %71, %72 : vector<50x50xf32>
    %74 = vector.extract_strided_slice %67 {offsets = [2, 100], sizes = [50, 50], strides = [1, 1]} : vector<54x250xf32> to vector<50x50xf32>
    %75 = arith.addf %73, %74 : vector<50x50xf32>
    %76 = vector.extract_strided_slice %67 {offsets = [3, 150], sizes = [50, 50], strides = [1, 1]} : vector<54x250xf32> to vector<50x50xf32>
    %77 = arith.addf %75, %76 : vector<50x50xf32>
    %78 = vector.extract_strided_slice %67 {offsets = [4, 200], sizes = [50, 50], strides = [1, 1]} : vector<54x250xf32> to vector<50x50xf32>
    %79 = arith.addf %77, %78 : vector<50x50xf32>
    %80 = tpu.concatenate %10, %63, %79, %52 in 1 : vector<50x50xf32>, vector<50x50xf32>, vector<50x50xf32>, vector<50x50xf32> -> vector<50x200xf32>
    %c0_35 = arith.constant 0 : index
    %c0_36 = arith.constant 0 : index
    %c0_37 = arith.constant 0 : index
    %81 = vector.load %arg15[%c0_35, %c0_36, %c0_37] : memref<2x50x200xf32, #tpu.memory_space<vmem>>, vector<1x50x200xf32>
    %82 = vector.shape_cast %81 : vector<1x50x200xf32> to vector<50x200xf32>
    %83 = vector.shape_cast %80 : vector<50x200xf32> to vector<1x50x200xf32>
    tpu.vector_store %arg15[%c0_35, %c0_36, %c0_37], %83 {strides = array<i32>} : memref<2x50x200xf32, #tpu.memory_space<vmem>>, vector<1x50x200xf32>,
    %c1 = arith.constant 1 : index
    %c0_38 = arith.constant 0 : index
    %c0_39 = arith.constant 0 : index
    %84 = vector.load %arg1[%c1, %c0_38, %c0_39] : memref<2x50x768xf32, #tpu.memory_space<vmem>>, vector<1x50x768xf32>
    %85 = vector.shape_cast %84 : vector<1x50x768xf32> to vector<50x768xf32>
    %86 = arith.truncf %85 : vector<50x768xf32> to vector<50x768xbf16>
    %cst_40 = arith.constant dense<0.000000e+00> : vector<50x640xf32>
    %87 = tpu.matmul %86, %0, %cst_40 {dimension_numbers = #tpu.dot_dimension_numbers<[1], [0], [0], [1], [0, 0, 1, 1], [], []>} : vector<50x768xbf16>, vector<768x640xbf16>, vector<50x640xf32> -> vector<50x640xf32>
    %88 = vector.extract_strided_slice %87 {offsets = [0, 0], sizes = [50, 50], strides = [1, 1]} : vector<50x640xf32> to vector<50x50xf32>
    %c0_41 = arith.constant 0 : index
    %c0_42 = arith.constant 0 : index
    %89 = vector.load %arg3[%c0_41, %c0_42] : memref<1x50xf32, #tpu.memory_space<vmem>>, vector<1x50xf32>
    %90 = vector.broadcast %89 : vector<1x50xf32> to vector<50x50xf32>
    %91 = arith.addf %88, %90 : vector<50x50xf32>
    %92 = vector.extract_strided_slice %87 {offsets = [0, 50], sizes = [50, 100], strides = [1, 1]} : vector<50x640xf32> to vector<50x100xf32>
    %c0_43 = arith.constant 0 : index
    %c0_44 = arith.constant 0 : index
    %93 = vector.load %arg4[%c0_43, %c0_44] : memref<1x100xf32, #tpu.memory_space<vmem>>, vector<1x100xf32>
    %94 = vector.broadcast %93 : vector<1x100xf32> to vector<50x100xf32>
    %95 = arith.addf %92, %94 : vector<50x100xf32>
    %c0_45 = arith.constant 0 : index
    %c0_46 = arith.constant 0 : index
    %96 = vector.load %arg5[%c0_45, %c0_46] : memref<1x100xf32, #tpu.memory_space<vmem>>, vector<1x100xf32>
    %97 = vector.broadcast %96 : vector<1x100xf32> to vector<50x100xf32>
    %98 = arith.mulf %95, %97 : vector<50x100xf32>
    %c0_47 = arith.constant 0 : index
    %c0_48 = arith.constant 0 : index
    %99 = vector.load %arg6[%c0_47, %c0_48] : memref<1x100xf32, #tpu.memory_space<vmem>>, vector<1x100xf32>
    %100 = vector.broadcast %99 : vector<1x100xf32> to vector<50x100xf32>
    %101 = arith.addf %98, %100 : vector<50x100xf32>
    %cst_49 = arith.constant 0.000000e+00 : f32
    %102 = vector.broadcast %cst_49 : f32 to vector<50x100xf32>
    %103 = arith.maximumf %101, %102 : vector<50x100xf32>
    %cst_50 = arith.constant 0.000000e+00 : f32
    %104 = vector.broadcast %cst_50 : f32 to vector<1x100xf32>
    %105 = vector.extract_strided_slice %87 {offsets = [0, 150], sizes = [49, 100], strides = [1, 1]} : vector<50x640xf32> to vector<49x100xf32>
    %106 = tpu.concatenate %104, %105 in 0 : vector<1x100xf32>, vector<49x100xf32> -> vector<50x100xf32>
    %107 = vector.extract_strided_slice %87 {offsets = [0, 250], sizes = [50, 100], strides = [1, 1]} : vector<50x640xf32> to vector<50x100xf32>
    %108 = arith.addf %106, %107 : vector<50x100xf32>
    %109 = vector.extract_strided_slice %87 {offsets = [1, 350], sizes = [49, 100], strides = [1, 1]} : vector<50x640xf32> to vector<49x100xf32>
    %110 = tpu.concatenate %109, %104 in 0 : vector<49x100xf32>, vector<1x100xf32> -> vector<50x100xf32>
    %111 = arith.addf %108, %110 : vector<50x100xf32>
    %c0_51 = arith.constant 0 : index
    %c0_52 = arith.constant 0 : index
    %112 = vector.load %arg7[%c0_51, %c0_52] : memref<1x100xf32, #tpu.memory_space<vmem>>, vector<1x100xf32>
    %113 = vector.broadcast %112 : vector<1x100xf32> to vector<50x100xf32>
    %114 = arith.addf %111, %113 : vector<50x100xf32>
    %c0_53 = arith.constant 0 : index
    %c0_54 = arith.constant 0 : index
    %115 = vector.load %arg8[%c0_53, %c0_54] : memref<1x100xf32, #tpu.memory_space<vmem>>, vector<1x100xf32>
    %116 = vector.broadcast %115 : vector<1x100xf32> to vector<50x100xf32>
    %117 = arith.mulf %114, %116 : vector<50x100xf32>
    %c0_55 = arith.constant 0 : index
    %c0_56 = arith.constant 0 : index
    %118 = vector.load %arg9[%c0_55, %c0_56] : memref<1x100xf32, #tpu.memory_space<vmem>>, vector<1x100xf32>
    %119 = vector.broadcast %118 : vector<1x100xf32> to vector<50x100xf32>
    %120 = arith.addf %117, %119 : vector<50x100xf32>
    %cst_57 = arith.constant 0.000000e+00 : f32
    %121 = vector.broadcast %cst_57 : f32 to vector<50x100xf32>
    %122 = arith.maximumf %120, %121 : vector<50x100xf32>
    %cst_58 = arith.constant 0.000000e+00 : f32
    %123 = vector.broadcast %cst_58 : f32 to vector<1x50xf32>
    %124 = vector.extract_strided_slice %87 {offsets = [0, 450], sizes = [49, 50], strides = [1, 1]} : vector<50x640xf32> to vector<49x50xf32>
    %125 = tpu.concatenate %123, %124 in 0 : vector<1x50xf32>, vector<49x50xf32> -> vector<50x50xf32>
    %126 = vector.extract_strided_slice %87 {offsets = [0, 500], sizes = [50, 50], strides = [1, 1]} : vector<50x640xf32> to vector<50x50xf32>
    %127 = arith.addf %125, %126 : vector<50x50xf32>
    %128 = vector.extract_strided_slice %87 {offsets = [1, 550], sizes = [49, 50], strides = [1, 1]} : vector<50x640xf32> to vector<49x50xf32>
    %129 = tpu.concatenate %128, %123 in 0 : vector<49x50xf32>, vector<1x50xf32> -> vector<50x50xf32>
    %130 = arith.addf %127, %129 : vector<50x50xf32>
    %c0_59 = arith.constant 0 : index
    %c0_60 = arith.constant 0 : index
    %131 = vector.load %arg10[%c0_59, %c0_60] : memref<1x50xf32, #tpu.memory_space<vmem>>, vector<1x50xf32>
    %132 = vector.broadcast %131 : vector<1x50xf32> to vector<50x50xf32>
    %133 = arith.addf %130, %132 : vector<50x50xf32>
    %134 = tpu.concatenate %104, %103, %104 in 0 : vector<1x100xf32>, vector<50x100xf32>, vector<1x100xf32> -> vector<52x100xf32>
    %135 = arith.truncf %134 : vector<52x100xf32> to vector<52x100xbf16>
    %cst_61 = arith.constant dense<0.000000e+00> : vector<52x150xf32>
    %136 = tpu.matmul %135, %1, %cst_61 {dimension_numbers = #tpu.dot_dimension_numbers<[1], [0], [0], [1], [0, 0, 1, 1], [], []>} : vector<52x100xbf16>, vector<100x150xbf16>, vector<52x150xf32> -> vector<52x150xf32>
    %137 = vector.extract_strided_slice %136 {offsets = [0, 0], sizes = [50, 50], strides = [1, 1]} : vector<52x150xf32> to vector<50x50xf32>
    %138 = vector.extract_strided_slice %136 {offsets = [1, 50], sizes = [50, 50], strides = [1, 1]} : vector<52x150xf32> to vector<50x50xf32>
    %139 = arith.addf %137, %138 : vector<50x50xf32>
    %140 = vector.extract_strided_slice %136 {offsets = [2, 100], sizes = [50, 50], strides = [1, 1]} : vector<52x150xf32> to vector<50x50xf32>
    %141 = arith.addf %139, %140 : vector<50x50xf32>
    %c0_62 = arith.constant 0 : index
    %c0_63 = arith.constant 0 : index
    %142 = vector.load %arg12[%c0_62, %c0_63] : memref<1x50xf32, #tpu.memory_space<vmem>>, vector<1x50xf32>
    %143 = vector.broadcast %142 : vector<1x50xf32> to vector<50x50xf32>
    %144 = arith.addf %141, %143 : vector<50x50xf32>
    %cst_64 = arith.constant 0.000000e+00 : f32
    %145 = vector.broadcast %cst_64 : f32 to vector<2x100xf32>
    %146 = tpu.concatenate %145, %122, %145 in 0 : vector<2x100xf32>, vector<50x100xf32>, vector<2x100xf32> -> vector<54x100xf32>
    %147 = arith.truncf %146 : vector<54x100xf32> to vector<54x100xbf16>
    %cst_65 = arith.constant dense<0.000000e+00> : vector<54x250xf32>
    %148 = tpu.matmul %147, %2, %cst_65 {dimension_numbers = #tpu.dot_dimension_numbers<[1], [0], [0], [1], [0, 0, 1, 1], [], []>} : vector<54x100xbf16>, vector<100x250xbf16>, vector<54x250xf32> -> vector<54x250xf32>
    %149 = vector.extract_strided_slice %148 {offsets = [0, 0], sizes = [50, 50], strides = [1, 1]} : vector<54x250xf32> to vector<50x50xf32>
    %c0_66 = arith.constant 0 : index
    %c0_67 = arith.constant 0 : index
    %150 = vector.load %arg14[%c0_66, %c0_67] : memref<1x50xf32, #tpu.memory_space<vmem>>, vector<1x50xf32>
    %151 = vector.broadcast %150 : vector<1x50xf32> to vector<50x50xf32>
    %152 = arith.addf %149, %151 : vector<50x50xf32>
    %153 = vector.extract_strided_slice %148 {offsets = [1, 50], sizes = [50, 50], strides = [1, 1]} : vector<54x250xf32> to vector<50x50xf32>
    %154 = arith.addf %152, %153 : vector<50x50xf32>
    %155 = vector.extract_strided_slice %148 {offsets = [2, 100], sizes = [50, 50], strides = [1, 1]} : vector<54x250xf32> to vector<50x50xf32>
    %156 = arith.addf %154, %155 : vector<50x50xf32>
    %157 = vector.extract_strided_slice %148 {offsets = [3, 150], sizes = [50, 50], strides = [1, 1]} : vector<54x250xf32> to vector<50x50xf32>
    %158 = arith.addf %156, %157 : vector<50x50xf32>
    %159 = vector.extract_strided_slice %148 {offsets = [4, 200], sizes = [50, 50], strides = [1, 1]} : vector<54x250xf32> to vector<50x50xf32>
    %160 = arith.addf %158, %159 : vector<50x50xf32>
    %161 = tpu.concatenate %91, %144, %160, %133 in 1 : vector<50x50xf32>, vector<50x50xf32>, vector<50x50xf32>, vector<50x50xf32> -> vector<50x200xf32>
    %c1_68 = arith.constant 1 : index
    %c0_69 = arith.constant 0 : index
    %c0_70 = arith.constant 0 : index
    %162 = vector.load %arg15[%c1_68, %c0_69, %c0_70] : memref<2x50x200xf32, #tpu.memory_space<vmem>>, vector<1x50x200xf32>
    %163 = vector.shape_cast %162 : vector<1x50x200xf32> to vector<50x200xf32>
    %164 = vector.shape_cast %161 : vector<50x200xf32> to vector<1x50x200xf32>
    tpu.vector_store %arg15[%c1_68, %c0_69, %c0_70], %164 {strides = array<i32>} : memref<2x50x200xf32, #tpu.memory_space<vmem>>, vector<1x50x200xf32>,
    return
  }
  func.func @transform_0(%arg0: i32) -> (i32, i32, i32) {
    %c0_i32 = arith.constant 0 : i32
    %c0_i32_0 = arith.constant 0 : i32
    %c0_i32_1 = arith.constant 0 : i32
    %c0_i32_2 = arith.constant 0 : i32
    return %c0_i32, %c0_i32_0, %c0_i32_1 : i32, i32, i32
  }
  func.func @transform_1(%arg0: i32) -> (i32, i32) {
    %c0_i32 = arith.constant 0 : i32
    %c0_i32_0 = arith.constant 0 : i32
    %c0_i32_1 = arith.constant 0 : i32
    return %c0_i32, %c0_i32_0 : i32, i32
  }
  func.func @transform_2(%arg0: i32) -> (i32, i32) {
    %c0_i32 = arith.constant 0 : i32
    %c0_i32_0 = arith.constant 0 : i32
    %c0_i32_1 = arith.constant 0 : i32
    return %c0_i32, %c0_i32_0 : i32, i32
  }
  func.func @transform_3(%arg0: i32) -> (i32, i32) {
    %c0_i32 = arith.constant 0 : i32
    %c0_i32_0 = arith.constant 0 : i32
    %c0_i32_1 = arith.constant 0 : i32
    return %c0_i32, %c0_i32_0 : i32, i32
  }
  func.func @transform_4(%arg0: i32) -> (i32, i32) {
    %c0_i32 = arith.constant 0 : i32
    %c0_i32_0 = arith.constant 0 : i32
    %c0_i32_1 = arith.constant 0 : i32
    return %c0_i32, %c0_i32_0 : i32, i32
  }
  func.func @transform_5(%arg0: i32) -> (i32, i32) {
    %c0_i32 = arith.constant 0 : i32
    %c0_i32_0 = arith.constant 0 : i32
    %c0_i32_1 = arith.constant 0 : i32
    return %c0_i32, %c0_i32_0 : i32, i32
  }
  func.func @transform_6(%arg0: i32) -> (i32, i32) {
    %c0_i32 = arith.constant 0 : i32
    %c0_i32_0 = arith.constant 0 : i32
    %c0_i32_1 = arith.constant 0 : i32
    return %c0_i32, %c0_i32_0 : i32, i32
  }
  func.func @transform_7(%arg0: i32) -> (i32, i32) {
    %c0_i32 = arith.constant 0 : i32
    %c0_i32_0 = arith.constant 0 : i32
    %c0_i32_1 = arith.constant 0 : i32
    return %c0_i32, %c0_i32_0 : i32, i32
  }
  func.func @transform_8(%arg0: i32) -> (i32, i32) {
    %c0_i32 = arith.constant 0 : i32
    %c0_i32_0 = arith.constant 0 : i32
    %c0_i32_1 = arith.constant 0 : i32
    return %c0_i32, %c0_i32_0 : i32, i32
  }
  func.func @transform_9(%arg0: i32) -> (i32, i32) {
    %c0_i32 = arith.constant 0 : i32
    %c0_i32_0 = arith.constant 0 : i32
    %c0_i32_1 = arith.constant 0 : i32
    return %c0_i32, %c0_i32_0 : i32, i32
  }
  func.func @transform_10(%arg0: i32) -> (i32, i32) {
    %c0_i32 = arith.constant 0 : i32
    %c0_i32_0 = arith.constant 0 : i32
    %c0_i32_1 = arith.constant 0 : i32
    return %c0_i32, %c0_i32_0 : i32, i32
  }
  func.func @transform_11(%arg0: i32) -> (i32, i32) {
    %c0_i32 = arith.constant 0 : i32
    %c0_i32_0 = arith.constant 0 : i32
    %c0_i32_1 = arith.constant 0 : i32
    return %c0_i32, %c0_i32_0 : i32, i32
  }
  func.func @transform_12(%arg0: i32) -> (i32, i32) {
    %c0_i32 = arith.constant 0 : i32
    %c0_i32_0 = arith.constant 0 : i32
    %c0_i32_1 = arith.constant 0 : i32
    return %c0_i32, %c0_i32_0 : i32, i32
  }
  func.func @transform_13(%arg0: i32) -> (i32, i32) {
    %c0_i32 = arith.constant 0 : i32
    %c0_i32_0 = arith.constant 0 : i32
    %c0_i32_1 = arith.constant 0 : i32
    return %c0_i32, %c0_i32_0 : i32, i32
  }
  func.func @transform_14(%arg0: i32) -> (i32, i32, i32) {
    %c0_i32 = arith.constant 0 : i32
    %c0_i32_0 = arith.constant 0 : i32
    %c0_i32_1 = arith.constant 0 : i32
    %c0_i32_2 = arith.constant 0 : i32
    return %c0_i32, %c0_i32_0, %c0_i32_1 : i32, i32, i32
  }
}

module attributes {stable_mosaic.version = 11 : i64} {
  func.func @head_kernel(%arg0: i32, %arg1: memref<2x10000xf32, #tpu.memory_space<vmem>>, %arg2: memref<2x83xf32, #tpu.memory_space<vmem>>, %arg3: memref<10000x100xbf16, #tpu.memory_space<vmem>>, %arg4: memref<1x100xf32, #tpu.memory_space<vmem>>, %arg5: memref<1x100xf32, #tpu.memory_space<vmem>>, %arg6: memref<1x100xf32, #tpu.memory_space<vmem>>, %arg7: memref<100x50xbf16, #tpu.memory_space<vmem>>, %arg8: memref<1x50xf32, #tpu.memory_space<vmem>>, %arg9: memref<1x50xf32, #tpu.memory_space<vmem>>, %arg10: memref<1x50xf32, #tpu.memory_space<vmem>>, %arg11: memref<83x50xbf16, #tpu.memory_space<vmem>>, %arg12: memref<1x50xf32, #tpu.memory_space<vmem>>, %arg13: memref<1x50xf32, #tpu.memory_space<vmem>>, %arg14: memref<1x50xf32, #tpu.memory_space<vmem>>, %arg15: memref<50x2xbf16, #tpu.memory_space<vmem>>, %arg16: memref<50x2xbf16, #tpu.memory_space<vmem>>, %arg17: memref<1x2xf32, #tpu.memory_space<vmem>>, %arg18: memref<2x2xf32, #tpu.memory_space<vmem>>) attributes {dimension_semantics = [#tpu.dimension_semantics<arbitrary>], iteration_bounds = array<i64: 1>, scalar_prefetch = 0 : i64, scratch_operands = 0 : i64, tpu.core_type = #tpu.core_type<tc>, window_params = [{pipeline_mode = #tpu.pipeline_mode<synchronous>, transform_indices = @transform_0, window_bounds = array<i64: 2, 10000>}, {pipeline_mode = #tpu.pipeline_mode<synchronous>, transform_indices = @transform_1, window_bounds = array<i64: 2, 83>}, {pipeline_mode = #tpu.pipeline_mode<synchronous>, transform_indices = @transform_2, window_bounds = array<i64: 10000, 100>}, {pipeline_mode = #tpu.pipeline_mode<synchronous>, transform_indices = @transform_3, window_bounds = array<i64: 1, 100>}, {pipeline_mode = #tpu.pipeline_mode<synchronous>, transform_indices = @transform_4, window_bounds = array<i64: 1, 100>}, {pipeline_mode = #tpu.pipeline_mode<synchronous>, transform_indices = @transform_5, window_bounds = array<i64: 1, 100>}, {pipeline_mode = #tpu.pipeline_mode<synchronous>, transform_indices = @transform_6, window_bounds = array<i64: 100, 50>}, {pipeline_mode = #tpu.pipeline_mode<synchronous>, transform_indices = @transform_7, window_bounds = array<i64: 1, 50>}, {pipeline_mode = #tpu.pipeline_mode<synchronous>, transform_indices = @transform_8, window_bounds = array<i64: 1, 50>}, {pipeline_mode = #tpu.pipeline_mode<synchronous>, transform_indices = @transform_9, window_bounds = array<i64: 1, 50>}, {pipeline_mode = #tpu.pipeline_mode<synchronous>, transform_indices = @transform_10, window_bounds = array<i64: 83, 50>}, {pipeline_mode = #tpu.pipeline_mode<synchronous>, transform_indices = @transform_11, window_bounds = array<i64: 1, 50>}, {pipeline_mode = #tpu.pipeline_mode<synchronous>, transform_indices = @transform_12, window_bounds = array<i64: 1, 50>}, {pipeline_mode = #tpu.pipeline_mode<synchronous>, transform_indices = @transform_13, window_bounds = array<i64: 1, 50>}, {pipeline_mode = #tpu.pipeline_mode<synchronous>, transform_indices = @transform_14, window_bounds = array<i64: 50, 2>}, {pipeline_mode = #tpu.pipeline_mode<synchronous>, transform_indices = @transform_15, window_bounds = array<i64: 50, 2>}, {pipeline_mode = #tpu.pipeline_mode<synchronous>, transform_indices = @transform_16, window_bounds = array<i64: 1, 2>}, {pipeline_mode = #tpu.pipeline_mode<synchronous>, transform_indices = @transform_17, window_bounds = array<i64: 2, 2>}]} {
    %c0 = arith.constant 0 : index
    %c0_0 = arith.constant 0 : index
    %0 = vector.load %arg1[%c0, %c0_0] : memref<2x10000xf32, #tpu.memory_space<vmem>>, vector<2x10000xf32>
    %1 = arith.truncf %0 : vector<2x10000xf32> to vector<2x10000xbf16>
    %c0_1 = arith.constant 0 : index
    %c0_2 = arith.constant 0 : index
    %2 = vector.load %arg3[%c0_1, %c0_2] : memref<10000x100xbf16, #tpu.memory_space<vmem>>, vector<10000x100xbf16>
    %cst = arith.constant dense<0.000000e+00> : vector<2x100xf32>
    %3 = tpu.matmul %1, %2, %cst {dimension_numbers = #tpu.dot_dimension_numbers<[1], [0], [0], [1], [0, 0, 1, 1], [], []>} : vector<2x10000xbf16>, vector<10000x100xbf16>, vector<2x100xf32> -> vector<2x100xf32>
    %c0_3 = arith.constant 0 : index
    %c0_4 = arith.constant 0 : index
    %4 = vector.load %arg4[%c0_3, %c0_4] : memref<1x100xf32, #tpu.memory_space<vmem>>, vector<1x100xf32>
    %5 = vector.broadcast %4 : vector<1x100xf32> to vector<2x100xf32>
    %6 = arith.addf %3, %5 : vector<2x100xf32>
    %c0_5 = arith.constant 0 : index
    %c0_6 = arith.constant 0 : index
    %7 = vector.load %arg5[%c0_5, %c0_6] : memref<1x100xf32, #tpu.memory_space<vmem>>, vector<1x100xf32>
    %8 = vector.broadcast %7 : vector<1x100xf32> to vector<2x100xf32>
    %9 = arith.mulf %6, %8 : vector<2x100xf32>
    %c0_7 = arith.constant 0 : index
    %c0_8 = arith.constant 0 : index
    %10 = vector.load %arg6[%c0_7, %c0_8] : memref<1x100xf32, #tpu.memory_space<vmem>>, vector<1x100xf32>
    %11 = vector.broadcast %10 : vector<1x100xf32> to vector<2x100xf32>
    %12 = arith.addf %9, %11 : vector<2x100xf32>
    %cst_9 = arith.constant 0.000000e+00 : f32
    %13 = vector.broadcast %cst_9 : f32 to vector<2x100xf32>
    %14 = arith.maximumf %12, %13 : vector<2x100xf32>
    %15 = arith.truncf %14 : vector<2x100xf32> to vector<2x100xbf16>
    %c0_10 = arith.constant 0 : index
    %c0_11 = arith.constant 0 : index
    %16 = vector.load %arg7[%c0_10, %c0_11] : memref<100x50xbf16, #tpu.memory_space<vmem>>, vector<100x50xbf16>
    %cst_12 = arith.constant dense<0.000000e+00> : vector<2x50xf32>
    %17 = tpu.matmul %15, %16, %cst_12 {dimension_numbers = #tpu.dot_dimension_numbers<[1], [0], [0], [1], [0, 0, 1, 1], [], []>} : vector<2x100xbf16>, vector<100x50xbf16>, vector<2x50xf32> -> vector<2x50xf32>
    %c0_13 = arith.constant 0 : index
    %c0_14 = arith.constant 0 : index
    %18 = vector.load %arg8[%c0_13, %c0_14] : memref<1x50xf32, #tpu.memory_space<vmem>>, vector<1x50xf32>
    %19 = vector.broadcast %18 : vector<1x50xf32> to vector<2x50xf32>
    %20 = arith.addf %17, %19 : vector<2x50xf32>
    %c0_15 = arith.constant 0 : index
    %c0_16 = arith.constant 0 : index
    %21 = vector.load %arg9[%c0_15, %c0_16] : memref<1x50xf32, #tpu.memory_space<vmem>>, vector<1x50xf32>
    %22 = vector.broadcast %21 : vector<1x50xf32> to vector<2x50xf32>
    %23 = arith.mulf %20, %22 : vector<2x50xf32>
    %c0_17 = arith.constant 0 : index
    %c0_18 = arith.constant 0 : index
    %24 = vector.load %arg10[%c0_17, %c0_18] : memref<1x50xf32, #tpu.memory_space<vmem>>, vector<1x50xf32>
    %25 = vector.broadcast %24 : vector<1x50xf32> to vector<2x50xf32>
    %26 = arith.addf %23, %25 : vector<2x50xf32>
    %cst_19 = arith.constant 0.000000e+00 : f32
    %27 = vector.broadcast %cst_19 : f32 to vector<2x50xf32>
    %28 = arith.maximumf %26, %27 : vector<2x50xf32>
    %c0_20 = arith.constant 0 : index
    %c0_21 = arith.constant 0 : index
    %29 = vector.load %arg2[%c0_20, %c0_21] : memref<2x83xf32, #tpu.memory_space<vmem>>, vector<2x83xf32>
    %30 = arith.truncf %29 : vector<2x83xf32> to vector<2x83xbf16>
    %c0_22 = arith.constant 0 : index
    %c0_23 = arith.constant 0 : index
    %31 = vector.load %arg11[%c0_22, %c0_23] : memref<83x50xbf16, #tpu.memory_space<vmem>>, vector<83x50xbf16>
    %cst_24 = arith.constant dense<0.000000e+00> : vector<2x50xf32>
    %32 = tpu.matmul %30, %31, %cst_24 {dimension_numbers = #tpu.dot_dimension_numbers<[1], [0], [0], [1], [0, 0, 1, 1], [], []>} : vector<2x83xbf16>, vector<83x50xbf16>, vector<2x50xf32> -> vector<2x50xf32>
    %c0_25 = arith.constant 0 : index
    %c0_26 = arith.constant 0 : index
    %33 = vector.load %arg12[%c0_25, %c0_26] : memref<1x50xf32, #tpu.memory_space<vmem>>, vector<1x50xf32>
    %34 = vector.broadcast %33 : vector<1x50xf32> to vector<2x50xf32>
    %35 = arith.addf %32, %34 : vector<2x50xf32>
    %c0_27 = arith.constant 0 : index
    %c0_28 = arith.constant 0 : index
    %36 = vector.load %arg13[%c0_27, %c0_28] : memref<1x50xf32, #tpu.memory_space<vmem>>, vector<1x50xf32>
    %37 = vector.broadcast %36 : vector<1x50xf32> to vector<2x50xf32>
    %38 = arith.mulf %35, %37 : vector<2x50xf32>
    %c0_29 = arith.constant 0 : index
    %c0_30 = arith.constant 0 : index
    %39 = vector.load %arg14[%c0_29, %c0_30] : memref<1x50xf32, #tpu.memory_space<vmem>>, vector<1x50xf32>
    %40 = vector.broadcast %39 : vector<1x50xf32> to vector<2x50xf32>
    %41 = arith.addf %38, %40 : vector<2x50xf32>
    %cst_31 = arith.constant 0.000000e+00 : f32
    %42 = vector.broadcast %cst_31 : f32 to vector<2x50xf32>
    %43 = arith.maximumf %41, %42 : vector<2x50xf32>
    %44 = arith.truncf %28 : vector<2x50xf32> to vector<2x50xbf16>
    %c0_32 = arith.constant 0 : index
    %c0_33 = arith.constant 0 : index
    %45 = vector.load %arg15[%c0_32, %c0_33] : memref<50x2xbf16, #tpu.memory_space<vmem>>, vector<50x2xbf16>
    %cst_34 = arith.constant dense<0.000000e+00> : vector<2x2xf32>
    %46 = tpu.matmul %44, %45, %cst_34 {dimension_numbers = #tpu.dot_dimension_numbers<[1], [0], [0], [1], [0, 0, 1, 1], [], []>} : vector<2x50xbf16>, vector<50x2xbf16>, vector<2x2xf32> -> vector<2x2xf32>
    %47 = arith.truncf %43 : vector<2x50xf32> to vector<2x50xbf16>
    %c0_35 = arith.constant 0 : index
    %c0_36 = arith.constant 0 : index
    %48 = vector.load %arg16[%c0_35, %c0_36] : memref<50x2xbf16, #tpu.memory_space<vmem>>, vector<50x2xbf16>
    %cst_37 = arith.constant dense<0.000000e+00> : vector<2x2xf32>
    %49 = tpu.matmul %47, %48, %cst_37 {dimension_numbers = #tpu.dot_dimension_numbers<[1], [0], [0], [1], [0, 0, 1, 1], [], []>} : vector<2x50xbf16>, vector<50x2xbf16>, vector<2x2xf32> -> vector<2x2xf32>
    %50 = arith.addf %46, %49 : vector<2x2xf32>
    %c0_38 = arith.constant 0 : index
    %c0_39 = arith.constant 0 : index
    %51 = vector.load %arg17[%c0_38, %c0_39] : memref<1x2xf32, #tpu.memory_space<vmem>>, vector<1x2xf32>
    %52 = vector.broadcast %51 : vector<1x2xf32> to vector<2x2xf32>
    %53 = arith.addf %50, %52 : vector<2x2xf32>
    %cst_40 = arith.constant dense<0xFF800000> : vector<2xf32>
    %54 = vector.multi_reduction <maximumf>, %53, %cst_40 [1] : vector<2x2xf32> to vector<2xf32>
    %55 = vector.shape_cast %54 : vector<2xf32> to vector<2x1xf32>
    %56 = vector.broadcast %55 : vector<2x1xf32> to vector<2x2xf32>
    %57 = arith.subf %53, %56 : vector<2x2xf32>
    %58 = math.exp %57 : vector<2x2xf32>
    %cst_41 = arith.constant dense<0.000000e+00> : vector<2xf32>
    %59 = vector.multi_reduction <add>, %58, %cst_41 [1] : vector<2x2xf32> to vector<2xf32>
    %60 = vector.shape_cast %59 : vector<2xf32> to vector<2x1xf32>
    %61 = vector.broadcast %60 : vector<2x1xf32> to vector<2x2xf32>
    %62 = arith.divf %58, %61 : vector<2x2xf32>
    %c0_42 = arith.constant 0 : index
    %c0_43 = arith.constant 0 : index
    %63 = vector.load %arg18[%c0_42, %c0_43] : memref<2x2xf32, #tpu.memory_space<vmem>>, vector<2x2xf32>
    tpu.vector_store %arg18[%c0_42, %c0_43], %62 {strides = array<i32>} : memref<2x2xf32, #tpu.memory_space<vmem>>, vector<2x2xf32>,
    return
  }
  func.func @transform_0(%arg0: i32) -> (i32, i32) {
    %c0_i32 = arith.constant 0 : i32
    %c0_i32_0 = arith.constant 0 : i32
    %c0_i32_1 = arith.constant 0 : i32
    return %c0_i32, %c0_i32_0 : i32, i32
  }
  func.func @transform_1(%arg0: i32) -> (i32, i32) {
    %c0_i32 = arith.constant 0 : i32
    %c0_i32_0 = arith.constant 0 : i32
    %c0_i32_1 = arith.constant 0 : i32
    return %c0_i32, %c0_i32_0 : i32, i32
  }
  func.func @transform_2(%arg0: i32) -> (i32, i32) {
    %c0_i32 = arith.constant 0 : i32
    %c0_i32_0 = arith.constant 0 : i32
    %c0_i32_1 = arith.constant 0 : i32
    return %c0_i32, %c0_i32_0 : i32, i32
  }
  func.func @transform_3(%arg0: i32) -> (i32, i32) {
    %c0_i32 = arith.constant 0 : i32
    %c0_i32_0 = arith.constant 0 : i32
    %c0_i32_1 = arith.constant 0 : i32
    return %c0_i32, %c0_i32_0 : i32, i32
  }
  func.func @transform_4(%arg0: i32) -> (i32, i32) {
    %c0_i32 = arith.constant 0 : i32
    %c0_i32_0 = arith.constant 0 : i32
    %c0_i32_1 = arith.constant 0 : i32
    return %c0_i32, %c0_i32_0 : i32, i32
  }
  func.func @transform_5(%arg0: i32) -> (i32, i32) {
    %c0_i32 = arith.constant 0 : i32
    %c0_i32_0 = arith.constant 0 : i32
    %c0_i32_1 = arith.constant 0 : i32
    return %c0_i32, %c0_i32_0 : i32, i32
  }
  func.func @transform_6(%arg0: i32) -> (i32, i32) {
    %c0_i32 = arith.constant 0 : i32
    %c0_i32_0 = arith.constant 0 : i32
    %c0_i32_1 = arith.constant 0 : i32
    return %c0_i32, %c0_i32_0 : i32, i32
  }
  func.func @transform_7(%arg0: i32) -> (i32, i32) {
    %c0_i32 = arith.constant 0 : i32
    %c0_i32_0 = arith.constant 0 : i32
    %c0_i32_1 = arith.constant 0 : i32
    return %c0_i32, %c0_i32_0 : i32, i32
  }
  func.func @transform_8(%arg0: i32) -> (i32, i32) {
    %c0_i32 = arith.constant 0 : i32
    %c0_i32_0 = arith.constant 0 : i32
    %c0_i32_1 = arith.constant 0 : i32
    return %c0_i32, %c0_i32_0 : i32, i32
  }
  func.func @transform_9(%arg0: i32) -> (i32, i32) {
    %c0_i32 = arith.constant 0 : i32
    %c0_i32_0 = arith.constant 0 : i32
    %c0_i32_1 = arith.constant 0 : i32
    return %c0_i32, %c0_i32_0 : i32, i32
  }
  func.func @transform_10(%arg0: i32) -> (i32, i32) {
    %c0_i32 = arith.constant 0 : i32
    %c0_i32_0 = arith.constant 0 : i32
    %c0_i32_1 = arith.constant 0 : i32
    return %c0_i32, %c0_i32_0 : i32, i32
  }
  func.func @transform_11(%arg0: i32) -> (i32, i32) {
    %c0_i32 = arith.constant 0 : i32
    %c0_i32_0 = arith.constant 0 : i32
    %c0_i32_1 = arith.constant 0 : i32
    return %c0_i32, %c0_i32_0 : i32, i32
  }
  func.func @transform_12(%arg0: i32) -> (i32, i32) {
    %c0_i32 = arith.constant 0 : i32
    %c0_i32_0 = arith.constant 0 : i32
    %c0_i32_1 = arith.constant 0 : i32
    return %c0_i32, %c0_i32_0 : i32, i32
  }
  func.func @transform_13(%arg0: i32) -> (i32, i32) {
    %c0_i32 = arith.constant 0 : i32
    %c0_i32_0 = arith.constant 0 : i32
    %c0_i32_1 = arith.constant 0 : i32
    return %c0_i32, %c0_i32_0 : i32, i32
  }
  func.func @transform_14(%arg0: i32) -> (i32, i32) {
    %c0_i32 = arith.constant 0 : i32
    %c0_i32_0 = arith.constant 0 : i32
    %c0_i32_1 = arith.constant 0 : i32
    return %c0_i32, %c0_i32_0 : i32, i32
  }
  func.func @transform_15(%arg0: i32) -> (i32, i32) {
    %c0_i32 = arith.constant 0 : i32
    %c0_i32_0 = arith.constant 0 : i32
    %c0_i32_1 = arith.constant 0 : i32
    return %c0_i32, %c0_i32_0 : i32, i32
  }
  func.func @transform_16(%arg0: i32) -> (i32, i32) {
    %c0_i32 = arith.constant 0 : i32
    %c0_i32_0 = arith.constant 0 : i32
    %c0_i32_1 = arith.constant 0 : i32
    return %c0_i32, %c0_i32_0 : i32, i32
  }
  func.func @transform_17(%arg0: i32) -> (i32, i32) {
    %c0_i32 = arith.constant 0 : i32
    %c0_i32_0 = arith.constant 0 : i32
    %c0_i32_1 = arith.constant 0 : i32
    return %c0_i32, %c0_i32_0 : i32, i32
  }
}

</mosaic_0001>

<llo_original>
// kernel: bert_net_forward.2
$region0: #{bert_net_forward.2}
  #allocation0 [shape = 'u32[]', space=smem, size = 0x4, offset = 0x4, fixed_abs, tag = 'smem constant byte address 0x4 - core index']
  #allocation1 [shape = 'u32[144,128]{1,0:T(1,128)}', space=vmem, size = 0x12000, scoped, tag = 'internal scratch']
  %s0 = inlined_call_operand.vmem [shape: f32[2,50,768], index: 0, kind: input, shape index: {}]
  %s1 = inlined_call_operand.hbm [shape: bf16[768,640], index: 1, kind: input, shape index: {}]
  %s2 = inlined_call_operand.hbm [shape: f32[1,50], index: 2, kind: input, shape index: {}]
  %s3 = inlined_call_operand.hbm [shape: f32[1,100], index: 3, kind: input, shape index: {}]
  %s4 = inlined_call_operand.hbm [shape: f32[1,100], index: 4, kind: input, shape index: {}]
  %s5 = inlined_call_operand.hbm [shape: f32[1,100], index: 5, kind: input, shape index: {}]
  %s6 = inlined_call_operand.hbm [shape: f32[1,100], index: 6, kind: input, shape index: {}]
  %s7 = inlined_call_operand.hbm [shape: f32[1,100], index: 7, kind: input, shape index: {}]
  %s8 = inlined_call_operand.hbm [shape: f32[1,100], index: 8, kind: input, shape index: {}]
  %s9 = inlined_call_operand.hbm [shape: f32[1,50], index: 9, kind: input, shape index: {}]
  %s10 = inlined_call_operand.vmem [shape: bf16[100,150], index: 10, kind: input, shape index: {}]
  %s11 = inlined_call_operand.hbm [shape: f32[1,50], index: 11, kind: input, shape index: {}]
  %s12 = inlined_call_operand.hbm [shape: bf16[100,250], index: 12, kind: input, shape index: {}]
  %s13 = inlined_call_operand.hbm [shape: f32[1,50], index: 13, kind: input, shape index: {}]
  %s14 = inlined_call_operand.vmem [shape: f32[2,50,200], index: 14, kind: output, shape index: {}]
  %s15 = sld [smem:[#allocation0]]
  $region114: #{bert_net_forward.2} parent=0
    _
  %s17 = ssub.s32 1, %s15
  %s18 = scalar_select 0, %s17, %s15
  $region1: #{bert_net_forward.2} parent=0
    #allocation2 [shape = 'u8[983040]{0}', space=vmem, size = 0xf0000, scoped, tag = 'input window, operand 1, single buffered']
    #allocation3 [shape = 's32[1]{0}', space=sflag, size = 0x4, scoped, tag = 'scoped memory for bert_net_forward.2']
    #allocation4 [shape = 'u8[512]{0}', space=vmem, size = 0x400, scoped, tag = 'input window, operand 2, single buffered']
    #allocation5 [shape = 's32[1]{0}', space=sflag, size = 0x4, scoped, tag = 'scoped memory for bert_net_forward.2']
    #allocation6 [shape = 'u8[512]{0}', space=vmem, size = 0x400, scoped, tag = 'input window, operand 3, single buffered']
    #allocation7 [shape = 'u8[512]{0}', space=vmem, size = 0x400, scoped, tag = 'input window, operand 4, single buffered']
    #allocation8 [shape = 's32[1]{0}', space=sflag, size = 0x4, scoped, tag = 'scoped memory for bert_net_forward.2']
    #allocation9 [shape = 'u8[512]{0}', space=vmem, size = 0x400, scoped, tag = 'input window, operand 5, single buffered']
    #allocation10 [shape = 'u8[512]{0}', space=vmem, size = 0x400, scoped, tag = 'input window, operand 6, single buffered']
    #allocation11 [shape = 's32[1]{0}', space=sflag, size = 0x4, scoped, tag = 'scoped memory for bert_net_forward.2']
    #allocation12 [shape = 'u8[512]{0}', space=vmem, size = 0x400, scoped, tag = 'input window, operand 7, single buffered']
    #allocation13 [shape = 'u8[512]{0}', space=vmem, size = 0x400, scoped, tag = 'input window, operand 8, single buffered']
    #allocation14 [shape = 's32[1]{0}', space=sflag, size = 0x4, scoped, tag = 'scoped memory for bert_net_forward.2']
    #allocation15 [shape = 'u8[512]{0}', space=vmem, size = 0x400, scoped, tag = 'input window, operand 9, single buffered']
    #allocation16 [shape = 'u8[512]{0}', space=vmem, size = 0x400, scoped, tag = 'input window, operand 11, single buffered']
    #allocation17 [shape = 's32[1]{0}', space=sflag, size = 0x4, scoped, tag = 'scoped memory for bert_net_forward.2']
    #allocation18 [shape = 'u8[53248]{0}', space=vmem, size = 0xd000, scoped, tag = 'input window, operand 12, single buffered']
    #allocation19 [shape = 'u8[512]{0}', space=vmem, size = 0x400, scoped, tag = 'input window, operand 13, single buffered']
    #allocation20 [shape = 's32[1]{0}', space=sflag, size = 0x4, scoped, tag = 'scoped memory for bert_net_forward.2']
    %19 = vsyncpa [#allocation3], 0
    %20 = vsyncpa [#allocation5], 0
    %21 = vsyncpa [#allocation8], 0
    %22 = vsyncpa [#allocation11], 0
    %23 = vsyncpa [#allocation14], 0
    %24 = vsyncpa [#allocation17], 0
    %25 = vsyncpa [#allocation20], 0
    // Predicated region
    $region2: #{bert_net_forward.2} parent=1 // pred_check
      _
    $region3: #{bert_net_forward.2} parent=1 // pred_check_branch
      %27 = sbr.rel (0) target = $region5
    $region4: #{bert_net_forward.2} parent=1 // pred_region
      _
    $region5: #{bert_net_forward.2} parent=1 // pred_fallthru
      _
    // Predicated region
    $region6: #{bert_net_forward.2} parent=1 // pred_check
      _
    $region7: #{bert_net_forward.2} parent=1 // pred_check_branch
      %29 = sbr.rel (0) target = $region9
    $region8: #{bert_net_forward.2} parent=1 // pred_region
      %s31 = ssub.s32 30720, 30720
      %32 = vsyncadd [#allocation3], %s31
      %s33 = sshll.u32 [#allocation2], 4
      %s34 = int_to_ptr.vmem [resolvable:$true] %s33
      %39 = dma.hbm_to_vmem [thread:$0]  %s1, 30720, %s34, [#allocation3], 320, 320, 20
    $region9: #{bert_net_forward.2} parent=1 // pred_fallthru
      _
    // Predicated region
    $region10: #{bert_net_forward.2} parent=1 // pred_check
      _
    $region11: #{bert_net_forward.2} parent=1 // pred_check_branch
      %41 = sbr.rel (0) target = $region13
    $region12: #{bert_net_forward.2} parent=1 // pred_region
      %s43 = ssub.s32 16, 16
      %44 = vsyncadd [#allocation5], %s43
      %s46 = sshll.u32 [#allocation4], 4
      %s47 = int_to_ptr.vmem [resolvable:$true] %s46
      %49 = dma.hbm_to_vmem [thread:$0]  %s2, 16, %s47, [#allocation5]
    $region13: #{bert_net_forward.2} parent=1 // pred_fallthru
      _
    // Predicated region
    $region14: #{bert_net_forward.2} parent=1 // pred_check
      _
    $region15: #{bert_net_forward.2} parent=1 // pred_check_branch
      %51 = sbr.rel (0) target = $region17
    $region16: #{bert_net_forward.2} parent=1 // pred_region
      %s53 = ssub.s32 16, 16
      %54 = vsyncadd [#allocation5], %s53
      %s56 = sshll.u32 [#allocation6], 4
      %s57 = int_to_ptr.vmem [resolvable:$true] %s56
      %59 = dma.hbm_to_vmem [thread:$0]  %s3, 16, %s57, [#allocation5]
    $region17: #{bert_net_forward.2} parent=1 // pred_fallthru
      _
    // Predicated region
    $region18: #{bert_net_forward.2} parent=1 // pred_check
      _
    $region19: #{bert_net_forward.2} parent=1 // pred_check_branch
      %61 = sbr.rel (0) target = $region21
    $region20: #{bert_net_forward.2} parent=1 // pred_region
      %s63 = ssub.s32 16, 16
      %64 = vsyncadd [#allocation8], %s63
      %s66 = sshll.u32 [#allocation7], 4
      %s67 = int_to_ptr.vmem [resolvable:$true] %s66
      %69 = dma.hbm_to_vmem [thread:$0]  %s4, 16, %s67, [#allocation8]
    $region21: #{bert_net_forward.2} parent=1 // pred_fallthru
      _
    // Predicated region
    $region22: #{bert_net_forward.2} parent=1 // pred_check
      _
    $region23: #{bert_net_forward.2} parent=1 // pred_check_branch
      %71 = sbr.rel (0) target = $region25
    $region24: #{bert_net_forward.2} parent=1 // pred_region
      %s73 = ssub.s32 16, 16
      %74 = vsyncadd [#allocation8], %s73
      %s76 = sshll.u32 [#allocation9], 4
      %s77 = int_to_ptr.vmem [resolvable:$true] %s76
      %79 = dma.hbm_to_vmem [thread:$0]  %s5, 16, %s77, [#allocation8]
    $region25: #{bert_net_forward.2} parent=1 // pred_fallthru
      _
    // Predicated region
    $region26: #{bert_net_forward.2} parent=1 // pred_check
      _
    $region27: #{bert_net_forward.2} parent=1 // pred_check_branch
      %81 = sbr.rel (0) target = $region29
    $region28: #{bert_net_forward.2} parent=1 // pred_region
      %s83 = ssub.s32 16, 16
      %84 = vsyncadd [#allocation11], %s83
      %s86 = sshll.u32 [#allocation10], 4
      %s87 = int_to_ptr.vmem [resolvable:$true] %s86
      %89 = dma.hbm_to_vmem [thread:$0]  %s6, 16, %s87, [#allocation11]
    $region29: #{bert_net_forward.2} parent=1 // pred_fallthru
      _
    // Predicated region
    $region30: #{bert_net_forward.2} parent=1 // pred_check
      _
    $region31: #{bert_net_forward.2} parent=1 // pred_check_branch
      %91 = sbr.rel (0) target = $region33
    $region32: #{bert_net_forward.2} parent=1 // pred_region
      %s93 = ssub.s32 16, 16
      %94 = vsyncadd [#allocation11], %s93
      %s96 = sshll.u32 [#allocation12], 4
      %s97 = int_to_ptr.vmem [resolvable:$true] %s96
      %99 = dma.hbm_to_vmem [thread:$0]  %s7, 16, %s97, [#allocation11]
    $region33: #{bert_net_forward.2} parent=1 // pred_fallthru
      _
    // Predicated region
    $region34: #{bert_net_forward.2} parent=1 // pred_check
      _
    $region35: #{bert_net_forward.2} parent=1 // pred_check_branch
      %101 = sbr.rel (0) target = $region37
    $region36: #{bert_net_forward.2} parent=1 // pred_region
      %s103 = ssub.s32 16, 16
      %104 = vsyncadd [#allocation14], %s103
      %s106 = sshll.u32 [#allocation13], 4
      %s107 = int_to_ptr.vmem [resolvable:$true] %s106
      %109 = dma.hbm_to_vmem [thread:$0]  %s8, 16, %s107, [#allocation14]
    $region37: #{bert_net_forward.2} parent=1 // pred_fallthru
      _
    // Predicated region
    $region38: #{bert_net_forward.2} parent=1 // pred_check
      _
    $region39: #{bert_net_forward.2} parent=1 // pred_check_branch
      %111 = sbr.rel (0) target = $region41
    $region40: #{bert_net_forward.2} parent=1 // pred_region
      %s113 = ssub.s32 16, 16
      %114 = vsyncadd [#allocation14], %s113
      %s116 = sshll.u32 [#allocation15], 4
      %s117 = int_to_ptr.vmem [resolvable:$true] %s116
      %119 = dma.hbm_to_vmem [thread:$0]  %s9, 16, %s117, [#allocation14]
    $region41: #{bert_net_forward.2} parent=1 // pred_fallthru
      _
    // Predicated region
    $region42: #{bert_net_forward.2} parent=1 // pred_check
      _
    $region43: #{bert_net_forward.2} parent=1 // pred_check_branch
      %121 = sbr.rel (0) target = $region45
    $region44: #{bert_net_forward.2} parent=1 // pred_region
      _
    $region45: #{bert_net_forward.2} parent=1 // pred_fallthru
      _
    // Predicated region
    $region46: #{bert_net_forward.2} parent=1 // pred_check
      _
    $region47: #{bert_net_forward.2} parent=1 // pred_check_branch
      %123 = sbr.rel (0) target = $region49
    $region48: #{bert_net_forward.2} parent=1 // pred_region
      %s125 = ssub.s32 16, 16
      %126 = vsyncadd [#allocation17], %s125
      %s128 = sshll.u32 [#allocation16], 4
      %s129 = int_to_ptr.vmem [resolvable:$true] %s128
      %131 = dma.hbm_to_vmem [thread:$0]  %s11, 16, %s129, [#allocation17]
    $region49: #{bert_net_forward.2} parent=1 // pred_fallthru
      _
    // Predicated region
    $region50: #{bert_net_forward.2} parent=1 // pred_check
      _
    $region51: #{bert_net_forward.2} parent=1 // pred_check_branch
      %133 = sbr.rel (0) target = $region53
    $region52: #{bert_net_forward.2} parent=1 // pred_region
      %s135 = ssub.s32 1664, 1664
      %136 = vsyncadd [#allocation17], %s135
      %s137 = sshll.u32 [#allocation18], 4
      %s138 = int_to_ptr.vmem [resolvable:$true] %s137
      %143 = dma.hbm_to_vmem [thread:$0]  %s12, 1664, %s138, [#allocation17], 128, 128, 8
    $region53: #{bert_net_forward.2} parent=1 // pred_fallthru
      _
    // Predicated region
    $region54: #{bert_net_forward.2} parent=1 // pred_check
      _
    $region55: #{bert_net_forward.2} parent=1 // pred_check_branch
      %145 = sbr.rel (0) target = $region57
    $region56: #{bert_net_forward.2} parent=1 // pred_region
      %s147 = ssub.s32 16, 16
      %148 = vsyncadd [#allocation20], %s147
      %s150 = sshll.u32 [#allocation19], 4
      %s151 = int_to_ptr.vmem [resolvable:$true] %s150
      %153 = dma.hbm_to_vmem [thread:$0]  %s13, 16, %s151, [#allocation20]
    $region57: #{bert_net_forward.2} parent=1 // pred_fallthru
      _
    // Predicated region
    $region58: #{bert_net_forward.2} parent=1 // pred_check
      _
    $region59: #{bert_net_forward.2} parent=1 // pred_check_branch
      %155 = sbr.rel (0) target = $region61
    $region60: #{bert_net_forward.2} parent=1 // pred_region
      %156 = dma.done [#allocation3], 30720
    $region61: #{bert_net_forward.2} parent=1 // pred_fallthru
      _
    // Predicated region
    $region62: #{bert_net_forward.2} parent=1 // pred_check
      _
    $region63: #{bert_net_forward.2} parent=1 // pred_check_branch
      %158 = sbr.rel (0) target = $region65
    $region64: #{bert_net_forward.2} parent=1 // pred_region
      %159 = dma.done [#allocation5], 16
    $region65: #{bert_net_forward.2} parent=1 // pred_fallthru
      _
    // Predicated region
    $region66: #{bert_net_forward.2} parent=1 // pred_check
      _
    $region67: #{bert_net_forward.2} parent=1 // pred_check_branch
      %161 = sbr.rel (0) target = $region69
    $region68: #{bert_net_forward.2} parent=1 // pred_region
      %162 = dma.done [#allocation5], 16
    $region69: #{bert_net_forward.2} parent=1 // pred_fallthru
      _
    // Predicated region
    $region70: #{bert_net_forward.2} parent=1 // pred_check
      _
    $region71: #{bert_net_forward.2} parent=1 // pred_check_branch
      %164 = sbr.rel (0) target = $region73
    $region72: #{bert_net_forward.2} parent=1 // pred_region
      %165 = dma.done [#allocation8], 16
    $region73: #{bert_net_forward.2} parent=1 // pred_fallthru
      _
    // Predicated region
    $region74: #{bert_net_forward.2} parent=1 // pred_check
      _
    $region75: #{bert_net_forward.2} parent=1 // pred_check_branch
      %167 = sbr.rel (0) target = $region77
    $region76: #{bert_net_forward.2} parent=1 // pred_region
      %168 = dma.done [#allocation8], 16
    $region77: #{bert_net_forward.2} parent=1 // pred_fallthru
      _
    // Predicated region
    $region78: #{bert_net_forward.2} parent=1 // pred_check
      _
    $region79: #{bert_net_forward.2} parent=1 // pred_check_branch
      %170 = sbr.rel (0) target = $region81
    $region80: #{bert_net_forward.2} parent=1 // pred_region
      %171 = dma.done [#allocation11], 16
    $region81: #{bert_net_forward.2} parent=1 // pred_fallthru
      _
    // Predicated region
    $region82: #{bert_net_forward.2} parent=1 // pred_check
      _
    $region83: #{bert_net_forward.2} parent=1 // pred_check_branch
      %173 = sbr.rel (0) target = $region85
    $region84: #{bert_net_forward.2} parent=1 // pred_region
      %174 = dma.done [#allocation11], 16
    $region85: #{bert_net_forward.2} parent=1 // pred_fallthru
      _
    // Predicated region
    $region86: #{bert_net_forward.2} parent=1 // pred_check
      _
    $region87: #{bert_net_forward.2} parent=1 // pred_check_branch
      %176 = sbr.rel (0) target = $region89
    $region88: #{bert_net_forward.2} parent=1 // pred_region
      %177 = dma.done [#allocation14], 16
    $region89: #{bert_net_forward.2} parent=1 // pred_fallthru
      _
    // Predicated region
    $region90: #{bert_net_forward.2} parent=1 // pred_check
      _
    $region91: #{bert_net_forward.2} parent=1 // pred_check_branch
      %179 = sbr.rel (0) target = $region93
    $region92: #{bert_net_forward.2} parent=1 // pred_region
      %180 = dma.done [#allocation14], 16
    $region93: #{bert_net_forward.2} parent=1 // pred_fallthru
      _
    // Predicated region
    $region94: #{bert_net_forward.2} parent=1 // pred_check
      _
    $region95: #{bert_net_forward.2} parent=1 // pred_check_branch
      %182 = sbr.rel (0) target = $region97
    $region96: #{bert_net_forward.2} parent=1 // pred_region
      %183 = dma.done [#allocation17], 16
    $region97: #{bert_net_forward.2} parent=1 // pred_fallthru
      _
    // Predicated region
    $region98: #{bert_net_forward.2} parent=1 // pred_check
      _
    $region99: #{bert_net_forward.2} parent=1 // pred_check_branch
      %185 = sbr.rel (0) target = $region101
    $region100: #{bert_net_forward.2} parent=1 // pred_region
      %186 = dma.done [#allocation17], 1664
    $region101: #{bert_net_forward.2} parent=1 // pred_fallthru
      _
    // Predicated region
    $region102: #{bert_net_forward.2} parent=1 // pred_check
      _
    $region103: #{bert_net_forward.2} parent=1 // pred_check_branch
      %188 = sbr.rel (0) target = $region105
    $region104: #{bert_net_forward.2} parent=1 // pred_region
      %189 = dma.done [#allocation20], 16
    $region105: #{bert_net_forward.2} parent=1 // pred_fallthru
      _
    %v191 = vld [vmem:[#allocation2] sm:$0xff]
    %v192 = vld [vmem:[#allocation2 + $0x8] sm:$0xff]
    %v193 = vld [vmem:[#allocation2 + $0x10] sm:$0xf]
    %v194 = vld [vmem:[#allocation2 + $0x14] sm:$0xff]
    %v195 = vld [vmem:[#allocation2 + $0x1c] sm:$0xff]
    %v196 = vld [vmem:[#allocation2 + $0x24] sm:$0xf]
    %v197 = vld [vmem:[#allocation2 + $0x28] sm:$0xff]
    %v198 = vld [vmem:[#allocation2 + $0x30] sm:$0xff]
    %v199 = vld [vmem:[#allocation2 + $0x38] sm:$0xf]
    %v200 = vld [vmem:[#allocation2 + $0x3c] sm:$0xff]
    %v201 = vld [vmem:[#allocation2 + $0x44] sm:$0xff]
    %v202 = vld [vmem:[#allocation2 + $0x4c] sm:$0xf]
    %v203 = vld [vmem:[#allocation2 + $0x50] sm:$0xff]
    %v204 = vld [vmem:[#allocation2 + $0x58] sm:$0xff]
    %v205 = vld [vmem:[#allocation2 + $0x60] sm:$0xf]
    %v206 = vld [vmem:[#allocation2 + $0x64] sm:$0xff]
    %v207 = vld [vmem:[#allocation2 + $0x6c] sm:$0xff]
    %v208 = vld [vmem:[#allocation2 + $0x74] sm:$0xf]
    %v209 = vld [vmem:[#allocation2 + $0x78] sm:$0xff]
    %v210 = vld [vmem:[#allocation2 + $0x80] sm:$0xff]
    %v211 = vld [vmem:[#allocation2 + $0x88] sm:$0xf]
    %v212 = vld [vmem:[#allocation2 + $0x8c] sm:$0xff]
    %v213 = vld [vmem:[#allocation2 + $0x94] sm:$0xff]
    %v214 = vld [vmem:[#allocation2 + $0x9c] sm:$0xf]
    %v215 = vld [vmem:[#allocation2 + $0xa0] sm:$0xff]
    %v216 = vld [vmem:[#allocation2 + $0xa8] sm:$0xff]
    %v217 = vld [vmem:[#allocation2 + $0xb0] sm:$0xf]
    %v218 = vld [vmem:[#allocation2 + $0xb4] sm:$0xff]
    %v219 = vld [vmem:[#allocation2 + $0xbc] sm:$0xff]
    %v220 = vld [vmem:[#allocation2 + $0xc4] sm:$0xf]
    %v221 = vld [vmem:[#allocation2 + $0xc8] sm:$0xff]
    %v222 = vld [vmem:[#allocation2 + $0xd0] sm:$0xff]
    %v223 = vld [vmem:[#allocation2 + $0xd8] sm:$0xf]
    %v224 = vld [vmem:[#allocation2 + $0xdc] sm:$0xff]
    %v225 = vld [vmem:[#allocation2 + $0xe4] sm:$0xff]
    %v226 = vld [vmem:[#allocation2 + $0xec] sm:$0xf]
    %v227 = vld [vmem:[#allocation2 + $0xf0] sm:$0xff]
    %v228 = vld [vmem:[#allocation2 + $0xf8] sm:$0xff]
    %v229 = vld [vmem:[#allocation2 + $0x100] sm:$0xf]
    %v230 = vld [vmem:[#allocation2 + $0x104] sm:$0xff]
    %v231 = vld [vmem:[#allocation2 + $0x10c] sm:$0xff]
    %v232 = vld [vmem:[#allocation2 + $0x114] sm:$0xf]
    %v233 = vld [vmem:[#allocation2 + $0x118] sm:$0xff]
    %v234 = vld [vmem:[#allocation2 + $0x120] sm:$0xff]
    %v235 = vld [vmem:[#allocation2 + $0x128] sm:$0xf]
    %v236 = vld [vmem:[#allocation2 + $0x12c] sm:$0xff]
    %v237 = vld [vmem:[#allocation2 + $0x134] sm:$0xff]
    %v238 = vld [vmem:[#allocation2 + $0x13c] sm:$0xf]
    %v239 = vld [vmem:[#allocation2 + $0x140] sm:$0xff]
    %v240 = vld [vmem:[#allocation2 + $0x148] sm:$0xff]
    %v241 = vld [vmem:[#allocation2 + $0x150] sm:$0xf]
    %v242 = vld [vmem:[#allocation2 + $0x154] sm:$0xff]
    %v243 = vld [vmem:[#allocation2 + $0x15c] sm:$0xff]
    %v244 = vld [vmem:[#allocation2 + $0x164] sm:$0xf]
    %v245 = vld [vmem:[#allocation2 + $0x168] sm:$0xff]
    %v246 = vld [vmem:[#allocation2 + $0x170] sm:$0xff]
    %v247 = vld [vmem:[#allocation2 + $0x178] sm:$0xf]
    %v248 = vld [vmem:[#allocation2 + $0x17c] sm:$0xff]
    %v249 = vld [vmem:[#allocation2 + $0x184] sm:$0xff]
    %v250 = vld [vmem:[#allocation2 + $0x18c] sm:$0xf]
    %v251 = vld [vmem:[#allocation2 + $0x190] sm:$0xff]
    %v252 = vld [vmem:[#allocation2 + $0x198] sm:$0xff]
    %v253 = vld [vmem:[#allocation2 + $0x1a0] sm:$0xf]
    %v254 = vld [vmem:[#allocation2 + $0x1a4] sm:$0xff]
    %v255 = vld [vmem:[#allocation2 + $0x1ac] sm:$0xff]
    %v256 = vld [vmem:[#allocation2 + $0x1b4] sm:$0xf]
    %v257 = vld [vmem:[#allocation2 + $0x1b8] sm:$0xff]
    %v258 = vld [vmem:[#allocation2 + $0x1c0] sm:$0xff]
    %v259 = vld [vmem:[#allocation2 + $0x1c8] sm:$0xf]
    %v260 = vld [vmem:[#allocation2 + $0x1cc] sm:$0xff]
    %v261 = vld [vmem:[#allocation2 + $0x1d4] sm:$0xff]
    %v262 = vld [vmem:[#allocation2 + $0x1dc] sm:$0xf]
    %v263 = vld [vmem:[#allocation2 + $0x1e0] sm:$0xff]
    %v264 = vld [vmem:[#allocation2 + $0x1e8] sm:$0xff]
    %v265 = vld [vmem:[#allocation2 + $0x1f0] sm:$0xf]
    %v266 = vld [vmem:[#allocation2 + $0x1f4] sm:$0xff]
    %v267 = vld [vmem:[#allocation2 + $0x1fc] sm:$0xff]
    %v268 = vld [vmem:[#allocation2 + $0x204] sm:$0xf]
    %v269 = vld [vmem:[#allocation2 + $0x208] sm:$0xff]
    %v270 = vld [vmem:[#allocation2 + $0x210] sm:$0xff]
    %v271 = vld [vmem:[#allocation2 + $0x218] sm:$0xf]
    %v272 = vld [vmem:[#allocation2 + $0x21c] sm:$0xff]
    %v273 = vld [vmem:[#allocation2 + $0x224] sm:$0xff]
    %v274 = vld [vmem:[#allocation2 + $0x22c] sm:$0xf]
    %v275 = vld [vmem:[#allocation2 + $0x230] sm:$0xff]
    %v276 = vld [vmem:[#allocation2 + $0x238] sm:$0xff]
    %v277 = vld [vmem:[#allocation2 + $0x240] sm:$0xf]
    %v278 = vld [vmem:[#allocation2 + $0x244] sm:$0xff]
    %v279 = vld [vmem:[#allocation2 + $0x24c] sm:$0xff]
    %v280 = vld [vmem:[#allocation2 + $0x254] sm:$0xf]
    %v281 = vld [vmem:[#allocation2 + $0x258] sm:$0xff]
    %v282 = vld [vmem:[#allocation2 + $0x260] sm:$0xff]
    %v283 = vld [vmem:[#allocation2 + $0x268] sm:$0xf]
    %v284 = vld [vmem:[#allocation2 + $0x26c] sm:$0xff]
    %v285 = vld [vmem:[#allocation2 + $0x274] sm:$0xff]
    %v286 = vld [vmem:[#allocation2 + $0x27c] sm:$0xf]
    %v287 = vld [vmem:[#allocation2 + $0x280] sm:$0xff]
    %v288 = vld [vmem:[#allocation2 + $0x288] sm:$0xff]
    %v289 = vld [vmem:[#allocation2 + $0x290] sm:$0xf]
    %v290 = vld [vmem:[#allocation2 + $0x294] sm:$0xff]
    %v291 = vld [vmem:[#allocation2 + $0x29c] sm:$0xff]
    %v292 = vld [vmem:[#allocation2 + $0x2a4] sm:$0xf]
    %v293 = vld [vmem:[#allocation2 + $0x2a8] sm:$0xff]
    %v294 = vld [vmem:[#allocation2 + $0x2b0] sm:$0xff]
    %v295 = vld [vmem:[#allocation2 + $0x2b8] sm:$0xf]
    %v296 = vld [vmem:[#allocation2 + $0x2bc] sm:$0xff]
    %v297 = vld [vmem:[#allocation2 + $0x2c4] sm:$0xff]
    %v298 = vld [vmem:[#allocation2 + $0x2cc] sm:$0xf]
    %v299 = vld [vmem:[#allocation2 + $0x2d0] sm:$0xff]
    %v300 = vld [vmem:[#allocation2 + $0x2d8] sm:$0xff]
    %v301 = vld [vmem:[#allocation2 + $0x2e0] sm:$0xf]
    %v302 = vld [vmem:[#allocation2 + $0x2e4] sm:$0xff]
    %v303 = vld [vmem:[#allocation2 + $0x2ec] sm:$0xff]
    %v304 = vld [vmem:[#allocation2 + $0x2f4] sm:$0xf]
    %v305 = vld [vmem:[#allocation2 + $0x2f8] sm:$0xff]
    %v306 = vld [vmem:[#allocation2 + $0x300] sm:$0xff]
    %v307 = vld [vmem:[#allocation2 + $0x308] sm:$0xf]
    %v308 = vld [vmem:[#allocation2 + $0x30c] sm:$0xff]
    %v309 = vld [vmem:[#allocation2 + $0x314] sm:$0xff]
    %v310 = vld [vmem:[#allocation2 + $0x31c] sm:$0xf]
    %v311 = vld [vmem:[#allocation2 + $0x320] sm:$0xff]
    %v312 = vld [vmem:[#allocation2 + $0x328] sm:$0xff]
    %v313 = vld [vmem:[#allocation2 + $0x330] sm:$0xf]
    %v314 = vld [vmem:[#allocation2 + $0x334] sm:$0xff]
    %v315 = vld [vmem:[#allocation2 + $0x33c] sm:$0xff]
    %v316 = vld [vmem:[#allocation2 + $0x344] sm:$0xf]
    %v317 = vld [vmem:[#allocation2 + $0x348] sm:$0xff]
    %v318 = vld [vmem:[#allocation2 + $0x350] sm:$0xff]
    %v319 = vld [vmem:[#allocation2 + $0x358] sm:$0xf]
    %v320 = vld [vmem:[#allocation2 + $0x35c] sm:$0xff]
    %v321 = vld [vmem:[#allocation2 + $0x364] sm:$0xff]
    %v322 = vld [vmem:[#allocation2 + $0x36c] sm:$0xf]
    %v323 = vld [vmem:[#allocation2 + $0x370] sm:$0xff]
    %v324 = vld [vmem:[#allocation2 + $0x378] sm:$0xff]
    %v325 = vld [vmem:[#allocation2 + $0x380] sm:$0xf]
    %v326 = vld [vmem:[#allocation2 + $0x384] sm:$0xff]
    %v327 = vld [vmem:[#allocation2 + $0x38c] sm:$0xff]
    %v328 = vld [vmem:[#allocation2 + $0x394] sm:$0xf]
    %v329 = vld [vmem:[#allocation2 + $0x398] sm:$0xff]
    %v330 = vld [vmem:[#allocation2 + $0x3a0] sm:$0xff]
    %v331 = vld [vmem:[#allocation2 + $0x3a8] sm:$0xf]
    %v332 = vld [vmem:[#allocation2 + $0x3ac] sm:$0xff]
    %v333 = vld [vmem:[#allocation2 + $0x3b4] sm:$0xff]
    %v334 = vld [vmem:[#allocation2 + $0x3bc] sm:$0xf]
    %v335 = vld [vmem:[#allocation2 + $0x3c0] sm:$0xff]
    %v336 = vld [vmem:[#allocation2 + $0x3c8] sm:$0xff]
    %v337 = vld [vmem:[#allocation2 + $0x3d0] sm:$0xf]
    %v338 = vld [vmem:[#allocation2 + $0x3d4] sm:$0xff]
    %v339 = vld [vmem:[#allocation2 + $0x3dc] sm:$0xff]
    %v340 = vld [vmem:[#allocation2 + $0x3e4] sm:$0xf]
    %v341 = vld [vmem:[#allocation2 + $0x3e8] sm:$0xff]
    %v342 = vld [vmem:[#allocation2 + $0x3f0] sm:$0xff]
    %v343 = vld [vmem:[#allocation2 + $0x3f8] sm:$0xf]
    %v344 = vld [vmem:[#allocation2 + $0x3fc] sm:$0xff]
    %v345 = vld [vmem:[#allocation2 + $0x404] sm:$0xff]
    %v346 = vld [vmem:[#allocation2 + $0x40c] sm:$0xf]
    %v347 = vld [vmem:[#allocation2 + $0x410] sm:$0xff]
    %v348 = vld [vmem:[#allocation2 + $0x418] sm:$0xff]
    %v349 = vld [vmem:[#allocation2 + $0x420] sm:$0xf]
    %v350 = vld [vmem:[#allocation2 + $0x424] sm:$0xff]
    %v351 = vld [vmem:[#allocation2 + $0x42c] sm:$0xff]
    %v352 = vld [vmem:[#allocation2 + $0x434] sm:$0xf]
    %v353 = vld [vmem:[#allocation2 + $0x438] sm:$0xff]
    %v354 = vld [vmem:[#allocation2 + $0x440] sm:$0xff]
    %v355 = vld [vmem:[#allocation2 + $0x448] sm:$0xf]
    %v356 = vld [vmem:[#allocation2 + $0x44c] sm:$0xff]
    %v357 = vld [vmem:[#allocation2 + $0x454] sm:$0xff]
    %v358 = vld [vmem:[#allocation2 + $0x45c] sm:$0xf]
    %v359 = vld [vmem:[#allocation2 + $0x460] sm:$0xff]
    %v360 = vld [vmem:[#allocation2 + $0x468] sm:$0xff]
    %v361 = vld [vmem:[#allocation2 + $0x470] sm:$0xf]
    %v362 = vld [vmem:[#allocation2 + $0x474] sm:$0xff]
    %v363 = vld [vmem:[#allocation2 + $0x47c] sm:$0xff]
    %v364 = vld [vmem:[#allocation2 + $0x484] sm:$0xf]
    %v365 = vld [vmem:[#allocation2 + $0x488] sm:$0xff]
    %v366 = vld [vmem:[#allocation2 + $0x490] sm:$0xff]
    %v367 = vld [vmem:[#allocation2 + $0x498] sm:$0xf]
    %v368 = vld [vmem:[#allocation2 + $0x49c] sm:$0xff]
    %v369 = vld [vmem:[#allocation2 + $0x4a4] sm:$0xff]
    %v370 = vld [vmem:[#allocation2 + $0x4ac] sm:$0xf]
    %v371 = vld [vmem:[#allocation2 + $0x4b0] sm:$0xff]
    %v372 = vld [vmem:[#allocation2 + $0x4b8] sm:$0xff]
    %v373 = vld [vmem:[#allocation2 + $0x4c0] sm:$0xf]
    %v374 = vld [vmem:[#allocation2 + $0x4c4] sm:$0xff]
    %v375 = vld [vmem:[#allocation2 + $0x4cc] sm:$0xff]
    %v376 = vld [vmem:[#allocation2 + $0x4d4] sm:$0xf]
    %v377 = vld [vmem:[#allocation2 + $0x4d8] sm:$0xff]
    %v378 = vld [vmem:[#allocation2 + $0x4e0] sm:$0xff]
    %v379 = vld [vmem:[#allocation2 + $0x4e8] sm:$0xf]
    %v380 = vld [vmem:[#allocation2 + $0x4ec] sm:$0xff]
    %v381 = vld [vmem:[#allocation2 + $0x4f4] sm:$0xff]
    %v382 = vld [vmem:[#allocation2 + $0x4fc] sm:$0xf]
    %v383 = vld [vmem:[#allocation2 + $0x500] sm:$0xff]
    %v384 = vld [vmem:[#allocation2 + $0x508] sm:$0xff]
    %v385 = vld [vmem:[#allocation2 + $0x510] sm:$0xf]
    %v386 = vld [vmem:[#allocation2 + $0x514] sm:$0xff]
    %v387 = vld [vmem:[#allocation2 + $0x51c] sm:$0xff]
    %v388 = vld [vmem:[#allocation2 + $0x524] sm:$0xf]
    %v389 = vld [vmem:[#allocation2 + $0x528] sm:$0xff]
    %v390 = vld [vmem:[#allocation2 + $0x530] sm:$0xff]
    %v391 = vld [vmem:[#allocation2 + $0x538] sm:$0xf]
    %v392 = vld [vmem:[#allocation2 + $0x53c] sm:$0xff]
    %v393 = vld [vmem:[#allocation2 + $0x544] sm:$0xff]
    %v394 = vld [vmem:[#allocation2 + $0x54c] sm:$0xf]
    %v395 = vld [vmem:[#allocation2 + $0x550] sm:$0xff]
    %v396 = vld [vmem:[#allocation2 + $0x558] sm:$0xff]
    %v397 = vld [vmem:[#allocation2 + $0x560] sm:$0xf]
    %v398 = vld [vmem:[#allocation2 + $0x564] sm:$0xff]
    %v399 = vld [vmem:[#allocation2 + $0x56c] sm:$0xff]
    %v400 = vld [vmem:[#allocation2 + $0x574] sm:$0xf]
    %v401 = vld [vmem:[#allocation2 + $0x578] sm:$0xff]
    %v402 = vld [vmem:[#allocation2 + $0x580] sm:$0xff]
    %v403 = vld [vmem:[#allocation2 + $0x588] sm:$0xf]
    %v404 = vld [vmem:[#allocation2 + $0x58c] sm:$0xff]
    %v405 = vld [vmem:[#allocation2 + $0x594] sm:$0xff]
    %v406 = vld [vmem:[#allocation2 + $0x59c] sm:$0xf]
    %v407 = vld [vmem:[#allocation2 + $0x5a0] sm:$0xff]
    %v408 = vld [vmem:[#allocation2 + $0x5a8] sm:$0xff]
    %v409 = vld [vmem:[#allocation2 + $0x5b0] sm:$0xf]
    %v410 = vld [vmem:[#allocation2 + $0x5b4] sm:$0xff]
    %v411 = vld [vmem:[#allocation2 + $0x5bc] sm:$0xff]
    %v412 = vld [vmem:[#allocation2 + $0x5c4] sm:$0xf]
    %v413 = vld [vmem:[#allocation2 + $0x5c8] sm:$0xff]
    %v414 = vld [vmem:[#allocation2 + $0x5d0] sm:$0xff]
    %v415 = vld [vmem:[#allocation2 + $0x5d8] sm:$0xf]
    %v416 = vld [vmem:[#allocation2 + $0x5dc] sm:$0xff]
    %v417 = vld [vmem:[#allocation2 + $0x5e4] sm:$0xff]
    %v418 = vld [vmem:[#allocation2 + $0x5ec] sm:$0xf]
    %v419 = vld [vmem:[#allocation2 + $0x5f0] sm:$0xff]
    %v420 = vld [vmem:[#allocation2 + $0x5f8] sm:$0xff]
    %v421 = vld [vmem:[#allocation2 + $0x600] sm:$0xf]
    %v422 = vld [vmem:[#allocation2 + $0x604] sm:$0xff]
    %v423 = vld [vmem:[#allocation2 + $0x60c] sm:$0xff]
    %v424 = vld [vmem:[#allocation2 + $0x614] sm:$0xf]
    %v425 = vld [vmem:[#allocation2 + $0x618] sm:$0xff]
    %v426 = vld [vmem:[#allocation2 + $0x620] sm:$0xff]
    %v427 = vld [vmem:[#allocation2 + $0x628] sm:$0xf]
    %v428 = vld [vmem:[#allocation2 + $0x62c] sm:$0xff]
    %v429 = vld [vmem:[#allocation2 + $0x634] sm:$0xff]
    %v430 = vld [vmem:[#allocation2 + $0x63c] sm:$0xf]
    %v431 = vld [vmem:[#allocation2 + $0x640] sm:$0xff]
    %v432 = vld [vmem:[#allocation2 + $0x648] sm:$0xff]
    %v433 = vld [vmem:[#allocation2 + $0x650] sm:$0xf]
    %v434 = vld [vmem:[#allocation2 + $0x654] sm:$0xff]
    %v435 = vld [vmem:[#allocation2 + $0x65c] sm:$0xff]
    %v436 = vld [vmem:[#allocation2 + $0x664] sm:$0xf]
    %v437 = vld [vmem:[#allocation2 + $0x668] sm:$0xff]
    %v438 = vld [vmem:[#allocation2 + $0x670] sm:$0xff]
    %v439 = vld [vmem:[#allocation2 + $0x678] sm:$0xf]
    %v440 = vld [vmem:[#allocation2 + $0x67c] sm:$0xff]
    %v441 = vld [vmem:[#allocation2 + $0x684] sm:$0xff]
    %v442 = vld [vmem:[#allocation2 + $0x68c] sm:$0xf]
    %v443 = vld [vmem:[#allocation2 + $0x690] sm:$0xff]
    %v444 = vld [vmem:[#allocation2 + $0x698] sm:$0xff]
    %v445 = vld [vmem:[#allocation2 + $0x6a0] sm:$0xf]
    %v446 = vld [vmem:[#allocation2 + $0x6a4] sm:$0xff]
    %v447 = vld [vmem:[#allocation2 + $0x6ac] sm:$0xff]
    %v448 = vld [vmem:[#allocation2 + $0x6b4] sm:$0xf]
    %v449 = vld [vmem:[#allocation2 + $0x6b8] sm:$0xff]
    %v450 = vld [vmem:[#allocation2 + $0x6c0] sm:$0xff]
    %v451 = vld [vmem:[#allocation2 + $0x6c8] sm:$0xf]
    %v452 = vld [vmem:[#allocation2 + $0x6cc] sm:$0xff]
    %v453 = vld [vmem:[#allocation2 + $0x6d4] sm:$0xff]
    %v454 = vld [vmem:[#allocation2 + $0x6dc] sm:$0xf]
    %v455 = vld [vmem:[#allocation2 + $0x6e0] sm:$0xff]
    %v456 = vld [vmem:[#allocation2 + $0x6e8] sm:$0xff]
    %v457 = vld [vmem:[#allocation2 + $0x6f0] sm:$0xf]
    %v458 = vld [vmem:[#allocation2 + $0x6f4] sm:$0xff]
    %v459 = vld [vmem:[#allocation2 + $0x6fc] sm:$0xff]
    %v460 = vld [vmem:[#allocation2 + $0x704] sm:$0xf]
    %v461 = vld [vmem:[#allocation2 + $0x708] sm:$0xff]
    %v462 = vld [vmem:[#allocation2 + $0x710] sm:$0xff]
    %v463 = vld [vmem:[#allocation2 + $0x718] sm:$0xf]
    %v464 = vld [vmem:[#allocation2 + $0x71c] sm:$0xff]
    %v465 = vld [vmem:[#allocation2 + $0x724] sm:$0xff]
    %v466 = vld [vmem:[#allocation2 + $0x72c] sm:$0xf]
    %v467 = vld [vmem:[#allocation2 + $0x730] sm:$0xff]
    %v468 = vld [vmem:[#allocation2 + $0x738] sm:$0xff]
    %v469 = vld [vmem:[#allocation2 + $0x740] sm:$0xf]
    %v470 = vld [vmem:[#allocation2 + $0x744] sm:$0xff]
    %v471 = vld [vmem:[#allocation2 + $0x74c] sm:$0xff]
    %v472 = vld [vmem:[#allocation2 + $0x754] sm:$0xf]
    %v473 = vld [vmem:[#allocation2 + $0x758] sm:$0xff]
    %v474 = vld [vmem:[#allocation2 + $0x760] sm:$0xff]
    %v475 = vld [vmem:[#allocation2 + $0x768] sm:$0xf]
    %v476 = vld [vmem:[#allocation2 + $0x76c] sm:$0xff]
    %v477 = vld [vmem:[#allocation2 + $0x774] sm:$0xff]
    %v478 = vld [vmem:[#allocation2 + $0x77c] sm:$0xf]
    %v479 = vld [vmem:[%s10] sm:$0xff]
    %v480 = vld [vmem:[%s10 + $0x8] sm:$0xff]
    %v481 = vld [vmem:[%s10 + $0x10] sm:$0xff]
    %v482 = vld [vmem:[%s10 + $0x18] sm:$0xff]
    %v483 = vld [vmem:[%s10 + $0x20] sm:$0xff]
    %v484 = vld [vmem:[%s10 + $0x28] sm:$0xff]
    %v485 = vld [vmem:[%s10 + $0x30] sm:$0xff]
    %v486 = vld [vmem:[%s10 + $0x38] sm:$0xff]
    %v487 = vld [vmem:[%s10 + $0x40] sm:$0xff]
    %v488 = vld [vmem:[%s10 + $0x48] sm:$0xff]
    %v489 = vld [vmem:[%s10 + $0x50] sm:$0xff]
    %v490 = vld [vmem:[%s10 + $0x58] sm:$0xff]
    %v491 = vld [vmem:[%s10 + $0x60] sm:$0x33]
    %v492 = vld [vmem:[#allocation18] sm:$0xff]
    %v493 = vld [vmem:[#allocation18 + $0x8] sm:$0xff]
    %v494 = vld [vmem:[#allocation18 + $0x10] sm:$0xff]
    %v495 = vld [vmem:[#allocation18 + $0x18] sm:$0xff]
    %v496 = vld [vmem:[#allocation18 + $0x20] sm:$0xff]
    %v497 = vld [vmem:[#allocation18 + $0x28] sm:$0xff]
    %v498 = vld [vmem:[#allocation18 + $0x30] sm:$0xff]
    %v499 = vld [vmem:[#allocation18 + $0x38] sm:$0xff]
    %v500 = vld [vmem:[#allocation18 + $0x40] sm:$0xff]
    %v501 = vld [vmem:[#allocation18 + $0x48] sm:$0xff]
    %v502 = vld [vmem:[#allocation18 + $0x50] sm:$0xff]
    %v503 = vld [vmem:[#allocation18 + $0x58] sm:$0xff]
    %v504 = vld [vmem:[#allocation18 + $0x60] sm:$0x33]
    %v505 = vld [vmem:[%s0] sm:$0xff]
    %v506 = vld [vmem:[%s0 + $0x8] sm:$0xff]
    %v507 = vld [vmem:[%s0 + $0x10] sm:$0xff]
    %v508 = vld [vmem:[%s0 + $0x18] sm:$0xff]
    %v509 = vld [vmem:[%s0 + $0x20] sm:$0xff]
    %v510 = vld [vmem:[%s0 + $0x28] sm:$0xff]
    %v511 = vld [vmem:[%s0 + $0x30] sm:$0xff]
    %v512 = vld [vmem:[%s0 + $0x38] sm:$0xff]
    %v513 = vld [vmem:[%s0 + $0x40] sm:$0xff]
    %v514 = vld [vmem:[%s0 + $0x48] sm:$0xff]
    %v515 = vld [vmem:[%s0 + $0x50] sm:$0xff]
    %v516 = vld [vmem:[%s0 + $0x58] sm:$0xff]
    %v517 = vld [vmem:[%s0 + $0x60] sm:$0xff]
    %v518 = vld [vmem:[%s0 + $0x68] sm:$0xff]
    %v519 = vld [vmem:[%s0 + $0x70] sm:$0xff]
    %v520 = vld [vmem:[%s0 + $0x78] sm:$0xff]
    %v521 = vld [vmem:[%s0 + $0x80] sm:$0xff]
    %v522 = vld [vmem:[%s0 + $0x88] sm:$0xff]
    %v523 = vld [vmem:[%s0 + $0x90] sm:$0xff]
    %v524 = vld [vmem:[%s0 + $0x98] sm:$0xff]
    %v525 = vld [vmem:[%s0 + $0xa0] sm:$0xff]
    %v526 = vld [vmem:[%s0 + $0xa8] sm:$0xff]
    %v527 = vld [vmem:[%s0 + $0xb0] sm:$0xff]
    %v528 = vld [vmem:[%s0 + $0xb8] sm:$0xff]
    %v529 = vld [vmem:[%s0 + $0xc0] sm:$0xff]
    %v530 = vld [vmem:[%s0 + $0xc8] sm:$0xff]
    %v531 = vld [vmem:[%s0 + $0xd0] sm:$0xff]
    %v532 = vld [vmem:[%s0 + $0xd8] sm:$0xff]
    %v533 = vld [vmem:[%s0 + $0xe0] sm:$0xff]
    %v534 = vld [vmem:[%s0 + $0xe8] sm:$0xff]
    %v535 = vld [vmem:[%s0 + $0xf0] sm:$0xff]
    %v536 = vld [vmem:[%s0 + $0xf8] sm:$0xff]
    %v537 = vld [vmem:[%s0 + $0x100] sm:$0xff]
    %v538 = vld [vmem:[%s0 + $0x108] sm:$0xff]
    %v539 = vld [vmem:[%s0 + $0x110] sm:$0xff]
    %v540 = vld [vmem:[%s0 + $0x118] sm:$0xff]
    %v541 = vld [vmem:[%s0 + $0x120] sm:$0x3]
    %v542 = vld [vmem:[%s0 + $0x128] sm:$0x3]
    %v543 = vld [vmem:[%s0 + $0x130] sm:$0x3]
    %v544 = vld [vmem:[%s0 + $0x138] sm:$0x3]
    %v545 = vld [vmem:[%s0 + $0x140] sm:$0x3]
    %v546 = vld [vmem:[%s0 + $0x148] sm:$0x3]
    %v547 = vpack.c.bf16 %v511, %v505
    %v548 = vpack.c.bf16 %v512, %v506
    %v549 = vpack.c.bf16 %v513, %v507
    %v550 = vpack.c.bf16 %v514, %v508
    %v551 = vpack.c.bf16 %v515, %v509
    %v552 = vpack.c.bf16 %v516, %v510
    %v553 = vpack.c.bf16 %v523, %v517
    %v554 = vpack.c.bf16 %v524, %v518
    %v555 = vpack.c.bf16 %v525, %v519
    %v556 = vpack.c.bf16 %v526, %v520
    %v557 = vpack.c.bf16 %v527, %v521
    %v558 = vpack.c.bf16 %v528, %v522
    %v559 = vpack.c.bf16 %v535, %v529
    %v560 = vpack.c.bf16 %v536, %v530
    %v561 = vpack.c.bf16 %v537, %v531
    %v562 = vpack.c.bf16 %v538, %v532
    %v563 = vpack.c.bf16 %v539, %v533
    %v564 = vpack.c.bf16 %v540, %v534
    %v565 = vpack.c.bf16 %v541, %v541
    %v566 = vpack.c.bf16 %v542, %v542
    %v567 = vpack.c.bf16 %v543, %v543
    %v568 = vpack.c.bf16 %v544, %v544
    %v569 = vpack.c.bf16 %v545, %v545
    %v570 = vpack.c.bf16 %v546, %v546
    %v859 = vunpack.c.l.b16 %v191
    %v860 = vunpack.c.h.b16 %v191
    %v861 = vunpack.c.l.b16 %v192
    %v862 = vunpack.c.h.b16 %v192
    %v863 = vunpack.c.l.b16 %v193
    %v864 = vunpack.c.l.b16 %v194
    %v865 = vunpack.c.h.b16 %v194
    %v866 = vunpack.c.l.b16 %v195
    %v867 = vunpack.c.h.b16 %v195
    %v868 = vunpack.c.l.b16 %v196
    %v869 = vunpack.c.l.b16 %v197
    %v870 = vunpack.c.h.b16 %v197
    %v871 = vunpack.c.l.b16 %v198
    %v872 = vunpack.c.h.b16 %v198
    %v873 = vunpack.c.l.b16 %v199
    %v874 = vunpack.c.l.b16 %v200
    %v875 = vunpack.c.h.b16 %v200
    %v876 = vunpack.c.l.b16 %v201
    %v877 = vunpack.c.h.b16 %v201
    %v878 = vunpack.c.l.b16 %v202
    %v879 = vunpack.c.l.b16 %v203
    %v880 = vunpack.c.h.b16 %v203
    %v881 = vunpack.c.l.b16 %v204
    %v882 = vunpack.c.h.b16 %v204
    %v883 = vunpack.c.l.b16 %v205
    %v884 = vunpack.c.l.b16 %v206
    %v885 = vunpack.c.h.b16 %v206
    %v886 = vunpack.c.l.b16 %v207
    %v887 = vunpack.c.h.b16 %v207
    %v888 = vunpack.c.l.b16 %v208
    %v889 = vunpack.c.l.b16 %v209
    %v890 = vunpack.c.h.b16 %v209
    %v891 = vunpack.c.l.b16 %v210
    %v892 = vunpack.c.h.b16 %v210
    %v893 = vunpack.c.l.b16 %v211
    %v894 = vunpack.c.l.b16 %v212
    %v895 = vunpack.c.h.b16 %v212
    %v896 = vunpack.c.l.b16 %v213
    %v897 = vunpack.c.h.b16 %v213
    %v898 = vunpack.c.l.b16 %v214
    %v899 = vunpack.c.l.b16 %v215
    %v900 = vunpack.c.h.b16 %v215
    %v901 = vunpack.c.l.b16 %v216
    %v902 = vunpack.c.h.b16 %v216
    %v903 = vunpack.c.l.b16 %v217
    %v904 = vunpack.c.l.b16 %v218
    %v905 = vunpack.c.h.b16 %v218
    %v906 = vunpack.c.l.b16 %v219
    %v907 = vunpack.c.h.b16 %v219
    %v908 = vunpack.c.l.b16 %v220
    %v909 = vunpack.c.l.b16 %v221
    %v910 = vunpack.c.h.b16 %v221
    %v911 = vunpack.c.l.b16 %v222
    %v912 = vunpack.c.h.b16 %v222
    %v913 = vunpack.c.l.b16 %v223
    %v914 = vunpack.c.l.b16 %v224
    %v915 = vunpack.c.h.b16 %v224
    %v916 = vunpack.c.l.b16 %v225
    %v917 = vunpack.c.h.b16 %v225
    %v918 = vunpack.c.l.b16 %v226
    %v919 = vunpack.c.l.b16 %v227
    %v920 = vunpack.c.h.b16 %v227
    %v921 = vunpack.c.l.b16 %v228
    %v922 = vunpack.c.h.b16 %v228
    %v923 = vunpack.c.l.b16 %v229
    %v924 = vunpack.c.l.b16 %v230
    %v925 = vunpack.c.h.b16 %v230
    %v926 = vunpack.c.l.b16 %v231
    %v927 = vunpack.c.h.b16 %v231
    %v928 = vunpack.c.l.b16 %v232
    %v929 = vunpack.c.l.b16 %v233
    %v930 = vunpack.c.h.b16 %v233
    %v931 = vunpack.c.l.b16 %v234
    %v932 = vunpack.c.h.b16 %v234
    %v933 = vunpack.c.l.b16 %v235
    %v934 = vunpack.c.l.b16 %v236
    %v935 = vunpack.c.h.b16 %v236
    %v936 = vunpack.c.l.b16 %v237
    %v937 = vunpack.c.h.b16 %v237
    %v938 = vunpack.c.l.b16 %v238
    %v939 = vunpack.c.l.b16 %v239
    %v940 = vunpack.c.h.b16 %v239
    %v941 = vunpack.c.l.b16 %v240
    %v942 = vunpack.c.h.b16 %v240
    %v943 = vunpack.c.l.b16 %v241
    %v944 = vunpack.c.l.b16 %v242
    %v945 = vunpack.c.h.b16 %v242
    %v946 = vunpack.c.l.b16 %v243
    %v947 = vunpack.c.h.b16 %v243
    %v948 = vunpack.c.l.b16 %v244
    %v949 = vunpack.c.l.b16 %v245
    %v950 = vunpack.c.h.b16 %v245
    %v951 = vunpack.c.l.b16 %v246
    %v952 = vunpack.c.h.b16 %v246
    %v953 = vunpack.c.l.b16 %v247
    %v954 = vunpack.c.l.b16 %v248
    %v955 = vunpack.c.h.b16 %v248
    %v956 = vunpack.c.l.b16 %v249
    %v957 = vunpack.c.h.b16 %v249
    %v958 = vunpack.c.l.b16 %v250
    %v959 = vunpack.c.l.b16 %v251
    %v960 = vunpack.c.h.b16 %v251
    %v961 = vunpack.c.l.b16 %v252
    %v962 = vunpack.c.h.b16 %v252
    %v963 = vunpack.c.l.b16 %v253
    %v964 = vunpack.c.l.b16 %v254
    %v965 = vunpack.c.h.b16 %v254
    %v966 = vunpack.c.l.b16 %v255
    %v967 = vunpack.c.h.b16 %v255
    %v968 = vunpack.c.l.b16 %v256
    %v969 = vunpack.c.l.b16 %v257
    %v970 = vunpack.c.h.b16 %v257
    %v971 = vunpack.c.l.b16 %v258
    %v972 = vunpack.c.h.b16 %v258
    %v973 = vunpack.c.l.b16 %v259
    %v974 = vunpack.c.l.b16 %v260
    %v975 = vunpack.c.h.b16 %v260
    %v976 = vunpack.c.l.b16 %v261
    %v977 = vunpack.c.h.b16 %v261
    %v978 = vunpack.c.l.b16 %v262
    %v979 = vunpack.c.l.b16 %v263
    %v980 = vunpack.c.h.b16 %v263
    %v981 = vunpack.c.l.b16 %v264
    %v982 = vunpack.c.h.b16 %v264
    %v983 = vunpack.c.l.b16 %v265
    %v984 = vunpack.c.l.b16 %v266
    %v985 = vunpack.c.h.b16 %v266
    %v986 = vunpack.c.l.b16 %v267
    %v987 = vunpack.c.h.b16 %v267
    %v988 = vunpack.c.l.b16 %v268
    %v989 = vunpack.c.l.b16 %v269
    %v990 = vunpack.c.h.b16 %v269
    %v991 = vunpack.c.l.b16 %v270
    %v992 = vunpack.c.h.b16 %v270
    %v993 = vunpack.c.l.b16 %v271
    %v994 = vunpack.c.l.b16 %v272
    %v995 = vunpack.c.h.b16 %v272
    %v996 = vunpack.c.l.b16 %v273
    %v997 = vunpack.c.h.b16 %v273
    %v998 = vunpack.c.l.b16 %v274
    %v999 = vunpack.c.l.b16 %v275
    %v1000 = vunpack.c.h.b16 %v275
    %v1001 = vunpack.c.l.b16 %v276
    %v1002 = vunpack.c.h.b16 %v276
    %v1003 = vunpack.c.l.b16 %v277
    %v1004 = vunpack.c.l.b16 %v278
    %v1005 = vunpack.c.h.b16 %v278
    %v1006 = vunpack.c.l.b16 %v279
    %v1007 = vunpack.c.h.b16 %v279
    %v1008 = vunpack.c.l.b16 %v280
    %v1009 = vunpack.c.l.b16 %v281
    %v1010 = vunpack.c.h.b16 %v281
    %v1011 = vunpack.c.l.b16 %v282
    %v1012 = vunpack.c.h.b16 %v282
    %v1013 = vunpack.c.l.b16 %v283
    %v1014 = vunpack.c.l.b16 %v284
    %v1015 = vunpack.c.h.b16 %v284
    %v1016 = vunpack.c.l.b16 %v285
    %v1017 = vunpack.c.h.b16 %v285
    %v1018 = vunpack.c.l.b16 %v286
    %v1019 = vunpack.c.l.b16 %v287
    %v1020 = vunpack.c.h.b16 %v287
    %v1021 = vunpack.c.l.b16 %v288
    %v1022 = vunpack.c.h.b16 %v288
    %v1023 = vunpack.c.l.b16 %v289
    %v1024 = vunpack.c.l.b16 %v290
    %v1025 = vunpack.c.h.b16 %v290
    %v1026 = vunpack.c.l.b16 %v291
    %v1027 = vunpack.c.h.b16 %v291
    %v1028 = vunpack.c.l.b16 %v292
    %v1029 = vunpack.c.l.b16 %v293
    %v1030 = vunpack.c.h.b16 %v293
    %v1031 = vunpack.c.l.b16 %v294
    %v1032 = vunpack.c.h.b16 %v294
    %v1033 = vunpack.c.l.b16 %v295
    %v1034 = vunpack.c.l.b16 %v296
    %v1035 = vunpack.c.h.b16 %v296
    %v1036 = vunpack.c.l.b16 %v297
    %v1037 = vunpack.c.h.b16 %v297
    %v1038 = vunpack.c.l.b16 %v298
    %v1039 = vunpack.c.l.b16 %v299
    %v1040 = vunpack.c.h.b16 %v299
    %v1041 = vunpack.c.l.b16 %v300
    %v1042 = vunpack.c.h.b16 %v300
    %v1043 = vunpack.c.l.b16 %v301
    %v1044 = vunpack.c.l.b16 %v302
    %v1045 = vunpack.c.h.b16 %v302
    %v1046 = vunpack.c.l.b16 %v303
    %v1047 = vunpack.c.h.b16 %v303
    %v1048 = vunpack.c.l.b16 %v304
    %v1049 = vunpack.c.l.b16 %v305
    %v1050 = vunpack.c.h.b16 %v305
    %v1051 = vunpack.c.l.b16 %v306
    %v1052 = vunpack.c.h.b16 %v306
    %v1053 = vunpack.c.l.b16 %v307
    %v1054 = vunpack.c.l.b16 %v308
    %v1055 = vunpack.c.h.b16 %v308
    %v1056 = vunpack.c.l.b16 %v309
    %v1057 = vunpack.c.h.b16 %v309
    %v1058 = vunpack.c.l.b16 %v310
    %v1059 = vunpack.c.l.b16 %v311
    %v1060 = vunpack.c.h.b16 %v311
    %v1061 = vunpack.c.l.b16 %v312
    %v1062 = vunpack.c.h.b16 %v312
    %v1063 = vunpack.c.l.b16 %v313
    %v1064 = vunpack.c.l.b16 %v314
    %v1065 = vunpack.c.h.b16 %v314
    %v1066 = vunpack.c.l.b16 %v315
    %v1067 = vunpack.c.h.b16 %v315
    %v1068 = vunpack.c.l.b16 %v316
    %v1069 = vunpack.c.l.b16 %v317
    %v1070 = vunpack.c.h.b16 %v317
    %v1071 = vunpack.c.l.b16 %v318
    %v1072 = vunpack.c.h.b16 %v318
    %v1073 = vunpack.c.l.b16 %v319
    %v1074 = vunpack.c.l.b16 %v320
    %v1075 = vunpack.c.h.b16 %v320
    %v1076 = vunpack.c.l.b16 %v321
    %v1077 = vunpack.c.h.b16 %v321
    %v1078 = vunpack.c.l.b16 %v322
    %v1079 = vunpack.c.l.b16 %v323
    %v1080 = vunpack.c.h.b16 %v323
    %v1081 = vunpack.c.l.b16 %v324
    %v1082 = vunpack.c.h.b16 %v324
    %v1083 = vunpack.c.l.b16 %v325
    %v1084 = vunpack.c.l.b16 %v326
    %v1085 = vunpack.c.h.b16 %v326
    %v1086 = vunpack.c.l.b16 %v327
    %v1087 = vunpack.c.h.b16 %v327
    %v1088 = vunpack.c.l.b16 %v328
    %v1089 = vunpack.c.l.b16 %v329
    %v1090 = vunpack.c.h.b16 %v329
    %v1091 = vunpack.c.l.b16 %v330
    %v1092 = vunpack.c.h.b16 %v330
    %v1093 = vunpack.c.l.b16 %v331
    %v1094 = vunpack.c.l.b16 %v332
    %v1095 = vunpack.c.h.b16 %v332
    %v1096 = vunpack.c.l.b16 %v333
    %v1097 = vunpack.c.h.b16 %v333
    %v1098 = vunpack.c.l.b16 %v334
    %v1099 = vunpack.c.l.b16 %v335
    %v1100 = vunpack.c.h.b16 %v335
    %v1101 = vunpack.c.l.b16 %v336
    %v1102 = vunpack.c.h.b16 %v336
    %v1103 = vunpack.c.l.b16 %v337
    %v1104 = vunpack.c.l.b16 %v338
    %v1105 = vunpack.c.h.b16 %v338
    %v1106 = vunpack.c.l.b16 %v339
    %v1107 = vunpack.c.h.b16 %v339
    %v1108 = vunpack.c.l.b16 %v340
    %v1109 = vunpack.c.l.b16 %v341
    %v1110 = vunpack.c.h.b16 %v341
    %v1111 = vunpack.c.l.b16 %v342
    %v1112 = vunpack.c.h.b16 %v342
    %v1113 = vunpack.c.l.b16 %v343
    %v1114 = vunpack.c.l.b16 %v344
    %v1115 = vunpack.c.h.b16 %v344
    %v1116 = vunpack.c.l.b16 %v345
    %v1117 = vunpack.c.h.b16 %v345
    %v1118 = vunpack.c.l.b16 %v346
    %v1119 = vunpack.c.l.b16 %v347
    %v1120 = vunpack.c.h.b16 %v347
    %v1121 = vunpack.c.l.b16 %v348
    %v1122 = vunpack.c.h.b16 %v348
    %v1123 = vunpack.c.l.b16 %v349
    %v1124 = vunpack.c.l.b16 %v350
    %v1125 = vunpack.c.h.b16 %v350
    %v1126 = vunpack.c.l.b16 %v351
    %v1127 = vunpack.c.h.b16 %v351
    %v1128 = vunpack.c.l.b16 %v352
    %v1129 = vunpack.c.l.b16 %v353
    %v1130 = vunpack.c.h.b16 %v353
    %v1131 = vunpack.c.l.b16 %v354
    %v1132 = vunpack.c.h.b16 %v354
    %v1133 = vunpack.c.l.b16 %v355
    %v1134 = vunpack.c.l.b16 %v356
    %v1135 = vunpack.c.h.b16 %v356
    %v1136 = vunpack.c.l.b16 %v357
    %v1137 = vunpack.c.h.b16 %v357
    %v1138 = vunpack.c.l.b16 %v358
    %v1139 = vunpack.c.l.b16 %v359
    %v1140 = vunpack.c.h.b16 %v359
    %v1141 = vunpack.c.l.b16 %v360
    %v1142 = vunpack.c.h.b16 %v360
    %v1143 = vunpack.c.l.b16 %v361
    %v1144 = vunpack.c.l.b16 %v362
    %v1145 = vunpack.c.h.b16 %v362
    %v1146 = vunpack.c.l.b16 %v363
    %v1147 = vunpack.c.h.b16 %v363
    %v1148 = vunpack.c.l.b16 %v364
    %v1149 = vunpack.c.l.b16 %v365
    %v1150 = vunpack.c.h.b16 %v365
    %v1151 = vunpack.c.l.b16 %v366
    %v1152 = vunpack.c.h.b16 %v366
    %v1153 = vunpack.c.l.b16 %v367
    %v1154 = vunpack.c.l.b16 %v368
    %v1155 = vunpack.c.h.b16 %v368
    %v1156 = vunpack.c.l.b16 %v369
    %v1157 = vunpack.c.h.b16 %v369
    %v1158 = vunpack.c.l.b16 %v370
    %v1159 = vunpack.c.l.b16 %v371
    %v1160 = vunpack.c.h.b16 %v371
    %v1161 = vunpack.c.l.b16 %v372
    %v1162 = vunpack.c.h.b16 %v372
    %v1163 = vunpack.c.l.b16 %v373
    %v1164 = vunpack.c.l.b16 %v374
    %v1165 = vunpack.c.h.b16 %v374
    %v1166 = vunpack.c.l.b16 %v375
    %v1167 = vunpack.c.h.b16 %v375
    %v1168 = vunpack.c.l.b16 %v376
    %v1169 = vunpack.c.l.b16 %v377
    %v1170 = vunpack.c.h.b16 %v377
    %v1171 = vunpack.c.l.b16 %v378
    %v1172 = vunpack.c.h.b16 %v378
    %v1173 = vunpack.c.l.b16 %v379
    %v1174 = vunpack.c.l.b16 %v380
    %v1175 = vunpack.c.h.b16 %v380
    %v1176 = vunpack.c.l.b16 %v381
    %v1177 = vunpack.c.h.b16 %v381
    %v1178 = vunpack.c.l.b16 %v382
    %v1179 = vunpack.c.l.b16 %v383
    %v1180 = vunpack.c.h.b16 %v383
    %v1181 = vunpack.c.l.b16 %v384
    %v1182 = vunpack.c.h.b16 %v384
    %v1183 = vunpack.c.l.b16 %v385
    %v1184 = vunpack.c.l.b16 %v386
    %v1185 = vunpack.c.h.b16 %v386
    %v1186 = vunpack.c.l.b16 %v387
    %v1187 = vunpack.c.h.b16 %v387
    %v1188 = vunpack.c.l.b16 %v388
    %v1189 = vunpack.c.l.b16 %v389
    %v1190 = vunpack.c.h.b16 %v389
    %v1191 = vunpack.c.l.b16 %v390
    %v1192 = vunpack.c.h.b16 %v390
    %v1193 = vunpack.c.l.b16 %v391
    %v1194 = vunpack.c.l.b16 %v392
    %v1195 = vunpack.c.h.b16 %v392
    %v1196 = vunpack.c.l.b16 %v393
    %v1197 = vunpack.c.h.b16 %v393
    %v1198 = vunpack.c.l.b16 %v394
    %v1199 = vunpack.c.l.b16 %v395
    %v1200 = vunpack.c.h.b16 %v395
    %v1201 = vunpack.c.l.b16 %v396
    %v1202 = vunpack.c.h.b16 %v396
    %v1203 = vunpack.c.l.b16 %v397
    %v1204 = vunpack.c.l.b16 %v398
    %v1205 = vunpack.c.h.b16 %v398
    %v1206 = vunpack.c.l.b16 %v399
    %v1207 = vunpack.c.h.b16 %v399
    %v1208 = vunpack.c.l.b16 %v400
    %v1209 = vunpack.c.l.b16 %v401
    %v1210 = vunpack.c.h.b16 %v401
    %v1211 = vunpack.c.l.b16 %v402
    %v1212 = vunpack.c.h.b16 %v402
    %v1213 = vunpack.c.l.b16 %v403
    %v1214 = vunpack.c.l.b16 %v404
    %v1215 = vunpack.c.h.b16 %v404
    %v1216 = vunpack.c.l.b16 %v405
    %v1217 = vunpack.c.h.b16 %v405
    %v1218 = vunpack.c.l.b16 %v406
    %v1219 = vunpack.c.l.b16 %v407
    %v1220 = vunpack.c.h.b16 %v407
    %v1221 = vunpack.c.l.b16 %v408
    %v1222 = vunpack.c.h.b16 %v408
    %v1223 = vunpack.c.l.b16 %v409
    %v1224 = vunpack.c.l.b16 %v410
    %v1225 = vunpack.c.h.b16 %v410
    %v1226 = vunpack.c.l.b16 %v411
    %v1227 = vunpack.c.h.b16 %v411
    %v1228 = vunpack.c.l.b16 %v412
    %v1229 = vunpack.c.l.b16 %v413
    %v1230 = vunpack.c.h.b16 %v413
    %v1231 = vunpack.c.l.b16 %v414
    %v1232 = vunpack.c.h.b16 %v414
    %v1233 = vunpack.c.l.b16 %v415
    %v1234 = vunpack.c.l.b16 %v416
    %v1235 = vunpack.c.h.b16 %v416
    %v1236 = vunpack.c.l.b16 %v417
    %v1237 = vunpack.c.h.b16 %v417
    %v1238 = vunpack.c.l.b16 %v418
    %v1239 = vunpack.c.l.b16 %v419
    %v1240 = vunpack.c.h.b16 %v419
    %v1241 = vunpack.c.l.b16 %v420
    %v1242 = vunpack.c.h.b16 %v420
    %v1243 = vunpack.c.l.b16 %v421
    %v1244 = vunpack.c.l.b16 %v422
    %v1245 = vunpack.c.h.b16 %v422
    %v1246 = vunpack.c.l.b16 %v423
    %v1247 = vunpack.c.h.b16 %v423
    %v1248 = vunpack.c.l.b16 %v424
    %v1249 = vunpack.c.l.b16 %v425
    %v1250 = vunpack.c.h.b16 %v425
    %v1251 = vunpack.c.l.b16 %v426
    %v1252 = vunpack.c.h.b16 %v426
    %v1253 = vunpack.c.l.b16 %v427
    %v1254 = vunpack.c.l.b16 %v428
    %v1255 = vunpack.c.h.b16 %v428
    %v1256 = vunpack.c.l.b16 %v429
    %v1257 = vunpack.c.h.b16 %v429
    %v1258 = vunpack.c.l.b16 %v430
    %v1259 = vunpack.c.l.b16 %v431
    %v1260 = vunpack.c.h.b16 %v431
    %v1261 = vunpack.c.l.b16 %v432
    %v1262 = vunpack.c.h.b16 %v432
    %v1263 = vunpack.c.l.b16 %v433
    %v1264 = vunpack.c.l.b16 %v434
    %v1265 = vunpack.c.h.b16 %v434
    %v1266 = vunpack.c.l.b16 %v435
    %v1267 = vunpack.c.h.b16 %v435
    %v1268 = vunpack.c.l.b16 %v436
    %v1269 = vunpack.c.l.b16 %v437
    %v1270 = vunpack.c.h.b16 %v437
    %v1271 = vunpack.c.l.b16 %v438
    %v1272 = vunpack.c.h.b16 %v438
    %v1273 = vunpack.c.l.b16 %v439
    %v1274 = vunpack.c.l.b16 %v440
    %v1275 = vunpack.c.h.b16 %v440
    %v1276 = vunpack.c.l.b16 %v441
    %v1277 = vunpack.c.h.b16 %v441
    %v1278 = vunpack.c.l.b16 %v442
    %v1279 = vunpack.c.l.b16 %v443
    %v1280 = vunpack.c.h.b16 %v443
    %v1281 = vunpack.c.l.b16 %v444
    %v1282 = vunpack.c.h.b16 %v444
    %v1283 = vunpack.c.l.b16 %v445
    %v1284 = vunpack.c.l.b16 %v446
    %v1285 = vunpack.c.h.b16 %v446
    %v1286 = vunpack.c.l.b16 %v447
    %v1287 = vunpack.c.h.b16 %v447
    %v1288 = vunpack.c.l.b16 %v448
    %v1289 = vunpack.c.l.b16 %v449
    %v1290 = vunpack.c.h.b16 %v449
    %v1291 = vunpack.c.l.b16 %v450
    %v1292 = vunpack.c.h.b16 %v450
    %v1293 = vunpack.c.l.b16 %v451
    %v1294 = vunpack.c.l.b16 %v452
    %v1295 = vunpack.c.h.b16 %v452
    %v1296 = vunpack.c.l.b16 %v453
    %v1297 = vunpack.c.h.b16 %v453
    %v1298 = vunpack.c.l.b16 %v454
    %v1299 = vunpack.c.l.b16 %v455
    %v1300 = vunpack.c.h.b16 %v455
    %v1301 = vunpack.c.l.b16 %v456
    %v1302 = vunpack.c.h.b16 %v456
    %v1303 = vunpack.c.l.b16 %v457
    %v1304 = vunpack.c.l.b16 %v458
    %v1305 = vunpack.c.h.b16 %v458
    %v1306 = vunpack.c.l.b16 %v459
    %v1307 = vunpack.c.h.b16 %v459
    %v1308 = vunpack.c.l.b16 %v460
    %v1309 = vunpack.c.l.b16 %v461
    %v1310 = vunpack.c.h.b16 %v461
    %v1311 = vunpack.c.l.b16 %v462
    %v1312 = vunpack.c.h.b16 %v462
    %v1313 = vunpack.c.l.b16 %v463
    %v1314 = vunpack.c.l.b16 %v464
    %v1315 = vunpack.c.h.b16 %v464
    %v1316 = vunpack.c.l.b16 %v465
    %v1317 = vunpack.c.h.b16 %v465
    %v1318 = vunpack.c.l.b16 %v466
    %v1319 = vunpack.c.l.b16 %v467
    %v1320 = vunpack.c.h.b16 %v467
    %v1321 = vunpack.c.l.b16 %v468
    %v1322 = vunpack.c.h.b16 %v468
    %v1323 = vunpack.c.l.b16 %v469
    %v1324 = vunpack.c.l.b16 %v470
    %v1325 = vunpack.c.h.b16 %v470
    %v1326 = vunpack.c.l.b16 %v471
    %v1327 = vunpack.c.h.b16 %v471
    %v1328 = vunpack.c.l.b16 %v472
    %v1329 = vunpack.c.l.b16 %v473
    %v1330 = vunpack.c.h.b16 %v473
    %v1331 = vunpack.c.l.b16 %v474
    %v1332 = vunpack.c.h.b16 %v474
    %v1333 = vunpack.c.l.b16 %v475
    %v1334 = vunpack.c.l.b16 %v476
    %v1335 = vunpack.c.h.b16 %v476
    %v1336 = vunpack.c.l.b16 %v477
    %v1337 = vunpack.c.h.b16 %v477
    %v1338 = vunpack.c.l.b16 %v478
    %v1339 = vpack.c.b16 %v864, %v859
    %v1340 = vpack.c.b16 %v865, %v860
    %v1341 = vpack.c.b16 %v866, %v861
    %v1342 = vpack.c.b16 %v867, %v862
    %v1343 = vpack.c.b16 %v868, %v863
    %v1344 = vpack.c.b16 %v874, %v869
    %v1345 = vpack.c.b16 %v875, %v870
    %v1346 = vpack.c.b16 %v876, %v871
    %v1347 = vpack.c.b16 %v877, %v872
    %v1348 = vpack.c.b16 %v878, %v873
    %v1349 = vpack.c.b16 %v884, %v879
    %v1350 = vpack.c.b16 %v885, %v880
    %v1351 = vpack.c.b16 %v886, %v881
    %v1352 = vpack.c.b16 %v887, %v882
    %v1353 = vpack.c.b16 %v888, %v883
    %v1354 = vpack.c.b16 %v894, %v889
    %v1355 = vpack.c.b16 %v895, %v890
    %v1356 = vpack.c.b16 %v896, %v891
    %v1357 = vpack.c.b16 %v897, %v892
    %v1358 = vpack.c.b16 %v898, %v893
    %v1359 = vpack.c.b16 %v904, %v899
    %v1360 = vpack.c.b16 %v905, %v900
    %v1361 = vpack.c.b16 %v906, %v901
    %v1362 = vpack.c.b16 %v907, %v902
    %v1363 = vpack.c.b16 %v908, %v903
    %v1364 = vpack.c.b16 %v914, %v909
    %v1365 = vpack.c.b16 %v915, %v910
    %v1366 = vpack.c.b16 %v916, %v911
    %v1367 = vpack.c.b16 %v917, %v912
    %v1368 = vpack.c.b16 %v918, %v913
    %v1369 = vpack.c.b16 %v924, %v919
    %v1370 = vpack.c.b16 %v925, %v920
    %v1371 = vpack.c.b16 %v926, %v921
    %v1372 = vpack.c.b16 %v927, %v922
    %v1373 = vpack.c.b16 %v928, %v923
    %v1374 = vpack.c.b16 %v934, %v929
    %v1375 = vpack.c.b16 %v935, %v930
    %v1376 = vpack.c.b16 %v936, %v931
    %v1377 = vpack.c.b16 %v937, %v932
    %v1378 = vpack.c.b16 %v938, %v933
    %v1379 = vpack.c.b16 %v944, %v939
    %v1380 = vpack.c.b16 %v945, %v940
    %v1381 = vpack.c.b16 %v946, %v941
    %v1382 = vpack.c.b16 %v947, %v942
    %v1383 = vpack.c.b16 %v948, %v943
    %v1384 = vpack.c.b16 %v954, %v949
    %v1385 = vpack.c.b16 %v955, %v950
    %v1386 = vpack.c.b16 %v956, %v951
    %v1387 = vpack.c.b16 %v957, %v952
    %v1388 = vpack.c.b16 %v958, %v953
    %v1389 = vpack.c.b16 %v964, %v959
    %v1390 = vpack.c.b16 %v965, %v960
    %v1391 = vpack.c.b16 %v966, %v961
    %v1392 = vpack.c.b16 %v967, %v962
    %v1393 = vpack.c.b16 %v968, %v963
    %v1394 = vpack.c.b16 %v974, %v969
    %v1395 = vpack.c.b16 %v975, %v970
    %v1396 = vpack.c.b16 %v976, %v971
    %v1397 = vpack.c.b16 %v977, %v972
    %v1398 = vpack.c.b16 %v978, %v973
    %v1399 = vpack.c.b16 %v984, %v979
    %v1400 = vpack.c.b16 %v985, %v980
    %v1401 = vpack.c.b16 %v986, %v981
    %v1402 = vpack.c.b16 %v987, %v982
    %v1403 = vpack.c.b16 %v988, %v983
    %v1404 = vpack.c.b16 %v994, %v989
    %v1405 = vpack.c.b16 %v995, %v990
    %v1406 = vpack.c.b16 %v996, %v991
    %v1407 = vpack.c.b16 %v997, %v992
    %v1408 = vpack.c.b16 %v998, %v993
    %v1409 = vpack.c.b16 %v1004, %v999
    %v1410 = vpack.c.b16 %v1005, %v1000
    %v1411 = vpack.c.b16 %v1006, %v1001
    %v1412 = vpack.c.b16 %v1007, %v1002
    %v1413 = vpack.c.b16 %v1008, %v1003
    %v1414 = vpack.c.b16 %v1014, %v1009
    %v1415 = vpack.c.b16 %v1015, %v1010
    %v1416 = vpack.c.b16 %v1016, %v1011
    %v1417 = vpack.c.b16 %v1017, %v1012
    %v1418 = vpack.c.b16 %v1018, %v1013
    %v1419 = vpack.c.b16 %v1024, %v1019
    %v1420 = vpack.c.b16 %v1025, %v1020
    %v1421 = vpack.c.b16 %v1026, %v1021
    %v1422 = vpack.c.b16 %v1027, %v1022
    %v1423 = vpack.c.b16 %v1028, %v1023
    %v1424 = vpack.c.b16 %v1034, %v1029
    %v1425 = vpack.c.b16 %v1035, %v1030
    %v1426 = vpack.c.b16 %v1036, %v1031
    %v1427 = vpack.c.b16 %v1037, %v1032
    %v1428 = vpack.c.b16 %v1038, %v1033
    %v1429 = vpack.c.b16 %v1044, %v1039
    %v1430 = vpack.c.b16 %v1045, %v1040
    %v1431 = vpack.c.b16 %v1046, %v1041
    %v1432 = vpack.c.b16 %v1047, %v1042
    %v1433 = vpack.c.b16 %v1048, %v1043
    %v1434 = vpack.c.b16 %v1054, %v1049
    %v1435 = vpack.c.b16 %v1055, %v1050
    %v1436 = vpack.c.b16 %v1056, %v1051
    %v1437 = vpack.c.b16 %v1057, %v1052
    %v1438 = vpack.c.b16 %v1058, %v1053
    %v1439 = vpack.c.b16 %v1064, %v1059
    %v1440 = vpack.c.b16 %v1065, %v1060
    %v1441 = vpack.c.b16 %v1066, %v1061
    %v1442 = vpack.c.b16 %v1067, %v1062
    %v1443 = vpack.c.b16 %v1068, %v1063
    %v1444 = vpack.c.b16 %v1074, %v1069
    %v1445 = vpack.c.b16 %v1075, %v1070
    %v1446 = vpack.c.b16 %v1076, %v1071
    %v1447 = vpack.c.b16 %v1077, %v1072
    %v1448 = vpack.c.b16 %v1078, %v1073
    %v1449 = vpack.c.b16 %v1084, %v1079
    %v1450 = vpack.c.b16 %v1085, %v1080
    %v1451 = vpack.c.b16 %v1086, %v1081
    %v1452 = vpack.c.b16 %v1087, %v1082
    %v1453 = vpack.c.b16 %v1088, %v1083
    %v1454 = vpack.c.b16 %v1094, %v1089
    %v1455 = vpack.c.b16 %v1095, %v1090
    %v1456 = vpack.c.b16 %v1096, %v1091
    %v1457 = vpack.c.b16 %v1097, %v1092
    %v1458 = vpack.c.b16 %v1098, %v1093
    %v1459 = vpack.c.b16 %v1104, %v1099
    %v1460 = vpack.c.b16 %v1105, %v1100
    %v1461 = vpack.c.b16 %v1106, %v1101
    %v1462 = vpack.c.b16 %v1107, %v1102
    %v1463 = vpack.c.b16 %v1108, %v1103
    %v1464 = vpack.c.b16 %v1114, %v1109
    %v1465 = vpack.c.b16 %v1115, %v1110
    %v1466 = vpack.c.b16 %v1116, %v1111
    %v1467 = vpack.c.b16 %v1117, %v1112
    %v1468 = vpack.c.b16 %v1118, %v1113
    %v1469 = vpack.c.b16 %v1124, %v1119
    %v1470 = vpack.c.b16 %v1125, %v1120
    %v1471 = vpack.c.b16 %v1126, %v1121
    %v1472 = vpack.c.b16 %v1127, %v1122
    %v1473 = vpack.c.b16 %v1128, %v1123
    %v1474 = vpack.c.b16 %v1134, %v1129
    %v1475 = vpack.c.b16 %v1135, %v1130
    %v1476 = vpack.c.b16 %v1136, %v1131
    %v1477 = vpack.c.b16 %v1137, %v1132
    %v1478 = vpack.c.b16 %v1138, %v1133
    %v1479 = vpack.c.b16 %v1144, %v1139
    %v1480 = vpack.c.b16 %v1145, %v1140
    %v1481 = vpack.c.b16 %v1146, %v1141
    %v1482 = vpack.c.b16 %v1147, %v1142
    %v1483 = vpack.c.b16 %v1148, %v1143
    %v1484 = vpack.c.b16 %v1154, %v1149
    %v1485 = vpack.c.b16 %v1155, %v1150
    %v1486 = vpack.c.b16 %v1156, %v1151
    %v1487 = vpack.c.b16 %v1157, %v1152
    %v1488 = vpack.c.b16 %v1158, %v1153
    %v1489 = vpack.c.b16 %v1164, %v1159
    %v1490 = vpack.c.b16 %v1165, %v1160
    %v1491 = vpack.c.b16 %v1166, %v1161
    %v1492 = vpack.c.b16 %v1167, %v1162
    %v1493 = vpack.c.b16 %v1168, %v1163
    %v1494 = vpack.c.b16 %v1174, %v1169
    %v1495 = vpack.c.b16 %v1175, %v1170
    %v1496 = vpack.c.b16 %v1176, %v1171
    %v1497 = vpack.c.b16 %v1177, %v1172
    %v1498 = vpack.c.b16 %v1178, %v1173
    %v1499 = vpack.c.b16 %v1184, %v1179
    %v1500 = vpack.c.b16 %v1185, %v1180
    %v1501 = vpack.c.b16 %v1186, %v1181
    %v1502 = vpack.c.b16 %v1187, %v1182
    %v1503 = vpack.c.b16 %v1188, %v1183
    %v1504 = vpack.c.b16 %v1194, %v1189
    %v1505 = vpack.c.b16 %v1195, %v1190
    %v1506 = vpack.c.b16 %v1196, %v1191
    %v1507 = vpack.c.b16 %v1197, %v1192
    %v1508 = vpack.c.b16 %v1198, %v1193
    %v1509 = vpack.c.b16 %v1204, %v1199
    %v1510 = vpack.c.b16 %v1205, %v1200
    %v1511 = vpack.c.b16 %v1206, %v1201
    %v1512 = vpack.c.b16 %v1207, %v1202
    %v1513 = vpack.c.b16 %v1208, %v1203
    %v1514 = vpack.c.b16 %v1214, %v1209
    %v1515 = vpack.c.b16 %v1215, %v1210
    %v1516 = vpack.c.b16 %v1216, %v1211
    %v1517 = vpack.c.b16 %v1217, %v1212
    %v1518 = vpack.c.b16 %v1218, %v1213
    %v1519 = vpack.c.b16 %v1224, %v1219
    %v1520 = vpack.c.b16 %v1225, %v1220
    %v1521 = vpack.c.b16 %v1226, %v1221
    %v1522 = vpack.c.b16 %v1227, %v1222
    %v1523 = vpack.c.b16 %v1228, %v1223
    %v1524 = vpack.c.b16 %v1234, %v1229
    %v1525 = vpack.c.b16 %v1235, %v1230
    %v1526 = vpack.c.b16 %v1236, %v1231
    %v1527 = vpack.c.b16 %v1237, %v1232
    %v1528 = vpack.c.b16 %v1238, %v1233
    %v1529 = vpack.c.b16 %v1244, %v1239
    %v1530 = vpack.c.b16 %v1245, %v1240
    %v1531 = vpack.c.b16 %v1246, %v1241
    %v1532 = vpack.c.b16 %v1247, %v1242
    %v1533 = vpack.c.b16 %v1248, %v1243
    %v1534 = vpack.c.b16 %v1254, %v1249
    %v1535 = vpack.c.b16 %v1255, %v1250
    %v1536 = vpack.c.b16 %v1256, %v1251
    %v1537 = vpack.c.b16 %v1257, %v1252
    %v1538 = vpack.c.b16 %v1258, %v1253
    %v1539 = vpack.c.b16 %v1264, %v1259
    %v1540 = vpack.c.b16 %v1265, %v1260
    %v1541 = vpack.c.b16 %v1266, %v1261
    %v1542 = vpack.c.b16 %v1267, %v1262
    %v1543 = vpack.c.b16 %v1268, %v1263
    %v1544 = vpack.c.b16 %v1274, %v1269
    %v1545 = vpack.c.b16 %v1275, %v1270
    %v1546 = vpack.c.b16 %v1276, %v1271
    %v1547 = vpack.c.b16 %v1277, %v1272
    %v1548 = vpack.c.b16 %v1278, %v1273
    %v1549 = vpack.c.b16 %v1284, %v1279
    %v1550 = vpack.c.b16 %v1285, %v1280
    %v1551 = vpack.c.b16 %v1286, %v1281
    %v1552 = vpack.c.b16 %v1287, %v1282
    %v1553 = vpack.c.b16 %v1288, %v1283
    %v1554 = vpack.c.b16 %v1294, %v1289
    %v1555 = vpack.c.b16 %v1295, %v1290
    %v1556 = vpack.c.b16 %v1296, %v1291
    %v1557 = vpack.c.b16 %v1297, %v1292
    %v1558 = vpack.c.b16 %v1298, %v1293
    %v1559 = vpack.c.b16 %v1304, %v1299
    %v1560 = vpack.c.b16 %v1305, %v1300
    %v1561 = vpack.c.b16 %v1306, %v1301
    %v1562 = vpack.c.b16 %v1307, %v1302
    %v1563 = vpack.c.b16 %v1308, %v1303
    %v1564 = vpack.c.b16 %v1314, %v1309
    %v1565 = vpack.c.b16 %v1315, %v1310
    %v1566 = vpack.c.b16 %v1316, %v1311
    %v1567 = vpack.c.b16 %v1317, %v1312
    %v1568 = vpack.c.b16 %v1318, %v1313
    %v1569 = vpack.c.b16 %v1324, %v1319
    %v1570 = vpack.c.b16 %v1325, %v1320
    %v1571 = vpack.c.b16 %v1326, %v1321
    %v1572 = vpack.c.b16 %v1327, %v1322
    %v1573 = vpack.c.b16 %v1328, %v1323
    %v1574 = vpack.c.b16 %v1334, %v1329
    %v1575 = vpack.c.b16 %v1335, %v1330
    %v1576 = vpack.c.b16 %v1336, %v1331
    %v1577 = vpack.c.b16 %v1337, %v1332
    %v1578 = vpack.c.b16 %v1338, %v1333
    %1819 = vmatprep.subr.bf16.mxu0 %v1340
    %1820 = vmatpush1.bf16.msra.mxu0 %v1339
    %1821 = vmatprep.subr.bf16.mxu0 %v1345
    %1822 = vmatpush1.bf16.msra.mxu0 %v1344
    %1823 = vmatprep.subr.bf16.mxu0 %v1350
    %1824 = vmatpush1.bf16.msra.mxu0 %v1349
    %1825 = vmatprep.subr.bf16.mxu0 %v1355
    %1826 = vmatpush1.bf16.msra.mxu0 %v1354
    %1827 = vmatprep.subr.bf16.mxu0 %v1360
    %1828 = vmatpush1.bf16.msra.mxu0 %v1359
    %1829 = vmatprep.subr.bf16.mxu0 %v1365
    %1830 = vmatpush1.bf16.msra.mxu0 %v1364
    %1831 = vmatprep.subr.bf16.mxu0 %v1370
    %1832 = vmatpush1.bf16.msra.mxu0 %v1369
    %1833 = vmatprep.subr.bf16.mxu0 %v1375
    %1834 = vmatpush1.bf16.msra.mxu0 %v1374
    %1835 = vmatprep.subr.bf16.mxu0 %v1380
    %1836 = vmatpush1.bf16.msra.mxu0 %v1379
    %1837 = vmatprep.subr.bf16.mxu0 %v1385
    %1838 = vmatpush1.bf16.msra.mxu0 %v1384
    %1839 = vmatprep.subr.bf16.mxu0 %v1390
    %1840 = vmatpush1.bf16.msra.mxu0 %v1389
    %1841 = vmatprep.subr.bf16.mxu0 %v1395
    %1842 = vmatpush1.bf16.msra.mxu0 %v1394
    %1843 = vmatprep.subr.bf16.mxu0 %v1400
    %1844 = vmatpush1.bf16.msra.mxu0 %v1399
    %1845 = vmatprep.subr.bf16.mxu0 %v1405
    %1846 = vmatpush1.bf16.msra.mxu0 %v1404
    %1847 = vmatprep.subr.bf16.mxu0 %v1410
    %1848 = vmatpush1.bf16.msra.mxu0 %v1409
    %1849 = vmatprep.subr.bf16.mxu0 %v1415
    %1850 = vmatpush1.bf16.msra.mxu0 %v1414
    %1851 = vmatprep.mubr.bf16.mxu0 %v548
    %1852 = vmatmul.mubr.bf16.gmra.mrb[0].mxu0 %v547
    %v1853 = vpop.f32.mrb[0].mxu0
    %v1854 = vadd.f32 0.0, %v1853
    %v1855 = vpop.f32.mrb[0].mxu0
    %v1856 = vadd.f32 0.0, %v1855
    %v1857 = vpop.f32.mrb[0].mxu0
    %v1858 = vadd.f32 0.0, %v1857
    %v1859 = vpop.f32.mrb[0].mxu0
    %v1860 = vadd.f32 0.0, %v1859
    %1861 = vmatprep.mubr.bf16.mxu0 %v554
    %1862 = vmatmul.mubr.bf16.gmra.mrb[0].mxu0 %v553
    %v1863 = vpop.f32.mrb[0].mxu0
    %v1864 = vadd.f32 0.0, %v1863
    %v1865 = vpop.f32.mrb[0].mxu0
    %v1866 = vadd.f32 0.0, %v1865
    %v1867 = vpop.f32.mrb[0].mxu0
    %v1868 = vadd.f32 0.0, %v1867
    %v1869 = vpop.f32.mrb[0].mxu0
    %v1870 = vadd.f32 0.0, %v1869
    %1871 = vmatprep.mubr.bf16.mxu0 %v560
    %1872 = vmatmul.mubr.bf16.gmra.mrb[0].mxu0 %v559
    %v1873 = vpop.f32.mrb[0].mxu0
    %v1874 = vadd.f32 0.0, %v1873
    %v1875 = vpop.f32.mrb[0].mxu0
    %v1876 = vadd.f32 0.0, %v1875
    %v1877 = vpop.f32.mrb[0].mxu0
    %v1878 = vadd.f32 0.0, %v1877
    %v1879 = vpop.f32.mrb[0].mxu0
    %v1880 = vadd.f32 0.0, %v1879
    %1881 = vmatprep.mubr.bf16.mxu0 %v566
    %1882 = vmatmul.mubr.bf16.gmra.mrb[0].mxu0 %v565
    %v1883 = vpop.f32.mrb[0].mxu0
    %v1884 = vadd.f32 0.0, %v1883
    %v1885 = vpop.f32.mrb[0].mxu0
    %v1886 = vadd.f32 0.0, %v1885
    %v1887 = vpop.f32.mrb[0].mxu0
    %v1888 = vpop.f32.mrb[0].mxu0
    %1889 = vdwg.mxu0
    %1890 = vmatprep.subr.bf16.mxu0 %v1420
    %1891 = vmatpush1.bf16.msra.mxu0 %v1419
    %1892 = vmatprep.subr.bf16.mxu0 %v1425
    %1893 = vmatpush1.bf16.msra.mxu0 %v1424
    %1894 = vmatprep.subr.bf16.mxu0 %v1430
    %1895 = vmatpush1.bf16.msra.mxu0 %v1429
    %1896 = vmatprep.subr.bf16.mxu0 %v1435
    %1897 = vmatpush1.bf16.msra.mxu0 %v1434
    %1898 = vmatprep.subr.bf16.mxu0 %v1440
    %1899 = vmatpush1.bf16.msra.mxu0 %v1439
    %1900 = vmatprep.subr.bf16.mxu0 %v1445
    %1901 = vmatpush1.bf16.msra.mxu0 %v1444
    %1902 = vmatprep.subr.bf16.mxu0 %v1450
    %1903 = vmatpush1.bf16.msra.mxu0 %v1449
    %1904 = vmatprep.subr.bf16.mxu0 %v1455
    %1905 = vmatpush1.bf16.msra.mxu0 %v1454
    %1906 = vmatprep.subr.bf16.mxu0 %v1460
    %1907 = vmatpush1.bf16.msra.mxu0 %v1459
    %1908 = vmatprep.subr.bf16.mxu0 %v1465
    %1909 = vmatpush1.bf16.msra.mxu0 %v1464
    %1910 = vmatprep.subr.bf16.mxu0 %v1470
    %1911 = vmatpush1.bf16.msra.mxu0 %v1469
    %1912 = vmatprep.subr.bf16.mxu0 %v1475
    %1913 = vmatpush1.bf16.msra.mxu0 %v1474
    %1914 = vmatprep.subr.bf16.mxu0 %v1480
    %1915 = vmatpush1.bf16.msra.mxu0 %v1479
    %1916 = vmatprep.subr.bf16.mxu0 %v1485
    %1917 = vmatpush1.bf16.msra.mxu0 %v1484
    %1918 = vmatprep.subr.bf16.mxu0 %v1490
    %1919 = vmatpush1.bf16.msra.mxu0 %v1489
    %1920 = vmatprep.subr.bf16.mxu0 %v1495
    %1921 = vmatpush1.bf16.msra.mxu0 %v1494
    %1922 = vmatprep.mubr.bf16.mxu0 %v550
    %1923 = vmatmul.mubr.bf16.gmra.mrb[0].mxu0 %v549
    %v1924 = vpop.f32.mrb[0].mxu0
    %v1925 = vadd.f32 %v1854, %v1924
    %v1926 = vpop.f32.mrb[0].mxu0
    %v1927 = vadd.f32 %v1856, %v1926
    %v1928 = vpop.f32.mrb[0].mxu0
    %v1929 = vadd.f32 %v1858, %v1928
    %v1930 = vpop.f32.mrb[0].mxu0
    %v1931 = vadd.f32 %v1860, %v1930
    %1932 = vmatprep.mubr.bf16.mxu0 %v556
    %1933 = vmatmul.mubr.bf16.gmra.mrb[0].mxu0 %v555
    %v1934 = vpop.f32.mrb[0].mxu0
    %v1935 = vadd.f32 %v1864, %v1934
    %v1936 = vpop.f32.mrb[0].mxu0
    %v1937 = vadd.f32 %v1866, %v1936
    %v1938 = vpop.f32.mrb[0].mxu0
    %v1939 = vadd.f32 %v1868, %v1938
    %v1940 = vpop.f32.mrb[0].mxu0
    %v1941 = vadd.f32 %v1870, %v1940
    %1942 = vmatprep.mubr.bf16.mxu0 %v562
    %1943 = vmatmul.mubr.bf16.gmra.mrb[0].mxu0 %v561
    %v1944 = vpop.f32.mrb[0].mxu0
    %v1945 = vadd.f32 %v1874, %v1944
    %v1946 = vpop.f32.mrb[0].mxu0
    %v1947 = vadd.f32 %v1876, %v1946
    %v1948 = vpop.f32.mrb[0].mxu0
    %v1949 = vadd.f32 %v1878, %v1948
    %v1950 = vpop.f32.mrb[0].mxu0
    %v1951 = vadd.f32 %v1880, %v1950
    %1952 = vmatprep.mubr.bf16.mxu0 %v568
    %1953 = vmatmul.mubr.bf16.gmra.mrb[0].mxu0 %v567
    %v1954 = vpop.f32.mrb[0].mxu0
    %v1955 = vadd.f32 %v1884, %v1954
    %v1956 = vpop.f32.mrb[0].mxu0
    %v1957 = vadd.f32 %v1886, %v1956
    %v1958 = vpop.f32.mrb[0].mxu0
    %v1959 = vpop.f32.mrb[0].mxu0
    %1960 = vdwg.mxu0
    %1961 = vmatprep.subr.bf16.mxu0 %v1500
    %1962 = vmatpush1.bf16.msra.mxu0 %v1499
    %1963 = vmatprep.subr.bf16.mxu0 %v1505
    %1964 = vmatpush1.bf16.msra.mxu0 %v1504
    %1965 = vmatprep.subr.bf16.mxu0 %v1510
    %1966 = vmatpush1.bf16.msra.mxu0 %v1509
    %1967 = vmatprep.subr.bf16.mxu0 %v1515
    %1968 = vmatpush1.bf16.msra.mxu0 %v1514
    %1969 = vmatprep.subr.bf16.mxu0 %v1520
    %1970 = vmatpush1.bf16.msra.mxu0 %v1519
    %1971 = vmatprep.subr.bf16.mxu0 %v1525
    %1972 = vmatpush1.bf16.msra.mxu0 %v1524
    %1973 = vmatprep.subr.bf16.mxu0 %v1530
    %1974 = vmatpush1.bf16.msra.mxu0 %v1529
    %1975 = vmatprep.subr.bf16.mxu0 %v1535
    %1976 = vmatpush1.bf16.msra.mxu0 %v1534
    %1977 = vmatprep.subr.bf16.mxu0 %v1540
    %1978 = vmatpush1.bf16.msra.mxu0 %v1539
    %1979 = vmatprep.subr.bf16.mxu0 %v1545
    %1980 = vmatpush1.bf16.msra.mxu0 %v1544
    %1981 = vmatprep.subr.bf16.mxu0 %v1550
    %1982 = vmatpush1.bf16.msra.mxu0 %v1549
    %1983 = vmatprep.subr.bf16.mxu0 %v1555
    %1984 = vmatpush1.bf16.msra.mxu0 %v1554
    %1985 = vmatprep.subr.bf16.mxu0 %v1560
    %1986 = vmatpush1.bf16.msra.mxu0 %v1559
    %1987 = vmatprep.subr.bf16.mxu0 %v1565
    %1988 = vmatpush1.bf16.msra.mxu0 %v1564
    %1989 = vmatprep.subr.bf16.mxu0 %v1570
    %1990 = vmatpush1.bf16.msra.mxu0 %v1569
    %1991 = vmatprep.subr.bf16.mxu0 %v1575
    %1992 = vmatpush1.bf16.msra.mxu0 %v1574
    %1993 = vmatprep.mubr.bf16.mxu0 %v552
    %1994 = vmatmul.mubr.bf16.gmra.mrb[0].mxu0 %v551
    %v1995 = vpop.f32.mrb[0].mxu0
    %v1996 = vadd.f32 %v1925, %v1995
    %v1997 = vpop.f32.mrb[0].mxu0
    %v1998 = vadd.f32 %v1927, %v1997
    %v1999 = vpop.f32.mrb[0].mxu0
    %v2000 = vadd.f32 %v1929, %v1999
    %v2001 = vpop.f32.mrb[0].mxu0
    %v2002 = vadd.f32 %v1931, %v2001
    %2003 = vmatprep.mubr.bf16.mxu0 %v558
    %2004 = vmatmul.mubr.bf16.gmra.mrb[0].mxu0 %v557
    %v2005 = vpop.f32.mrb[0].mxu0
    %v2006 = vadd.f32 %v1935, %v2005
    %v2007 = vpop.f32.mrb[0].mxu0
    %v2008 = vadd.f32 %v1937, %v2007
    %v2009 = vpop.f32.mrb[0].mxu0
    %v2010 = vadd.f32 %v1939, %v2009
    %v2011 = vpop.f32.mrb[0].mxu0
    %v2012 = vadd.f32 %v1941, %v2011
    %2013 = vmatprep.mubr.bf16.mxu0 %v564
    %2014 = vmatmul.mubr.bf16.gmra.mrb[0].mxu0 %v563
    %v2015 = vpop.f32.mrb[0].mxu0
    %v2016 = vadd.f32 %v1945, %v2015
    %v2017 = vpop.f32.mrb[0].mxu0
    %v2018 = vadd.f32 %v1947, %v2017
    %v2019 = vpop.f32.mrb[0].mxu0
    %v2020 = vadd.f32 %v1949, %v2019
    %v2021 = vpop.f32.mrb[0].mxu0
    %v2022 = vadd.f32 %v1951, %v2021
    %2023 = vmatprep.mubr.bf16.mxu0 %v570
    %2024 = vmatmul.mubr.bf16.gmra.mrb[0].mxu0 %v569
    %v2025 = vpop.f32.mrb[0].mxu0
    %v2026 = vadd.f32 %v1955, %v2025
    %v2027 = vpop.f32.mrb[0].mxu0
    %v2028 = vadd.f32 %v1957, %v2027
    %v2029 = vpop.f32.mrb[0].mxu0
    %v2030 = vpop.f32.mrb[0].mxu0
    %2031 = vdwg.mxu0
    %2032 = vmatprep.subr.bf16.mxu0 %v1342
    %2033 = vmatpush1.bf16.msra.mxu0 %v1341
    %2034 = vmatprep.subr.bf16.mxu0 %v1347
    %2035 = vmatpush1.bf16.msra.mxu0 %v1346
    %2036 = vmatprep.subr.bf16.mxu0 %v1352
    %2037 = vmatpush1.bf16.msra.mxu0 %v1351
    %2038 = vmatprep.subr.bf16.mxu0 %v1357
    %2039 = vmatpush1.bf16.msra.mxu0 %v1356
    %2040 = vmatprep.subr.bf16.mxu0 %v1362
    %2041 = vmatpush1.bf16.msra.mxu0 %v1361
    %2042 = vmatprep.subr.bf16.mxu0 %v1367
    %2043 = vmatpush1.bf16.msra.mxu0 %v1366
    %2044 = vmatprep.subr.bf16.mxu0 %v1372
    %2045 = vmatpush1.bf16.msra.mxu0 %v1371
    %2046 = vmatprep.subr.bf16.mxu0 %v1377
    %2047 = vmatpush1.bf16.msra.mxu0 %v1376
    %2048 = vmatprep.subr.bf16.mxu0 %v1382
    %2049 = vmatpush1.bf16.msra.mxu0 %v1381
    %2050 = vmatprep.subr.bf16.mxu0 %v1387
    %2051 = vmatpush1.bf16.msra.mxu0 %v1386
    %2052 = vmatprep.subr.bf16.mxu0 %v1392
    %2053 = vmatpush1.bf16.msra.mxu0 %v1391
    %2054 = vmatprep.subr.bf16.mxu0 %v1397
    %2055 = vmatpush1.bf16.msra.mxu0 %v1396
    %2056 = vmatprep.subr.bf16.mxu0 %v1402
    %2057 = vmatpush1.bf16.msra.mxu0 %v1401
    %2058 = vmatprep.subr.bf16.mxu0 %v1407
    %2059 = vmatpush1.bf16.msra.mxu0 %v1406
    %2060 = vmatprep.subr.bf16.mxu0 %v1412
    %2061 = vmatpush1.bf16.msra.mxu0 %v1411
    %2062 = vmatprep.subr.bf16.mxu0 %v1417
    %2063 = vmatpush1.bf16.msra.mxu0 %v1416
    %2064 = vmatprep.mubr.bf16.mxu0 %v548
    %2065 = vmatmul.mubr.bf16.gmra.mrb[0].mxu0 %v547
    %v2066 = vpop.f32.mrb[0].mxu0
    %v2067 = vadd.f32 0.0, %v2066
    %v2068 = vpop.f32.mrb[0].mxu0
    %v2069 = vadd.f32 0.0, %v2068
    %v2070 = vpop.f32.mrb[0].mxu0
    %v2071 = vadd.f32 0.0, %v2070
    %v2072 = vpop.f32.mrb[0].mxu0
    %v2073 = vadd.f32 0.0, %v2072
    %2074 = vmatprep.mubr.bf16.mxu0 %v554
    %2075 = vmatmul.mubr.bf16.gmra.mrb[0].mxu0 %v553
    %v2076 = vpop.f32.mrb[0].mxu0
    %v2077 = vadd.f32 0.0, %v2076
    %v2078 = vpop.f32.mrb[0].mxu0
    %v2079 = vadd.f32 0.0, %v2078
    %v2080 = vpop.f32.mrb[0].mxu0
    %v2081 = vadd.f32 0.0, %v2080
    %v2082 = vpop.f32.mrb[0].mxu0
    %v2083 = vadd.f32 0.0, %v2082
    %2084 = vmatprep.mubr.bf16.mxu0 %v560
    %2085 = vmatmul.mubr.bf16.gmra.mrb[0].mxu0 %v559
    %v2086 = vpop.f32.mrb[0].mxu0
    %v2087 = vadd.f32 0.0, %v2086
    %v2088 = vpop.f32.mrb[0].mxu0
    %v2089 = vadd.f32 0.0, %v2088
    %v2090 = vpop.f32.mrb[0].mxu0
    %v2091 = vadd.f32 0.0, %v2090
    %v2092 = vpop.f32.mrb[0].mxu0
    %v2093 = vadd.f32 0.0, %v2092
    %2094 = vmatprep.mubr.bf16.mxu0 %v566
    %2095 = vmatmul.mubr.bf16.gmra.mrb[0].mxu0 %v565
    %v2096 = vpop.f32.mrb[0].mxu0
    %v2097 = vadd.f32 0.0, %v2096
    %v2098 = vpop.f32.mrb[0].mxu0
    %v2099 = vadd.f32 0.0, %v2098
    %v2100 = vpop.f32.mrb[0].mxu0
    %v2101 = vpop.f32.mrb[0].mxu0
    %2102 = vdwg.mxu0
    %2103 = vmatprep.subr.bf16.mxu0 %v1422
    %2104 = vmatpush1.bf16.msra.mxu0 %v1421
    %2105 = vmatprep.subr.bf16.mxu0 %v1427
    %2106 = vmatpush1.bf16.msra.mxu0 %v1426
    %2107 = vmatprep.subr.bf16.mxu0 %v1432
    %2108 = vmatpush1.bf16.msra.mxu0 %v1431
    %2109 = vmatprep.subr.bf16.mxu0 %v1437
    %2110 = vmatpush1.bf16.msra.mxu0 %v1436
    %2111 = vmatprep.subr.bf16.mxu0 %v1442
    %2112 = vmatpush1.bf16.msra.mxu0 %v1441
    %2113 = vmatprep.subr.bf16.mxu0 %v1447
    %2114 = vmatpush1.bf16.msra.mxu0 %v1446
    %2115 = vmatprep.subr.bf16.mxu0 %v1452
    %2116 = vmatpush1.bf16.msra.mxu0 %v1451
    %2117 = vmatprep.subr.bf16.mxu0 %v1457
    %2118 = vmatpush1.bf16.msra.mxu0 %v1456
    %2119 = vmatprep.subr.bf16.mxu0 %v1462
    %2120 = vmatpush1.bf16.msra.mxu0 %v1461
    %2121 = vmatprep.subr.bf16.mxu0 %v1467
    %2122 = vmatpush1.bf16.msra.mxu0 %v1466
    %2123 = vmatprep.subr.bf16.mxu0 %v1472
    %2124 = vmatpush1.bf16.msra.mxu0 %v1471
    %2125 = vmatprep.subr.bf16.mxu0 %v1477
    %2126 = vmatpush1.bf16.msra.mxu0 %v1476
    %2127 = vmatprep.subr.bf16.mxu0 %v1482
    %2128 = vmatpush1.bf16.msra.mxu0 %v1481
    %2129 = vmatprep.subr.bf16.mxu0 %v1487
    %2130 = vmatpush1.bf16.msra.mxu0 %v1486
    %2131 = vmatprep.subr.bf16.mxu0 %v1492
    %2132 = vmatpush1.bf16.msra.mxu0 %v1491
    %2133 = vmatprep.subr.bf16.mxu0 %v1497
    %2134 = vmatpush1.bf16.msra.mxu0 %v1496
    %2135 = vmatprep.mubr.bf16.mxu0 %v550
    %2136 = vmatmul.mubr.bf16.gmra.mrb[0].mxu0 %v549
    %v2137 = vpop.f32.mrb[0].mxu0
    %v2138 = vadd.f32 %v2067, %v2137
    %v2139 = vpop.f32.mrb[0].mxu0
    %v2140 = vadd.f32 %v2069, %v2139
    %v2141 = vpop.f32.mrb[0].mxu0
    %v2142 = vadd.f32 %v2071, %v2141
    %v2143 = vpop.f32.mrb[0].mxu0
    %v2144 = vadd.f32 %v2073, %v2143
    %2145 = vmatprep.mubr.bf16.mxu0 %v556
    %2146 = vmatmul.mubr.bf16.gmra.mrb[0].mxu0 %v555
    %v2147 = vpop.f32.mrb[0].mxu0
    %v2148 = vadd.f32 %v2077, %v2147
    %v2149 = vpop.f32.mrb[0].mxu0
    %v2150 = vadd.f32 %v2079, %v2149
    %v2151 = vpop.f32.mrb[0].mxu0
    %v2152 = vadd.f32 %v2081, %v2151
    %v2153 = vpop.f32.mrb[0].mxu0
    %v2154 = vadd.f32 %v2083, %v2153
    %2155 = vmatprep.mubr.bf16.mxu0 %v562
    %2156 = vmatmul.mubr.bf16.gmra.mrb[0].mxu0 %v561
    %v2157 = vpop.f32.mrb[0].mxu0
    %v2158 = vadd.f32 %v2087, %v2157
    %v2159 = vpop.f32.mrb[0].mxu0
    %v2160 = vadd.f32 %v2089, %v2159
    %v2161 = vpop.f32.mrb[0].mxu0
    %v2162 = vadd.f32 %v2091, %v2161
    %v2163 = vpop.f32.mrb[0].mxu0
    %v2164 = vadd.f32 %v2093, %v2163
    %2165 = vmatprep.mubr.bf16.mxu0 %v568
    %2166 = vmatmul.mubr.bf16.gmra.mrb[0].mxu0 %v567
    %v2167 = vpop.f32.mrb[0].mxu0
    %v2168 = vadd.f32 %v2097, %v2167
    %v2169 = vpop.f32.mrb[0].mxu0
    %v2170 = vadd.f32 %v2099, %v2169
    %v2171 = vpop.f32.mrb[0].mxu0
    %v2172 = vpop.f32.mrb[0].mxu0
    %2173 = vdwg.mxu0
    %2174 = vmatprep.subr.bf16.mxu0 %v1502
    %2175 = vmatpush1.bf16.msra.mxu0 %v1501
    %2176 = vmatprep.subr.bf16.mxu0 %v1507
    %2177 = vmatpush1.bf16.msra.mxu0 %v1506
    %2178 = vmatprep.subr.bf16.mxu0 %v1512
    %2179 = vmatpush1.bf16.msra.mxu0 %v1511
    %2180 = vmatprep.subr.bf16.mxu0 %v1517
    %2181 = vmatpush1.bf16.msra.mxu0 %v1516
    %2182 = vmatprep.subr.bf16.mxu0 %v1522
    %2183 = vmatpush1.bf16.msra.mxu0 %v1521
    %2184 = vmatprep.subr.bf16.mxu0 %v1527
    %2185 = vmatpush1.bf16.msra.mxu0 %v1526
    %2186 = vmatprep.subr.bf16.mxu0 %v1532
    %2187 = vmatpush1.bf16.msra.mxu0 %v1531
    %2188 = vmatprep.subr.bf16.mxu0 %v1537
    %2189 = vmatpush1.bf16.msra.mxu0 %v1536
    %2190 = vmatprep.subr.bf16.mxu0 %v1542
    %2191 = vmatpush1.bf16.msra.mxu0 %v1541
    %2192 = vmatprep.subr.bf16.mxu0 %v1547
    %2193 = vmatpush1.bf16.msra.mxu0 %v1546
    %2194 = vmatprep.subr.bf16.mxu0 %v1552
    %2195 = vmatpush1.bf16.msra.mxu0 %v1551
    %2196 = vmatprep.subr.bf16.mxu0 %v1557
    %2197 = vmatpush1.bf16.msra.mxu0 %v1556
    %2198 = vmatprep.subr.bf16.mxu0 %v1562
    %2199 = vmatpush1.bf16.msra.mxu0 %v1561
    %2200 = vmatprep.subr.bf16.mxu0 %v1567
    %2201 = vmatpush1.bf16.msra.mxu0 %v1566
    %2202 = vmatprep.subr.bf16.mxu0 %v1572
    %2203 = vmatpush1.bf16.msra.mxu0 %v1571
    %2204 = vmatprep.subr.bf16.mxu0 %v1577
    %2205 = vmatpush1.bf16.msra.mxu0 %v1576
    %2206 = vmatprep.mubr.bf16.mxu0 %v552
    %2207 = vmatmul.mubr.bf16.gmra.mrb[0].mxu0 %v551
    %v2208 = vpop.f32.mrb[0].mxu0
    %v2209 = vadd.f32 %v2138, %v2208
    %v2210 = vpop.f32.mrb[0].mxu0
    %v2211 = vadd.f32 %v2140, %v2210
    %v2212 = vpop.f32.mrb[0].mxu0
    %v2213 = vadd.f32 %v2142, %v2212
    %v2214 = vpop.f32.mrb[0].mxu0
    %v2215 = vadd.f32 %v2144, %v2214
    %2216 = vmatprep.mubr.bf16.mxu0 %v558
    %2217 = vmatmul.mubr.bf16.gmra.mrb[0].mxu0 %v557
    %v2218 = vpop.f32.mrb[0].mxu0
    %v2219 = vadd.f32 %v2148, %v2218
    %v2220 = vpop.f32.mrb[0].mxu0
    %v2221 = vadd.f32 %v2150, %v2220
    %v2222 = vpop.f32.mrb[0].mxu0
    %v2223 = vadd.f32 %v2152, %v2222
    %v2224 = vpop.f32.mrb[0].mxu0
    %v2225 = vadd.f32 %v2154, %v2224
    %2226 = vmatprep.mubr.bf16.mxu0 %v564
    %2227 = vmatmul.mubr.bf16.gmra.mrb[0].mxu0 %v563
    %v2228 = vpop.f32.mrb[0].mxu0
    %v2229 = vadd.f32 %v2158, %v2228
    %v2230 = vpop.f32.mrb[0].mxu0
    %v2231 = vadd.f32 %v2160, %v2230
    %v2232 = vpop.f32.mrb[0].mxu0
    %v2233 = vadd.f32 %v2162, %v2232
    %v2234 = vpop.f32.mrb[0].mxu0
    %v2235 = vadd.f32 %v2164, %v2234
    %2236 = vmatprep.mubr.bf16.mxu0 %v570
    %2237 = vmatmul.mubr.bf16.gmra.mrb[0].mxu0 %v569
    %v2238 = vpop.f32.mrb[0].mxu0
    %v2239 = vadd.f32 %v2168, %v2238
    %v2240 = vpop.f32.mrb[0].mxu0
    %v2241 = vadd.f32 %v2170, %v2240
    %v2242 = vpop.f32.mrb[0].mxu0
    %v2243 = vpop.f32.mrb[0].mxu0
    %2244 = vdwg.mxu0
    %2245 = vmatprep.subr.bf16.mxu0 0
    %2246 = vmatpush1.bf16.msra.mxu0 %v1343
    %2247 = vmatprep.subr.bf16.mxu0 0
    %2248 = vmatpush1.bf16.msra.mxu0 %v1348
    %2249 = vmatprep.subr.bf16.mxu0 0
    %2250 = vmatpush1.bf16.msra.mxu0 %v1353
    %2251 = vmatprep.subr.bf16.mxu0 0
    %2252 = vmatpush1.bf16.msra.mxu0 %v1358
    %2253 = vmatprep.subr.bf16.mxu0 0
    %2254 = vmatpush1.bf16.msra.mxu0 %v1363
    %2255 = vmatprep.subr.bf16.mxu0 0
    %2256 = vmatpush1.bf16.msra.mxu0 %v1368
    %2257 = vmatprep.subr.bf16.mxu0 0
    %2258 = vmatpush1.bf16.msra.mxu0 %v1373
    %2259 = vmatprep.subr.bf16.mxu0 0
    %2260 = vmatpush1.bf16.msra.mxu0 %v1378
    %2261 = vmatprep.subr.bf16.mxu0 0
    %2262 = vmatpush1.bf16.msra.mxu0 %v1383
    %2263 = vmatprep.subr.bf16.mxu0 0
    %2264 = vmatpush1.bf16.msra.mxu0 %v1388
    %2265 = vmatprep.subr.bf16.mxu0 0
    %2266 = vmatpush1.bf16.msra.mxu0 %v1393
    %2267 = vmatprep.subr.bf16.mxu0 0
    %2268 = vmatpush1.bf16.msra.mxu0 %v1398
    %2269 = vmatprep.subr.bf16.mxu0 0
    %2270 = vmatpush1.bf16.msra.mxu0 %v1403
    %2271 = vmatprep.subr.bf16.mxu0 0
    %2272 = vmatpush1.bf16.msra.mxu0 %v1408
    %2273 = vmatprep.subr.bf16.mxu0 0
    %2274 = vmatpush1.bf16.msra.mxu0 %v1413
    %2275 = vmatprep.subr.bf16.mxu0 0
    %2276 = vmatpush1.bf16.msra.mxu0 %v1418
    %2277 = vmatprep.mubr.bf16.mxu0 %v548
    %2278 = vmatmul.mubr.bf16.gmra.mrb[0].mxu0 %v547
    %v2279 = vpop.f32.mrb[0].mxu0
    %v2280 = vadd.f32 0.0, %v2279
    %v2281 = vpop.f32.mrb[0].mxu0
    %v2282 = vpop.f32.mrb[0].mxu0
    %v2283 = vadd.f32 0.0, %v2282
    %v2284 = vpop.f32.mrb[0].mxu0
    %2285 = vmatprep.mubr.bf16.mxu0 %v554
    %2286 = vmatmul.mubr.bf16.gmra.mrb[0].mxu0 %v553
    %v2287 = vpop.f32.mrb[0].mxu0
    %v2288 = vadd.f32 0.0, %v2287
    %v2289 = vpop.f32.mrb[0].mxu0
    %v2290 = vpop.f32.mrb[0].mxu0
    %v2291 = vadd.f32 0.0, %v2290
    %v2292 = vpop.f32.mrb[0].mxu0
    %2293 = vmatprep.mubr.bf16.mxu0 %v560
    %2294 = vmatmul.mubr.bf16.gmra.mrb[0].mxu0 %v559
    %v2295 = vpop.f32.mrb[0].mxu0
    %v2296 = vadd.f32 0.0, %v2295
    %v2297 = vpop.f32.mrb[0].mxu0
    %v2298 = vpop.f32.mrb[0].mxu0
    %v2299 = vadd.f32 0.0, %v2298
    %v2300 = vpop.f32.mrb[0].mxu0
    %2301 = vmatprep.mubr.bf16.mxu0 %v566
    %2302 = vmatmul.mubr.bf16.gmra.mrb[0].mxu0 %v565
    %v2303 = vpop.f32.mrb[0].mxu0
    %v2304 = vadd.f32 0.0, %v2303
    %v2305 = vpop.f32.mrb[0].mxu0
    %v2306 = vpop.f32.mrb[0].mxu0
    %v2307 = vpop.f32.mrb[0].mxu0
    %2308 = vdwg.mxu0
    %2309 = vmatprep.subr.bf16.mxu0 0
    %2310 = vmatpush1.bf16.msra.mxu0 %v1423
    %2311 = vmatprep.subr.bf16.mxu0 0
    %2312 = vmatpush1.bf16.msra.mxu0 %v1428
    %2313 = vmatprep.subr.bf16.mxu0 0
    %2314 = vmatpush1.bf16.msra.mxu0 %v1433
    %2315 = vmatprep.subr.bf16.mxu0 0
    %2316 = vmatpush1.bf16.msra.mxu0 %v1438
    %2317 = vmatprep.subr.bf16.mxu0 0
    %2318 = vmatpush1.bf16.msra.mxu0 %v1443
    %2319 = vmatprep.subr.bf16.mxu0 0
    %2320 = vmatpush1.bf16.msra.mxu0 %v1448
    %2321 = vmatprep.subr.bf16.mxu0 0
    %2322 = vmatpush1.bf16.msra.mxu0 %v1453
    %2323 = vmatprep.subr.bf16.mxu0 0
    %2324 = vmatpush1.bf16.msra.mxu0 %v1458
    %2325 = vmatprep.subr.bf16.mxu0 0
    %2326 = vmatpush1.bf16.msra.mxu0 %v1463
    %2327 = vmatprep.subr.bf16.mxu0 0
    %2328 = vmatpush1.bf16.msra.mxu0 %v1468
    %2329 = vmatprep.subr.bf16.mxu0 0
    %2330 = vmatpush1.bf16.msra.mxu0 %v1473
    %2331 = vmatprep.subr.bf16.mxu0 0
    %2332 = vmatpush1.bf16.msra.mxu0 %v1478
    %2333 = vmatprep.subr.bf16.mxu0 0
    %2334 = vmatpush1.bf16.msra.mxu0 %v1483
    %2335 = vmatprep.subr.bf16.mxu0 0
    %2336 = vmatpush1.bf16.msra.mxu0 %v1488
    %2337 = vmatprep.subr.bf16.mxu0 0
    %2338 = vmatpush1.bf16.msra.mxu0 %v1493
    %2339 = vmatprep.subr.bf16.mxu0 0
    %2340 = vmatpush1.bf16.msra.mxu0 %v1498
    %2341 = vmatprep.mubr.bf16.mxu0 %v550
    %2342 = vmatmul.mubr.bf16.gmra.mrb[0].mxu0 %v549
    %v2343 = vpop.f32.mrb[0].mxu0
    %v2344 = vadd.f32 %v2280, %v2343
    %v2345 = vpop.f32.mrb[0].mxu0
    %v2346 = vpop.f32.mrb[0].mxu0
    %v2347 = vadd.f32 %v2283, %v2346
    %v2348 = vpop.f32.mrb[0].mxu0
    %2349 = vmatprep.mubr.bf16.mxu0 %v556
    %2350 = vmatmul.mubr.bf16.gmra.mrb[0].mxu0 %v555
    %v2351 = vpop.f32.mrb[0].mxu0
    %v2352 = vadd.f32 %v2288, %v2351
    %v2353 = vpop.f32.mrb[0].mxu0
    %v2354 = vpop.f32.mrb[0].mxu0
    %v2355 = vadd.f32 %v2291, %v2354
    %v2356 = vpop.f32.mrb[0].mxu0
    %2357 = vmatprep.mubr.bf16.mxu0 %v562
    %2358 = vmatmul.mubr.bf16.gmra.mrb[0].mxu0 %v561
    %v2359 = vpop.f32.mrb[0].mxu0
    %v2360 = vadd.f32 %v2296, %v2359
    %v2361 = vpop.f32.mrb[0].mxu0
    %v2362 = vpop.f32.mrb[0].mxu0
    %v2363 = vadd.f32 %v2299, %v2362
    %v2364 = vpop.f32.mrb[0].mxu0
    %2365 = vmatprep.mubr.bf16.mxu0 %v568
    %2366 = vmatmul.mubr.bf16.gmra.mrb[0].mxu0 %v567
    %v2367 = vpop.f32.mrb[0].mxu0
    %v2368 = vadd.f32 %v2304, %v2367
    %v2369 = vpop.f32.mrb[0].mxu0
    %v2370 = vpop.f32.mrb[0].mxu0
    %v2371 = vpop.f32.mrb[0].mxu0
    %2372 = vdwg.mxu0
    %2373 = vmatprep.subr.bf16.mxu0 0
    %2374 = vmatpush1.bf16.msra.mxu0 %v1503
    %2375 = vmatprep.subr.bf16.mxu0 0
    %2376 = vmatpush1.bf16.msra.mxu0 %v1508
    %2377 = vmatprep.subr.bf16.mxu0 0
    %2378 = vmatpush1.bf16.msra.mxu0 %v1513
    %2379 = vmatprep.subr.bf16.mxu0 0
    %2380 = vmatpush1.bf16.msra.mxu0 %v1518
    %2381 = vmatprep.subr.bf16.mxu0 0
    %2382 = vmatpush1.bf16.msra.mxu0 %v1523
    %2383 = vmatprep.subr.bf16.mxu0 0
    %2384 = vmatpush1.bf16.msra.mxu0 %v1528
    %2385 = vmatprep.subr.bf16.mxu0 0
    %2386 = vmatpush1.bf16.msra.mxu0 %v1533
    %2387 = vmatprep.subr.bf16.mxu0 0
    %2388 = vmatpush1.bf16.msra.mxu0 %v1538
    %2389 = vmatprep.subr.bf16.mxu0 0
    %2390 = vmatpush1.bf16.msra.mxu0 %v1543
    %2391 = vmatprep.subr.bf16.mxu0 0
    %2392 = vmatpush1.bf16.msra.mxu0 %v1548
    %2393 = vmatprep.subr.bf16.mxu0 0
    %2394 = vmatpush1.bf16.msra.mxu0 %v1553
    %2395 = vmatprep.subr.bf16.mxu0 0
    %2396 = vmatpush1.bf16.msra.mxu0 %v1558
    %2397 = vmatprep.subr.bf16.mxu0 0
    %2398 = vmatpush1.bf16.msra.mxu0 %v1563
    %2399 = vmatprep.subr.bf16.mxu0 0
    %2400 = vmatpush1.bf16.msra.mxu0 %v1568
    %2401 = vmatprep.subr.bf16.mxu0 0
    %2402 = vmatpush1.bf16.msra.mxu0 %v1573
    %2403 = vmatprep.subr.bf16.mxu0 0
    %2404 = vmatpush1.bf16.msra.mxu0 %v1578
    %2405 = vmatprep.mubr.bf16.mxu0 %v552
    %2406 = vmatmul.mubr.bf16.gmra.mrb[0].mxu0 %v551
    %v2407 = vpop.f32.mrb[0].mxu0
    %v2408 = vadd.f32 %v2344, %v2407
    %v2409 = vpop.f32.mrb[0].mxu0
    %v2410 = vpop.f32.mrb[0].mxu0
    %v2411 = vadd.f32 %v2347, %v2410
    %v2412 = vpop.f32.mrb[0].mxu0
    %2413 = vmatprep.mubr.bf16.mxu0 %v558
    %2414 = vmatmul.mubr.bf16.gmra.mrb[0].mxu0 %v557
    %v2415 = vpop.f32.mrb[0].mxu0
    %v2416 = vadd.f32 %v2352, %v2415
    %v2417 = vpop.f32.mrb[0].mxu0
    %v2418 = vpop.f32.mrb[0].mxu0
    %v2419 = vadd.f32 %v2355, %v2418
    %v2420 = vpop.f32.mrb[0].mxu0
    %2421 = vmatprep.mubr.bf16.mxu0 %v564
    %2422 = vmatmul.mubr.bf16.gmra.mrb[0].mxu0 %v563
    %v2423 = vpop.f32.mrb[0].mxu0
    %v2424 = vadd.f32 %v2360, %v2423
    %v2425 = vpop.f32.mrb[0].mxu0
    %v2426 = vpop.f32.mrb[0].mxu0
    %v2427 = vadd.f32 %v2363, %v2426
    %v2428 = vpop.f32.mrb[0].mxu0
    %2429 = vmatprep.mubr.bf16.mxu0 %v570
    %2430 = vmatmul.mubr.bf16.gmra.mrb[0].mxu0 %v569
    %v2431 = vpop.f32.mrb[0].mxu0
    %v2432 = vadd.f32 %v2368, %v2431
    %v2433 = vpop.f32.mrb[0].mxu0
    %v2434 = vpop.f32.mrb[0].mxu0
    %v2435 = vpop.f32.mrb[0].mxu0
    %2436 = vdwg.mxu0
    %v2437 = vld [vmem:[#allocation4] sm:$0x1]
    %v2439 = vlaneseq
    %v2440 = vshrl.u32 %v2439, 7
    %v2441 = vsub.s32 0, %v2440
    %v2442 = vrot.slane %v2437, %v2441
    %v2444 = vadd.f32 %v1996, %v2442
    %v2445 = vadd.f32 %v2000, %v2442
    %v2446 = vadd.f32 %v2006, %v2442
    %v2447 = vadd.f32 %v2010, %v2442
    %v2448 = vadd.f32 %v2016, %v2442
    %v2449 = vadd.f32 %v2020, %v2442
    %v2450 = vadd.f32 %v2026, %v2442
    %v2451 = vld [vmem:[#allocation6] sm:$0x1]
    %v2453 = vlaneseq
    %v2454 = vshrl.u32 %v2453, 7
    %v2455 = vsub.s32 0, %v2454
    %v2456 = vrot.slane %v2451, %v2455
    %2457 = vrot.lane.b32.xlu0 %v2456, 50
    %v2458 = vpop.permute.xlu0 %2457
    %v2460 = vadd.f32 %v1996, %v2458
    %v2461 = vadd.f32 %v1998, %v2458
    %v2462 = vadd.f32 %v2000, %v2458
    %v2463 = vadd.f32 %v2002, %v2458
    %v2464 = vadd.f32 %v2006, %v2458
    %v2465 = vadd.f32 %v2008, %v2458
    %v2466 = vadd.f32 %v2010, %v2458
    %v2467 = vadd.f32 %v2012, %v2458
    %v2468 = vadd.f32 %v2016, %v2458
    %v2469 = vadd.f32 %v2018, %v2458
    %v2470 = vadd.f32 %v2020, %v2458
    %v2471 = vadd.f32 %v2022, %v2458
    %v2472 = vadd.f32 %v2026, %v2458
    %v2473 = vadd.f32 %v2028, %v2458
    %v2474 = vld [vmem:[#allocation7] sm:$0x1]
    %v2476 = vlaneseq
    %v2477 = vshrl.u32 %v2476, 7
    %v2478 = vsub.s32 0, %v2477
    %v2479 = vrot.slane %v2474, %v2478
    %2480 = vrot.lane.b32.xlu0 %v2479, 50
    %v2481 = vpop.permute.xlu0 %2480
    %v2483 = vmul.f32 %v2460, %v2481
    %v2484 = vmul.f32 %v2461, %v2481
    %v2485 = vmul.f32 %v2462, %v2481
    %v2486 = vmul.f32 %v2463, %v2481
    %v2487 = vmul.f32 %v2464, %v2481
    %v2488 = vmul.f32 %v2465, %v2481
    %v2489 = vmul.f32 %v2466, %v2481
    %v2490 = vmul.f32 %v2467, %v2481
    %v2491 = vmul.f32 %v2468, %v2481
    %v2492 = vmul.f32 %v2469, %v2481
    %v2493 = vmul.f32 %v2470, %v2481
    %v2494 = vmul.f32 %v2471, %v2481
    %v2495 = vmul.f32 %v2472, %v2481
    %v2496 = vmul.f32 %v2473, %v2481
    %v2497 = vld [vmem:[#allocation9] sm:$0x1]
    %v2499 = vlaneseq
    %v2500 = vshrl.u32 %v2499, 7
    %v2501 = vsub.s32 0, %v2500
    %v2502 = vrot.slane %v2497, %v2501
    %2503 = vrot.lane.b32.xlu0 %v2502, 50
    %v2504 = vpop.permute.xlu0 %2503
    %v2506 = vadd.f32 %v2483, %v2504
    %v2507 = vadd.f32 %v2484, %v2504
    %v2508 = vadd.f32 %v2485, %v2504
    %v2509 = vadd.f32 %v2486, %v2504
    %v2510 = vadd.f32 %v2487, %v2504
    %v2511 = vadd.f32 %v2488, %v2504
    %v2512 = vadd.f32 %v2489, %v2504
    %v2513 = vadd.f32 %v2490, %v2504
    %v2514 = vadd.f32 %v2491, %v2504
    %v2515 = vadd.f32 %v2492, %v2504
    %v2516 = vadd.f32 %v2493, %v2504
    %v2517 = vadd.f32 %v2494, %v2504
    %v2518 = vadd.f32 %v2495, %v2504
    %v2519 = vadd.f32 %v2496, %v2504
    %v2520 = vmax.f32 %v2506, 0.0
    %v2521 = vmax.f32 %v2507, 0.0
    %v2522 = vmax.f32 %v2508, 0.0
    %v2523 = vmax.f32 %v2509, 0.0
    %v2524 = vmax.f32 %v2510, 0.0
    %v2525 = vmax.f32 %v2511, 0.0
    %v2526 = vmax.f32 %v2512, 0.0
    %v2527 = vmax.f32 %v2513, 0.0
    %v2528 = vmax.f32 %v2514, 0.0
    %v2529 = vmax.f32 %v2515, 0.0
    %v2530 = vmax.f32 %v2516, 0.0
    %v2531 = vmax.f32 %v2517, 0.0
    %v2532 = vmax.f32 %v2518, 0.0
    %v2533 = vmax.f32 %v2519, 0.0
    %vm2541 = vcmask 1040384
    %v2542 = vrot.slane %v1998, 7
    %v2543 = vrot.slane %v2002, 7
    %v2544 = vsel %vm2541, %v2542, %v2543
    %v2545 = vrot.slane %v2008, 7
    %v2546 = vsel %vm2541, %v2543, %v2545
    %v2547 = vrot.slane %v2012, 7
    %v2548 = vsel %vm2541, %v2545, %v2547
    %v2549 = vrot.slane %v2018, 7
    %v2550 = vsel %vm2541, %v2547, %v2549
    %v2551 = vrot.slane %v2022, 7
    %v2552 = vsel %vm2541, %v2549, %v2551
    %v2553 = vrot.slane %v2028, 7
    %v2554 = vsel %vm2541, %v2551, %v2553
    %2555 = vrot.lane.b32.xlu0 %v2542, 106
    %v2556 = vpop.permute.xlu0 %2555
    %2557 = vrot.lane.b32.xlu0 %v2544, 106
    %v2558 = vpop.permute.xlu0 %2557
    %2559 = vrot.lane.b32.xlu0 %v2546, 106
    %v2560 = vpop.permute.xlu0 %2559
    %2561 = vrot.lane.b32.xlu0 %v2548, 106
    %v2562 = vpop.permute.xlu0 %2561
    %2563 = vrot.lane.b32.xlu0 %v2550, 106
    %v2564 = vpop.permute.xlu0 %2563
    %2565 = vrot.lane.b32.xlu0 %v2552, 106
    %v2566 = vpop.permute.xlu0 %2565
    %2567 = vrot.lane.b32.xlu0 %v2554, 106
    %v2568 = vpop.permute.xlu0 %2567
    %v2576 = vsel %vm2541, 0.0, %v2556
    %2584 = vrot.lane.b32.xlu0 %v1998, 6
    %v2585 = vpop.permute.xlu0 %2584
    %2586 = vrot.lane.b32.xlu0 %v2209, 6
    %v2587 = vpop.permute.xlu0 %2586
    %2588 = vrot.lane.b32.xlu0 %v2002, 6
    %v2589 = vpop.permute.xlu0 %2588
    %2590 = vrot.lane.b32.xlu0 %v2213, 6
    %v2591 = vpop.permute.xlu0 %2590
    %2592 = vrot.lane.b32.xlu0 %v2008, 6
    %v2593 = vpop.permute.xlu0 %2592
    %2594 = vrot.lane.b32.xlu0 %v2219, 6
    %v2595 = vpop.permute.xlu0 %2594
    %2596 = vrot.lane.b32.xlu0 %v2012, 6
    %v2597 = vpop.permute.xlu0 %2596
    %2598 = vrot.lane.b32.xlu0 %v2223, 6
    %v2599 = vpop.permute.xlu0 %2598
    %2600 = vrot.lane.b32.xlu0 %v2018, 6
    %v2601 = vpop.permute.xlu0 %2600
    %2602 = vrot.lane.b32.xlu0 %v2229, 6
    %v2603 = vpop.permute.xlu0 %2602
    %2604 = vrot.lane.b32.xlu0 %v2022, 6
    %v2605 = vpop.permute.xlu0 %2604
    %2606 = vrot.lane.b32.xlu0 %v2233, 6
    %v2607 = vpop.permute.xlu0 %2606
    %2608 = vrot.lane.b32.xlu0 %v2028, 6
    %v2609 = vpop.permute.xlu0 %2608
    %2610 = vrot.lane.b32.xlu0 %v2239, 6
    %v2611 = vpop.permute.xlu0 %2610
    %vm2612 = vcmask 48128
    %v2613 = vsel %vm2612, %v2585, %v2587
    %v2614 = vsel %vm2612, %v2589, %v2591
    %v2615 = vsel %vm2612, %v2593, %v2595
    %v2616 = vsel %vm2612, %v2597, %v2599
    %v2617 = vsel %vm2612, %v2601, %v2603
    %v2618 = vsel %vm2612, %v2605, %v2607
    %v2619 = vsel %vm2612, %v2609, %v2611
    %v2627 = vadd.f32 %v2576, %v2613
    %v2628 = vadd.f32 %v2558, %v2614
    %v2629 = vadd.f32 %v2560, %v2615
    %v2630 = vadd.f32 %v2562, %v2616
    %v2631 = vadd.f32 %v2564, %v2617
    %v2632 = vadd.f32 %v2566, %v2618
    %v2633 = vadd.f32 %v2568, %v2619
    %vm2641 = vcmask 1046528
    %v2642 = vrot.slane %v2209, 1
    %v2643 = vrot.slane %v2213, 1
    %v2644 = vsel %vm2641, %v2642, %v2643
    %v2645 = vrot.slane %v2211, 1
    %v2646 = vrot.slane %v2215, 1
    %v2647 = vsel %vm2641, %v2645, %v2646
    %v2648 = vrot.slane %v2219, 1
    %v2649 = vsel %vm2641, %v2643, %v2648
    %v2650 = vrot.slane %v2221, 1
    %v2651 = vsel %vm2641, %v2646, %v2650
    %v2652 = vrot.slane %v2223, 1
    %v2653 = vsel %vm2641, %v2648, %v2652
    %v2654 = vrot.slane %v2225, 1
    %v2655 = vsel %vm2641, %v2650, %v2654
    %v2656 = vrot.slane %v2229, 1
    %v2657 = vsel %vm2641, %v2652, %v2656
    %v2658 = vrot.slane %v2231, 1
    %v2659 = vsel %vm2641, %v2654, %v2658
    %v2660 = vrot.slane %v2233, 1
    %v2661 = vsel %vm2641, %v2656, %v2660
    %v2662 = vrot.slane %v2235, 1
    %v2663 = vsel %vm2641, %v2658, %v2662
    %v2664 = vrot.slane %v2239, 1
    %v2665 = vsel %vm2641, %v2660, %v2664
    %v2666 = vrot.slane %v2241, 1
    %v2667 = vsel %vm2641, %v2662, %v2666
    %v2670 = vsel %vm2541, %v2664, 0.0
    %v2671 = vsel %vm2541, %v2666, 0.0
    %2674 = vrot.lane.b32.xlu0 %v2644, 34
    %v2675 = vpop.permute.xlu0 %2674
    %2676 = vrot.lane.b32.xlu0 %v2647, 34
    %v2677 = vpop.permute.xlu0 %2676
    %2678 = vrot.lane.b32.xlu0 %v2649, 34
    %v2679 = vpop.permute.xlu0 %2678
    %2680 = vrot.lane.b32.xlu0 %v2651, 34
    %v2681 = vpop.permute.xlu0 %2680
    %2682 = vrot.lane.b32.xlu0 %v2653, 34
    %v2683 = vpop.permute.xlu0 %2682
    %2684 = vrot.lane.b32.xlu0 %v2655, 34
    %v2685 = vpop.permute.xlu0 %2684
    %2686 = vrot.lane.b32.xlu0 %v2657, 34
    %v2687 = vpop.permute.xlu0 %2686
    %2688 = vrot.lane.b32.xlu0 %v2659, 34
    %v2689 = vpop.permute.xlu0 %2688
    %2690 = vrot.lane.b32.xlu0 %v2661, 34
    %v2691 = vpop.permute.xlu0 %2690
    %2692 = vrot.lane.b32.xlu0 %v2663, 34
    %v2693 = vpop.permute.xlu0 %2692
    %2694 = vrot.lane.b32.xlu0 %v2665, 34
    %v2695 = vpop.permute.xlu0 %2694
    %2696 = vrot.lane.b32.xlu0 %v2667, 34
    %v2697 = vpop.permute.xlu0 %2696
    %2698 = vrot.lane.b32.xlu0 %v2670, 34
    %v2699 = vpop.permute.xlu0 %2698
    %2700 = vrot.lane.b32.xlu0 %v2671, 34
    %v2701 = vpop.permute.xlu0 %2700
    %vm2702 = vcmask 277504
    %v2703 = vsel %vm2702, %v2675, %v2677
    %v2704 = vsel %vm2702, %v2679, %v2681
    %v2705 = vsel %vm2702, %v2683, %v2685
    %v2706 = vsel %vm2702, %v2687, %v2689
    %v2707 = vsel %vm2702, %v2691, %v2693
    %v2708 = vsel %vm2702, %v2695, %v2697
    %v2709 = vsel %vm2702, %v2699, %v2701
    %v2717 = vadd.f32 %v2627, %v2703
    %v2718 = vadd.f32 %v2628, %v2704
    %v2719 = vadd.f32 %v2629, %v2705
    %v2720 = vadd.f32 %v2630, %v2706
    %v2721 = vadd.f32 %v2631, %v2707
    %v2722 = vadd.f32 %v2632, %v2708
    %v2723 = vadd.f32 %v2633, %v2709
    %v2724 = vld [vmem:[#allocation10] sm:$0x1]
    %v2726 = vlaneseq
    %v2727 = vshrl.u32 %v2726, 7
    %v2728 = vsub.s32 0, %v2727
    %v2729 = vrot.slane %v2724, %v2728
    %v2731 = vadd.f32 %v2717, %v2729
    %v2732 = vadd.f32 %v2718, %v2729
    %v2733 = vadd.f32 %v2719, %v2729
    %v2734 = vadd.f32 %v2720, %v2729
    %v2735 = vadd.f32 %v2721, %v2729
    %v2736 = vadd.f32 %v2722, %v2729
    %v2737 = vadd.f32 %v2723, %v2729
    %v2738 = vld [vmem:[#allocation12] sm:$0x1]
    %v2740 = vlaneseq
    %v2741 = vshrl.u32 %v2740, 7
    %v2742 = vsub.s32 0, %v2741
    %v2743 = vrot.slane %v2738, %v2742
    %v2745 = vmul.f32 %v2731, %v2743
    %v2746 = vmul.f32 %v2732, %v2743
    %v2747 = vmul.f32 %v2733, %v2743
    %v2748 = vmul.f32 %v2734, %v2743
    %v2749 = vmul.f32 %v2735, %v2743
    %v2750 = vmul.f32 %v2736, %v2743
    %v2751 = vmul.f32 %v2737, %v2743
    %v2752 = vld [vmem:[#allocation13] sm:$0x1]
    %v2754 = vlaneseq
    %v2755 = vshrl.u32 %v2754, 7
    %v2756 = vsub.s32 0, %v2755
    %v2757 = vrot.slane %v2752, %v2756
    %v2759 = vadd.f32 %v2745, %v2757
    %v2760 = vadd.f32 %v2746, %v2757
    %v2761 = vadd.f32 %v2747, %v2757
    %v2762 = vadd.f32 %v2748, %v2757
    %v2763 = vadd.f32 %v2749, %v2757
    %v2764 = vadd.f32 %v2750, %v2757
    %v2765 = vadd.f32 %v2751, %v2757
    %v2766 = vmax.f32 %v2759, 0.0
    %v2767 = vmax.f32 %v2760, 0.0
    %v2768 = vmax.f32 %v2761, 0.0
    %v2769 = vmax.f32 %v2762, 0.0
    %v2770 = vmax.f32 %v2763, 0.0
    %v2771 = vmax.f32 %v2764, 0.0
    %v2772 = vmax.f32 %v2765, 0.0
    %v2773 = vrot.slane %v2211, 7
    %v2774 = vrot.slane %v2215, 7
    %v2775 = vsel %vm2541, %v2773, %v2774
    %v2776 = vrot.slane %v2221, 7
    %v2777 = vsel %vm2541, %v2774, %v2776
    %v2778 = vrot.slane %v2225, 7
    %v2779 = vsel %vm2541, %v2776, %v2778
    %v2780 = vrot.slane %v2231, 7
    %v2781 = vsel %vm2541, %v2778, %v2780
    %v2782 = vrot.slane %v2235, 7
    %v2783 = vsel %vm2541, %v2780, %v2782
    %v2784 = vrot.slane %v2241, 7
    %v2785 = vsel %vm2541, %v2782, %v2784
    %2786 = vrot.lane.b32.xlu0 %v2773, 62
    %v2787 = vpop.permute.xlu0 %2786
    %2788 = vrot.lane.b32.xlu0 %v2775, 62
    %v2789 = vpop.permute.xlu0 %2788
    %2790 = vrot.lane.b32.xlu0 %v2777, 62
    %v2791 = vpop.permute.xlu0 %2790
    %2792 = vrot.lane.b32.xlu0 %v2779, 62
    %v2793 = vpop.permute.xlu0 %2792
    %2794 = vrot.lane.b32.xlu0 %v2781, 62
    %v2795 = vpop.permute.xlu0 %2794
    %2796 = vrot.lane.b32.xlu0 %v2783, 62
    %v2797 = vpop.permute.xlu0 %2796
    %2798 = vrot.lane.b32.xlu0 %v2785, 62
    %v2799 = vpop.permute.xlu0 %2798
    %v2807 = vsel %vm2541, 0.0, %v2787
    %2815 = vrot.lane.b32.xlu0 %v2211, 12
    %v2816 = vpop.permute.xlu0 %2815
    %2817 = vrot.lane.b32.xlu0 %v2408, 12
    %v2818 = vpop.permute.xlu0 %2817
    %2819 = vrot.lane.b32.xlu0 %v2215, 12
    %v2820 = vpop.permute.xlu0 %2819
    %2821 = vrot.lane.b32.xlu0 %v2411, 12
    %v2822 = vpop.permute.xlu0 %2821
    %2823 = vrot.lane.b32.xlu0 %v2221, 12
    %v2824 = vpop.permute.xlu0 %2823
    %2825 = vrot.lane.b32.xlu0 %v2416, 12
    %v2826 = vpop.permute.xlu0 %2825
    %2827 = vrot.lane.b32.xlu0 %v2225, 12
    %v2828 = vpop.permute.xlu0 %2827
    %2829 = vrot.lane.b32.xlu0 %v2419, 12
    %v2830 = vpop.permute.xlu0 %2829
    %2831 = vrot.lane.b32.xlu0 %v2231, 12
    %v2832 = vpop.permute.xlu0 %2831
    %2833 = vrot.lane.b32.xlu0 %v2424, 12
    %v2834 = vpop.permute.xlu0 %2833
    %2835 = vrot.lane.b32.xlu0 %v2235, 12
    %v2836 = vpop.permute.xlu0 %2835
    %2837 = vrot.lane.b32.xlu0 %v2427, 12
    %v2838 = vpop.permute.xlu0 %2837
    %2839 = vrot.lane.b32.xlu0 %v2241, 12
    %v2840 = vpop.permute.xlu0 %2839
    %2841 = vrot.lane.b32.xlu0 %v2432, 12
    %v2842 = vpop.permute.xlu0 %2841
    %vm2843 = vcmask 97280
    %v2844 = vsel %vm2843, %v2816, %v2818
    %v2845 = vsel %vm2843, %v2820, %v2822
    %v2846 = vsel %vm2843, %v2824, %v2826
    %v2847 = vsel %vm2843, %v2828, %v2830
    %v2848 = vsel %vm2843, %v2832, %v2834
    %v2849 = vsel %vm2843, %v2836, %v2838
    %v2850 = vsel %vm2843, %v2840, %v2842
    %v2858 = vadd.f32 %v2807, %v2844
    %v2859 = vadd.f32 %v2789, %v2845
    %v2860 = vadd.f32 %v2791, %v2846
    %v2861 = vadd.f32 %v2793, %v2847
    %v2862 = vadd.f32 %v2795, %v2848
    %v2863 = vadd.f32 %v2797, %v2849
    %v2864 = vadd.f32 %v2799, %v2850
    %v2865 = vrot.slane %v2408, 1
    %v2866 = vrot.slane %v2411, 1
    %v2867 = vsel %vm2641, %v2865, %v2866
    %v2868 = vrot.slane %v2416, 1
    %v2869 = vsel %vm2641, %v2866, %v2868
    %v2870 = vrot.slane %v2419, 1
    %v2871 = vsel %vm2641, %v2868, %v2870
    %v2872 = vrot.slane %v2424, 1
    %v2873 = vsel %vm2641, %v2870, %v2872
    %v2874 = vrot.slane %v2427, 1
    %v2875 = vsel %vm2641, %v2872, %v2874
    %v2876 = vrot.slane %v2432, 1
    %v2877 = vsel %vm2641, %v2874, %v2876
    %v2879 = vsel %vm2541, %v2876, 0.0
    %2881 = vrot.lane.b32.xlu0 %v2867, 90
    %v2882 = vpop.permute.xlu0 %2881
    %2883 = vrot.lane.b32.xlu0 %v2869, 90
    %v2884 = vpop.permute.xlu0 %2883
    %2885 = vrot.lane.b32.xlu0 %v2871, 90
    %v2886 = vpop.permute.xlu0 %2885
    %2887 = vrot.lane.b32.xlu0 %v2873, 90
    %v2888 = vpop.permute.xlu0 %2887
    %2889 = vrot.lane.b32.xlu0 %v2875, 90
    %v2890 = vpop.permute.xlu0 %2889
    %2891 = vrot.lane.b32.xlu0 %v2877, 90
    %v2892 = vpop.permute.xlu0 %2891
    %2893 = vrot.lane.b32.xlu0 %v2879, 90
    %v2894 = vpop.permute.xlu0 %2893
    %v2902 = vadd.f32 %v2858, %v2882
    %v2903 = vadd.f32 %v2859, %v2884
    %v2904 = vadd.f32 %v2860, %v2886
    %v2905 = vadd.f32 %v2861, %v2888
    %v2906 = vadd.f32 %v2862, %v2890
    %v2907 = vadd.f32 %v2863, %v2892
    %v2908 = vadd.f32 %v2864, %v2894
    %v2909 = vld [vmem:[#allocation15] sm:$0x1]
    %v2911 = vlaneseq
    %v2912 = vshrl.u32 %v2911, 7
    %v2913 = vsub.s32 0, %v2912
    %v2914 = vrot.slane %v2909, %v2913
    %v2916 = vadd.f32 %v2902, %v2914
    %v2917 = vadd.f32 %v2903, %v2914
    %v2918 = vadd.f32 %v2904, %v2914
    %v2919 = vadd.f32 %v2905, %v2914
    %v2920 = vadd.f32 %v2906, %v2914
    %v2921 = vadd.f32 %v2907, %v2914
    %v2922 = vadd.f32 %v2908, %v2914
    %v2937 = vrot.slane %v2520, 7
    %v2938 = vrot.slane %v2521, 7
    %v2939 = vrot.slane %v2522, 7
    %v2940 = vsel %vm2541, %v2937, %v2939
    %v2941 = vrot.slane %v2523, 7
    %v2942 = vsel %vm2541, %v2938, %v2941
    %v2943 = vrot.slane %v2524, 7
    %v2944 = vsel %vm2541, %v2939, %v2943
    %v2945 = vrot.slane %v2525, 7
    %v2946 = vsel %vm2541, %v2941, %v2945
    %v2947 = vrot.slane %v2526, 7
    %v2948 = vsel %vm2541, %v2943, %v2947
    %v2949 = vrot.slane %v2527, 7
    %v2950 = vsel %vm2541, %v2945, %v2949
    %v2951 = vrot.slane %v2528, 7
    %v2952 = vsel %vm2541, %v2947, %v2951
    %v2953 = vrot.slane %v2529, 7
    %v2954 = vsel %vm2541, %v2949, %v2953
    %v2955 = vrot.slane %v2530, 7
    %v2956 = vsel %vm2541, %v2951, %v2955
    %v2957 = vrot.slane %v2531, 7
    %v2958 = vsel %vm2541, %v2953, %v2957
    %v2959 = vrot.slane %v2532, 7
    %v2960 = vsel %vm2541, %v2955, %v2959
    %v2961 = vrot.slane %v2533, 7
    %v2962 = vsel %vm2541, %v2957, %v2961
    %2963 = vrot.lane.b32.xlu0 %v2937, 78
    %v2964 = vpop.permute.xlu0 %2963
    %2965 = vrot.lane.b32.xlu0 %v2938, 78
    %v2966 = vpop.permute.xlu0 %2965
    %2967 = vrot.lane.b32.xlu0 %v2940, 78
    %v2968 = vpop.permute.xlu0 %2967
    %2969 = vrot.lane.b32.xlu0 %v2942, 78
    %v2970 = vpop.permute.xlu0 %2969
    %2971 = vrot.lane.b32.xlu0 %v2944, 78
    %v2972 = vpop.permute.xlu0 %2971
    %2973 = vrot.lane.b32.xlu0 %v2946, 78
    %v2974 = vpop.permute.xlu0 %2973
    %2975 = vrot.lane.b32.xlu0 %v2948, 78
    %v2976 = vpop.permute.xlu0 %2975
    %2977 = vrot.lane.b32.xlu0 %v2950, 78
    %v2978 = vpop.permute.xlu0 %2977
    %2979 = vrot.lane.b32.xlu0 %v2952, 78
    %v2980 = vpop.permute.xlu0 %2979
    %2981 = vrot.lane.b32.xlu0 %v2954, 78
    %v2982 = vpop.permute.xlu0 %2981
    %2983 = vrot.lane.b32.xlu0 %v2956, 78
    %v2984 = vpop.permute.xlu0 %2983
    %2985 = vrot.lane.b32.xlu0 %v2958, 78
    %v2986 = vpop.permute.xlu0 %2985
    %2987 = vrot.lane.b32.xlu0 %v2960, 78
    %v2988 = vpop.permute.xlu0 %2987
    %2989 = vrot.lane.b32.xlu0 %v2962, 78
    %v2990 = vpop.permute.xlu0 %2989
    %vm2991 = vcmask 637952
    %v2992 = vsel %vm2991, %v2964, %v2966
    %v2993 = vsel %vm2991, %v2968, %v2970
    %v2994 = vsel %vm2991, %v2972, %v2974
    %v2995 = vsel %vm2991, %v2976, %v2978
    %v2996 = vsel %vm2991, %v2980, %v2982
    %v2997 = vsel %vm2991, %v2984, %v2986
    %v2998 = vsel %vm2991, %v2988, %v2990
    %v3006 = vsel %vm2541, 0.0, %v2992
    %vm3007 = vcmask 1042432
    %v3008 = vsel %vm3007, %v2998, 0.0
    %v3009 = vpack.c.bf16 %v2993, %v3006
    %v3010 = vpack.c.bf16 %v2995, %v2994
    %v3011 = vpack.c.bf16 %v2997, %v2996
    %v3012 = vpack.c.bf16 %v3008, %v3008
    %v3026 = vunpack.c.l.b16 %v479
    %v3027 = vunpack.c.h.b16 %v479
    %v3028 = vunpack.c.l.b16 %v480
    %v3029 = vunpack.c.h.b16 %v480
    %v3030 = vunpack.c.l.b16 %v481
    %v3031 = vunpack.c.h.b16 %v481
    %v3032 = vunpack.c.l.b16 %v482
    %v3033 = vunpack.c.h.b16 %v482
    %v3034 = vunpack.c.l.b16 %v483
    %v3035 = vunpack.c.h.b16 %v483
    %v3036 = vunpack.c.l.b16 %v484
    %v3037 = vunpack.c.h.b16 %v484
    %v3038 = vunpack.c.l.b16 %v485
    %v3039 = vunpack.c.h.b16 %v485
    %v3040 = vunpack.c.l.b16 %v486
    %v3041 = vunpack.c.h.b16 %v486
    %v3042 = vunpack.c.l.b16 %v487
    %v3043 = vunpack.c.h.b16 %v487
    %v3044 = vunpack.c.l.b16 %v488
    %v3045 = vunpack.c.h.b16 %v488
    %v3046 = vunpack.c.l.b16 %v489
    %v3047 = vunpack.c.h.b16 %v489
    %v3048 = vunpack.c.l.b16 %v490
    %v3049 = vunpack.c.h.b16 %v490
    %v3050 = vunpack.c.l.b16 %v491
    %v3051 = vunpack.c.h.b16 %v491
    %v3052 = vpack.c.b16 %v3028, %v3026
    %v3053 = vpack.c.b16 %v3029, %v3027
    %v3054 = vpack.c.b16 %v3032, %v3030
    %v3055 = vpack.c.b16 %v3033, %v3031
    %v3056 = vpack.c.b16 %v3036, %v3034
    %v3057 = vpack.c.b16 %v3037, %v3035
    %v3058 = vpack.c.b16 %v3040, %v3038
    %v3059 = vpack.c.b16 %v3041, %v3039
    %v3060 = vpack.c.b16 %v3044, %v3042
    %v3061 = vpack.c.b16 %v3045, %v3043
    %v3062 = vpack.c.b16 %v3048, %v3046
    %v3063 = vpack.c.b16 %v3049, %v3047
    %v3064 = vpack.c.b16 %v3050, %v3050
    %v3065 = vpack.c.b16 %v3051, %v3051
    %vm3078 = vcmask 818176
    %v3080 = vsel %vm3078, %v3009, 0
    %v3083 = vsel %vm3078, %v3010, 0
    %v3086 = vsel %vm3078, %v3011, 0
    %v3089 = vsel %vm3078, %v3012, 0
    %vm3091 = vcmask 1041408
    %v3093 = vsel %vm3091, %v3064, 0
    %v3096 = vsel %vm3091, %v3065, 0
    %3098 = vmatprep.subr.bf16.mxu0 %v3053
    %3099 = vmatpush1.bf16.msra.mxu0 %v3052
    %3100 = vmatprep.subr.bf16.mxu0 %v3055
    %3101 = vmatpush1.bf16.msra.mxu0 %v3054
    %3102 = vmatprep.subr.bf16.mxu0 %v3057
    %3103 = vmatpush1.bf16.msra.mxu0 %v3056
    %3104 = vmatprep.subr.bf16.mxu0 %v3059
    %3105 = vmatpush1.bf16.msra.mxu0 %v3058
    %3106 = vmatprep.subr.bf16.mxu0 %v3061
    %3107 = vmatpush1.bf16.msra.mxu0 %v3060
    %3108 = vmatprep.subr.bf16.mxu0 %v3063
    %3109 = vmatpush1.bf16.msra.mxu0 %v3062
    %3110 = vmatprep.subr.bf16.mxu0 %v3096
    %3111 = vmatpush1.bf16.msra.mxu0 %v3093
    %3112 = vmatprep.subr.bf16.mxu0 0
    %3113 = vmatpush1.bf16.msra.mxu0 0
    %3114 = vmatprep.subr.bf16.mxu0 0
    %3115 = vmatpush1.bf16.msra.mxu0 0
    %3116 = vmatprep.subr.bf16.mxu0 0
    %3117 = vmatpush1.bf16.msra.mxu0 0
    %3118 = vmatprep.subr.bf16.mxu0 0
    %3119 = vmatpush1.bf16.msra.mxu0 0
    %3120 = vmatprep.subr.bf16.mxu0 0
    %3121 = vmatpush1.bf16.msra.mxu0 0
    %3122 = vmatprep.subr.bf16.mxu0 0
    %3123 = vmatpush1.bf16.msra.mxu0 0
    %3124 = vmatprep.subr.bf16.mxu0 0
    %3125 = vmatpush1.bf16.msra.mxu0 0
    %3126 = vmatprep.subr.bf16.mxu0 0
    %3127 = vmatpush1.bf16.msra.mxu0 0
    %3128 = vmatprep.subr.bf16.mxu0 0
    %3129 = vmatpush1.bf16.msra.mxu0 0
    %3130 = vmatprep.mubr.bf16.mxu0 0
    %3131 = vmatmul.mubr.bf16.gmra.mrb[0].mxu0 %v3080
    %v3132 = vpop.f32.mrb[0].mxu0
    %v3133 = vadd.f32 0.0, %v3132
    %v3134 = vpop.f32.mrb[0].mxu0
    %v3135 = vadd.f32 0.0, %v3134
    %v3136 = vpop.f32.mrb[0].mxu0
    %v3137 = vadd.f32 0.0, %v3136
    %v3138 = vpop.f32.mrb[0].mxu0
    %v3139 = vadd.f32 0.0, %v3138
    %3140 = vmatprep.mubr.bf16.mxu0 0
    %3141 = vmatmul.mubr.bf16.gmra.mrb[0].mxu0 %v3083
    %v3142 = vpop.f32.mrb[0].mxu0
    %v3143 = vadd.f32 0.0, %v3142
    %v3144 = vpop.f32.mrb[0].mxu0
    %v3145 = vadd.f32 0.0, %v3144
    %v3146 = vpop.f32.mrb[0].mxu0
    %v3147 = vadd.f32 0.0, %v3146
    %v3148 = vpop.f32.mrb[0].mxu0
    %v3149 = vadd.f32 0.0, %v3148
    %3150 = vmatprep.mubr.bf16.mxu0 0
    %3151 = vmatmul.mubr.bf16.gmra.mrb[0].mxu0 %v3086
    %v3152 = vpop.f32.mrb[0].mxu0
    %v3153 = vadd.f32 0.0, %v3152
    %v3154 = vpop.f32.mrb[0].mxu0
    %v3155 = vadd.f32 0.0, %v3154
    %v3156 = vpop.f32.mrb[0].mxu0
    %v3157 = vadd.f32 0.0, %v3156
    %v3158 = vpop.f32.mrb[0].mxu0
    %v3159 = vadd.f32 0.0, %v3158
    %3160 = vmatprep.mubr.bf16.mxu0 0
    %3161 = vmatmul.mubr.bf16.gmra.mrb[0].mxu0 %v3089
    %v3162 = vpop.f32.mrb[0].mxu0
    %v3163 = vadd.f32 0.0, %v3162
    %v3164 = vpop.f32.mrb[0].mxu0
    %v3165 = vadd.f32 0.0, %v3164
    %v3166 = vpop.f32.mrb[0].mxu0
    %v3167 = vpop.f32.mrb[0].mxu0
    %3168 = vdwg.mxu0
    %v3176 = vrot.slane %v3133, 1
    %v3177 = vrot.slane %v3137, 1
    %v3178 = vsel %vm2641, %v3176, %v3177
    %v3179 = vrot.slane %v3143, 1
    %v3180 = vsel %vm2641, %v3177, %v3179
    %v3181 = vrot.slane %v3147, 1
    %v3182 = vsel %vm2641, %v3179, %v3181
    %v3183 = vrot.slane %v3153, 1
    %v3184 = vsel %vm2641, %v3181, %v3183
    %v3185 = vrot.slane %v3157, 1
    %v3186 = vsel %vm2641, %v3183, %v3185
    %v3187 = vrot.slane %v3163, 1
    %v3188 = vsel %vm2641, %v3185, %v3187
    %3189 = vrot.lane.b32.xlu0 %v3178, 78
    %v3190 = vpop.permute.xlu0 %3189
    %3191 = vrot.lane.b32.xlu0 %v3180, 78
    %v3192 = vpop.permute.xlu0 %3191
    %3193 = vrot.lane.b32.xlu0 %v3182, 78
    %v3194 = vpop.permute.xlu0 %3193
    %3195 = vrot.lane.b32.xlu0 %v3184, 78
    %v3196 = vpop.permute.xlu0 %3195
    %3197 = vrot.lane.b32.xlu0 %v3186, 78
    %v3198 = vpop.permute.xlu0 %3197
    %3199 = vrot.lane.b32.xlu0 %v3188, 78
    %v3200 = vpop.permute.xlu0 %3199
    %3201 = vrot.lane.b32.xlu0 %v3187, 78
    %v3202 = vpop.permute.xlu0 %3201
    %v3210 = vadd.f32 %v3133, %v3190
    %v3211 = vadd.f32 %v3137, %v3192
    %v3212 = vadd.f32 %v3143, %v3194
    %v3213 = vadd.f32 %v3147, %v3196
    %v3214 = vadd.f32 %v3153, %v3198
    %v3215 = vadd.f32 %v3157, %v3200
    %v3216 = vadd.f32 %v3163, %v3202
    %vm3224 = vcmask 1045504
    %v3225 = vrot.slane %v3133, 2
    %v3226 = vrot.slane %v3137, 2
    %v3227 = vsel %vm3224, %v3225, %v3226
    %v3228 = vrot.slane %v3135, 2
    %v3229 = vrot.slane %v3139, 2
    %v3230 = vsel %vm3224, %v3228, %v3229
    %v3231 = vrot.slane %v3143, 2
    %v3232 = vsel %vm3224, %v3226, %v3231
    %v3233 = vrot.slane %v3145, 2
    %v3234 = vsel %vm3224, %v3229, %v3233
    %v3235 = vrot.slane %v3147, 2
    %v3236 = vsel %vm3224, %v3231, %v3235
    %v3237 = vrot.slane %v3149, 2
    %v3238 = vsel %vm3224, %v3233, %v3237
    %v3239 = vrot.slane %v3153, 2
    %v3240 = vsel %vm3224, %v3235, %v3239
    %v3241 = vrot.slane %v3155, 2
    %v3242 = vsel %vm3224, %v3237, %v3241
    %v3243 = vrot.slane %v3157, 2
    %v3244 = vsel %vm3224, %v3239, %v3243
    %v3245 = vrot.slane %v3159, 2
    %v3246 = vsel %vm3224, %v3241, %v3245
    %v3247 = vrot.slane %v3163, 2
    %v3248 = vsel %vm3224, %v3243, %v3247
    %v3249 = vrot.slane %v3165, 2
    %v3250 = vsel %vm3224, %v3245, %v3249
    %3251 = vrot.lane.b32.xlu0 %v3227, 28
    %v3252 = vpop.permute.xlu0 %3251
    %3253 = vrot.lane.b32.xlu0 %v3230, 28
    %v3254 = vpop.permute.xlu0 %3253
    %3255 = vrot.lane.b32.xlu0 %v3232, 28
    %v3256 = vpop.permute.xlu0 %3255
    %3257 = vrot.lane.b32.xlu0 %v3234, 28
    %v3258 = vpop.permute.xlu0 %3257
    %3259 = vrot.lane.b32.xlu0 %v3236, 28
    %v3260 = vpop.permute.xlu0 %3259
    %3261 = vrot.lane.b32.xlu0 %v3238, 28
    %v3262 = vpop.permute.xlu0 %3261
    %3263 = vrot.lane.b32.xlu0 %v3240, 28
    %v3264 = vpop.permute.xlu0 %3263
    %3265 = vrot.lane.b32.xlu0 %v3242, 28
    %v3266 = vpop.permute.xlu0 %3265
    %3267 = vrot.lane.b32.xlu0 %v3244, 28
    %v3268 = vpop.permute.xlu0 %3267
    %3269 = vrot.lane.b32.xlu0 %v3246, 28
    %v3270 = vpop.permute.xlu0 %3269
    %3271 = vrot.lane.b32.xlu0 %v3248, 28
    %v3272 = vpop.permute.xlu0 %3271
    %3273 = vrot.lane.b32.xlu0 %v3250, 28
    %v3274 = vpop.permute.xlu0 %3273
    %3275 = vrot.lane.b32.xlu0 %v3247, 28
    %v3276 = vpop.permute.xlu0 %3275
    %3277 = vrot.lane.b32.xlu0 %v3249, 28
    %v3278 = vpop.permute.xlu0 %3277
    %vm3279 = vcmask 228352
    %v3280 = vsel %vm3279, %v3252, %v3254
    %v3281 = vsel %vm3279, %v3256, %v3258
    %v3282 = vsel %vm3279, %v3260, %v3262
    %v3283 = vsel %vm3279, %v3264, %v3266
    %v3284 = vsel %vm3279, %v3268, %v3270
    %v3285 = vsel %vm3279, %v3272, %v3274
    %v3286 = vsel %vm3279, %v3276, %v3278
    %v3294 = vadd.f32 %v3210, %v3280
    %v3295 = vadd.f32 %v3211, %v3281
    %v3296 = vadd.f32 %v3212, %v3282
    %v3297 = vadd.f32 %v3213, %v3283
    %v3298 = vadd.f32 %v3214, %v3284
    %v3299 = vadd.f32 %v3215, %v3285
    %v3300 = vadd.f32 %v3216, %v3286
    %v3301 = vld [vmem:[#allocation16] sm:$0x1]
    %v3303 = vlaneseq
    %v3304 = vshrl.u32 %v3303, 7
    %v3305 = vsub.s32 0, %v3304
    %v3306 = vrot.slane %v3301, %v3305
    %v3308 = vadd.f32 %v3294, %v3306
    %v3309 = vadd.f32 %v3295, %v3306
    %v3310 = vadd.f32 %v3296, %v3306
    %v3311 = vadd.f32 %v3297, %v3306
    %v3312 = vadd.f32 %v3298, %v3306
    %v3313 = vadd.f32 %v3299, %v3306
    %v3314 = vadd.f32 %v3300, %v3306
    %v3322 = vrot.slane %v2766, 6
    %v3323 = vrot.slane %v2767, 6
    %v3324 = vsel %vm3091, %v3322, %v3323
    %v3325 = vrot.slane %v2768, 6
    %v3326 = vsel %vm3091, %v3323, %v3325
    %v3327 = vrot.slane %v2769, 6
    %v3328 = vsel %vm3091, %v3325, %v3327
    %v3329 = vrot.slane %v2770, 6
    %v3330 = vsel %vm3091, %v3327, %v3329
    %v3331 = vrot.slane %v2771, 6
    %v3332 = vsel %vm3091, %v3329, %v3331
    %v3333 = vrot.slane %v2772, 6
    %v3334 = vsel %vm3091, %v3331, %v3333
    %v3342 = vsel %vm3091, 0.0, %v3322
    %vm3343 = vcmask 1043456
    %v3344 = vsel %vm3343, %v3334, 0.0
    %v3345 = vpack.c.bf16 %v3324, %v3342
    %v3346 = vpack.c.bf16 %v3328, %v3326
    %v3347 = vpack.c.bf16 %v3332, %v3330
    %v3348 = vpack.c.bf16 %v3344, %v3344
    %v3362 = vunpack.c.l.b16 %v492
    %v3363 = vunpack.c.h.b16 %v492
    %v3364 = vunpack.c.l.b16 %v493
    %v3365 = vunpack.c.h.b16 %v493
    %v3366 = vunpack.c.l.b16 %v494
    %v3367 = vunpack.c.h.b16 %v494
    %v3368 = vunpack.c.l.b16 %v495
    %v3369 = vunpack.c.h.b16 %v495
    %v3370 = vunpack.c.l.b16 %v496
    %v3371 = vunpack.c.h.b16 %v496
    %v3372 = vunpack.c.l.b16 %v497
    %v3373 = vunpack.c.h.b16 %v497
    %v3374 = vunpack.c.l.b16 %v498
    %v3375 = vunpack.c.h.b16 %v498
    %v3376 = vunpack.c.l.b16 %v499
    %v3377 = vunpack.c.h.b16 %v499
    %v3378 = vunpack.c.l.b16 %v500
    %v3379 = vunpack.c.h.b16 %v500
    %v3380 = vunpack.c.l.b16 %v501
    %v3381 = vunpack.c.h.b16 %v501
    %v3382 = vunpack.c.l.b16 %v502
    %v3383 = vunpack.c.h.b16 %v502
    %v3384 = vunpack.c.l.b16 %v503
    %v3385 = vunpack.c.h.b16 %v503
    %v3386 = vunpack.c.l.b16 %v504
    %v3387 = vunpack.c.h.b16 %v504
    %v3388 = vpack.c.b16 %v3364, %v3362
    %v3389 = vpack.c.b16 %v3365, %v3363
    %v3390 = vpack.c.b16 %v3368, %v3366
    %v3391 = vpack.c.b16 %v3369, %v3367
    %v3392 = vpack.c.b16 %v3372, %v3370
    %v3393 = vpack.c.b16 %v3373, %v3371
    %v3394 = vpack.c.b16 %v3376, %v3374
    %v3395 = vpack.c.b16 %v3377, %v3375
    %v3396 = vpack.c.b16 %v3380, %v3378
    %v3397 = vpack.c.b16 %v3381, %v3379
    %v3398 = vpack.c.b16 %v3384, %v3382
    %v3399 = vpack.c.b16 %v3385, %v3383
    %v3400 = vpack.c.b16 %v3386, %v3386
    %v3401 = vpack.c.b16 %v3387, %v3387
    %v3415 = vsel %vm3078, %v3345, 0
    %v3418 = vsel %vm3078, %v3346, 0
    %v3421 = vsel %vm3078, %v3347, 0
    %v3424 = vsel %vm3078, %v3348, 0
    %v3427 = vsel %vm3091, %v3400, 0
    %v3430 = vsel %vm3091, %v3401, 0
    %3432 = vmatprep.subr.bf16.mxu0 %v3389
    %3433 = vmatpush1.bf16.msra.mxu0 %v3388
    %3434 = vmatprep.subr.bf16.mxu0 %v3391
    %3435 = vmatpush1.bf16.msra.mxu0 %v3390
    %3436 = vmatprep.subr.bf16.mxu0 %v3393
    %3437 = vmatpush1.bf16.msra.mxu0 %v3392
    %3438 = vmatprep.subr.bf16.mxu0 %v3395
    %3439 = vmatpush1.bf16.msra.mxu0 %v3394
    %3440 = vmatprep.subr.bf16.mxu0 %v3397
    %3441 = vmatpush1.bf16.msra.mxu0 %v3396
    %3442 = vmatprep.subr.bf16.mxu0 %v3399
    %3443 = vmatpush1.bf16.msra.mxu0 %v3398
    %3444 = vmatprep.subr.bf16.mxu0 %v3430
    %3445 = vmatpush1.bf16.msra.mxu0 %v3427
    %3446 = vmatprep.subr.bf16.mxu0 0
    %3447 = vmatpush1.bf16.msra.mxu0 0
    %3448 = vmatprep.subr.bf16.mxu0 0
    %3449 = vmatpush1.bf16.msra.mxu0 0
    %3450 = vmatprep.subr.bf16.mxu0 0
    %3451 = vmatpush1.bf16.msra.mxu0 0
    %3452 = vmatprep.subr.bf16.mxu0 0
    %3453 = vmatpush1.bf16.msra.mxu0 0
    %3454 = vmatprep.subr.bf16.mxu0 0
    %3455 = vmatpush1.bf16.msra.mxu0 0
    %3456 = vmatprep.subr.bf16.mxu0 0
    %3457 = vmatpush1.bf16.msra.mxu0 0
    %3458 = vmatprep.subr.bf16.mxu0 0
    %3459 = vmatpush1.bf16.msra.mxu0 0
    %3460 = vmatprep.subr.bf16.mxu0 0
    %3461 = vmatpush1.bf16.msra.mxu0 0
    %3462 = vmatprep.subr.bf16.mxu0 0
    %3463 = vmatpush1.bf16.msra.mxu0 0
    %3464 = vmatprep.mubr.bf16.mxu0 0
    %3465 = vmatmul.mubr.bf16.gmra.mrb[0].mxu0 %v3415
    %v3466 = vpop.f32.mrb[0].mxu0
    %v3467 = vadd.f32 0.0, %v3466
    %v3468 = vpop.f32.mrb[0].mxu0
    %v3469 = vadd.f32 0.0, %v3468
    %v3470 = vpop.f32.mrb[0].mxu0
    %v3471 = vadd.f32 0.0, %v3470
    %v3472 = vpop.f32.mrb[0].mxu0
    %v3473 = vadd.f32 0.0, %v3472
    %3474 = vmatprep.mubr.bf16.mxu0 0
    %3475 = vmatmul.mubr.bf16.gmra.mrb[0].mxu0 %v3418
    %v3476 = vpop.f32.mrb[0].mxu0
    %v3477 = vadd.f32 0.0, %v3476
    %v3478 = vpop.f32.mrb[0].mxu0
    %v3479 = vadd.f32 0.0, %v3478
    %v3480 = vpop.f32.mrb[0].mxu0
    %v3481 = vadd.f32 0.0, %v3480
    %v3482 = vpop.f32.mrb[0].mxu0
    %v3483 = vadd.f32 0.0, %v3482
    %3484 = vmatprep.mubr.bf16.mxu0 0
    %3485 = vmatmul.mubr.bf16.gmra.mrb[0].mxu0 %v3421
    %v3486 = vpop.f32.mrb[0].mxu0
    %v3487 = vadd.f32 0.0, %v3486
    %v3488 = vpop.f32.mrb[0].mxu0
    %v3489 = vadd.f32 0.0, %v3488
    %v3490 = vpop.f32.mrb[0].mxu0
    %v3491 = vadd.f32 0.0, %v3490
    %v3492 = vpop.f32.mrb[0].mxu0
    %v3493 = vadd.f32 0.0, %v3492
    %3494 = vmatprep.mubr.bf16.mxu0 0
    %3495 = vmatmul.mubr.bf16.gmra.mrb[0].mxu0 %v3424
    %v3496 = vpop.f32.mrb[0].mxu0
    %v3497 = vadd.f32 0.0, %v3496
    %v3498 = vpop.f32.mrb[0].mxu0
    %v3499 = vadd.f32 0.0, %v3498
    %v3500 = vpop.f32.mrb[0].mxu0
    %v3501 = vpop.f32.mrb[0].mxu0
    %3502 = vdwg.mxu0
    %v3503 = vld [vmem:[#allocation19] sm:$0x1]
    %v3505 = vlaneseq
    %v3506 = vshrl.u32 %v3505, 7
    %v3507 = vsub.s32 0, %v3506
    %v3508 = vrot.slane %v3503, %v3507
    %v3510 = vadd.f32 %v3467, %v3508
    %v3511 = vadd.f32 %v3471, %v3508
    %v3512 = vadd.f32 %v3477, %v3508
    %v3513 = vadd.f32 %v3481, %v3508
    %v3514 = vadd.f32 %v3487, %v3508
    %v3515 = vadd.f32 %v3491, %v3508
    %v3516 = vadd.f32 %v3497, %v3508
    %v3524 = vrot.slane %v3467, 1
    %v3525 = vrot.slane %v3471, 1
    %v3526 = vsel %vm2641, %v3524, %v3525
    %v3527 = vrot.slane %v3477, 1
    %v3528 = vsel %vm2641, %v3525, %v3527
    %v3529 = vrot.slane %v3481, 1
    %v3530 = vsel %vm2641, %v3527, %v3529
    %v3531 = vrot.slane %v3487, 1
    %v3532 = vsel %vm2641, %v3529, %v3531
    %v3533 = vrot.slane %v3491, 1
    %v3534 = vsel %vm2641, %v3531, %v3533
    %v3535 = vrot.slane %v3497, 1
    %v3536 = vsel %vm2641, %v3533, %v3535
    %3537 = vrot.lane.b32.xlu0 %v3526, 78
    %v3538 = vpop.permute.xlu0 %3537
    %3539 = vrot.lane.b32.xlu0 %v3528, 78
    %v3540 = vpop.permute.xlu0 %3539
    %3541 = vrot.lane.b32.xlu0 %v3530, 78
    %v3542 = vpop.permute.xlu0 %3541
    %3543 = vrot.lane.b32.xlu0 %v3532, 78
    %v3544 = vpop.permute.xlu0 %3543
    %3545 = vrot.lane.b32.xlu0 %v3534, 78
    %v3546 = vpop.permute.xlu0 %3545
    %3547 = vrot.lane.b32.xlu0 %v3536, 78
    %v3548 = vpop.permute.xlu0 %3547
    %3549 = vrot.lane.b32.xlu0 %v3535, 78
    %v3550 = vpop.permute.xlu0 %3549
    %v3558 = vadd.f32 %v3510, %v3538
    %v3559 = vadd.f32 %v3511, %v3540
    %v3560 = vadd.f32 %v3512, %v3542
    %v3561 = vadd.f32 %v3513, %v3544
    %v3562 = vadd.f32 %v3514, %v3546
    %v3563 = vadd.f32 %v3515, %v3548
    %v3564 = vadd.f32 %v3516, %v3550
    %v3572 = vrot.slane %v3467, 2
    %v3573 = vrot.slane %v3471, 2
    %v3574 = vsel %vm3224, %v3572, %v3573
    %v3575 = vrot.slane %v3469, 2
    %v3576 = vrot.slane %v3473, 2
    %v3577 = vsel %vm3224, %v3575, %v3576
    %v3578 = vrot.slane %v3477, 2
    %v3579 = vsel %vm3224, %v3573, %v3578
    %v3580 = vrot.slane %v3479, 2
    %v3581 = vsel %vm3224, %v3576, %v3580
    %v3582 = vrot.slane %v3481, 2
    %v3583 = vsel %vm3224, %v3578, %v3582
    %v3584 = vrot.slane %v3483, 2
    %v3585 = vsel %vm3224, %v3580, %v3584
    %v3586 = vrot.slane %v3487, 2
    %v3587 = vsel %vm3224, %v3582, %v3586
    %v3588 = vrot.slane %v3489, 2
    %v3589 = vsel %vm3224, %v3584, %v3588
    %v3590 = vrot.slane %v3491, 2
    %v3591 = vsel %vm3224, %v3586, %v3590
    %v3592 = vrot.slane %v3493, 2
    %v3593 = vsel %vm3224, %v3588, %v3592
    %v3594 = vrot.slane %v3497, 2
    %v3595 = vsel %vm3224, %v3590, %v3594
    %v3596 = vrot.slane %v3499, 2
    %v3597 = vsel %vm3224, %v3592, %v3596
    %3598 = vrot.lane.b32.xlu0 %v3574, 28
    %v3599 = vpop.permute.xlu0 %3598
    %3600 = vrot.lane.b32.xlu0 %v3577, 28
    %v3601 = vpop.permute.xlu0 %3600
    %3602 = vrot.lane.b32.xlu0 %v3579, 28
    %v3603 = vpop.permute.xlu0 %3602
    %3604 = vrot.lane.b32.xlu0 %v3581, 28
    %v3605 = vpop.permute.xlu0 %3604
    %3606 = vrot.lane.b32.xlu0 %v3583, 28
    %v3607 = vpop.permute.xlu0 %3606
    %3608 = vrot.lane.b32.xlu0 %v3585, 28
    %v3609 = vpop.permute.xlu0 %3608
    %3610 = vrot.lane.b32.xlu0 %v3587, 28
    %v3611 = vpop.permute.xlu0 %3610
    %3612 = vrot.lane.b32.xlu0 %v3589, 28
    %v3613 = vpop.permute.xlu0 %3612
    %3614 = vrot.lane.b32.xlu0 %v3591, 28
    %v3615 = vpop.permute.xlu0 %3614
    %3616 = vrot.lane.b32.xlu0 %v3593, 28
    %v3617 = vpop.permute.xlu0 %3616
    %3618 = vrot.lane.b32.xlu0 %v3595, 28
    %v3619 = vpop.permute.xlu0 %3618
    %3620 = vrot.lane.b32.xlu0 %v3597, 28
    %v3621 = vpop.permute.xlu0 %3620
    %3622 = vrot.lane.b32.xlu0 %v3594, 28
    %v3623 = vpop.permute.xlu0 %3622
    %3624 = vrot.lane.b32.xlu0 %v3596, 28
    %v3625 = vpop.permute.xlu0 %3624
    %v3626 = vsel %vm3279, %v3599, %v3601
    %v3627 = vsel %vm3279, %v3603, %v3605
    %v3628 = vsel %vm3279, %v3607, %v3609
    %v3629 = vsel %vm3279, %v3611, %v3613
    %v3630 = vsel %vm3279, %v3615, %v3617
    %v3631 = vsel %vm3279, %v3619, %v3621
    %v3632 = vsel %vm3279, %v3623, %v3625
    %v3640 = vadd.f32 %v3558, %v3626
    %v3641 = vadd.f32 %v3559, %v3627
    %v3642 = vadd.f32 %v3560, %v3628
    %v3643 = vadd.f32 %v3561, %v3629
    %v3644 = vadd.f32 %v3562, %v3630
    %v3645 = vadd.f32 %v3563, %v3631
    %v3646 = vadd.f32 %v3564, %v3632
    %vm3647 = vcmask 1044480
    %v3648 = vrot.slane %v3469, 3
    %v3649 = vrot.slane %v3473, 3
    %v3650 = vsel %vm3647, %v3648, %v3649
    %v3651 = vrot.slane %v3479, 3
    %v3652 = vsel %vm3647, %v3649, %v3651
    %v3653 = vrot.slane %v3483, 3
    %v3654 = vsel %vm3647, %v3651, %v3653
    %v3655 = vrot.slane %v3489, 3
    %v3656 = vsel %vm3647, %v3653, %v3655
    %v3657 = vrot.slane %v3493, 3
    %v3658 = vsel %vm3647, %v3655, %v3657
    %v3659 = vrot.slane %v3499, 3
    %v3660 = vsel %vm3647, %v3657, %v3659
    %3661 = vrot.lane.b32.xlu0 %v3650, 106
    %v3662 = vpop.permute.xlu0 %3661
    %3663 = vrot.lane.b32.xlu0 %v3652, 106
    %v3664 = vpop.permute.xlu0 %3663
    %3665 = vrot.lane.b32.xlu0 %v3654, 106
    %v3666 = vpop.permute.xlu0 %3665
    %3667 = vrot.lane.b32.xlu0 %v3656, 106
    %v3668 = vpop.permute.xlu0 %3667
    %3669 = vrot.lane.b32.xlu0 %v3658, 106
    %v3670 = vpop.permute.xlu0 %3669
    %3671 = vrot.lane.b32.xlu0 %v3660, 106
    %v3672 = vpop.permute.xlu0 %3671
    %3673 = vrot.lane.b32.xlu0 %v3659, 106
    %v3674 = vpop.permute.xlu0 %3673
    %v3682 = vadd.f32 %v3640, %v3662
    %v3683 = vadd.f32 %v3641, %v3664
    %v3684 = vadd.f32 %v3642, %v3666
    %v3685 = vadd.f32 %v3643, %v3668
    %v3686 = vadd.f32 %v3644, %v3670
    %v3687 = vadd.f32 %v3645, %v3672
    %v3688 = vadd.f32 %v3646, %v3674
    %v3689 = vrot.slane %v3469, 4
    %v3690 = vrot.slane %v3473, 4
    %v3691 = vsel %vm3343, %v3689, %v3690
    %v3692 = vrot.slane %v3479, 4
    %v3693 = vsel %vm3343, %v3690, %v3692
    %v3694 = vrot.slane %v3483, 4
    %v3695 = vsel %vm3343, %v3692, %v3694
    %v3696 = vrot.slane %v3489, 4
    %v3697 = vsel %vm3343, %v3694, %v3696
    %v3698 = vrot.slane %v3493, 4
    %v3699 = vsel %vm3343, %v3696, %v3698
    %v3700 = vrot.slane %v3499, 4
    %v3701 = vsel %vm3343, %v3698, %v3700
    %3702 = vrot.lane.b32.xlu0 %v3691, 56
    %v3703 = vpop.permute.xlu0 %3702
    %3704 = vrot.lane.b32.xlu0 %v3693, 56
    %v3705 = vpop.permute.xlu0 %3704
    %3706 = vrot.lane.b32.xlu0 %v3695, 56
    %v3707 = vpop.permute.xlu0 %3706
    %3708 = vrot.lane.b32.xlu0 %v3697, 56
    %v3709 = vpop.permute.xlu0 %3708
    %3710 = vrot.lane.b32.xlu0 %v3699, 56
    %v3711 = vpop.permute.xlu0 %3710
    %3712 = vrot.lane.b32.xlu0 %v3701, 56
    %v3713 = vpop.permute.xlu0 %3712
    %3714 = vrot.lane.b32.xlu0 %v3700, 56
    %v3715 = vpop.permute.xlu0 %3714
    %v3723 = vadd.f32 %v3682, %v3703
    %v3724 = vadd.f32 %v3683, %v3705
    %v3725 = vadd.f32 %v3684, %v3707
    %v3726 = vadd.f32 %v3685, %v3709
    %v3727 = vadd.f32 %v3686, %v3711
    %v3728 = vadd.f32 %v3687, %v3713
    %v3729 = vadd.f32 %v3688, %v3715
    %3737 = vrot.lane.b32.xlu0 %v3308, 50
    %v3738 = vpop.permute.xlu0 %3737
    %3739 = vrot.lane.b32.xlu0 %v3309, 50
    %v3740 = vpop.permute.xlu0 %3739
    %3741 = vrot.lane.b32.xlu0 %v3310, 50
    %v3742 = vpop.permute.xlu0 %3741
    %3743 = vrot.lane.b32.xlu0 %v3311, 50
    %v3744 = vpop.permute.xlu0 %3743
    %3745 = vrot.lane.b32.xlu0 %v3312, 50
    %v3746 = vpop.permute.xlu0 %3745
    %3747 = vrot.lane.b32.xlu0 %v3313, 50
    %v3748 = vpop.permute.xlu0 %3747
    %3749 = vrot.lane.b32.xlu0 %v3314, 50
    %v3750 = vpop.permute.xlu0 %3749
    %3765 = vrot.lane.b32.xlu0 %v3723, 100
    %v3766 = vpop.permute.xlu0 %3765
    %3767 = vrot.lane.b32.xlu0 %v3724, 100
    %v3768 = vpop.permute.xlu0 %3767
    %3769 = vrot.lane.b32.xlu0 %v3725, 100
    %v3770 = vpop.permute.xlu0 %3769
    %3771 = vrot.lane.b32.xlu0 %v3726, 100
    %v3772 = vpop.permute.xlu0 %3771
    %3773 = vrot.lane.b32.xlu0 %v3727, 100
    %v3774 = vpop.permute.xlu0 %3773
    %3775 = vrot.lane.b32.xlu0 %v3728, 100
    %v3776 = vpop.permute.xlu0 %3775
    %3777 = vrot.lane.b32.xlu0 %v3729, 100
    %v3778 = vpop.permute.xlu0 %3777
    %3793 = vrot.lane.b32.xlu0 %v2916, 22
    %v3794 = vpop.permute.xlu0 %3793
    %3795 = vrot.lane.b32.xlu0 %v2917, 22
    %v3796 = vpop.permute.xlu0 %3795
    %3797 = vrot.lane.b32.xlu0 %v2918, 22
    %v3798 = vpop.permute.xlu0 %3797
    %3799 = vrot.lane.b32.xlu0 %v2919, 22
    %v3800 = vpop.permute.xlu0 %3799
    %3801 = vrot.lane.b32.xlu0 %v2920, 22
    %v3802 = vpop.permute.xlu0 %3801
    %3803 = vrot.lane.b32.xlu0 %v2921, 22
    %v3804 = vpop.permute.xlu0 %3803
    %3805 = vrot.lane.b32.xlu0 %v2922, 22
    %v3806 = vpop.permute.xlu0 %3805
    %vm3814 = vcmask 408576
    %v3815 = vsel %vm3814, %v2444, %v3738
    %v3816 = vsel %vm3814, %v2445, %v3740
    %v3817 = vsel %vm3814, %v2446, %v3742
    %v3818 = vsel %vm3814, %v2447, %v3744
    %v3819 = vsel %vm3814, %v2448, %v3746
    %v3820 = vsel %vm3814, %v2449, %v3748
    %v3821 = vsel %vm3814, %v2450, %v3750
    %v3822 = vsel %vm3078, %v3815, %v3766
    %v3823 = vsel %vm3078, %v3816, %v3768
    %v3824 = vsel %vm3078, %v3817, %v3770
    %v3825 = vsel %vm3078, %v3818, %v3772
    %v3826 = vsel %vm3078, %v3819, %v3774
    %v3827 = vsel %vm3078, %v3820, %v3776
    %v3828 = vsel %vm3078, %v3821, %v3778
    %vm3829 = vcmask 179200
    %v3830 = vsel %vm3829, %v3766, %v3794
    %v3831 = vsel %vm3829, %v3768, %v3796
    %v3832 = vsel %vm3829, %v3770, %v3798
    %v3833 = vsel %vm3829, %v3772, %v3800
    %v3834 = vsel %vm3829, %v3774, %v3802
    %v3835 = vsel %vm3829, %v3776, %v3804
    %v3836 = vsel %vm3829, %v3778, %v3806
    %3837 = vst [vmem:[%s14] sm:$0xff] %v3822
    %vm3838 = vcmask 588800
    %3839 = vst.msk [vmem:[%s14 + $0x8] sm:$0xff] %vm3838, %v3830
    %3840 = vst [vmem:[%s14 + $0x10] sm:$0xff] %v3823
    %3841 = vst.msk [vmem:[%s14 + $0x18] sm:$0xff] %vm3838, %v3831
    %3842 = vst [vmem:[%s14 + $0x20] sm:$0xff] %v3824
    %3843 = vst.msk [vmem:[%s14 + $0x28] sm:$0xff] %vm3838, %v3832
    %3844 = vst [vmem:[%s14 + $0x30] sm:$0xff] %v3825
    %3845 = vst.msk [vmem:[%s14 + $0x38] sm:$0xff] %vm3838, %v3833
    %3846 = vst [vmem:[%s14 + $0x40] sm:$0xff] %v3826
    %3847 = vst.msk [vmem:[%s14 + $0x48] sm:$0xff] %vm3838, %v3834
    %3848 = vst [vmem:[%s14 + $0x50] sm:$0xff] %v3827
    %3849 = vst.msk [vmem:[%s14 + $0x58] sm:$0xff] %vm3838, %v3835
    %3850 = vst [vmem:[%s14 + $0x60] sm:$0x3] %v3828
    %vm3851 = vcmask 582656
    %3852 = vst.msk [vmem:[%s14 + $0x68] sm:$0x3] %vm3851, %v3836
    %s3853 = scalar_lea.vmem %s0, 336
    %v3854 = vld [vmem:[%s3853] sm:$0xff]
    %v3855 = vld [vmem:[%s3853 + $0x8] sm:$0xff]
    %v3856 = vld [vmem:[%s3853 + $0x10] sm:$0xff]
    %v3857 = vld [vmem:[%s3853 + $0x18] sm:$0xff]
    %v3858 = vld [vmem:[%s3853 + $0x20] sm:$0xff]
    %v3859 = vld [vmem:[%s3853 + $0x28] sm:$0xff]
    %v3860 = vld [vmem:[%s3853 + $0x30] sm:$0xff]
    %v3861 = vld [vmem:[%s3853 + $0x38] sm:$0xff]
    %v3862 = vld [vmem:[%s3853 + $0x40] sm:$0xff]
    %v3863 = vld [vmem:[%s3853 + $0x48] sm:$0xff]
    %v3864 = vld [vmem:[%s3853 + $0x50] sm:$0xff]
    %v3865 = vld [vmem:[%s3853 + $0x58] sm:$0xff]
    %v3866 = vld [vmem:[%s3853 + $0x60] sm:$0xff]
    %v3867 = vld [vmem:[%s3853 + $0x68] sm:$0xff]
    %v3868 = vld [vmem:[%s3853 + $0x70] sm:$0xff]
    %v3869 = vld [vmem:[%s3853 + $0x78] sm:$0xff]
    %v3870 = vld [vmem:[%s3853 + $0x80] sm:$0xff]
    %v3871 = vld [vmem:[%s3853 + $0x88] sm:$0xff]
    %v3872 = vld [vmem:[%s3853 + $0x90] sm:$0xff]
    %v3873 = vld [vmem:[%s3853 + $0x98] sm:$0xff]
    %v3874 = vld [vmem:[%s3853 + $0xa0] sm:$0xff]
    %v3875 = vld [vmem:[%s3853 + $0xa8] sm:$0xff]
    %v3876 = vld [vmem:[%s3853 + $0xb0] sm:$0xff]
    %v3877 = vld [vmem:[%s3853 + $0xb8] sm:$0xff]
    %v3878 = vld [vmem:[%s3853 + $0xc0] sm:$0xff]
    %v3879 = vld [vmem:[%s3853 + $0xc8] sm:$0xff]
    %v3880 = vld [vmem:[%s3853 + $0xd0] sm:$0xff]
    %v3881 = vld [vmem:[%s3853 + $0xd8] sm:$0xff]
    %v3882 = vld [vmem:[%s3853 + $0xe0] sm:$0xff]
    %v3883 = vld [vmem:[%s3853 + $0xe8] sm:$0xff]
    %v3884 = vld [vmem:[%s3853 + $0xf0] sm:$0xff]
    %v3885 = vld [vmem:[%s3853 + $0xf8] sm:$0xff]
    %v3886 = vld [vmem:[%s3853 + $0x100] sm:$0xff]
    %v3887 = vld [vmem:[%s3853 + $0x108] sm:$0xff]
    %v3888 = vld [vmem:[%s3853 + $0x110] sm:$0xff]
    %v3889 = vld [vmem:[%s3853 + $0x118] sm:$0xff]
    %v3890 = vld [vmem:[%s3853 + $0x120] sm:$0x3]
    %v3891 = vld [vmem:[%s3853 + $0x128] sm:$0x3]
    %v3892 = vld [vmem:[%s3853 + $0x130] sm:$0x3]
    %v3893 = vld [vmem:[%s3853 + $0x138] sm:$0x3]
    %v3894 = vld [vmem:[%s3853 + $0x140] sm:$0x3]
    %v3895 = vld [vmem:[%s3853 + $0x148] sm:$0x3]
    %v3896 = vpack.c.bf16 %v3860, %v3854
    %v3897 = vpack.c.bf16 %v3861, %v3855
    %v3898 = vpack.c.bf16 %v3862, %v3856
    %v3899 = vpack.c.bf16 %v3863, %v3857
    %v3900 = vpack.c.bf16 %v3864, %v3858
    %v3901 = vpack.c.bf16 %v3865, %v3859
    %v3902 = vpack.c.bf16 %v3872, %v3866
    %v3903 = vpack.c.bf16 %v3873, %v3867
    %v3904 = vpack.c.bf16 %v3874, %v3868
    %v3905 = vpack.c.bf16 %v3875, %v3869
    %v3906 = vpack.c.bf16 %v3876, %v3870
    %v3907 = vpack.c.bf16 %v3877, %v3871
    %v3908 = vpack.c.bf16 %v3884, %v3878
    %v3909 = vpack.c.bf16 %v3885, %v3879
    %v3910 = vpack.c.bf16 %v3886, %v3880
    %v3911 = vpack.c.bf16 %v3887, %v3881
    %v3912 = vpack.c.bf16 %v3888, %v3882
    %v3913 = vpack.c.bf16 %v3889, %v3883
    %v3914 = vpack.c.bf16 %v3890, %v3890
    %v3915 = vpack.c.bf16 %v3891, %v3891
    %v3916 = vpack.c.bf16 %v3892, %v3892
    %v3917 = vpack.c.bf16 %v3893, %v3893
    %v3918 = vpack.c.bf16 %v3894, %v3894
    %v3919 = vpack.c.bf16 %v3895, %v3895
    %3920 = vmatprep.subr.bf16.mxu0 %v1340
    %3921 = vmatpush1.bf16.msra.mxu0 %v1339
    %3922 = vmatprep.subr.bf16.mxu0 %v1345
    %3923 = vmatpush1.bf16.msra.mxu0 %v1344
    %3924 = vmatprep.subr.bf16.mxu0 %v1350
    %3925 = vmatpush1.bf16.msra.mxu0 %v1349
    %3926 = vmatprep.subr.bf16.mxu0 %v1355
    %3927 = vmatpush1.bf16.msra.mxu0 %v1354
    %3928 = vmatprep.subr.bf16.mxu0 %v1360
    %3929 = vmatpush1.bf16.msra.mxu0 %v1359
    %3930 = vmatprep.subr.bf16.mxu0 %v1365
    %3931 = vmatpush1.bf16.msra.mxu0 %v1364
    %3932 = vmatprep.subr.bf16.mxu0 %v1370
    %3933 = vmatpush1.bf16.msra.mxu0 %v1369
    %3934 = vmatprep.subr.bf16.mxu0 %v1375
    %3935 = vmatpush1.bf16.msra.mxu0 %v1374
    %3936 = vmatprep.subr.bf16.mxu0 %v1380
    %3937 = vmatpush1.bf16.msra.mxu0 %v1379
    %3938 = vmatprep.subr.bf16.mxu0 %v1385
    %3939 = vmatpush1.bf16.msra.mxu0 %v1384
    %3940 = vmatprep.subr.bf16.mxu0 %v1390
    %3941 = vmatpush1.bf16.msra.mxu0 %v1389
    %3942 = vmatprep.subr.bf16.mxu0 %v1395
    %3943 = vmatpush1.bf16.msra.mxu0 %v1394
    %3944 = vmatprep.subr.bf16.mxu0 %v1400
    %3945 = vmatpush1.bf16.msra.mxu0 %v1399
    %3946 = vmatprep.subr.bf16.mxu0 %v1405
    %3947 = vmatpush1.bf16.msra.mxu0 %v1404
    %3948 = vmatprep.subr.bf16.mxu0 %v1410
    %3949 = vmatpush1.bf16.msra.mxu0 %v1409
    %3950 = vmatprep.subr.bf16.mxu0 %v1415
    %3951 = vmatpush1.bf16.msra.mxu0 %v1414
    %3952 = vmatprep.mubr.bf16.mxu0 %v3897
    %3953 = vmatmul.mubr.bf16.gmra.mrb[0].mxu0 %v3896
    %v3954 = vpop.f32.mrb[0].mxu0
    %v3955 = vadd.f32 0.0, %v3954
    %v3956 = vpop.f32.mrb[0].mxu0
    %v3957 = vadd.f32 0.0, %v3956
    %v3958 = vpop.f32.mrb[0].mxu0
    %v3959 = vadd.f32 0.0, %v3958
    %v3960 = vpop.f32.mrb[0].mxu0
    %v3961 = vadd.f32 0.0, %v3960
    %3962 = vmatprep.mubr.bf16.mxu0 %v3903
    %3963 = vmatmul.mubr.bf16.gmra.mrb[0].mxu0 %v3902
    %v3964 = vpop.f32.mrb[0].mxu0
    %v3965 = vadd.f32 0.0, %v3964
    %v3966 = vpop.f32.mrb[0].mxu0
    %v3967 = vadd.f32 0.0, %v3966
    %v3968 = vpop.f32.mrb[0].mxu0
    %v3969 = vadd.f32 0.0, %v3968
    %v3970 = vpop.f32.mrb[0].mxu0
    %v3971 = vadd.f32 0.0, %v3970
    %3972 = vmatprep.mubr.bf16.mxu0 %v3909
    %3973 = vmatmul.mubr.bf16.gmra.mrb[0].mxu0 %v3908
    %v3974 = vpop.f32.mrb[0].mxu0
    %v3975 = vadd.f32 0.0, %v3974
    %v3976 = vpop.f32.mrb[0].mxu0
    %v3977 = vadd.f32 0.0, %v3976
    %v3978 = vpop.f32.mrb[0].mxu0
    %v3979 = vadd.f32 0.0, %v3978
    %v3980 = vpop.f32.mrb[0].mxu0
    %v3981 = vadd.f32 0.0, %v3980
    %3982 = vmatprep.mubr.bf16.mxu0 %v3915
    %3983 = vmatmul.mubr.bf16.gmra.mrb[0].mxu0 %v3914
    %v3984 = vpop.f32.mrb[0].mxu0
    %v3985 = vadd.f32 0.0, %v3984
    %v3986 = vpop.f32.mrb[0].mxu0
    %v3987 = vadd.f32 0.0, %v3986
    %v3988 = vpop.f32.mrb[0].mxu0
    %v3989 = vpop.f32.mrb[0].mxu0
    %3990 = vdwg.mxu0
    %3991 = vmatprep.subr.bf16.mxu0 %v1420
    %3992 = vmatpush1.bf16.msra.mxu0 %v1419
    %3993 = vmatprep.subr.bf16.mxu0 %v1425
    %3994 = vmatpush1.bf16.msra.mxu0 %v1424
    %3995 = vmatprep.subr.bf16.mxu0 %v1430
    %3996 = vmatpush1.bf16.msra.mxu0 %v1429
    %3997 = vmatprep.subr.bf16.mxu0 %v1435
    %3998 = vmatpush1.bf16.msra.mxu0 %v1434
    %3999 = vmatprep.subr.bf16.mxu0 %v1440
    %4000 = vmatpush1.bf16.msra.mxu0 %v1439
    %4001 = vmatprep.subr.bf16.mxu0 %v1445
    %4002 = vmatpush1.bf16.msra.mxu0 %v1444
    %4003 = vmatprep.subr.bf16.mxu0 %v1450
    %4004 = vmatpush1.bf16.msra.mxu0 %v1449
    %4005 = vmatprep.subr.bf16.mxu0 %v1455
    %4006 = vmatpush1.bf16.msra.mxu0 %v1454
    %4007 = vmatprep.subr.bf16.mxu0 %v1460
    %4008 = vmatpush1.bf16.msra.mxu0 %v1459
    %4009 = vmatprep.subr.bf16.mxu0 %v1465
    %4010 = vmatpush1.bf16.msra.mxu0 %v1464
    %4011 = vmatprep.subr.bf16.mxu0 %v1470
    %4012 = vmatpush1.bf16.msra.mxu0 %v1469
    %4013 = vmatprep.subr.bf16.mxu0 %v1475
    %4014 = vmatpush1.bf16.msra.mxu0 %v1474
    %4015 = vmatprep.subr.bf16.mxu0 %v1480
    %4016 = vmatpush1.bf16.msra.mxu0 %v1479
    %4017 = vmatprep.subr.bf16.mxu0 %v1485
    %4018 = vmatpush1.bf16.msra.mxu0 %v1484
    %4019 = vmatprep.subr.bf16.mxu0 %v1490
    %4020 = vmatpush1.bf16.msra.mxu0 %v1489
    %4021 = vmatprep.subr.bf16.mxu0 %v1495
    %4022 = vmatpush1.bf16.msra.mxu0 %v1494
    %4023 = vmatprep.mubr.bf16.mxu0 %v3899
    %4024 = vmatmul.mubr.bf16.gmra.mrb[0].mxu0 %v3898
    %v4025 = vpop.f32.mrb[0].mxu0
    %v4026 = vadd.f32 %v3955, %v4025
    %v4027 = vpop.f32.mrb[0].mxu0
    %v4028 = vadd.f32 %v3957, %v4027
    %v4029 = vpop.f32.mrb[0].mxu0
    %v4030 = vadd.f32 %v3959, %v4029
    %v4031 = vpop.f32.mrb[0].mxu0
    %v4032 = vadd.f32 %v3961, %v4031
    %4033 = vmatprep.mubr.bf16.mxu0 %v3905
    %4034 = vmatmul.mubr.bf16.gmra.mrb[0].mxu0 %v3904
    %v4035 = vpop.f32.mrb[0].mxu0
    %v4036 = vadd.f32 %v3965, %v4035
    %v4037 = vpop.f32.mrb[0].mxu0
    %v4038 = vadd.f32 %v3967, %v4037
    %v4039 = vpop.f32.mrb[0].mxu0
    %v4040 = vadd.f32 %v3969, %v4039
    %v4041 = vpop.f32.mrb[0].mxu0
    %v4042 = vadd.f32 %v3971, %v4041
    %4043 = vmatprep.mubr.bf16.mxu0 %v3911
    %4044 = vmatmul.mubr.bf16.gmra.mrb[0].mxu0 %v3910
    %v4045 = vpop.f32.mrb[0].mxu0
    %v4046 = vadd.f32 %v3975, %v4045
    %v4047 = vpop.f32.mrb[0].mxu0
    %v4048 = vadd.f32 %v3977, %v4047
    %v4049 = vpop.f32.mrb[0].mxu0
    %v4050 = vadd.f32 %v3979, %v4049
    %v4051 = vpop.f32.mrb[0].mxu0
    %v4052 = vadd.f32 %v3981, %v4051
    %4053 = vmatprep.mubr.bf16.mxu0 %v3917
    %4054 = vmatmul.mubr.bf16.gmra.mrb[0].mxu0 %v3916
    %v4055 = vpop.f32.mrb[0].mxu0
    %v4056 = vadd.f32 %v3985, %v4055
    %v4057 = vpop.f32.mrb[0].mxu0
    %v4058 = vadd.f32 %v3987, %v4057
    %v4059 = vpop.f32.mrb[0].mxu0
    %v4060 = vpop.f32.mrb[0].mxu0
    %4061 = vdwg.mxu0
    %4062 = vmatprep.subr.bf16.mxu0 %v1500
    %4063 = vmatpush1.bf16.msra.mxu0 %v1499
    %4064 = vmatprep.subr.bf16.mxu0 %v1505
    %4065 = vmatpush1.bf16.msra.mxu0 %v1504
    %4066 = vmatprep.subr.bf16.mxu0 %v1510
    %4067 = vmatpush1.bf16.msra.mxu0 %v1509
    %4068 = vmatprep.subr.bf16.mxu0 %v1515
    %4069 = vmatpush1.bf16.msra.mxu0 %v1514
    %4070 = vmatprep.subr.bf16.mxu0 %v1520
    %4071 = vmatpush1.bf16.msra.mxu0 %v1519
    %4072 = vmatprep.subr.bf16.mxu0 %v1525
    %4073 = vmatpush1.bf16.msra.mxu0 %v1524
    %4074 = vmatprep.subr.bf16.mxu0 %v1530
    %4075 = vmatpush1.bf16.msra.mxu0 %v1529
    %4076 = vmatprep.subr.bf16.mxu0 %v1535
    %4077 = vmatpush1.bf16.msra.mxu0 %v1534
    %4078 = vmatprep.subr.bf16.mxu0 %v1540
    %4079 = vmatpush1.bf16.msra.mxu0 %v1539
    %4080 = vmatprep.subr.bf16.mxu0 %v1545
    %4081 = vmatpush1.bf16.msra.mxu0 %v1544
    %4082 = vmatprep.subr.bf16.mxu0 %v1550
    %4083 = vmatpush1.bf16.msra.mxu0 %v1549
    %4084 = vmatprep.subr.bf16.mxu0 %v1555
    %4085 = vmatpush1.bf16.msra.mxu0 %v1554
    %4086 = vmatprep.subr.bf16.mxu0 %v1560
    %4087 = vmatpush1.bf16.msra.mxu0 %v1559
    %4088 = vmatprep.subr.bf16.mxu0 %v1565
    %4089 = vmatpush1.bf16.msra.mxu0 %v1564
    %4090 = vmatprep.subr.bf16.mxu0 %v1570
    %4091 = vmatpush1.bf16.msra.mxu0 %v1569
    %4092 = vmatprep.subr.bf16.mxu0 %v1575
    %4093 = vmatpush1.bf16.msra.mxu0 %v1574
    %4094 = vmatprep.mubr.bf16.mxu0 %v3901
    %4095 = vmatmul.mubr.bf16.gmra.mrb[0].mxu0 %v3900
    %v4096 = vpop.f32.mrb[0].mxu0
    %v4097 = vadd.f32 %v4026, %v4096
    %v4098 = vpop.f32.mrb[0].mxu0
    %v4099 = vadd.f32 %v4028, %v4098
    %v4100 = vpop.f32.mrb[0].mxu0
    %v4101 = vadd.f32 %v4030, %v4100
    %v4102 = vpop.f32.mrb[0].mxu0
    %v4103 = vadd.f32 %v4032, %v4102
    %4104 = vmatprep.mubr.bf16.mxu0 %v3907
    %4105 = vmatmul.mubr.bf16.gmra.mrb[0].mxu0 %v3906
    %v4106 = vpop.f32.mrb[0].mxu0
    %v4107 = vadd.f32 %v4036, %v4106
    %v4108 = vpop.f32.mrb[0].mxu0
    %v4109 = vadd.f32 %v4038, %v4108
    %v4110 = vpop.f32.mrb[0].mxu0
    %v4111 = vadd.f32 %v4040, %v4110
    %v4112 = vpop.f32.mrb[0].mxu0
    %v4113 = vadd.f32 %v4042, %v4112
    %4114 = vmatprep.mubr.bf16.mxu0 %v3913
    %4115 = vmatmul.mubr.bf16.gmra.mrb[0].mxu0 %v3912
    %v4116 = vpop.f32.mrb[0].mxu0
    %v4117 = vadd.f32 %v4046, %v4116
    %v4118 = vpop.f32.mrb[0].mxu0
    %v4119 = vadd.f32 %v4048, %v4118
    %v4120 = vpop.f32.mrb[0].mxu0
    %v4121 = vadd.f32 %v4050, %v4120
    %v4122 = vpop.f32.mrb[0].mxu0
    %v4123 = vadd.f32 %v4052, %v4122
    %4124 = vmatprep.mubr.bf16.mxu0 %v3919
    %4125 = vmatmul.mubr.bf16.gmra.mrb[0].mxu0 %v3918
    %v4126 = vpop.f32.mrb[0].mxu0
    %v4127 = vadd.f32 %v4056, %v4126
    %v4128 = vpop.f32.mrb[0].mxu0
    %v4129 = vadd.f32 %v4058, %v4128
    %v4130 = vpop.f32.mrb[0].mxu0
    %v4131 = vpop.f32.mrb[0].mxu0
    %4132 = vdwg.mxu0
    %4133 = vmatprep.subr.bf16.mxu0 %v1342
    %4134 = vmatpush1.bf16.msra.mxu0 %v1341
    %4135 = vmatprep.subr.bf16.mxu0 %v1347
    %4136 = vmatpush1.bf16.msra.mxu0 %v1346
    %4137 = vmatprep.subr.bf16.mxu0 %v1352
    %4138 = vmatpush1.bf16.msra.mxu0 %v1351
    %4139 = vmatprep.subr.bf16.mxu0 %v1357
    %4140 = vmatpush1.bf16.msra.mxu0 %v1356
    %4141 = vmatprep.subr.bf16.mxu0 %v1362
    %4142 = vmatpush1.bf16.msra.mxu0 %v1361
    %4143 = vmatprep.subr.bf16.mxu0 %v1367
    %4144 = vmatpush1.bf16.msra.mxu0 %v1366
    %4145 = vmatprep.subr.bf16.mxu0 %v1372
    %4146 = vmatpush1.bf16.msra.mxu0 %v1371
    %4147 = vmatprep.subr.bf16.mxu0 %v1377
    %4148 = vmatpush1.bf16.msra.mxu0 %v1376
    %4149 = vmatprep.subr.bf16.mxu0 %v1382
    %4150 = vmatpush1.bf16.msra.mxu0 %v1381
    %4151 = vmatprep.subr.bf16.mxu0 %v1387
    %4152 = vmatpush1.bf16.msra.mxu0 %v1386
    %4153 = vmatprep.subr.bf16.mxu0 %v1392
    %4154 = vmatpush1.bf16.msra.mxu0 %v1391
    %4155 = vmatprep.subr.bf16.mxu0 %v1397
    %4156 = vmatpush1.bf16.msra.mxu0 %v1396
    %4157 = vmatprep.subr.bf16.mxu0 %v1402
    %4158 = vmatpush1.bf16.msra.mxu0 %v1401
    %4159 = vmatprep.subr.bf16.mxu0 %v1407
    %4160 = vmatpush1.bf16.msra.mxu0 %v1406
    %4161 = vmatprep.subr.bf16.mxu0 %v1412
    %4162 = vmatpush1.bf16.msra.mxu0 %v1411
    %4163 = vmatprep.subr.bf16.mxu0 %v1417
    %4164 = vmatpush1.bf16.msra.mxu0 %v1416
    %4165 = vmatprep.mubr.bf16.mxu0 %v3897
    %4166 = vmatmul.mubr.bf16.gmra.mrb[0].mxu0 %v3896
    %v4167 = vpop.f32.mrb[0].mxu0
    %v4168 = vadd.f32 0.0, %v4167
    %v4169 = vpop.f32.mrb[0].mxu0
    %v4170 = vadd.f32 0.0, %v4169
    %v4171 = vpop.f32.mrb[0].mxu0
    %v4172 = vadd.f32 0.0, %v4171
    %v4173 = vpop.f32.mrb[0].mxu0
    %v4174 = vadd.f32 0.0, %v4173
    %4175 = vmatprep.mubr.bf16.mxu0 %v3903
    %4176 = vmatmul.mubr.bf16.gmra.mrb[0].mxu0 %v3902
    %v4177 = vpop.f32.mrb[0].mxu0
    %v4178 = vadd.f32 0.0, %v4177
    %v4179 = vpop.f32.mrb[0].mxu0
    %v4180 = vadd.f32 0.0, %v4179
    %v4181 = vpop.f32.mrb[0].mxu0
    %v4182 = vadd.f32 0.0, %v4181
    %v4183 = vpop.f32.mrb[0].mxu0
    %v4184 = vadd.f32 0.0, %v4183
    %4185 = vmatprep.mubr.bf16.mxu0 %v3909
    %4186 = vmatmul.mubr.bf16.gmra.mrb[0].mxu0 %v3908
    %v4187 = vpop.f32.mrb[0].mxu0
    %v4188 = vadd.f32 0.0, %v4187
    %v4189 = vpop.f32.mrb[0].mxu0
    %v4190 = vadd.f32 0.0, %v4189
    %v4191 = vpop.f32.mrb[0].mxu0
    %v4192 = vadd.f32 0.0, %v4191
    %v4193 = vpop.f32.mrb[0].mxu0
    %v4194 = vadd.f32 0.0, %v4193
    %4195 = vmatprep.mubr.bf16.mxu0 %v3915
    %4196 = vmatmul.mubr.bf16.gmra.mrb[0].mxu0 %v3914
    %v4197 = vpop.f32.mrb[0].mxu0
    %v4198 = vadd.f32 0.0, %v4197
    %v4199 = vpop.f32.mrb[0].mxu0
    %v4200 = vadd.f32 0.0, %v4199
    %v4201 = vpop.f32.mrb[0].mxu0
    %v4202 = vpop.f32.mrb[0].mxu0
    %4203 = vdwg.mxu0
    %4204 = vmatprep.subr.bf16.mxu0 %v1422
    %4205 = vmatpush1.bf16.msra.mxu0 %v1421
    %4206 = vmatprep.subr.bf16.mxu0 %v1427
    %4207 = vmatpush1.bf16.msra.mxu0 %v1426
    %4208 = vmatprep.subr.bf16.mxu0 %v1432
    %4209 = vmatpush1.bf16.msra.mxu0 %v1431
    %4210 = vmatprep.subr.bf16.mxu0 %v1437
    %4211 = vmatpush1.bf16.msra.mxu0 %v1436
    %4212 = vmatprep.subr.bf16.mxu0 %v1442
    %4213 = vmatpush1.bf16.msra.mxu0 %v1441
    %4214 = vmatprep.subr.bf16.mxu0 %v1447
    %4215 = vmatpush1.bf16.msra.mxu0 %v1446
    %4216 = vmatprep.subr.bf16.mxu0 %v1452
    %4217 = vmatpush1.bf16.msra.mxu0 %v1451
    %4218 = vmatprep.subr.bf16.mxu0 %v1457
    %4219 = vmatpush1.bf16.msra.mxu0 %v1456
    %4220 = vmatprep.subr.bf16.mxu0 %v1462
    %4221 = vmatpush1.bf16.msra.mxu0 %v1461
    %4222 = vmatprep.subr.bf16.mxu0 %v1467
    %4223 = vmatpush1.bf16.msra.mxu0 %v1466
    %4224 = vmatprep.subr.bf16.mxu0 %v1472
    %4225 = vmatpush1.bf16.msra.mxu0 %v1471
    %4226 = vmatprep.subr.bf16.mxu0 %v1477
    %4227 = vmatpush1.bf16.msra.mxu0 %v1476
    %4228 = vmatprep.subr.bf16.mxu0 %v1482
    %4229 = vmatpush1.bf16.msra.mxu0 %v1481
    %4230 = vmatprep.subr.bf16.mxu0 %v1487
    %4231 = vmatpush1.bf16.msra.mxu0 %v1486
    %4232 = vmatprep.subr.bf16.mxu0 %v1492
    %4233 = vmatpush1.bf16.msra.mxu0 %v1491
    %4234 = vmatprep.subr.bf16.mxu0 %v1497
    %4235 = vmatpush1.bf16.msra.mxu0 %v1496
    %4236 = vmatprep.mubr.bf16.mxu0 %v3899
    %4237 = vmatmul.mubr.bf16.gmra.mrb[0].mxu0 %v3898
    %v4238 = vpop.f32.mrb[0].mxu0
    %v4239 = vadd.f32 %v4168, %v4238
    %v4240 = vpop.f32.mrb[0].mxu0
    %v4241 = vadd.f32 %v4170, %v4240
    %v4242 = vpop.f32.mrb[0].mxu0
    %v4243 = vadd.f32 %v4172, %v4242
    %v4244 = vpop.f32.mrb[0].mxu0
    %v4245 = vadd.f32 %v4174, %v4244
    %4246 = vmatprep.mubr.bf16.mxu0 %v3905
    %4247 = vmatmul.mubr.bf16.gmra.mrb[0].mxu0 %v3904
    %v4248 = vpop.f32.mrb[0].mxu0
    %v4249 = vadd.f32 %v4178, %v4248
    %v4250 = vpop.f32.mrb[0].mxu0
    %v4251 = vadd.f32 %v4180, %v4250
    %v4252 = vpop.f32.mrb[0].mxu0
    %v4253 = vadd.f32 %v4182, %v4252
    %v4254 = vpop.f32.mrb[0].mxu0
    %v4255 = vadd.f32 %v4184, %v4254
    %4256 = vmatprep.mubr.bf16.mxu0 %v3911
    %4257 = vmatmul.mubr.bf16.gmra.mrb[0].mxu0 %v3910
    %v4258 = vpop.f32.mrb[0].mxu0
    %v4259 = vadd.f32 %v4188, %v4258
    %v4260 = vpop.f32.mrb[0].mxu0
    %v4261 = vadd.f32 %v4190, %v4260
    %v4262 = vpop.f32.mrb[0].mxu0
    %v4263 = vadd.f32 %v4192, %v4262
    %v4264 = vpop.f32.mrb[0].mxu0
    %v4265 = vadd.f32 %v4194, %v4264
    %4266 = vmatprep.mubr.bf16.mxu0 %v3917
    %4267 = vmatmul.mubr.bf16.gmra.mrb[0].mxu0 %v3916
    %v4268 = vpop.f32.mrb[0].mxu0
    %v4269 = vadd.f32 %v4198, %v4268
    %v4270 = vpop.f32.mrb[0].mxu0
    %v4271 = vadd.f32 %v4200, %v4270
    %v4272 = vpop.f32.mrb[0].mxu0
    %v4273 = vpop.f32.mrb[0].mxu0
    %4274 = vdwg.mxu0
    %4275 = vmatprep.subr.bf16.mxu0 %v1502
    %4276 = vmatpush1.bf16.msra.mxu0 %v1501
    %4277 = vmatprep.subr.bf16.mxu0 %v1507
    %4278 = vmatpush1.bf16.msra.mxu0 %v1506
    %4279 = vmatprep.subr.bf16.mxu0 %v1512
    %4280 = vmatpush1.bf16.msra.mxu0 %v1511
    %4281 = vmatprep.subr.bf16.mxu0 %v1517
    %4282 = vmatpush1.bf16.msra.mxu0 %v1516
    %4283 = vmatprep.subr.bf16.mxu0 %v1522
    %4284 = vmatpush1.bf16.msra.mxu0 %v1521
    %4285 = vmatprep.subr.bf16.mxu0 %v1527
    %4286 = vmatpush1.bf16.msra.mxu0 %v1526
    %4287 = vmatprep.subr.bf16.mxu0 %v1532
    %4288 = vmatpush1.bf16.msra.mxu0 %v1531
    %4289 = vmatprep.subr.bf16.mxu0 %v1537
    %4290 = vmatpush1.bf16.msra.mxu0 %v1536
    %4291 = vmatprep.subr.bf16.mxu0 %v1542
    %4292 = vmatpush1.bf16.msra.mxu0 %v1541
    %4293 = vmatprep.subr.bf16.mxu0 %v1547
    %4294 = vmatpush1.bf16.msra.mxu0 %v1546
    %4295 = vmatprep.subr.bf16.mxu0 %v1552
    %4296 = vmatpush1.bf16.msra.mxu0 %v1551
    %4297 = vmatprep.subr.bf16.mxu0 %v1557
    %4298 = vmatpush1.bf16.msra.mxu0 %v1556
    %4299 = vmatprep.subr.bf16.mxu0 %v1562
    %4300 = vmatpush1.bf16.msra.mxu0 %v1561
    %4301 = vmatprep.subr.bf16.mxu0 %v1567
    %4302 = vmatpush1.bf16.msra.mxu0 %v1566
    %4303 = vmatprep.subr.bf16.mxu0 %v1572
    %4304 = vmatpush1.bf16.msra.mxu0 %v1571
    %4305 = vmatprep.subr.bf16.mxu0 %v1577
    %4306 = vmatpush1.bf16.msra.mxu0 %v1576
    %4307 = vmatprep.mubr.bf16.mxu0 %v3901
    %4308 = vmatmul.mubr.bf16.gmra.mrb[0].mxu0 %v3900
    %v4309 = vpop.f32.mrb[0].mxu0
    %v4310 = vadd.f32 %v4239, %v4309
    %v4311 = vpop.f32.mrb[0].mxu0
    %v4312 = vadd.f32 %v4241, %v4311
    %v4313 = vpop.f32.mrb[0].mxu0
    %v4314 = vadd.f32 %v4243, %v4313
    %v4315 = vpop.f32.mrb[0].mxu0
    %v4316 = vadd.f32 %v4245, %v4315
    %4317 = vmatprep.mubr.bf16.mxu0 %v3907
    %4318 = vmatmul.mubr.bf16.gmra.mrb[0].mxu0 %v3906
    %v4319 = vpop.f32.mrb[0].mxu0
    %v4320 = vadd.f32 %v4249, %v4319
    %v4321 = vpop.f32.mrb[0].mxu0
    %v4322 = vadd.f32 %v4251, %v4321
    %v4323 = vpop.f32.mrb[0].mxu0
    %v4324 = vadd.f32 %v4253, %v4323
    %v4325 = vpop.f32.mrb[0].mxu0
    %v4326 = vadd.f32 %v4255, %v4325
    %4327 = vmatprep.mubr.bf16.mxu0 %v3913
    %4328 = vmatmul.mubr.bf16.gmra.mrb[0].mxu0 %v3912
    %v4329 = vpop.f32.mrb[0].mxu0
    %v4330 = vadd.f32 %v4259, %v4329
    %v4331 = vpop.f32.mrb[0].mxu0
    %v4332 = vadd.f32 %v4261, %v4331
    %v4333 = vpop.f32.mrb[0].mxu0
    %v4334 = vadd.f32 %v4263, %v4333
    %v4335 = vpop.f32.mrb[0].mxu0
    %v4336 = vadd.f32 %v4265, %v4335
    %4337 = vmatprep.mubr.bf16.mxu0 %v3919
    %4338 = vmatmul.mubr.bf16.gmra.mrb[0].mxu0 %v3918
    %v4339 = vpop.f32.mrb[0].mxu0
    %v4340 = vadd.f32 %v4269, %v4339
    %v4341 = vpop.f32.mrb[0].mxu0
    %v4342 = vadd.f32 %v4271, %v4341
    %v4343 = vpop.f32.mrb[0].mxu0
    %v4344 = vpop.f32.mrb[0].mxu0
    %4345 = vdwg.mxu0
    %4346 = vmatprep.subr.bf16.mxu0 0
    %4347 = vmatpush1.bf16.msra.mxu0 %v1343
    %4348 = vmatprep.subr.bf16.mxu0 0
    %4349 = vmatpush1.bf16.msra.mxu0 %v1348
    %4350 = vmatprep.subr.bf16.mxu0 0
    %4351 = vmatpush1.bf16.msra.mxu0 %v1353
    %4352 = vmatprep.subr.bf16.mxu0 0
    %4353 = vmatpush1.bf16.msra.mxu0 %v1358
    %4354 = vmatprep.subr.bf16.mxu0 0
    %4355 = vmatpush1.bf16.msra.mxu0 %v1363
    %4356 = vmatprep.subr.bf16.mxu0 0
    %4357 = vmatpush1.bf16.msra.mxu0 %v1368
    %4358 = vmatprep.subr.bf16.mxu0 0
    %4359 = vmatpush1.bf16.msra.mxu0 %v1373
    %4360 = vmatprep.subr.bf16.mxu0 0
    %4361 = vmatpush1.bf16.msra.mxu0 %v1378
    %4362 = vmatprep.subr.bf16.mxu0 0
    %4363 = vmatpush1.bf16.msra.mxu0 %v1383
    %4364 = vmatprep.subr.bf16.mxu0 0
    %4365 = vmatpush1.bf16.msra.mxu0 %v1388
    %4366 = vmatprep.subr.bf16.mxu0 0
    %4367 = vmatpush1.bf16.msra.mxu0 %v1393
    %4368 = vmatprep.subr.bf16.mxu0 0
    %4369 = vmatpush1.bf16.msra.mxu0 %v1398
    %4370 = vmatprep.subr.bf16.mxu0 0
    %4371 = vmatpush1.bf16.msra.mxu0 %v1403
    %4372 = vmatprep.subr.bf16.mxu0 0
    %4373 = vmatpush1.bf16.msra.mxu0 %v1408
    %4374 = vmatprep.subr.bf16.mxu0 0
    %4375 = vmatpush1.bf16.msra.mxu0 %v1413
    %4376 = vmatprep.subr.bf16.mxu0 0
    %4377 = vmatpush1.bf16.msra.mxu0 %v1418
    %4378 = vmatprep.mubr.bf16.mxu0 %v3897
    %4379 = vmatmul.mubr.bf16.gmra.mrb[0].mxu0 %v3896
    %v4380 = vpop.f32.mrb[0].mxu0
    %v4381 = vadd.f32 0.0, %v4380
    %v4382 = vpop.f32.mrb[0].mxu0
    %v4383 = vpop.f32.mrb[0].mxu0
    %v4384 = vadd.f32 0.0, %v4383
    %v4385 = vpop.f32.mrb[0].mxu0
    %4386 = vmatprep.mubr.bf16.mxu0 %v3903
    %4387 = vmatmul.mubr.bf16.gmra.mrb[0].mxu0 %v3902
    %v4388 = vpop.f32.mrb[0].mxu0
    %v4389 = vadd.f32 0.0, %v4388
    %v4390 = vpop.f32.mrb[0].mxu0
    %v4391 = vpop.f32.mrb[0].mxu0
    %v4392 = vadd.f32 0.0, %v4391
    %v4393 = vpop.f32.mrb[0].mxu0
    %4394 = vmatprep.mubr.bf16.mxu0 %v3909
    %4395 = vmatmul.mubr.bf16.gmra.mrb[0].mxu0 %v3908
    %v4396 = vpop.f32.mrb[0].mxu0
    %v4397 = vadd.f32 0.0, %v4396
    %v4398 = vpop.f32.mrb[0].mxu0
    %v4399 = vpop.f32.mrb[0].mxu0
    %v4400 = vadd.f32 0.0, %v4399
    %v4401 = vpop.f32.mrb[0].mxu0
    %4402 = vmatprep.mubr.bf16.mxu0 %v3915
    %4403 = vmatmul.mubr.bf16.gmra.mrb[0].mxu0 %v3914
    %v4404 = vpop.f32.mrb[0].mxu0
    %v4405 = vadd.f32 0.0, %v4404
    %v4406 = vpop.f32.mrb[0].mxu0
    %v4407 = vpop.f32.mrb[0].mxu0
    %v4408 = vpop.f32.mrb[0].mxu0
    %4409 = vdwg.mxu0
    %4410 = vmatprep.subr.bf16.mxu0 0
    %4411 = vmatpush1.bf16.msra.mxu0 %v1423
    %4412 = vmatprep.subr.bf16.mxu0 0
    %4413 = vmatpush1.bf16.msra.mxu0 %v1428
    %4414 = vmatprep.subr.bf16.mxu0 0
    %4415 = vmatpush1.bf16.msra.mxu0 %v1433
    %4416 = vmatprep.subr.bf16.mxu0 0
    %4417 = vmatpush1.bf16.msra.mxu0 %v1438
    %4418 = vmatprep.subr.bf16.mxu0 0
    %4419 = vmatpush1.bf16.msra.mxu0 %v1443
    %4420 = vmatprep.subr.bf16.mxu0 0
    %4421 = vmatpush1.bf16.msra.mxu0 %v1448
    %4422 = vmatprep.subr.bf16.mxu0 0
    %4423 = vmatpush1.bf16.msra.mxu0 %v1453
    %4424 = vmatprep.subr.bf16.mxu0 0
    %4425 = vmatpush1.bf16.msra.mxu0 %v1458
    %4426 = vmatprep.subr.bf16.mxu0 0
    %4427 = vmatpush1.bf16.msra.mxu0 %v1463
    %4428 = vmatprep.subr.bf16.mxu0 0
    %4429 = vmatpush1.bf16.msra.mxu0 %v1468
    %4430 = vmatprep.subr.bf16.mxu0 0
    %4431 = vmatpush1.bf16.msra.mxu0 %v1473
    %4432 = vmatprep.subr.bf16.mxu0 0
    %4433 = vmatpush1.bf16.msra.mxu0 %v1478
    %4434 = vmatprep.subr.bf16.mxu0 0
    %4435 = vmatpush1.bf16.msra.mxu0 %v1483
    %4436 = vmatprep.subr.bf16.mxu0 0
    %4437 = vmatpush1.bf16.msra.mxu0 %v1488
    %4438 = vmatprep.subr.bf16.mxu0 0
    %4439 = vmatpush1.bf16.msra.mxu0 %v1493
    %4440 = vmatprep.subr.bf16.mxu0 0
    %4441 = vmatpush1.bf16.msra.mxu0 %v1498
    %4442 = vmatprep.mubr.bf16.mxu0 %v3899
    %4443 = vmatmul.mubr.bf16.gmra.mrb[0].mxu0 %v3898
    %v4444 = vpop.f32.mrb[0].mxu0
    %v4445 = vadd.f32 %v4381, %v4444
    %v4446 = vpop.f32.mrb[0].mxu0
    %v4447 = vpop.f32.mrb[0].mxu0
    %v4448 = vadd.f32 %v4384, %v4447
    %v4449 = vpop.f32.mrb[0].mxu0
    %4450 = vmatprep.mubr.bf16.mxu0 %v3905
    %4451 = vmatmul.mubr.bf16.gmra.mrb[0].mxu0 %v3904
    %v4452 = vpop.f32.mrb[0].mxu0
    %v4453 = vadd.f32 %v4389, %v4452
    %v4454 = vpop.f32.mrb[0].mxu0
    %v4455 = vpop.f32.mrb[0].mxu0
    %v4456 = vadd.f32 %v4392, %v4455
    %v4457 = vpop.f32.mrb[0].mxu0
    %4458 = vmatprep.mubr.bf16.mxu0 %v3911
    %4459 = vmatmul.mubr.bf16.gmra.mrb[0].mxu0 %v3910
    %v4460 = vpop.f32.mrb[0].mxu0
    %v4461 = vadd.f32 %v4397, %v4460
    %v4462 = vpop.f32.mrb[0].mxu0
    %v4463 = vpop.f32.mrb[0].mxu0
    %v4464 = vadd.f32 %v4400, %v4463
    %v4465 = vpop.f32.mrb[0].mxu0
    %4466 = vmatprep.mubr.bf16.mxu0 %v3917
    %4467 = vmatmul.mubr.bf16.gmra.mrb[0].mxu0 %v3916
    %v4468 = vpop.f32.mrb[0].mxu0
    %v4469 = vadd.f32 %v4405, %v4468
    %v4470 = vpop.f32.mrb[0].mxu0
    %v4471 = vpop.f32.mrb[0].mxu0
    %v4472 = vpop.f32.mrb[0].mxu0
    %4473 = vdwg.mxu0
    %4474 = vmatprep.subr.bf16.mxu0 0
    %4475 = vmatpush1.bf16.msra.mxu0 %v1503
    %4476 = vmatprep.subr.bf16.mxu0 0
    %4477 = vmatpush1.bf16.msra.mxu0 %v1508
    %4478 = vmatprep.subr.bf16.mxu0 0
    %4479 = vmatpush1.bf16.msra.mxu0 %v1513
    %4480 = vmatprep.subr.bf16.mxu0 0
    %4481 = vmatpush1.bf16.msra.mxu0 %v1518
    %4482 = vmatprep.subr.bf16.mxu0 0
    %4483 = vmatpush1.bf16.msra.mxu0 %v1523
    %4484 = vmatprep.subr.bf16.mxu0 0
    %4485 = vmatpush1.bf16.msra.mxu0 %v1528
    %4486 = vmatprep.subr.bf16.mxu0 0
    %4487 = vmatpush1.bf16.msra.mxu0 %v1533
    %4488 = vmatprep.subr.bf16.mxu0 0
    %4489 = vmatpush1.bf16.msra.mxu0 %v1538
    %4490 = vmatprep.subr.bf16.mxu0 0
    %4491 = vmatpush1.bf16.msra.mxu0 %v1543
    %4492 = vmatprep.subr.bf16.mxu0 0
    %4493 = vmatpush1.bf16.msra.mxu0 %v1548
    %4494 = vmatprep.subr.bf16.mxu0 0
    %4495 = vmatpush1.bf16.msra.mxu0 %v1553
    %4496 = vmatprep.subr.bf16.mxu0 0
    %4497 = vmatpush1.bf16.msra.mxu0 %v1558
    %4498 = vmatprep.subr.bf16.mxu0 0
    %4499 = vmatpush1.bf16.msra.mxu0 %v1563
    %4500 = vmatprep.subr.bf16.mxu0 0
    %4501 = vmatpush1.bf16.msra.mxu0 %v1568
    %4502 = vmatprep.subr.bf16.mxu0 0
    %4503 = vmatpush1.bf16.msra.mxu0 %v1573
    %4504 = vmatprep.subr.bf16.mxu0 0
    %4505 = vmatpush1.bf16.msra.mxu0 %v1578
    %4506 = vmatprep.mubr.bf16.mxu0 %v3901
    %4507 = vmatmul.mubr.bf16.gmra.mrb[0].mxu0 %v3900
    %v4508 = vpop.f32.mrb[0].mxu0
    %v4509 = vadd.f32 %v4445, %v4508
    %v4510 = vpop.f32.mrb[0].mxu0
    %v4511 = vpop.f32.mrb[0].mxu0
    %v4512 = vadd.f32 %v4448, %v4511
    %v4513 = vpop.f32.mrb[0].mxu0
    %4514 = vmatprep.mubr.bf16.mxu0 %v3907
    %4515 = vmatmul.mubr.bf16.gmra.mrb[0].mxu0 %v3906
    %v4516 = vpop.f32.mrb[0].mxu0
    %v4517 = vadd.f32 %v4453, %v4516
    %v4518 = vpop.f32.mrb[0].mxu0
    %v4519 = vpop.f32.mrb[0].mxu0
    %v4520 = vadd.f32 %v4456, %v4519
    %v4521 = vpop.f32.mrb[0].mxu0
    %4522 = vmatprep.mubr.bf16.mxu0 %v3913
    %4523 = vmatmul.mubr.bf16.gmra.mrb[0].mxu0 %v3912
    %v4524 = vpop.f32.mrb[0].mxu0
    %v4525 = vadd.f32 %v4461, %v4524
    %v4526 = vpop.f32.mrb[0].mxu0
    %v4527 = vpop.f32.mrb[0].mxu0
    %v4528 = vadd.f32 %v4464, %v4527
    %v4529 = vpop.f32.mrb[0].mxu0
    %4530 = vmatprep.mubr.bf16.mxu0 %v3919
    %4531 = vmatmul.mubr.bf16.gmra.mrb[0].mxu0 %v3918
    %v4532 = vpop.f32.mrb[0].mxu0
    %v4533 = vadd.f32 %v4469, %v4532
    %v4534 = vpop.f32.mrb[0].mxu0
    %v4535 = vpop.f32.mrb[0].mxu0
    %v4536 = vpop.f32.mrb[0].mxu0
    %4537 = vdwg.mxu0
    %v4538 = vld [vmem:[#allocation4] sm:$0x1]
    %v4540 = vlaneseq
    %v4541 = vshrl.u32 %v4540, 7
    %v4542 = vsub.s32 0, %v4541
    %v4543 = vrot.slane %v4538, %v4542
    %v4545 = vadd.f32 %v4097, %v4543
    %v4546 = vadd.f32 %v4101, %v4543
    %v4547 = vadd.f32 %v4107, %v4543
    %v4548 = vadd.f32 %v4111, %v4543
    %v4549 = vadd.f32 %v4117, %v4543
    %v4550 = vadd.f32 %v4121, %v4543
    %v4551 = vadd.f32 %v4127, %v4543
    %v4552 = vld [vmem:[#allocation6] sm:$0x1]
    %v4554 = vlaneseq
    %v4555 = vshrl.u32 %v4554, 7
    %v4556 = vsub.s32 0, %v4555
    %v4557 = vrot.slane %v4552, %v4556
    %4558 = vrot.lane.b32.xlu0 %v4557, 50
    %v4559 = vpop.permute.xlu0 %4558
    %v4561 = vadd.f32 %v4097, %v4559
    %v4562 = vadd.f32 %v4099, %v4559
    %v4563 = vadd.f32 %v4101, %v4559
    %v4564 = vadd.f32 %v4103, %v4559
    %v4565 = vadd.f32 %v4107, %v4559
    %v4566 = vadd.f32 %v4109, %v4559
    %v4567 = vadd.f32 %v4111, %v4559
    %v4568 = vadd.f32 %v4113, %v4559
    %v4569 = vadd.f32 %v4117, %v4559
    %v4570 = vadd.f32 %v4119, %v4559
    %v4571 = vadd.f32 %v4121, %v4559
    %v4572 = vadd.f32 %v4123, %v4559
    %v4573 = vadd.f32 %v4127, %v4559
    %v4574 = vadd.f32 %v4129, %v4559
    %v4575 = vld [vmem:[#allocation7] sm:$0x1]
    %v4577 = vlaneseq
    %v4578 = vshrl.u32 %v4577, 7
    %v4579 = vsub.s32 0, %v4578
    %v4580 = vrot.slane %v4575, %v4579
    %4581 = vrot.lane.b32.xlu0 %v4580, 50
    %v4582 = vpop.permute.xlu0 %4581
    %v4584 = vmul.f32 %v4561, %v4582
    %v4585 = vmul.f32 %v4562, %v4582
    %v4586 = vmul.f32 %v4563, %v4582
    %v4587 = vmul.f32 %v4564, %v4582
    %v4588 = vmul.f32 %v4565, %v4582
    %v4589 = vmul.f32 %v4566, %v4582
    %v4590 = vmul.f32 %v4567, %v4582
    %v4591 = vmul.f32 %v4568, %v4582
    %v4592 = vmul.f32 %v4569, %v4582
    %v4593 = vmul.f32 %v4570, %v4582
    %v4594 = vmul.f32 %v4571, %v4582
    %v4595 = vmul.f32 %v4572, %v4582
    %v4596 = vmul.f32 %v4573, %v4582
    %v4597 = vmul.f32 %v4574, %v4582
    %v4598 = vld [vmem:[#allocation9] sm:$0x1]
    %v4600 = vlaneseq
    %v4601 = vshrl.u32 %v4600, 7
    %v4602 = vsub.s32 0, %v4601
    %v4603 = vrot.slane %v4598, %v4602
    %4604 = vrot.lane.b32.xlu0 %v4603, 50
    %v4605 = vpop.permute.xlu0 %4604
    %v4607 = vadd.f32 %v4584, %v4605
    %v4608 = vadd.f32 %v4585, %v4605
    %v4609 = vadd.f32 %v4586, %v4605
    %v4610 = vadd.f32 %v4587, %v4605
    %v4611 = vadd.f32 %v4588, %v4605
    %v4612 = vadd.f32 %v4589, %v4605
    %v4613 = vadd.f32 %v4590, %v4605
    %v4614 = vadd.f32 %v4591, %v4605
    %v4615 = vadd.f32 %v4592, %v4605
    %v4616 = vadd.f32 %v4593, %v4605
    %v4617 = vadd.f32 %v4594, %v4605
    %v4618 = vadd.f32 %v4595, %v4605
    %v4619 = vadd.f32 %v4596, %v4605
    %v4620 = vadd.f32 %v4597, %v4605
    %v4621 = vmax.f32 %v4607, 0.0
    %v4622 = vmax.f32 %v4608, 0.0
    %v4623 = vmax.f32 %v4609, 0.0
    %v4624 = vmax.f32 %v4610, 0.0
    %v4625 = vmax.f32 %v4611, 0.0
    %v4626 = vmax.f32 %v4612, 0.0
    %v4627 = vmax.f32 %v4613, 0.0
    %v4628 = vmax.f32 %v4614, 0.0
    %v4629 = vmax.f32 %v4615, 0.0
    %v4630 = vmax.f32 %v4616, 0.0
    %v4631 = vmax.f32 %v4617, 0.0
    %v4632 = vmax.f32 %v4618, 0.0
    %v4633 = vmax.f32 %v4619, 0.0
    %v4634 = vmax.f32 %v4620, 0.0
    %v4642 = vrot.slane %v4099, 7
    %v4643 = vrot.slane %v4103, 7
    %v4644 = vsel %vm2541, %v4642, %v4643
    %v4645 = vrot.slane %v4109, 7
    %v4646 = vsel %vm2541, %v4643, %v4645
    %v4647 = vrot.slane %v4113, 7
    %v4648 = vsel %vm2541, %v4645, %v4647
    %v4649 = vrot.slane %v4119, 7
    %v4650 = vsel %vm2541, %v4647, %v4649
    %v4651 = vrot.slane %v4123, 7
    %v4652 = vsel %vm2541, %v4649, %v4651
    %v4653 = vrot.slane %v4129, 7
    %v4654 = vsel %vm2541, %v4651, %v4653
    %4655 = vrot.lane.b32.xlu0 %v4642, 106
    %v4656 = vpop.permute.xlu0 %4655
    %4657 = vrot.lane.b32.xlu0 %v4644, 106
    %v4658 = vpop.permute.xlu0 %4657
    %4659 = vrot.lane.b32.xlu0 %v4646, 106
    %v4660 = vpop.permute.xlu0 %4659
    %4661 = vrot.lane.b32.xlu0 %v4648, 106
    %v4662 = vpop.permute.xlu0 %4661
    %4663 = vrot.lane.b32.xlu0 %v4650, 106
    %v4664 = vpop.permute.xlu0 %4663
    %4665 = vrot.lane.b32.xlu0 %v4652, 106
    %v4666 = vpop.permute.xlu0 %4665
    %4667 = vrot.lane.b32.xlu0 %v4654, 106
    %v4668 = vpop.permute.xlu0 %4667
    %v4676 = vsel %vm2541, 0.0, %v4656
    %4684 = vrot.lane.b32.xlu0 %v4099, 6
    %v4685 = vpop.permute.xlu0 %4684
    %4686 = vrot.lane.b32.xlu0 %v4310, 6
    %v4687 = vpop.permute.xlu0 %4686
    %4688 = vrot.lane.b32.xlu0 %v4103, 6
    %v4689 = vpop.permute.xlu0 %4688
    %4690 = vrot.lane.b32.xlu0 %v4314, 6
    %v4691 = vpop.permute.xlu0 %4690
    %4692 = vrot.lane.b32.xlu0 %v4109, 6
    %v4693 = vpop.permute.xlu0 %4692
    %4694 = vrot.lane.b32.xlu0 %v4320, 6
    %v4695 = vpop.permute.xlu0 %4694
    %4696 = vrot.lane.b32.xlu0 %v4113, 6
    %v4697 = vpop.permute.xlu0 %4696
    %4698 = vrot.lane.b32.xlu0 %v4324, 6
    %v4699 = vpop.permute.xlu0 %4698
    %4700 = vrot.lane.b32.xlu0 %v4119, 6
    %v4701 = vpop.permute.xlu0 %4700
    %4702 = vrot.lane.b32.xlu0 %v4330, 6
    %v4703 = vpop.permute.xlu0 %4702
    %4704 = vrot.lane.b32.xlu0 %v4123, 6
    %v4705 = vpop.permute.xlu0 %4704
    %4706 = vrot.lane.b32.xlu0 %v4334, 6
    %v4707 = vpop.permute.xlu0 %4706
    %4708 = vrot.lane.b32.xlu0 %v4129, 6
    %v4709 = vpop.permute.xlu0 %4708
    %4710 = vrot.lane.b32.xlu0 %v4340, 6
    %v4711 = vpop.permute.xlu0 %4710
    %v4712 = vsel %vm2612, %v4685, %v4687
    %v4713 = vsel %vm2612, %v4689, %v4691
    %v4714 = vsel %vm2612, %v4693, %v4695
    %v4715 = vsel %vm2612, %v4697, %v4699
    %v4716 = vsel %vm2612, %v4701, %v4703
    %v4717 = vsel %vm2612, %v4705, %v4707
    %v4718 = vsel %vm2612, %v4709, %v4711
    %v4726 = vadd.f32 %v4676, %v4712
    %v4727 = vadd.f32 %v4658, %v4713
    %v4728 = vadd.f32 %v4660, %v4714
    %v4729 = vadd.f32 %v4662, %v4715
    %v4730 = vadd.f32 %v4664, %v4716
    %v4731 = vadd.f32 %v4666, %v4717
    %v4732 = vadd.f32 %v4668, %v4718
    %v4740 = vrot.slane %v4310, 1
    %v4741 = vrot.slane %v4314, 1
    %v4742 = vsel %vm2641, %v4740, %v4741
    %v4743 = vrot.slane %v4312, 1
    %v4744 = vrot.slane %v4316, 1
    %v4745 = vsel %vm2641, %v4743, %v4744
    %v4746 = vrot.slane %v4320, 1
    %v4747 = vsel %vm2641, %v4741, %v4746
    %v4748 = vrot.slane %v4322, 1
    %v4749 = vsel %vm2641, %v4744, %v4748
    %v4750 = vrot.slane %v4324, 1
    %v4751 = vsel %vm2641, %v4746, %v4750
    %v4752 = vrot.slane %v4326, 1
    %v4753 = vsel %vm2641, %v4748, %v4752
    %v4754 = vrot.slane %v4330, 1
    %v4755 = vsel %vm2641, %v4750, %v4754
    %v4756 = vrot.slane %v4332, 1
    %v4757 = vsel %vm2641, %v4752, %v4756
    %v4758 = vrot.slane %v4334, 1
    %v4759 = vsel %vm2641, %v4754, %v4758
    %v4760 = vrot.slane %v4336, 1
    %v4761 = vsel %vm2641, %v4756, %v4760
    %v4762 = vrot.slane %v4340, 1
    %v4763 = vsel %vm2641, %v4758, %v4762
    %v4764 = vrot.slane %v4342, 1
    %v4765 = vsel %vm2641, %v4760, %v4764
    %v4768 = vsel %vm2541, %v4762, 0.0
    %v4769 = vsel %vm2541, %v4764, 0.0
    %4772 = vrot.lane.b32.xlu0 %v4742, 34
    %v4773 = vpop.permute.xlu0 %4772
    %4774 = vrot.lane.b32.xlu0 %v4745, 34
    %v4775 = vpop.permute.xlu0 %4774
    %4776 = vrot.lane.b32.xlu0 %v4747, 34
    %v4777 = vpop.permute.xlu0 %4776
    %4778 = vrot.lane.b32.xlu0 %v4749, 34
    %v4779 = vpop.permute.xlu0 %4778
    %4780 = vrot.lane.b32.xlu0 %v4751, 34
    %v4781 = vpop.permute.xlu0 %4780
    %4782 = vrot.lane.b32.xlu0 %v4753, 34
    %v4783 = vpop.permute.xlu0 %4782
    %4784 = vrot.lane.b32.xlu0 %v4755, 34
    %v4785 = vpop.permute.xlu0 %4784
    %4786 = vrot.lane.b32.xlu0 %v4757, 34
    %v4787 = vpop.permute.xlu0 %4786
    %4788 = vrot.lane.b32.xlu0 %v4759, 34
    %v4789 = vpop.permute.xlu0 %4788
    %4790 = vrot.lane.b32.xlu0 %v4761, 34
    %v4791 = vpop.permute.xlu0 %4790
    %4792 = vrot.lane.b32.xlu0 %v4763, 34
    %v4793 = vpop.permute.xlu0 %4792
    %4794 = vrot.lane.b32.xlu0 %v4765, 34
    %v4795 = vpop.permute.xlu0 %4794
    %4796 = vrot.lane.b32.xlu0 %v4768, 34
    %v4797 = vpop.permute.xlu0 %4796
    %4798 = vrot.lane.b32.xlu0 %v4769, 34
    %v4799 = vpop.permute.xlu0 %4798
    %v4800 = vsel %vm2702, %v4773, %v4775
    %v4801 = vsel %vm2702, %v4777, %v4779
    %v4802 = vsel %vm2702, %v4781, %v4783
    %v4803 = vsel %vm2702, %v4785, %v4787
    %v4804 = vsel %vm2702, %v4789, %v4791
    %v4805 = vsel %vm2702, %v4793, %v4795
    %v4806 = vsel %vm2702, %v4797, %v4799
    %v4814 = vadd.f32 %v4726, %v4800
    %v4815 = vadd.f32 %v4727, %v4801
    %v4816 = vadd.f32 %v4728, %v4802
    %v4817 = vadd.f32 %v4729, %v4803
    %v4818 = vadd.f32 %v4730, %v4804
    %v4819 = vadd.f32 %v4731, %v4805
    %v4820 = vadd.f32 %v4732, %v4806
    %v4821 = vld [vmem:[#allocation10] sm:$0x1]
    %v4823 = vlaneseq
    %v4824 = vshrl.u32 %v4823, 7
    %v4825 = vsub.s32 0, %v4824
    %v4826 = vrot.slane %v4821, %v4825
    %v4828 = vadd.f32 %v4814, %v4826
    %v4829 = vadd.f32 %v4815, %v4826
    %v4830 = vadd.f32 %v4816, %v4826
    %v4831 = vadd.f32 %v4817, %v4826
    %v4832 = vadd.f32 %v4818, %v4826
    %v4833 = vadd.f32 %v4819, %v4826
    %v4834 = vadd.f32 %v4820, %v4826
    %v4835 = vld [vmem:[#allocation12] sm:$0x1]
    %v4837 = vlaneseq
    %v4838 = vshrl.u32 %v4837, 7
    %v4839 = vsub.s32 0, %v4838
    %v4840 = vrot.slane %v4835, %v4839
    %v4842 = vmul.f32 %v4828, %v4840
    %v4843 = vmul.f32 %v4829, %v4840
    %v4844 = vmul.f32 %v4830, %v4840
    %v4845 = vmul.f32 %v4831, %v4840
    %v4846 = vmul.f32 %v4832, %v4840
    %v4847 = vmul.f32 %v4833, %v4840
    %v4848 = vmul.f32 %v4834, %v4840
    %v4849 = vld [vmem:[#allocation13] sm:$0x1]
    %v4851 = vlaneseq
    %v4852 = vshrl.u32 %v4851, 7
    %v4853 = vsub.s32 0, %v4852
    %v4854 = vrot.slane %v4849, %v4853
    %v4856 = vadd.f32 %v4842, %v4854
    %v4857 = vadd.f32 %v4843, %v4854
    %v4858 = vadd.f32 %v4844, %v4854
    %v4859 = vadd.f32 %v4845, %v4854
    %v4860 = vadd.f32 %v4846, %v4854
    %v4861 = vadd.f32 %v4847, %v4854
    %v4862 = vadd.f32 %v4848, %v4854
    %v4863 = vmax.f32 %v4856, 0.0
    %v4864 = vmax.f32 %v4857, 0.0
    %v4865 = vmax.f32 %v4858, 0.0
    %v4866 = vmax.f32 %v4859, 0.0
    %v4867 = vmax.f32 %v4860, 0.0
    %v4868 = vmax.f32 %v4861, 0.0
    %v4869 = vmax.f32 %v4862, 0.0
    %v4870 = vrot.slane %v4312, 7
    %v4871 = vrot.slane %v4316, 7
    %v4872 = vsel %vm2541, %v4870, %v4871
    %v4873 = vrot.slane %v4322, 7
    %v4874 = vsel %vm2541, %v4871, %v4873
    %v4875 = vrot.slane %v4326, 7
    %v4876 = vsel %vm2541, %v4873, %v4875
    %v4877 = vrot.slane %v4332, 7
    %v4878 = vsel %vm2541, %v4875, %v4877
    %v4879 = vrot.slane %v4336, 7
    %v4880 = vsel %vm2541, %v4877, %v4879
    %v4881 = vrot.slane %v4342, 7
    %v4882 = vsel %vm2541, %v4879, %v4881
    %4883 = vrot.lane.b32.xlu0 %v4870, 62
    %v4884 = vpop.permute.xlu0 %4883
    %4885 = vrot.lane.b32.xlu0 %v4872, 62
    %v4886 = vpop.permute.xlu0 %4885
    %4887 = vrot.lane.b32.xlu0 %v4874, 62
    %v4888 = vpop.permute.xlu0 %4887
    %4889 = vrot.lane.b32.xlu0 %v4876, 62
    %v4890 = vpop.permute.xlu0 %4889
    %4891 = vrot.lane.b32.xlu0 %v4878, 62
    %v4892 = vpop.permute.xlu0 %4891
    %4893 = vrot.lane.b32.xlu0 %v4880, 62
    %v4894 = vpop.permute.xlu0 %4893
    %4895 = vrot.lane.b32.xlu0 %v4882, 62
    %v4896 = vpop.permute.xlu0 %4895
    %v4904 = vsel %vm2541, 0.0, %v4884
    %4912 = vrot.lane.b32.xlu0 %v4312, 12
    %v4913 = vpop.permute.xlu0 %4912
    %4914 = vrot.lane.b32.xlu0 %v4509, 12
    %v4915 = vpop.permute.xlu0 %4914
    %4916 = vrot.lane.b32.xlu0 %v4316, 12
    %v4917 = vpop.permute.xlu0 %4916
    %4918 = vrot.lane.b32.xlu0 %v4512, 12
    %v4919 = vpop.permute.xlu0 %4918
    %4920 = vrot.lane.b32.xlu0 %v4322, 12
    %v4921 = vpop.permute.xlu0 %4920
    %4922 = vrot.lane.b32.xlu0 %v4517, 12
    %v4923 = vpop.permute.xlu0 %4922
    %4924 = vrot.lane.b32.xlu0 %v4326, 12
    %v4925 = vpop.permute.xlu0 %4924
    %4926 = vrot.lane.b32.xlu0 %v4520, 12
    %v4927 = vpop.permute.xlu0 %4926
    %4928 = vrot.lane.b32.xlu0 %v4332, 12
    %v4929 = vpop.permute.xlu0 %4928
    %4930 = vrot.lane.b32.xlu0 %v4525, 12
    %v4931 = vpop.permute.xlu0 %4930
    %4932 = vrot.lane.b32.xlu0 %v4336, 12
    %v4933 = vpop.permute.xlu0 %4932
    %4934 = vrot.lane.b32.xlu0 %v4528, 12
    %v4935 = vpop.permute.xlu0 %4934
    %4936 = vrot.lane.b32.xlu0 %v4342, 12
    %v4937 = vpop.permute.xlu0 %4936
    %4938 = vrot.lane.b32.xlu0 %v4533, 12
    %v4939 = vpop.permute.xlu0 %4938
    %v4940 = vsel %vm2843, %v4913, %v4915
    %v4941 = vsel %vm2843, %v4917, %v4919
    %v4942 = vsel %vm2843, %v4921, %v4923
    %v4943 = vsel %vm2843, %v4925, %v4927
    %v4944 = vsel %vm2843, %v4929, %v4931
    %v4945 = vsel %vm2843, %v4933, %v4935
    %v4946 = vsel %vm2843, %v4937, %v4939
    %v4954 = vadd.f32 %v4904, %v4940
    %v4955 = vadd.f32 %v4886, %v4941
    %v4956 = vadd.f32 %v4888, %v4942
    %v4957 = vadd.f32 %v4890, %v4943
    %v4958 = vadd.f32 %v4892, %v4944
    %v4959 = vadd.f32 %v4894, %v4945
    %v4960 = vadd.f32 %v4896, %v4946
    %v4961 = vrot.slane %v4509, 1
    %v4962 = vrot.slane %v4512, 1
    %v4963 = vsel %vm2641, %v4961, %v4962
    %v4964 = vrot.slane %v4517, 1
    %v4965 = vsel %vm2641, %v4962, %v4964
    %v4966 = vrot.slane %v4520, 1
    %v4967 = vsel %vm2641, %v4964, %v4966
    %v4968 = vrot.slane %v4525, 1
    %v4969 = vsel %vm2641, %v4966, %v4968
    %v4970 = vrot.slane %v4528, 1
    %v4971 = vsel %vm2641, %v4968, %v4970
    %v4972 = vrot.slane %v4533, 1
    %v4973 = vsel %vm2641, %v4970, %v4972
    %v4975 = vsel %vm2541, %v4972, 0.0
    %4977 = vrot.lane.b32.xlu0 %v4963, 90
    %v4978 = vpop.permute.xlu0 %4977
    %4979 = vrot.lane.b32.xlu0 %v4965, 90
    %v4980 = vpop.permute.xlu0 %4979
    %4981 = vrot.lane.b32.xlu0 %v4967, 90
    %v4982 = vpop.permute.xlu0 %4981
    %4983 = vrot.lane.b32.xlu0 %v4969, 90
    %v4984 = vpop.permute.xlu0 %4983
    %4985 = vrot.lane.b32.xlu0 %v4971, 90
    %v4986 = vpop.permute.xlu0 %4985
    %4987 = vrot.lane.b32.xlu0 %v4973, 90
    %v4988 = vpop.permute.xlu0 %4987
    %4989 = vrot.lane.b32.xlu0 %v4975, 90
    %v4990 = vpop.permute.xlu0 %4989
    %v4998 = vadd.f32 %v4954, %v4978
    %v4999 = vadd.f32 %v4955, %v4980
    %v5000 = vadd.f32 %v4956, %v4982
    %v5001 = vadd.f32 %v4957, %v4984
    %v5002 = vadd.f32 %v4958, %v4986
    %v5003 = vadd.f32 %v4959, %v4988
    %v5004 = vadd.f32 %v4960, %v4990
    %v5005 = vld [vmem:[#allocation15] sm:$0x1]
    %v5007 = vlaneseq
    %v5008 = vshrl.u32 %v5007, 7
    %v5009 = vsub.s32 0, %v5008
    %v5010 = vrot.slane %v5005, %v5009
    %v5012 = vadd.f32 %v4998, %v5010
    %v5013 = vadd.f32 %v4999, %v5010
    %v5014 = vadd.f32 %v5000, %v5010
    %v5015 = vadd.f32 %v5001, %v5010
    %v5016 = vadd.f32 %v5002, %v5010
    %v5017 = vadd.f32 %v5003, %v5010
    %v5018 = vadd.f32 %v5004, %v5010
    %v5033 = vrot.slane %v4621, 7
    %v5034 = vrot.slane %v4622, 7
    %v5035 = vrot.slane %v4623, 7
    %v5036 = vsel %vm2541, %v5033, %v5035
    %v5037 = vrot.slane %v4624, 7
    %v5038 = vsel %vm2541, %v5034, %v5037
    %v5039 = vrot.slane %v4625, 7
    %v5040 = vsel %vm2541, %v5035, %v5039
    %v5041 = vrot.slane %v4626, 7
    %v5042 = vsel %vm2541, %v5037, %v5041
    %v5043 = vrot.slane %v4627, 7
    %v5044 = vsel %vm2541, %v5039, %v5043
    %v5045 = vrot.slane %v4628, 7
    %v5046 = vsel %vm2541, %v5041, %v5045
    %v5047 = vrot.slane %v4629, 7
    %v5048 = vsel %vm2541, %v5043, %v5047
    %v5049 = vrot.slane %v4630, 7
    %v5050 = vsel %vm2541, %v5045, %v5049
    %v5051 = vrot.slane %v4631, 7
    %v5052 = vsel %vm2541, %v5047, %v5051
    %v5053 = vrot.slane %v4632, 7
    %v5054 = vsel %vm2541, %v5049, %v5053
    %v5055 = vrot.slane %v4633, 7
    %v5056 = vsel %vm2541, %v5051, %v5055
    %v5057 = vrot.slane %v4634, 7
    %v5058 = vsel %vm2541, %v5053, %v5057
    %5059 = vrot.lane.b32.xlu0 %v5033, 78
    %v5060 = vpop.permute.xlu0 %5059
    %5061 = vrot.lane.b32.xlu0 %v5034, 78
    %v5062 = vpop.permute.xlu0 %5061
    %5063 = vrot.lane.b32.xlu0 %v5036, 78
    %v5064 = vpop.permute.xlu0 %5063
    %5065 = vrot.lane.b32.xlu0 %v5038, 78
    %v5066 = vpop.permute.xlu0 %5065
    %5067 = vrot.lane.b32.xlu0 %v5040, 78
    %v5068 = vpop.permute.xlu0 %5067
    %5069 = vrot.lane.b32.xlu0 %v5042, 78
    %v5070 = vpop.permute.xlu0 %5069
    %5071 = vrot.lane.b32.xlu0 %v5044, 78
    %v5072 = vpop.permute.xlu0 %5071
    %5073 = vrot.lane.b32.xlu0 %v5046, 78
    %v5074 = vpop.permute.xlu0 %5073
    %5075 = vrot.lane.b32.xlu0 %v5048, 78
    %v5076 = vpop.permute.xlu0 %5075
    %5077 = vrot.lane.b32.xlu0 %v5050, 78
    %v5078 = vpop.permute.xlu0 %5077
    %5079 = vrot.lane.b32.xlu0 %v5052, 78
    %v5080 = vpop.permute.xlu0 %5079
    %5081 = vrot.lane.b32.xlu0 %v5054, 78
    %v5082 = vpop.permute.xlu0 %5081
    %5083 = vrot.lane.b32.xlu0 %v5056, 78
    %v5084 = vpop.permute.xlu0 %5083
    %5085 = vrot.lane.b32.xlu0 %v5058, 78
    %v5086 = vpop.permute.xlu0 %5085
    %v5087 = vsel %vm2991, %v5060, %v5062
    %v5088 = vsel %vm2991, %v5064, %v5066
    %v5089 = vsel %vm2991, %v5068, %v5070
    %v5090 = vsel %vm2991, %v5072, %v5074
    %v5091 = vsel %vm2991, %v5076, %v5078
    %v5092 = vsel %vm2991, %v5080, %v5082
    %v5093 = vsel %vm2991, %v5084, %v5086
    %v5101 = vsel %vm2541, 0.0, %v5087
    %v5102 = vsel %vm3007, %v5093, 0.0
    %v5103 = vpack.c.bf16 %v5088, %v5101
    %v5104 = vpack.c.bf16 %v5090, %v5089
    %v5105 = vpack.c.bf16 %v5092, %v5091
    %v5106 = vpack.c.bf16 %v5102, %v5102
    %v5108 = vsel %vm3078, %v5103, 0
    %v5111 = vsel %vm3078, %v5104, 0
    %v5114 = vsel %vm3078, %v5105, 0
    %v5117 = vsel %vm3078, %v5106, 0
    %5119 = vmatprep.subr.bf16.mxu0 %v3053
    %5120 = vmatpush1.bf16.msra.mxu0 %v3052
    %5121 = vmatprep.subr.bf16.mxu0 %v3055
    %5122 = vmatpush1.bf16.msra.mxu0 %v3054
    %5123 = vmatprep.subr.bf16.mxu0 %v3057
    %5124 = vmatpush1.bf16.msra.mxu0 %v3056
    %5125 = vmatprep.subr.bf16.mxu0 %v3059
    %5126 = vmatpush1.bf16.msra.mxu0 %v3058
    %5127 = vmatprep.subr.bf16.mxu0 %v3061
    %5128 = vmatpush1.bf16.msra.mxu0 %v3060
    %5129 = vmatprep.subr.bf16.mxu0 %v3063
    %5130 = vmatpush1.bf16.msra.mxu0 %v3062
    %5131 = vmatprep.subr.bf16.mxu0 %v3096
    %5132 = vmatpush1.bf16.msra.mxu0 %v3093
    %5133 = vmatprep.subr.bf16.mxu0 0
    %5134 = vmatpush1.bf16.msra.mxu0 0
    %5135 = vmatprep.subr.bf16.mxu0 0
    %5136 = vmatpush1.bf16.msra.mxu0 0
    %5137 = vmatprep.subr.bf16.mxu0 0
    %5138 = vmatpush1.bf16.msra.mxu0 0
    %5139 = vmatprep.subr.bf16.mxu0 0
    %5140 = vmatpush1.bf16.msra.mxu0 0
    %5141 = vmatprep.subr.bf16.mxu0 0
    %5142 = vmatpush1.bf16.msra.mxu0 0
    %5143 = vmatprep.subr.bf16.mxu0 0
    %5144 = vmatpush1.bf16.msra.mxu0 0
    %5145 = vmatprep.subr.bf16.mxu0 0
    %5146 = vmatpush1.bf16.msra.mxu0 0
    %5147 = vmatprep.subr.bf16.mxu0 0
    %5148 = vmatpush1.bf16.msra.mxu0 0
    %5149 = vmatprep.subr.bf16.mxu0 0
    %5150 = vmatpush1.bf16.msra.mxu0 0
    %5151 = vmatprep.mubr.bf16.mxu0 0
    %5152 = vmatmul.mubr.bf16.gmra.mrb[0].mxu0 %v5108
    %v5153 = vpop.f32.mrb[0].mxu0
    %v5154 = vadd.f32 0.0, %v5153
    %v5155 = vpop.f32.mrb[0].mxu0
    %v5156 = vadd.f32 0.0, %v5155
    %v5157 = vpop.f32.mrb[0].mxu0
    %v5158 = vadd.f32 0.0, %v5157
    %v5159 = vpop.f32.mrb[0].mxu0
    %v5160 = vadd.f32 0.0, %v5159
    %5161 = vmatprep.mubr.bf16.mxu0 0
    %5162 = vmatmul.mubr.bf16.gmra.mrb[0].mxu0 %v5111
    %v5163 = vpop.f32.mrb[0].mxu0
    %v5164 = vadd.f32 0.0, %v5163
    %v5165 = vpop.f32.mrb[0].mxu0
    %v5166 = vadd.f32 0.0, %v5165
    %v5167 = vpop.f32.mrb[0].mxu0
    %v5168 = vadd.f32 0.0, %v5167
    %v5169 = vpop.f32.mrb[0].mxu0
    %v5170 = vadd.f32 0.0, %v5169
    %5171 = vmatprep.mubr.bf16.mxu0 0
    %5172 = vmatmul.mubr.bf16.gmra.mrb[0].mxu0 %v5114
    %v5173 = vpop.f32.mrb[0].mxu0
    %v5174 = vadd.f32 0.0, %v5173
    %v5175 = vpop.f32.mrb[0].mxu0
    %v5176 = vadd.f32 0.0, %v5175
    %v5177 = vpop.f32.mrb[0].mxu0
    %v5178 = vadd.f32 0.0, %v5177
    %v5179 = vpop.f32.mrb[0].mxu0
    %v5180 = vadd.f32 0.0, %v5179
    %5181 = vmatprep.mubr.bf16.mxu0 0
    %5182 = vmatmul.mubr.bf16.gmra.mrb[0].mxu0 %v5117
    %v5183 = vpop.f32.mrb[0].mxu0
    %v5184 = vadd.f32 0.0, %v5183
    %v5185 = vpop.f32.mrb[0].mxu0
    %v5186 = vadd.f32 0.0, %v5185
    %v5187 = vpop.f32.mrb[0].mxu0
    %v5188 = vpop.f32.mrb[0].mxu0
    %5189 = vdwg.mxu0
    %v5197 = vrot.slane %v5154, 1
    %v5198 = vrot.slane %v5158, 1
    %v5199 = vsel %vm2641, %v5197, %v5198
    %v5200 = vrot.slane %v5164, 1
    %v5201 = vsel %vm2641, %v5198, %v5200
    %v5202 = vrot.slane %v5168, 1
    %v5203 = vsel %vm2641, %v5200, %v5202
    %v5204 = vrot.slane %v5174, 1
    %v5205 = vsel %vm2641, %v5202, %v5204
    %v5206 = vrot.slane %v5178, 1
    %v5207 = vsel %vm2641, %v5204, %v5206
    %v5208 = vrot.slane %v5184, 1
    %v5209 = vsel %vm2641, %v5206, %v5208
    %5210 = vrot.lane.b32.xlu0 %v5199, 78
    %v5211 = vpop.permute.xlu0 %5210
    %5212 = vrot.lane.b32.xlu0 %v5201, 78
    %v5213 = vpop.permute.xlu0 %5212
    %5214 = vrot.lane.b32.xlu0 %v5203, 78
    %v5215 = vpop.permute.xlu0 %5214
    %5216 = vrot.lane.b32.xlu0 %v5205, 78
    %v5217 = vpop.permute.xlu0 %5216
    %5218 = vrot.lane.b32.xlu0 %v5207, 78
    %v5219 = vpop.permute.xlu0 %5218
    %5220 = vrot.lane.b32.xlu0 %v5209, 78
    %v5221 = vpop.permute.xlu0 %5220
    %5222 = vrot.lane.b32.xlu0 %v5208, 78
    %v5223 = vpop.permute.xlu0 %5222
    %v5231 = vadd.f32 %v5154, %v5211
    %v5232 = vadd.f32 %v5158, %v5213
    %v5233 = vadd.f32 %v5164, %v5215
    %v5234 = vadd.f32 %v5168, %v5217
    %v5235 = vadd.f32 %v5174, %v5219
    %v5236 = vadd.f32 %v5178, %v5221
    %v5237 = vadd.f32 %v5184, %v5223
    %v5245 = vrot.slane %v5154, 2
    %v5246 = vrot.slane %v5158, 2
    %v5247 = vsel %vm3224, %v5245, %v5246
    %v5248 = vrot.slane %v5156, 2
    %v5249 = vrot.slane %v5160, 2
    %v5250 = vsel %vm3224, %v5248, %v5249
    %v5251 = vrot.slane %v5164, 2
    %v5252 = vsel %vm3224, %v5246, %v5251
    %v5253 = vrot.slane %v5166, 2
    %v5254 = vsel %vm3224, %v5249, %v5253
    %v5255 = vrot.slane %v5168, 2
    %v5256 = vsel %vm3224, %v5251, %v5255
    %v5257 = vrot.slane %v5170, 2
    %v5258 = vsel %vm3224, %v5253, %v5257
    %v5259 = vrot.slane %v5174, 2
    %v5260 = vsel %vm3224, %v5255, %v5259
    %v5261 = vrot.slane %v5176, 2
    %v5262 = vsel %vm3224, %v5257, %v5261
    %v5263 = vrot.slane %v5178, 2
    %v5264 = vsel %vm3224, %v5259, %v5263
    %v5265 = vrot.slane %v5180, 2
    %v5266 = vsel %vm3224, %v5261, %v5265
    %v5267 = vrot.slane %v5184, 2
    %v5268 = vsel %vm3224, %v5263, %v5267
    %v5269 = vrot.slane %v5186, 2
    %v5270 = vsel %vm3224, %v5265, %v5269
    %5271 = vrot.lane.b32.xlu0 %v5247, 28
    %v5272 = vpop.permute.xlu0 %5271
    %5273 = vrot.lane.b32.xlu0 %v5250, 28
    %v5274 = vpop.permute.xlu0 %5273
    %5275 = vrot.lane.b32.xlu0 %v5252, 28
    %v5276 = vpop.permute.xlu0 %5275
    %5277 = vrot.lane.b32.xlu0 %v5254, 28
    %v5278 = vpop.permute.xlu0 %5277
    %5279 = vrot.lane.b32.xlu0 %v5256, 28
    %v5280 = vpop.permute.xlu0 %5279
    %5281 = vrot.lane.b32.xlu0 %v5258, 28
    %v5282 = vpop.permute.xlu0 %5281
    %5283 = vrot.lane.b32.xlu0 %v5260, 28
    %v5284 = vpop.permute.xlu0 %5283
    %5285 = vrot.lane.b32.xlu0 %v5262, 28
    %v5286 = vpop.permute.xlu0 %5285
    %5287 = vrot.lane.b32.xlu0 %v5264, 28
    %v5288 = vpop.permute.xlu0 %5287
    %5289 = vrot.lane.b32.xlu0 %v5266, 28
    %v5290 = vpop.permute.xlu0 %5289
    %5291 = vrot.lane.b32.xlu0 %v5268, 28
    %v5292 = vpop.permute.xlu0 %5291
    %5293 = vrot.lane.b32.xlu0 %v5270, 28
    %v5294 = vpop.permute.xlu0 %5293
    %5295 = vrot.lane.b32.xlu0 %v5267, 28
    %v5296 = vpop.permute.xlu0 %5295
    %5297 = vrot.lane.b32.xlu0 %v5269, 28
    %v5298 = vpop.permute.xlu0 %5297
    %v5299 = vsel %vm3279, %v5272, %v5274
    %v5300 = vsel %vm3279, %v5276, %v5278
    %v5301 = vsel %vm3279, %v5280, %v5282
    %v5302 = vsel %vm3279, %v5284, %v5286
    %v5303 = vsel %vm3279, %v5288, %v5290
    %v5304 = vsel %vm3279, %v5292, %v5294
    %v5305 = vsel %vm3279, %v5296, %v5298
    %v5313 = vadd.f32 %v5231, %v5299
    %v5314 = vadd.f32 %v5232, %v5300
    %v5315 = vadd.f32 %v5233, %v5301
    %v5316 = vadd.f32 %v5234, %v5302
    %v5317 = vadd.f32 %v5235, %v5303
    %v5318 = vadd.f32 %v5236, %v5304
    %v5319 = vadd.f32 %v5237, %v5305
    %v5320 = vld [vmem:[#allocation16] sm:$0x1]
    %v5322 = vlaneseq
    %v5323 = vshrl.u32 %v5322, 7
    %v5324 = vsub.s32 0, %v5323
    %v5325 = vrot.slane %v5320, %v5324
    %v5327 = vadd.f32 %v5313, %v5325
    %v5328 = vadd.f32 %v5314, %v5325
    %v5329 = vadd.f32 %v5315, %v5325
    %v5330 = vadd.f32 %v5316, %v5325
    %v5331 = vadd.f32 %v5317, %v5325
    %v5332 = vadd.f32 %v5318, %v5325
    %v5333 = vadd.f32 %v5319, %v5325
    %v5341 = vrot.slane %v4863, 6
    %v5342 = vrot.slane %v4864, 6
    %v5343 = vsel %vm3091, %v5341, %v5342
    %v5344 = vrot.slane %v4865, 6
    %v5345 = vsel %vm3091, %v5342, %v5344
    %v5346 = vrot.slane %v4866, 6
    %v5347 = vsel %vm3091, %v5344, %v5346
    %v5348 = vrot.slane %v4867, 6
    %v5349 = vsel %vm3091, %v5346, %v5348
    %v5350 = vrot.slane %v4868, 6
    %v5351 = vsel %vm3091, %v5348, %v5350
    %v5352 = vrot.slane %v4869, 6
    %v5353 = vsel %vm3091, %v5350, %v5352
    %v5361 = vsel %vm3091, 0.0, %v5341
    %v5362 = vsel %vm3343, %v5353, 0.0
    %v5363 = vpack.c.bf16 %v5343, %v5361
    %v5364 = vpack.c.bf16 %v5347, %v5345
    %v5365 = vpack.c.bf16 %v5351, %v5349
    %v5366 = vpack.c.bf16 %v5362, %v5362
    %v5368 = vsel %vm3078, %v5363, 0
    %v5371 = vsel %vm3078, %v5364, 0
    %v5374 = vsel %vm3078, %v5365, 0
    %v5377 = vsel %vm3078, %v5366, 0
    %5379 = vmatprep.subr.bf16.mxu0 %v3389
    %5380 = vmatpush1.bf16.msra.mxu0 %v3388
    %5381 = vmatprep.subr.bf16.mxu0 %v3391
    %5382 = vmatpush1.bf16.msra.mxu0 %v3390
    %5383 = vmatprep.subr.bf16.mxu0 %v3393
    %5384 = vmatpush1.bf16.msra.mxu0 %v3392
    %5385 = vmatprep.subr.bf16.mxu0 %v3395
    %5386 = vmatpush1.bf16.msra.mxu0 %v3394
    %5387 = vmatprep.subr.bf16.mxu0 %v3397
    %5388 = vmatpush1.bf16.msra.mxu0 %v3396
    %5389 = vmatprep.subr.bf16.mxu0 %v3399
    %5390 = vmatpush1.bf16.msra.mxu0 %v3398
    %5391 = vmatprep.subr.bf16.mxu0 %v3430
    %5392 = vmatpush1.bf16.msra.mxu0 %v3427
    %5393 = vmatprep.subr.bf16.mxu0 0
    %5394 = vmatpush1.bf16.msra.mxu0 0
    %5395 = vmatprep.subr.bf16.mxu0 0
    %5396 = vmatpush1.bf16.msra.mxu0 0
    %5397 = vmatprep.subr.bf16.mxu0 0
    %5398 = vmatpush1.bf16.msra.mxu0 0
    %5399 = vmatprep.subr.bf16.mxu0 0
    %5400 = vmatpush1.bf16.msra.mxu0 0
    %5401 = vmatprep.subr.bf16.mxu0 0
    %5402 = vmatpush1.bf16.msra.mxu0 0
    %5403 = vmatprep.subr.bf16.mxu0 0
    %5404 = vmatpush1.bf16.msra.mxu0 0
    %5405 = vmatprep.subr.bf16.mxu0 0
    %5406 = vmatpush1.bf16.msra.mxu0 0
    %5407 = vmatprep.subr.bf16.mxu0 0
    %5408 = vmatpush1.bf16.msra.mxu0 0
    %5409 = vmatprep.subr.bf16.mxu0 0
    %5410 = vmatpush1.bf16.msra.mxu0 0
    %5411 = vmatprep.mubr.bf16.mxu0 0
    %5412 = vmatmul.mubr.bf16.gmra.mrb[0].mxu0 %v5368
    %v5413 = vpop.f32.mrb[0].mxu0
    %v5414 = vadd.f32 0.0, %v5413
    %v5415 = vpop.f32.mrb[0].mxu0
    %v5416 = vadd.f32 0.0, %v5415
    %v5417 = vpop.f32.mrb[0].mxu0
    %v5418 = vadd.f32 0.0, %v5417
    %v5419 = vpop.f32.mrb[0].mxu0
    %v5420 = vadd.f32 0.0, %v5419
    %5421 = vmatprep.mubr.bf16.mxu0 0
    %5422 = vmatmul.mubr.bf16.gmra.mrb[0].mxu0 %v5371
    %v5423 = vpop.f32.mrb[0].mxu0
    %v5424 = vadd.f32 0.0, %v5423
    %v5425 = vpop.f32.mrb[0].mxu0
    %v5426 = vadd.f32 0.0, %v5425
    %v5427 = vpop.f32.mrb[0].mxu0
    %v5428 = vadd.f32 0.0, %v5427
    %v5429 = vpop.f32.mrb[0].mxu0
    %v5430 = vadd.f32 0.0, %v5429
    %5431 = vmatprep.mubr.bf16.mxu0 0
    %5432 = vmatmul.mubr.bf16.gmra.mrb[0].mxu0 %v5374
    %v5433 = vpop.f32.mrb[0].mxu0
    %v5434 = vadd.f32 0.0, %v5433
    %v5435 = vpop.f32.mrb[0].mxu0
    %v5436 = vadd.f32 0.0, %v5435
    %v5437 = vpop.f32.mrb[0].mxu0
    %v5438 = vadd.f32 0.0, %v5437
    %v5439 = vpop.f32.mrb[0].mxu0
    %v5440 = vadd.f32 0.0, %v5439
    %5441 = vmatprep.mubr.bf16.mxu0 0
    %5442 = vmatmul.mubr.bf16.gmra.mrb[0].mxu0 %v5377
    %v5443 = vpop.f32.mrb[0].mxu0
    %v5444 = vadd.f32 0.0, %v5443
    %v5445 = vpop.f32.mrb[0].mxu0
    %v5446 = vadd.f32 0.0, %v5445
    %v5447 = vpop.f32.mrb[0].mxu0
    %v5448 = vpop.f32.mrb[0].mxu0
    %5449 = vdwg.mxu0
    %v5450 = vld [vmem:[#allocation19] sm:$0x1]
    %v5452 = vlaneseq
    %v5453 = vshrl.u32 %v5452, 7
    %v5454 = vsub.s32 0, %v5453
    %v5455 = vrot.slane %v5450, %v5454
    %v5457 = vadd.f32 %v5414, %v5455
    %v5458 = vadd.f32 %v5418, %v5455
    %v5459 = vadd.f32 %v5424, %v5455
    %v5460 = vadd.f32 %v5428, %v5455
    %v5461 = vadd.f32 %v5434, %v5455
    %v5462 = vadd.f32 %v5438, %v5455
    %v5463 = vadd.f32 %v5444, %v5455
    %v5471 = vrot.slane %v5414, 1
    %v5472 = vrot.slane %v5418, 1
    %v5473 = vsel %vm2641, %v5471, %v5472
    %v5474 = vrot.slane %v5424, 1
    %v5475 = vsel %vm2641, %v5472, %v5474
    %v5476 = vrot.slane %v5428, 1
    %v5477 = vsel %vm2641, %v5474, %v5476
    %v5478 = vrot.slane %v5434, 1
    %v5479 = vsel %vm2641, %v5476, %v5478
    %v5480 = vrot.slane %v5438, 1
    %v5481 = vsel %vm2641, %v5478, %v5480
    %v5482 = vrot.slane %v5444, 1
    %v5483 = vsel %vm2641, %v5480, %v5482
    %5484 = vrot.lane.b32.xlu0 %v5473, 78
    %v5485 = vpop.permute.xlu0 %5484
    %5486 = vrot.lane.b32.xlu0 %v5475, 78
    %v5487 = vpop.permute.xlu0 %5486
    %5488 = vrot.lane.b32.xlu0 %v5477, 78
    %v5489 = vpop.permute.xlu0 %5488
    %5490 = vrot.lane.b32.xlu0 %v5479, 78
    %v5491 = vpop.permute.xlu0 %5490
    %5492 = vrot.lane.b32.xlu0 %v5481, 78
    %v5493 = vpop.permute.xlu0 %5492
    %5494 = vrot.lane.b32.xlu0 %v5483, 78
    %v5495 = vpop.permute.xlu0 %5494
    %5496 = vrot.lane.b32.xlu0 %v5482, 78
    %v5497 = vpop.permute.xlu0 %5496
    %v5505 = vadd.f32 %v5457, %v5485
    %v5506 = vadd.f32 %v5458, %v5487
    %v5507 = vadd.f32 %v5459, %v5489
    %v5508 = vadd.f32 %v5460, %v5491
    %v5509 = vadd.f32 %v5461, %v5493
    %v5510 = vadd.f32 %v5462, %v5495
    %v5511 = vadd.f32 %v5463, %v5497
    %v5519 = vrot.slane %v5414, 2
    %v5520 = vrot.slane %v5418, 2
    %v5521 = vsel %vm3224, %v5519, %v5520
    %v5522 = vrot.slane %v5416, 2
    %v5523 = vrot.slane %v5420, 2
    %v5524 = vsel %vm3224, %v5522, %v5523
    %v5525 = vrot.slane %v5424, 2
    %v5526 = vsel %vm3224, %v5520, %v5525
    %v5527 = vrot.slane %v5426, 2
    %v5528 = vsel %vm3224, %v5523, %v5527
    %v5529 = vrot.slane %v5428, 2
    %v5530 = vsel %vm3224, %v5525, %v5529
    %v5531 = vrot.slane %v5430, 2
    %v5532 = vsel %vm3224, %v5527, %v5531
    %v5533 = vrot.slane %v5434, 2
    %v5534 = vsel %vm3224, %v5529, %v5533
    %v5535 = vrot.slane %v5436, 2
    %v5536 = vsel %vm3224, %v5531, %v5535
    %v5537 = vrot.slane %v5438, 2
    %v5538 = vsel %vm3224, %v5533, %v5537
    %v5539 = vrot.slane %v5440, 2
    %v5540 = vsel %vm3224, %v5535, %v5539
    %v5541 = vrot.slane %v5444, 2
    %v5542 = vsel %vm3224, %v5537, %v5541
    %v5543 = vrot.slane %v5446, 2
    %v5544 = vsel %vm3224, %v5539, %v5543
    %5545 = vrot.lane.b32.xlu0 %v5521, 28
    %v5546 = vpop.permute.xlu0 %5545
    %5547 = vrot.lane.b32.xlu0 %v5524, 28
    %v5548 = vpop.permute.xlu0 %5547
    %5549 = vrot.lane.b32.xlu0 %v5526, 28
    %v5550 = vpop.permute.xlu0 %5549
    %5551 = vrot.lane.b32.xlu0 %v5528, 28
    %v5552 = vpop.permute.xlu0 %5551
    %5553 = vrot.lane.b32.xlu0 %v5530, 28
    %v5554 = vpop.permute.xlu0 %5553
    %5555 = vrot.lane.b32.xlu0 %v5532, 28
    %v5556 = vpop.permute.xlu0 %5555
    %5557 = vrot.lane.b32.xlu0 %v5534, 28
    %v5558 = vpop.permute.xlu0 %5557
    %5559 = vrot.lane.b32.xlu0 %v5536, 28
    %v5560 = vpop.permute.xlu0 %5559
    %5561 = vrot.lane.b32.xlu0 %v5538, 28
    %v5562 = vpop.permute.xlu0 %5561
    %5563 = vrot.lane.b32.xlu0 %v5540, 28
    %v5564 = vpop.permute.xlu0 %5563
    %5565 = vrot.lane.b32.xlu0 %v5542, 28
    %v5566 = vpop.permute.xlu0 %5565
    %5567 = vrot.lane.b32.xlu0 %v5544, 28
    %v5568 = vpop.permute.xlu0 %5567
    %5569 = vrot.lane.b32.xlu0 %v5541, 28
    %v5570 = vpop.permute.xlu0 %5569
    %5571 = vrot.lane.b32.xlu0 %v5543, 28
    %v5572 = vpop.permute.xlu0 %5571
    %v5573 = vsel %vm3279, %v5546, %v5548
    %v5574 = vsel %vm3279, %v5550, %v5552
    %v5575 = vsel %vm3279, %v5554, %v5556
    %v5576 = vsel %vm3279, %v5558, %v5560
    %v5577 = vsel %vm3279, %v5562, %v5564
    %v5578 = vsel %vm3279, %v5566, %v5568
    %v5579 = vsel %vm3279, %v5570, %v5572
    %v5587 = vadd.f32 %v5505, %v5573
    %v5588 = vadd.f32 %v5506, %v5574
    %v5589 = vadd.f32 %v5507, %v5575
    %v5590 = vadd.f32 %v5508, %v5576
    %v5591 = vadd.f32 %v5509, %v5577
    %v5592 = vadd.f32 %v5510, %v5578
    %v5593 = vadd.f32 %v5511, %v5579
    %v5594 = vrot.slane %v5416, 3
    %v5595 = vrot.slane %v5420, 3
    %v5596 = vsel %vm3647, %v5594, %v5595
    %v5597 = vrot.slane %v5426, 3
    %v5598 = vsel %vm3647, %v5595, %v5597
    %v5599 = vrot.slane %v5430, 3
    %v5600 = vsel %vm3647, %v5597, %v5599
    %v5601 = vrot.slane %v5436, 3
    %v5602 = vsel %vm3647, %v5599, %v5601
    %v5603 = vrot.slane %v5440, 3
    %v5604 = vsel %vm3647, %v5601, %v5603
    %v5605 = vrot.slane %v5446, 3
    %v5606 = vsel %vm3647, %v5603, %v5605
    %5607 = vrot.lane.b32.xlu0 %v5596, 106
    %v5608 = vpop.permute.xlu0 %5607
    %5609 = vrot.lane.b32.xlu0 %v5598, 106
    %v5610 = vpop.permute.xlu0 %5609
    %5611 = vrot.lane.b32.xlu0 %v5600, 106
    %v5612 = vpop.permute.xlu0 %5611
    %5613 = vrot.lane.b32.xlu0 %v5602, 106
    %v5614 = vpop.permute.xlu0 %5613
    %5615 = vrot.lane.b32.xlu0 %v5604, 106
    %v5616 = vpop.permute.xlu0 %5615
    %5617 = vrot.lane.b32.xlu0 %v5606, 106
    %v5618 = vpop.permute.xlu0 %5617
    %5619 = vrot.lane.b32.xlu0 %v5605, 106
    %v5620 = vpop.permute.xlu0 %5619
    %v5628 = vadd.f32 %v5587, %v5608
    %v5629 = vadd.f32 %v5588, %v5610
    %v5630 = vadd.f32 %v5589, %v5612
    %v5631 = vadd.f32 %v5590, %v5614
    %v5632 = vadd.f32 %v5591, %v5616
    %v5633 = vadd.f32 %v5592, %v5618
    %v5634 = vadd.f32 %v5593, %v5620
    %v5635 = vrot.slane %v5416, 4
    %v5636 = vrot.slane %v5420, 4
    %v5637 = vsel %vm3343, %v5635, %v5636
    %v5638 = vrot.slane %v5426, 4
    %v5639 = vsel %vm3343, %v5636, %v5638
    %v5640 = vrot.slane %v5430, 4
    %v5641 = vsel %vm3343, %v5638, %v5640
    %v5642 = vrot.slane %v5436, 4
    %v5643 = vsel %vm3343, %v5640, %v5642
    %v5644 = vrot.slane %v5440, 4
    %v5645 = vsel %vm3343, %v5642, %v5644
    %v5646 = vrot.slane %v5446, 4
    %v5647 = vsel %vm3343, %v5644, %v5646
    %5648 = vrot.lane.b32.xlu0 %v5637, 56
    %v5649 = vpop.permute.xlu0 %5648
    %5650 = vrot.lane.b32.xlu0 %v5639, 56
    %v5651 = vpop.permute.xlu0 %5650
    %5652 = vrot.lane.b32.xlu0 %v5641, 56
    %v5653 = vpop.permute.xlu0 %5652
    %5654 = vrot.lane.b32.xlu0 %v5643, 56
    %v5655 = vpop.permute.xlu0 %5654
    %5656 = vrot.lane.b32.xlu0 %v5645, 56
    %v5657 = vpop.permute.xlu0 %5656
    %5658 = vrot.lane.b32.xlu0 %v5647, 56
    %v5659 = vpop.permute.xlu0 %5658
    %5660 = vrot.lane.b32.xlu0 %v5646, 56
    %v5661 = vpop.permute.xlu0 %5660
    %v5669 = vadd.f32 %v5628, %v5649
    %v5670 = vadd.f32 %v5629, %v5651
    %v5671 = vadd.f32 %v5630, %v5653
    %v5672 = vadd.f32 %v5631, %v5655
    %v5673 = vadd.f32 %v5632, %v5657
    %v5674 = vadd.f32 %v5633, %v5659
    %v5675 = vadd.f32 %v5634, %v5661
    %5683 = vrot.lane.b32.xlu0 %v5327, 50
    %v5684 = vpop.permute.xlu0 %5683
    %5685 = vrot.lane.b32.xlu0 %v5328, 50
    %v5686 = vpop.permute.xlu0 %5685
    %5687 = vrot.lane.b32.xlu0 %v5329, 50
    %v5688 = vpop.permute.xlu0 %5687
    %5689 = vrot.lane.b32.xlu0 %v5330, 50
    %v5690 = vpop.permute.xlu0 %5689
    %5691 = vrot.lane.b32.xlu0 %v5331, 50
    %v5692 = vpop.permute.xlu0 %5691
    %5693 = vrot.lane.b32.xlu0 %v5332, 50
    %v5694 = vpop.permute.xlu0 %5693
    %5695 = vrot.lane.b32.xlu0 %v5333, 50
    %v5696 = vpop.permute.xlu0 %5695
    %5711 = vrot.lane.b32.xlu0 %v5669, 100
    %v5712 = vpop.permute.xlu0 %5711
    %5713 = vrot.lane.b32.xlu0 %v5670, 100
    %v5714 = vpop.permute.xlu0 %5713
    %5715 = vrot.lane.b32.xlu0 %v5671, 100
    %v5716 = vpop.permute.xlu0 %5715
    %5717 = vrot.lane.b32.xlu0 %v5672, 100
    %v5718 = vpop.permute.xlu0 %5717
    %5719 = vrot.lane.b32.xlu0 %v5673, 100
    %v5720 = vpop.permute.xlu0 %5719
    %5721 = vrot.lane.b32.xlu0 %v5674, 100
    %v5722 = vpop.permute.xlu0 %5721
    %5723 = vrot.lane.b32.xlu0 %v5675, 100
    %v5724 = vpop.permute.xlu0 %5723
    %5739 = vrot.lane.b32.xlu0 %v5012, 22
    %v5740 = vpop.permute.xlu0 %5739
    %5741 = vrot.lane.b32.xlu0 %v5013, 22
    %v5742 = vpop.permute.xlu0 %5741
    %5743 = vrot.lane.b32.xlu0 %v5014, 22
    %v5744 = vpop.permute.xlu0 %5743
    %5745 = vrot.lane.b32.xlu0 %v5015, 22
    %v5746 = vpop.permute.xlu0 %5745
    %5747 = vrot.lane.b32.xlu0 %v5016, 22
    %v5748 = vpop.permute.xlu0 %5747
    %5749 = vrot.lane.b32.xlu0 %v5017, 22
    %v5750 = vpop.permute.xlu0 %5749
    %5751 = vrot.lane.b32.xlu0 %v5018, 22
    %v5752 = vpop.permute.xlu0 %5751
    %v5760 = vsel %vm3814, %v4545, %v5684
    %v5761 = vsel %vm3814, %v4546, %v5686
    %v5762 = vsel %vm3814, %v4547, %v5688
    %v5763 = vsel %vm3814, %v4548, %v5690
    %v5764 = vsel %vm3814, %v4549, %v5692
    %v5765 = vsel %vm3814, %v4550, %v5694
    %v5766 = vsel %vm3814, %v4551, %v5696
    %v5767 = vsel %vm3078, %v5760, %v5712
    %v5768 = vsel %vm3078, %v5761, %v5714
    %v5769 = vsel %vm3078, %v5762, %v5716
    %v5770 = vsel %vm3078, %v5763, %v5718
    %v5771 = vsel %vm3078, %v5764, %v5720
    %v5772 = vsel %vm3078, %v5765, %v5722
    %v5773 = vsel %vm3078, %v5766, %v5724
    %v5774 = vsel %vm3829, %v5712, %v5740
    %v5775 = vsel %vm3829, %v5714, %v5742
    %v5776 = vsel %vm3829, %v5716, %v5744
    %v5777 = vsel %vm3829, %v5718, %v5746
    %v5778 = vsel %vm3829, %v5720, %v5748
    %v5779 = vsel %vm3829, %v5722, %v5750
    %v5780 = vsel %vm3829, %v5724, %v5752
    %s5781 = scalar_lea.vmem %s14, 112
    %5782 = vst [vmem:[%s5781] sm:$0xff] %v5767
    %5783 = vst.msk [vmem:[%s5781 + $0x8] sm:$0xff] %vm3838, %v5774
    %5784 = vst [vmem:[%s5781 + $0x10] sm:$0xff] %v5768
    %5785 = vst.msk [vmem:[%s5781 + $0x18] sm:$0xff] %vm3838, %v5775
    %5786 = vst [vmem:[%s5781 + $0x20] sm:$0xff] %v5769
    %5787 = vst.msk [vmem:[%s5781 + $0x28] sm:$0xff] %vm3838, %v5776
    %5788 = vst [vmem:[%s5781 + $0x30] sm:$0xff] %v5770
    %5789 = vst.msk [vmem:[%s5781 + $0x38] sm:$0xff] %vm3838, %v5777
    %5790 = vst [vmem:[%s5781 + $0x40] sm:$0xff] %v5771
    %5791 = vst.msk [vmem:[%s5781 + $0x48] sm:$0xff] %vm3838, %v5778
    %5792 = vst [vmem:[%s5781 + $0x50] sm:$0xff] %v5772
    %5793 = vst.msk [vmem:[%s5781 + $0x58] sm:$0xff] %vm3838, %v5779
    %5794 = vst [vmem:[%s5781 + $0x60] sm:$0x3] %v5773
    %5795 = vst.msk [vmem:[%s5781 + $0x68] sm:$0x3] %vm3851, %v5780
    // Predicated region
    $region106: #{bert_net_forward.2} parent=1 // pred_check
      _
    $region107: #{bert_net_forward.2} parent=1 // pred_check_branch
      %5797 = sbr.rel (0) target = $region109
    $region108: #{bert_net_forward.2} parent=1 // pred_region
      _
    $region109: #{bert_net_forward.2} parent=1 // pred_fallthru
      _
    // Predicated region
    $region110: #{bert_net_forward.2} parent=1 // pred_check
      _
    $region111: #{bert_net_forward.2} parent=1 // pred_check_branch
      %5799 = sbr.rel (0) target = $region113
    $region112: #{bert_net_forward.2} parent=1 // pred_region
      _
    $region113: #{bert_net_forward.2} parent=1 // pred_fallthru
      _
    %5800 = vsyncpa [#allocation3], 1
    %5801 = vsyncpa [#allocation5], 1
    %5802 = vsyncpa [#allocation8], 1
    %5803 = vsyncpa [#allocation11], 1
    %5804 = vsyncpa [#allocation14], 1
    %5805 = vsyncpa [#allocation17], 1
    %5806 = vsyncpa [#allocation20], 1

// kernel: bert_net_forward.3
$region0: #{bert_net_forward.3}
  #allocation0 [shape = 'u32[]', space=smem, size = 0x4, offset = 0x4, fixed_abs, tag = 'smem constant byte address 0x4 - core index']
  #allocation1 [shape = 'u32[144,128]{1,0:T(1,128)}', space=vmem, size = 0x12000, scoped, tag = 'internal scratch']
  %s0 = inlined_call_operand.vmem [shape: f32[2,10000], index: 0, kind: input, shape index: {}]
  %s1 = inlined_call_operand.vmem [shape: f32[2,83], index: 1, kind: input, shape index: {}]
  %s2 = inlined_call_operand.vmem [shape: bf16[10000,100], index: 2, kind: input, shape index: {}]
  %s3 = inlined_call_operand.vmem [shape: f32[1,100], index: 3, kind: input, shape index: {}]
  %s4 = inlined_call_operand.vmem [shape: f32[1,100], index: 4, kind: input, shape index: {}]
  %s5 = inlined_call_operand.vmem [shape: f32[1,100], index: 5, kind: input, shape index: {}]
  %s6 = inlined_call_operand.vmem [shape: bf16[100,50], index: 6, kind: input, shape index: {}]
  %s7 = inlined_call_operand.vmem [shape: f32[1,50], index: 7, kind: input, shape index: {}]
  %s8 = inlined_call_operand.vmem [shape: f32[1,50], index: 8, kind: input, shape index: {}]
  %s9 = inlined_call_operand.vmem [shape: f32[1,50], index: 9, kind: input, shape index: {}]
  %s10 = inlined_call_operand.vmem [shape: bf16[83,50], index: 10, kind: input, shape index: {}]
  %s11 = inlined_call_operand.vmem [shape: f32[1,50], index: 11, kind: input, shape index: {}]
  %s12 = inlined_call_operand.vmem [shape: f32[1,50], index: 12, kind: input, shape index: {}]
  %s13 = inlined_call_operand.vmem [shape: f32[1,50], index: 13, kind: input, shape index: {}]
  %s14 = inlined_call_operand.vmem [shape: bf16[50,2], index: 14, kind: input, shape index: {}]
  %s15 = inlined_call_operand.vmem [shape: bf16[50,2], index: 15, kind: input, shape index: {}]
  %s16 = inlined_call_operand.vmem [shape: f32[1,2], index: 16, kind: input, shape index: {}]
  %s17 = inlined_call_operand.hbm [shape: f32[2,2], index: 17, kind: output, shape index: {}]
  %s18 = sld [smem:[#allocation0]]
  $region78: #{bert_net_forward.3} parent=0
    _
  %s20 = ssub.s32 1, %s18
  %s21 = scalar_select 0, %s20, %s18
  $region1: #{bert_net_forward.3} parent=0
    #allocation2 [shape = 'u8[1024]{0}', space=vmem, size = 0x400, scoped, tag = 'output window, operand 0, single buffered']
    #allocation3 [shape = 's32[1]{0}', space=sflag, size = 0x4, scoped, tag = 'scoped memory for bert_net_forward.3']
    %22 = vsyncpa [#allocation3], 0
    // Predicated region
    $region2: #{bert_net_forward.3} parent=1 // pred_check
      _
    $region3: #{bert_net_forward.3} parent=1 // pred_check_branch
      %24 = sbr.rel (0) target = $region5
    $region4: #{bert_net_forward.3} parent=1 // pred_region
      _
    $region5: #{bert_net_forward.3} parent=1 // pred_fallthru
      _
    // Predicated region
    $region6: #{bert_net_forward.3} parent=1 // pred_check
      _
    $region7: #{bert_net_forward.3} parent=1 // pred_check_branch
      %26 = sbr.rel (0) target = $region9
    $region8: #{bert_net_forward.3} parent=1 // pred_region
      _
    $region9: #{bert_net_forward.3} parent=1 // pred_fallthru
      _
    // Predicated region
    $region10: #{bert_net_forward.3} parent=1 // pred_check
      _
    $region11: #{bert_net_forward.3} parent=1 // pred_check_branch
      %28 = sbr.rel (0) target = $region13
    $region12: #{bert_net_forward.3} parent=1 // pred_region
      _
    $region13: #{bert_net_forward.3} parent=1 // pred_fallthru
      _
    // Predicated region
    $region14: #{bert_net_forward.3} parent=1 // pred_check
      _
    $region15: #{bert_net_forward.3} parent=1 // pred_check_branch
      %30 = sbr.rel (0) target = $region17
    $region16: #{bert_net_forward.3} parent=1 // pred_region
      _
    $region17: #{bert_net_forward.3} parent=1 // pred_fallthru
      _
    // Predicated region
    $region18: #{bert_net_forward.3} parent=1 // pred_check
      _
    $region19: #{bert_net_forward.3} parent=1 // pred_check_branch
      %32 = sbr.rel (0) target = $region21
    $region20: #{bert_net_forward.3} parent=1 // pred_region
      _
    $region21: #{bert_net_forward.3} parent=1 // pred_fallthru
      _
    // Predicated region
    $region22: #{bert_net_forward.3} parent=1 // pred_check
      _
    $region23: #{bert_net_forward.3} parent=1 // pred_check_branch
      %34 = sbr.rel (0) target = $region25
    $region24: #{bert_net_forward.3} parent=1 // pred_region
      _
    $region25: #{bert_net_forward.3} parent=1 // pred_fallthru
      _
    // Predicated region
    $region26: #{bert_net_forward.3} parent=1 // pred_check
      _
    $region27: #{bert_net_forward.3} parent=1 // pred_check_branch
      %36 = sbr.rel (0) target = $region29
    $region28: #{bert_net_forward.3} parent=1 // pred_region
      _
    $region29: #{bert_net_forward.3} parent=1 // pred_fallthru
      _
    // Predicated region
    $region30: #{bert_net_forward.3} parent=1 // pred_check
      _
    $region31: #{bert_net_forward.3} parent=1 // pred_check_branch
      %38 = sbr.rel (0) target = $region33
    $region32: #{bert_net_forward.3} parent=1 // pred_region
      _
    $region33: #{bert_net_forward.3} parent=1 // pred_fallthru
      _
    // Predicated region
    $region34: #{bert_net_forward.3} parent=1 // pred_check
      _
    $region35: #{bert_net_forward.3} parent=1 // pred_check_branch
      %40 = sbr.rel (0) target = $region37
    $region36: #{bert_net_forward.3} parent=1 // pred_region
      _
    $region37: #{bert_net_forward.3} parent=1 // pred_fallthru
      _
    // Predicated region
    $region38: #{bert_net_forward.3} parent=1 // pred_check
      _
    $region39: #{bert_net_forward.3} parent=1 // pred_check_branch
      %42 = sbr.rel (0) target = $region41
    $region40: #{bert_net_forward.3} parent=1 // pred_region
      _
    $region41: #{bert_net_forward.3} parent=1 // pred_fallthru
      _
    // Predicated region
    $region42: #{bert_net_forward.3} parent=1 // pred_check
      _
    $region43: #{bert_net_forward.3} parent=1 // pred_check_branch
      %44 = sbr.rel (0) target = $region45
    $region44: #{bert_net_forward.3} parent=1 // pred_region
      _
    $region45: #{bert_net_forward.3} parent=1 // pred_fallthru
      _
    // Predicated region
    $region46: #{bert_net_forward.3} parent=1 // pred_check
      _
    $region47: #{bert_net_forward.3} parent=1 // pred_check_branch
      %46 = sbr.rel (0) target = $region49
    $region48: #{bert_net_forward.3} parent=1 // pred_region
      _
    $region49: #{bert_net_forward.3} parent=1 // pred_fallthru
      _
    // Predicated region
    $region50: #{bert_net_forward.3} parent=1 // pred_check
      _
    $region51: #{bert_net_forward.3} parent=1 // pred_check_branch
      %48 = sbr.rel (0) target = $region53
    $region52: #{bert_net_forward.3} parent=1 // pred_region
      _
    $region53: #{bert_net_forward.3} parent=1 // pred_fallthru
      _
    // Predicated region
    $region54: #{bert_net_forward.3} parent=1 // pred_check
      _
    $region55: #{bert_net_forward.3} parent=1 // pred_check_branch
      %50 = sbr.rel (0) target = $region57
    $region56: #{bert_net_forward.3} parent=1 // pred_region
      _
    $region57: #{bert_net_forward.3} parent=1 // pred_fallthru
      _
    // Predicated region
    $region58: #{bert_net_forward.3} parent=1 // pred_check
      _
    $region59: #{bert_net_forward.3} parent=1 // pred_check_branch
      %52 = sbr.rel (0) target = $region61
    $region60: #{bert_net_forward.3} parent=1 // pred_region
      _
    $region61: #{bert_net_forward.3} parent=1 // pred_fallthru
      _
    // Predicated region
    $region62: #{bert_net_forward.3} parent=1 // pred_check
      _
    $region63: #{bert_net_forward.3} parent=1 // pred_check_branch
      %54 = sbr.rel (0) target = $region65
    $region64: #{bert_net_forward.3} parent=1 // pred_region
      _
    $region65: #{bert_net_forward.3} parent=1 // pred_fallthru
      _
    // Predicated region
    $region66: #{bert_net_forward.3} parent=1 // pred_check
      _
    $region67: #{bert_net_forward.3} parent=1 // pred_check_branch
      %56 = sbr.rel (0) target = $region69
    $region68: #{bert_net_forward.3} parent=1 // pred_region
      _
    $region69: #{bert_net_forward.3} parent=1 // pred_fallthru
      _
    %v58 = vld [vmem:[%s0] sm:$0xff]
    %v59 = vld [vmem:[%s0 + $0x8] sm:$0xff]
    %v60 = vld [vmem:[%s0 + $0x10] sm:$0xff]
    %v61 = vld [vmem:[%s0 + $0x18] sm:$0xff]
    %v62 = vld [vmem:[%s0 + $0x20] sm:$0xff]
    %v63 = vld [vmem:[%s0 + $0x28] sm:$0xff]
    %v64 = vld [vmem:[%s0 + $0x30] sm:$0xff]
    %v65 = vld [vmem:[%s0 + $0x38] sm:$0xff]
    %v66 = vld [vmem:[%s0 + $0x40] sm:$0xff]
    %v67 = vld [vmem:[%s0 + $0x48] sm:$0xff]
    %v68 = vld [vmem:[%s0 + $0x50] sm:$0xff]
    %v69 = vld [vmem:[%s0 + $0x58] sm:$0xff]
    %v70 = vld [vmem:[%s0 + $0x60] sm:$0xff]
    %v71 = vld [vmem:[%s0 + $0x68] sm:$0xff]
    %v72 = vld [vmem:[%s0 + $0x70] sm:$0xff]
    %v73 = vld [vmem:[%s0 + $0x78] sm:$0xff]
    %v74 = vld [vmem:[%s0 + $0x80] sm:$0xff]
    %v75 = vld [vmem:[%s0 + $0x88] sm:$0xff]
    %v76 = vld [vmem:[%s0 + $0x90] sm:$0xff]
    %v77 = vld [vmem:[%s0 + $0x98] sm:$0x3f]
    %v98 = vcombine.high %v58, %v58
    %v100 = vunpack.c.l.s4 1983009808
    %v101 = vunpack.c.0.s8 %v100
    %v102 = vlaneseq
    %v103 = vshrl.u32 %v102, 7
    %v104 = vsub.s32 %v101, %v103
    %v105 = vrot.slane %v58, %v104
    %v107 = vunpack.c.l.s4 1983009808
    %v108 = vunpack.c.0.s8 %v107
    %v109 = vlaneseq
    %v110 = vshrl.u32 %v109, 7
    %v111 = vsub.s32 %v108, %v110
    %v112 = vrot.slane %v98, %v111
    %v113 = vcombine.high %v105, %v105
    %v114 = vcombine.high %v112, %v112
    %v115 = vcombine.high %v59, %v59
    %v117 = vunpack.c.l.s4 1983009808
    %v118 = vunpack.c.0.s8 %v117
    %v119 = vlaneseq
    %v120 = vshrl.u32 %v119, 7
    %v121 = vsub.s32 %v118, %v120
    %v122 = vrot.slane %v59, %v121
    %v124 = vunpack.c.l.s4 1983009808
    %v125 = vunpack.c.0.s8 %v124
    %v126 = vlaneseq
    %v127 = vshrl.u32 %v126, 7
    %v128 = vsub.s32 %v125, %v127
    %v129 = vrot.slane %v115, %v128
    %v130 = vcombine.high %v122, %v122
    %v131 = vcombine.high %v129, %v129
    %v132 = vcombine.high %v60, %v60
    %v134 = vunpack.c.l.s4 1983009808
    %v135 = vunpack.c.0.s8 %v134
    %v136 = vlaneseq
    %v137 = vshrl.u32 %v136, 7
    %v138 = vsub.s32 %v135, %v137
    %v139 = vrot.slane %v60, %v138
    %v141 = vunpack.c.l.s4 1983009808
    %v142 = vunpack.c.0.s8 %v141
    %v143 = vlaneseq
    %v144 = vshrl.u32 %v143, 7
    %v145 = vsub.s32 %v142, %v144
    %v146 = vrot.slane %v132, %v145
    %v147 = vcombine.high %v139, %v139
    %v148 = vcombine.high %v146, %v146
    %v149 = vcombine.high %v61, %v61
    %v151 = vunpack.c.l.s4 1983009808
    %v152 = vunpack.c.0.s8 %v151
    %v153 = vlaneseq
    %v154 = vshrl.u32 %v153, 7
    %v155 = vsub.s32 %v152, %v154
    %v156 = vrot.slane %v61, %v155
    %v158 = vunpack.c.l.s4 1983009808
    %v159 = vunpack.c.0.s8 %v158
    %v160 = vlaneseq
    %v161 = vshrl.u32 %v160, 7
    %v162 = vsub.s32 %v159, %v161
    %v163 = vrot.slane %v149, %v162
    %v164 = vcombine.high %v156, %v156
    %v165 = vcombine.high %v163, %v163
    %v166 = vcombine.high %v62, %v62
    %v168 = vunpack.c.l.s4 1983009808
    %v169 = vunpack.c.0.s8 %v168
    %v170 = vlaneseq
    %v171 = vshrl.u32 %v170, 7
    %v172 = vsub.s32 %v169, %v171
    %v173 = vrot.slane %v62, %v172
    %v175 = vunpack.c.l.s4 1983009808
    %v176 = vunpack.c.0.s8 %v175
    %v177 = vlaneseq
    %v178 = vshrl.u32 %v177, 7
    %v179 = vsub.s32 %v176, %v178
    %v180 = vrot.slane %v166, %v179
    %v181 = vcombine.high %v173, %v173
    %v182 = vcombine.high %v180, %v180
    %v183 = vcombine.high %v63, %v63
    %v185 = vunpack.c.l.s4 1983009808
    %v186 = vunpack.c.0.s8 %v185
    %v187 = vlaneseq
    %v188 = vshrl.u32 %v187, 7
    %v189 = vsub.s32 %v186, %v188
    %v190 = vrot.slane %v63, %v189
    %v192 = vunpack.c.l.s4 1983009808
    %v193 = vunpack.c.0.s8 %v192
    %v194 = vlaneseq
    %v195 = vshrl.u32 %v194, 7
    %v196 = vsub.s32 %v193, %v195
    %v197 = vrot.slane %v183, %v196
    %v198 = vcombine.high %v190, %v190
    %v199 = vcombine.high %v197, %v197
    %v200 = vcombine.high %v64, %v64
    %v202 = vunpack.c.l.s4 1983009808
    %v203 = vunpack.c.0.s8 %v202
    %v204 = vlaneseq
    %v205 = vshrl.u32 %v204, 7
    %v206 = vsub.s32 %v203, %v205
    %v207 = vrot.slane %v64, %v206
    %v209 = vunpack.c.l.s4 1983009808
    %v210 = vunpack.c.0.s8 %v209
    %v211 = vlaneseq
    %v212 = vshrl.u32 %v211, 7
    %v213 = vsub.s32 %v210, %v212
    %v214 = vrot.slane %v200, %v213
    %v215 = vcombine.high %v207, %v207
    %v216 = vcombine.high %v214, %v214
    %v217 = vcombine.high %v65, %v65
    %v219 = vunpack.c.l.s4 1983009808
    %v220 = vunpack.c.0.s8 %v219
    %v221 = vlaneseq
    %v222 = vshrl.u32 %v221, 7
    %v223 = vsub.s32 %v220, %v222
    %v224 = vrot.slane %v65, %v223
    %v226 = vunpack.c.l.s4 1983009808
    %v227 = vunpack.c.0.s8 %v226
    %v228 = vlaneseq
    %v229 = vshrl.u32 %v228, 7
    %v230 = vsub.s32 %v227, %v229
    %v231 = vrot.slane %v217, %v230
    %v232 = vcombine.high %v224, %v224
    %v233 = vcombine.high %v231, %v231
    %v234 = vcombine.high %v66, %v66
    %v236 = vunpack.c.l.s4 1983009808
    %v237 = vunpack.c.0.s8 %v236
    %v238 = vlaneseq
    %v239 = vshrl.u32 %v238, 7
    %v240 = vsub.s32 %v237, %v239
    %v241 = vrot.slane %v66, %v240
    %v243 = vunpack.c.l.s4 1983009808
    %v244 = vunpack.c.0.s8 %v243
    %v245 = vlaneseq
    %v246 = vshrl.u32 %v245, 7
    %v247 = vsub.s32 %v244, %v246
    %v248 = vrot.slane %v234, %v247
    %v249 = vcombine.high %v241, %v241
    %v250 = vcombine.high %v248, %v248
    %v251 = vcombine.high %v67, %v67
    %v253 = vunpack.c.l.s4 1983009808
    %v254 = vunpack.c.0.s8 %v253
    %v255 = vlaneseq
    %v256 = vshrl.u32 %v255, 7
    %v257 = vsub.s32 %v254, %v256
    %v258 = vrot.slane %v67, %v257
    %v260 = vunpack.c.l.s4 1983009808
    %v261 = vunpack.c.0.s8 %v260
    %v262 = vlaneseq
    %v263 = vshrl.u32 %v262, 7
    %v264 = vsub.s32 %v261, %v263
    %v265 = vrot.slane %v251, %v264
    %v266 = vcombine.high %v258, %v258
    %v267 = vcombine.high %v265, %v265
    %v268 = vcombine.high %v68, %v68
    %v270 = vunpack.c.l.s4 1983009808
    %v271 = vunpack.c.0.s8 %v270
    %v272 = vlaneseq
    %v273 = vshrl.u32 %v272, 7
    %v274 = vsub.s32 %v271, %v273
    %v275 = vrot.slane %v68, %v274
    %v277 = vunpack.c.l.s4 1983009808
    %v278 = vunpack.c.0.s8 %v277
    %v279 = vlaneseq
    %v280 = vshrl.u32 %v279, 7
    %v281 = vsub.s32 %v278, %v280
    %v282 = vrot.slane %v268, %v281
    %v283 = vcombine.high %v275, %v275
    %v284 = vcombine.high %v282, %v282
    %v285 = vcombine.high %v69, %v69
    %v287 = vunpack.c.l.s4 1983009808
    %v288 = vunpack.c.0.s8 %v287
    %v289 = vlaneseq
    %v290 = vshrl.u32 %v289, 7
    %v291 = vsub.s32 %v288, %v290
    %v292 = vrot.slane %v69, %v291
    %v294 = vunpack.c.l.s4 1983009808
    %v295 = vunpack.c.0.s8 %v294
    %v296 = vlaneseq
    %v297 = vshrl.u32 %v296, 7
    %v298 = vsub.s32 %v295, %v297
    %v299 = vrot.slane %v285, %v298
    %v300 = vcombine.high %v292, %v292
    %v301 = vcombine.high %v299, %v299
    %v302 = vcombine.high %v70, %v70
    %v304 = vunpack.c.l.s4 1983009808
    %v305 = vunpack.c.0.s8 %v304
    %v306 = vlaneseq
    %v307 = vshrl.u32 %v306, 7
    %v308 = vsub.s32 %v305, %v307
    %v309 = vrot.slane %v70, %v308
    %v311 = vunpack.c.l.s4 1983009808
    %v312 = vunpack.c.0.s8 %v311
    %v313 = vlaneseq
    %v314 = vshrl.u32 %v313, 7
    %v315 = vsub.s32 %v312, %v314
    %v316 = vrot.slane %v302, %v315
    %v317 = vcombine.high %v309, %v309
    %v318 = vcombine.high %v316, %v316
    %v319 = vcombine.high %v71, %v71
    %v321 = vunpack.c.l.s4 1983009808
    %v322 = vunpack.c.0.s8 %v321
    %v323 = vlaneseq
    %v324 = vshrl.u32 %v323, 7
    %v325 = vsub.s32 %v322, %v324
    %v326 = vrot.slane %v71, %v325
    %v328 = vunpack.c.l.s4 1983009808
    %v329 = vunpack.c.0.s8 %v328
    %v330 = vlaneseq
    %v331 = vshrl.u32 %v330, 7
    %v332 = vsub.s32 %v329, %v331
    %v333 = vrot.slane %v319, %v332
    %v334 = vcombine.high %v326, %v326
    %v335 = vcombine.high %v333, %v333
    %v336 = vcombine.high %v72, %v72
    %v338 = vunpack.c.l.s4 1983009808
    %v339 = vunpack.c.0.s8 %v338
    %v340 = vlaneseq
    %v341 = vshrl.u32 %v340, 7
    %v342 = vsub.s32 %v339, %v341
    %v343 = vrot.slane %v72, %v342
    %v345 = vunpack.c.l.s4 1983009808
    %v346 = vunpack.c.0.s8 %v345
    %v347 = vlaneseq
    %v348 = vshrl.u32 %v347, 7
    %v349 = vsub.s32 %v346, %v348
    %v350 = vrot.slane %v336, %v349
    %v351 = vcombine.high %v343, %v343
    %v352 = vcombine.high %v350, %v350
    %v353 = vcombine.high %v73, %v73
    %v355 = vunpack.c.l.s4 1983009808
    %v356 = vunpack.c.0.s8 %v355
    %v357 = vlaneseq
    %v358 = vshrl.u32 %v357, 7
    %v359 = vsub.s32 %v356, %v358
    %v360 = vrot.slane %v73, %v359
    %v362 = vunpack.c.l.s4 1983009808
    %v363 = vunpack.c.0.s8 %v362
    %v364 = vlaneseq
    %v365 = vshrl.u32 %v364, 7
    %v366 = vsub.s32 %v363, %v365
    %v367 = vrot.slane %v353, %v366
    %v368 = vcombine.high %v360, %v360
    %v369 = vcombine.high %v367, %v367
    %v370 = vcombine.high %v74, %v74
    %v372 = vunpack.c.l.s4 1983009808
    %v373 = vunpack.c.0.s8 %v372
    %v374 = vlaneseq
    %v375 = vshrl.u32 %v374, 7
    %v376 = vsub.s32 %v373, %v375
    %v377 = vrot.slane %v74, %v376
    %v379 = vunpack.c.l.s4 1983009808
    %v380 = vunpack.c.0.s8 %v379
    %v381 = vlaneseq
    %v382 = vshrl.u32 %v381, 7
    %v383 = vsub.s32 %v380, %v382
    %v384 = vrot.slane %v370, %v383
    %v385 = vcombine.high %v377, %v377
    %v386 = vcombine.high %v384, %v384
    %v387 = vcombine.high %v75, %v75
    %v389 = vunpack.c.l.s4 1983009808
    %v390 = vunpack.c.0.s8 %v389
    %v391 = vlaneseq
    %v392 = vshrl.u32 %v391, 7
    %v393 = vsub.s32 %v390, %v392
    %v394 = vrot.slane %v75, %v393
    %v396 = vunpack.c.l.s4 1983009808
    %v397 = vunpack.c.0.s8 %v396
    %v398 = vlaneseq
    %v399 = vshrl.u32 %v398, 7
    %v400 = vsub.s32 %v397, %v399
    %v401 = vrot.slane %v387, %v400
    %v402 = vcombine.high %v394, %v394
    %v403 = vcombine.high %v401, %v401
    %v404 = vcombine.high %v76, %v76
    %v406 = vunpack.c.l.s4 1983009808
    %v407 = vunpack.c.0.s8 %v406
    %v408 = vlaneseq
    %v409 = vshrl.u32 %v408, 7
    %v410 = vsub.s32 %v407, %v409
    %v411 = vrot.slane %v76, %v410
    %v413 = vunpack.c.l.s4 1983009808
    %v414 = vunpack.c.0.s8 %v413
    %v415 = vlaneseq
    %v416 = vshrl.u32 %v415, 7
    %v417 = vsub.s32 %v414, %v416
    %v418 = vrot.slane %v404, %v417
    %v419 = vcombine.high %v411, %v411
    %v420 = vcombine.high %v418, %v418
    %v421 = vcombine.high %v77, %v77
    %v423 = vunpack.c.l.s4 1983009808
    %v424 = vunpack.c.0.s8 %v423
    %v425 = vlaneseq
    %v426 = vshrl.u32 %v425, 7
    %v427 = vsub.s32 %v424, %v426
    %v428 = vrot.slane %v77, %v427
    %v430 = vunpack.c.l.s4 1983009808
    %v431 = vunpack.c.0.s8 %v430
    %v432 = vlaneseq
    %v433 = vshrl.u32 %v432, 7
    %v434 = vsub.s32 %v431, %v433
    %v435 = vrot.slane %v421, %v434
    %v436 = vcombine.high %v428, %v428
    %v516 = vpack.c.bf16 %v105, %v105
    %v517 = vpack.c.bf16 %v113, %v113
    %v518 = vpack.c.bf16 %v112, %v112
    %v519 = vpack.c.bf16 %v114, %v114
    %v520 = vpack.c.bf16 %v122, %v122
    %v521 = vpack.c.bf16 %v130, %v130
    %v522 = vpack.c.bf16 %v129, %v129
    %v523 = vpack.c.bf16 %v131, %v131
    %v524 = vpack.c.bf16 %v139, %v139
    %v525 = vpack.c.bf16 %v147, %v147
    %v526 = vpack.c.bf16 %v146, %v146
    %v527 = vpack.c.bf16 %v148, %v148
    %v528 = vpack.c.bf16 %v156, %v156
    %v529 = vpack.c.bf16 %v164, %v164
    %v530 = vpack.c.bf16 %v163, %v163
    %v531 = vpack.c.bf16 %v165, %v165
    %v532 = vpack.c.bf16 %v173, %v173
    %v533 = vpack.c.bf16 %v181, %v181
    %v534 = vpack.c.bf16 %v180, %v180
    %v535 = vpack.c.bf16 %v182, %v182
    %v536 = vpack.c.bf16 %v190, %v190
    %v537 = vpack.c.bf16 %v198, %v198
    %v538 = vpack.c.bf16 %v197, %v197
    %v539 = vpack.c.bf16 %v199, %v199
    %v540 = vpack.c.bf16 %v207, %v207
    %v541 = vpack.c.bf16 %v215, %v215
    %v542 = vpack.c.bf16 %v214, %v214
    %v543 = vpack.c.bf16 %v216, %v216
    %v544 = vpack.c.bf16 %v224, %v224
    %v545 = vpack.c.bf16 %v232, %v232
    %v546 = vpack.c.bf16 %v231, %v231
    %v547 = vpack.c.bf16 %v233, %v233
    %v548 = vpack.c.bf16 %v241, %v241
    %v549 = vpack.c.bf16 %v249, %v249
    %v550 = vpack.c.bf16 %v248, %v248
    %v551 = vpack.c.bf16 %v250, %v250
    %v552 = vpack.c.bf16 %v258, %v258
    %v553 = vpack.c.bf16 %v266, %v266
    %v554 = vpack.c.bf16 %v265, %v265
    %v555 = vpack.c.bf16 %v267, %v267
    %v556 = vpack.c.bf16 %v275, %v275
    %v557 = vpack.c.bf16 %v283, %v283
    %v558 = vpack.c.bf16 %v282, %v282
    %v559 = vpack.c.bf16 %v284, %v284
    %v560 = vpack.c.bf16 %v292, %v292
    %v561 = vpack.c.bf16 %v300, %v300
    %v562 = vpack.c.bf16 %v299, %v299
    %v563 = vpack.c.bf16 %v301, %v301
    %v564 = vpack.c.bf16 %v309, %v309
    %v565 = vpack.c.bf16 %v317, %v317
    %v566 = vpack.c.bf16 %v316, %v316
    %v567 = vpack.c.bf16 %v318, %v318
    %v568 = vpack.c.bf16 %v326, %v326
    %v569 = vpack.c.bf16 %v334, %v334
    %v570 = vpack.c.bf16 %v333, %v333
    %v571 = vpack.c.bf16 %v335, %v335
    %v572 = vpack.c.bf16 %v343, %v343
    %v573 = vpack.c.bf16 %v351, %v351
    %v574 = vpack.c.bf16 %v350, %v350
    %v575 = vpack.c.bf16 %v352, %v352
    %v576 = vpack.c.bf16 %v360, %v360
    %v577 = vpack.c.bf16 %v368, %v368
    %v578 = vpack.c.bf16 %v367, %v367
    %v579 = vpack.c.bf16 %v369, %v369
    %v580 = vpack.c.bf16 %v377, %v377
    %v581 = vpack.c.bf16 %v385, %v385
    %v582 = vpack.c.bf16 %v384, %v384
    %v583 = vpack.c.bf16 %v386, %v386
    %v584 = vpack.c.bf16 %v394, %v394
    %v585 = vpack.c.bf16 %v402, %v402
    %v586 = vpack.c.bf16 %v401, %v401
    %v587 = vpack.c.bf16 %v403, %v403
    %v588 = vpack.c.bf16 %v411, %v411
    %v589 = vpack.c.bf16 %v419, %v419
    %v590 = vpack.c.bf16 %v418, %v418
    %v591 = vpack.c.bf16 %v420, %v420
    %v592 = vpack.c.bf16 %v428, %v428
    %v593 = vpack.c.bf16 %v436, %v436
    %v594 = vpack.c.bf16 %v435, %v435
    %v595 = vld [vmem:[%s2] sm:$0xf]
    %v596 = vld [vmem:[%s2 + $0x4] sm:$0xf]
    %v597 = vld [vmem:[%s2 + $0x8] sm:$0xf]
    %v598 = vld [vmem:[%s2 + $0xc] sm:$0xf]
    %v599 = vld [vmem:[%s2 + $0x10] sm:$0xf]
    %v600 = vld [vmem:[%s2 + $0x14] sm:$0xf]
    %v601 = vld [vmem:[%s2 + $0x18] sm:$0xf]
    %v602 = vld [vmem:[%s2 + $0x1c] sm:$0xf]
    %v603 = vld [vmem:[%s2 + $0x20] sm:$0xf]
    %v604 = vld [vmem:[%s2 + $0x24] sm:$0xf]
    %v605 = vld [vmem:[%s2 + $0x28] sm:$0xf]
    %v606 = vld [vmem:[%s2 + $0x2c] sm:$0xf]
    %v607 = vld [vmem:[%s2 + $0x30] sm:$0xf]
    %v608 = vld [vmem:[%s2 + $0x34] sm:$0xf]
    %v609 = vld [vmem:[%s2 + $0x38] sm:$0xf]
    %v610 = vld [vmem:[%s2 + $0x3c] sm:$0xf]
    %v611 = vld [vmem:[%s2 + $0x40] sm:$0xf]
    %v612 = vld [vmem:[%s2 + $0x44] sm:$0xf]
    %v613 = vld [vmem:[%s2 + $0x48] sm:$0xf]
    %v614 = vld [vmem:[%s2 + $0x4c] sm:$0xf]
    %v615 = vld [vmem:[%s2 + $0x50] sm:$0xf]
    %v616 = vld [vmem:[%s2 + $0x54] sm:$0xf]
    %v617 = vld [vmem:[%s2 + $0x58] sm:$0xf]
    %v618 = vld [vmem:[%s2 + $0x5c] sm:$0xf]
    %v619 = vld [vmem:[%s2 + $0x60] sm:$0xf]
    %v620 = vld [vmem:[%s2 + $0x64] sm:$0xf]
    %v621 = vld [vmem:[%s2 + $0x68] sm:$0xf]
    %v622 = vld [vmem:[%s2 + $0x6c] sm:$0xf]
    %v623 = vld [vmem:[%s2 + $0x70] sm:$0xf]
    %v624 = vld [vmem:[%s2 + $0x74] sm:$0xf]
    %v625 = vld [vmem:[%s2 + $0x78] sm:$0xf]
    %v626 = vld [vmem:[%s2 + $0x7c] sm:$0xf]
    %v627 = vld [vmem:[%s2 + $0x80] sm:$0xf]
    %v628 = vld [vmem:[%s2 + $0x84] sm:$0xf]
    %v629 = vld [vmem:[%s2 + $0x88] sm:$0xf]
    %v630 = vld [vmem:[%s2 + $0x8c] sm:$0xf]
    %v631 = vld [vmem:[%s2 + $0x90] sm:$0xf]
    %v632 = vld [vmem:[%s2 + $0x94] sm:$0xf]
    %v633 = vld [vmem:[%s2 + $0x98] sm:$0xf]
    %v634 = vld [vmem:[%s2 + $0x9c] sm:$0xf]
    %v635 = vld [vmem:[%s2 + $0xa0] sm:$0xf]
    %v636 = vld [vmem:[%s2 + $0xa4] sm:$0xf]
    %v637 = vld [vmem:[%s2 + $0xa8] sm:$0xf]
    %v638 = vld [vmem:[%s2 + $0xac] sm:$0xf]
    %v639 = vld [vmem:[%s2 + $0xb0] sm:$0xf]
    %v640 = vld [vmem:[%s2 + $0xb4] sm:$0xf]
    %v641 = vld [vmem:[%s2 + $0xb8] sm:$0xf]
    %v642 = vld [vmem:[%s2 + $0xbc] sm:$0xf]
    %v643 = vld [vmem:[%s2 + $0xc0] sm:$0xf]
    %v644 = vld [vmem:[%s2 + $0xc4] sm:$0xf]
    %v645 = vld [vmem:[%s2 + $0xc8] sm:$0xf]
    %v646 = vld [vmem:[%s2 + $0xcc] sm:$0xf]
    %v647 = vld [vmem:[%s2 + $0xd0] sm:$0xf]
    %v648 = vld [vmem:[%s2 + $0xd4] sm:$0xf]
    %v649 = vld [vmem:[%s2 + $0xd8] sm:$0xf]
    %v650 = vld [vmem:[%s2 + $0xdc] sm:$0xf]
    %v651 = vld [vmem:[%s2 + $0xe0] sm:$0xf]
    %v652 = vld [vmem:[%s2 + $0xe4] sm:$0xf]
    %v653 = vld [vmem:[%s2 + $0xe8] sm:$0xf]
    %v654 = vld [vmem:[%s2 + $0xec] sm:$0xf]
    %v655 = vld [vmem:[%s2 + $0xf0] sm:$0xf]
    %v656 = vld [vmem:[%s2 + $0xf4] sm:$0xf]
    %v657 = vld [vmem:[%s2 + $0xf8] sm:$0xf]
    %v658 = vld [vmem:[%s2 + $0xfc] sm:$0xf]
    %v659 = vld [vmem:[%s2 + $0x100] sm:$0xf]
    %v660 = vld [vmem:[%s2 + $0x104] sm:$0xf]
    %v661 = vld [vmem:[%s2 + $0x108] sm:$0xf]
    %v662 = vld [vmem:[%s2 + $0x10c] sm:$0xf]
    %v663 = vld [vmem:[%s2 + $0x110] sm:$0xf]
    %v664 = vld [vmem:[%s2 + $0x114] sm:$0xf]
    %v665 = vld [vmem:[%s2 + $0x118] sm:$0xf]
    %v666 = vld [vmem:[%s2 + $0x11c] sm:$0xf]
    %v667 = vld [vmem:[%s2 + $0x120] sm:$0xf]
    %v668 = vld [vmem:[%s2 + $0x124] sm:$0xf]
    %v669 = vld [vmem:[%s2 + $0x128] sm:$0xf]
    %v670 = vld [vmem:[%s2 + $0x12c] sm:$0xf]
    %v671 = vld [vmem:[%s2 + $0x130] sm:$0xf]
    %v672 = vld [vmem:[%s2 + $0x134] sm:$0xf]
    %v673 = vld [vmem:[%s2 + $0x138] sm:$0xf]
    %v674 = vld [vmem:[%s2 + $0x13c] sm:$0xf]
    %v675 = vld [vmem:[%s2 + $0x140] sm:$0xf]
    %v676 = vld [vmem:[%s2 + $0x144] sm:$0xf]
    %v677 = vld [vmem:[%s2 + $0x148] sm:$0xf]
    %v678 = vld [vmem:[%s2 + $0x14c] sm:$0xf]
    %v679 = vld [vmem:[%s2 + $0x150] sm:$0xf]
    %v680 = vld [vmem:[%s2 + $0x154] sm:$0xf]
    %v681 = vld [vmem:[%s2 + $0x158] sm:$0xf]
    %v682 = vld [vmem:[%s2 + $0x15c] sm:$0xf]
    %v683 = vld [vmem:[%s2 + $0x160] sm:$0xf]
    %v684 = vld [vmem:[%s2 + $0x164] sm:$0xf]
    %v685 = vld [vmem:[%s2 + $0x168] sm:$0xf]
    %v686 = vld [vmem:[%s2 + $0x16c] sm:$0xf]
    %v687 = vld [vmem:[%s2 + $0x170] sm:$0xf]
    %v688 = vld [vmem:[%s2 + $0x174] sm:$0xf]
    %v689 = vld [vmem:[%s2 + $0x178] sm:$0xf]
    %v690 = vld [vmem:[%s2 + $0x17c] sm:$0xf]
    %v691 = vld [vmem:[%s2 + $0x180] sm:$0xf]
    %v692 = vld [vmem:[%s2 + $0x184] sm:$0xf]
    %v693 = vld [vmem:[%s2 + $0x188] sm:$0xf]
    %v694 = vld [vmem:[%s2 + $0x18c] sm:$0xf]
    %v695 = vld [vmem:[%s2 + $0x190] sm:$0xf]
    %v696 = vld [vmem:[%s2 + $0x194] sm:$0xf]
    %v697 = vld [vmem:[%s2 + $0x198] sm:$0xf]
    %v698 = vld [vmem:[%s2 + $0x19c] sm:$0xf]
    %v699 = vld [vmem:[%s2 + $0x1a0] sm:$0xf]
    %v700 = vld [vmem:[%s2 + $0x1a4] sm:$0xf]
    %v701 = vld [vmem:[%s2 + $0x1a8] sm:$0xf]
    %v702 = vld [vmem:[%s2 + $0x1ac] sm:$0xf]
    %v703 = vld [vmem:[%s2 + $0x1b0] sm:$0xf]
    %v704 = vld [vmem:[%s2 + $0x1b4] sm:$0xf]
    %v705 = vld [vmem:[%s2 + $0x1b8] sm:$0xf]
    %v706 = vld [vmem:[%s2 + $0x1bc] sm:$0xf]
    %v707 = vld [vmem:[%s2 + $0x1c0] sm:$0xf]
    %v708 = vld [vmem:[%s2 + $0x1c4] sm:$0xf]
    %v709 = vld [vmem:[%s2 + $0x1c8] sm:$0xf]
    %v710 = vld [vmem:[%s2 + $0x1cc] sm:$0xf]
    %v711 = vld [vmem:[%s2 + $0x1d0] sm:$0xf]
    %v712 = vld [vmem:[%s2 + $0x1d4] sm:$0xf]
    %v713 = vld [vmem:[%s2 + $0x1d8] sm:$0xf]
    %v714 = vld [vmem:[%s2 + $0x1dc] sm:$0xf]
    %v715 = vld [vmem:[%s2 + $0x1e0] sm:$0xf]
    %v716 = vld [vmem:[%s2 + $0x1e4] sm:$0xf]
    %v717 = vld [vmem:[%s2 + $0x1e8] sm:$0xf]
    %v718 = vld [vmem:[%s2 + $0x1ec] sm:$0xf]
    %v719 = vld [vmem:[%s2 + $0x1f0] sm:$0xf]
    %v720 = vld [vmem:[%s2 + $0x1f4] sm:$0xf]
    %v721 = vld [vmem:[%s2 + $0x1f8] sm:$0xf]
    %v722 = vld [vmem:[%s2 + $0x1fc] sm:$0xf]
    %v723 = vld [vmem:[%s2 + $0x200] sm:$0xf]
    %v724 = vld [vmem:[%s2 + $0x204] sm:$0xf]
    %v725 = vld [vmem:[%s2 + $0x208] sm:$0xf]
    %v726 = vld [vmem:[%s2 + $0x20c] sm:$0xf]
    %v727 = vld [vmem:[%s2 + $0x210] sm:$0xf]
    %v728 = vld [vmem:[%s2 + $0x214] sm:$0xf]
    %v729 = vld [vmem:[%s2 + $0x218] sm:$0xf]
    %v730 = vld [vmem:[%s2 + $0x21c] sm:$0xf]
    %v731 = vld [vmem:[%s2 + $0x220] sm:$0xf]
    %v732 = vld [vmem:[%s2 + $0x224] sm:$0xf]
    %v733 = vld [vmem:[%s2 + $0x228] sm:$0xf]
    %v734 = vld [vmem:[%s2 + $0x22c] sm:$0xf]
    %v735 = vld [vmem:[%s2 + $0x230] sm:$0xf]
    %v736 = vld [vmem:[%s2 + $0x234] sm:$0xf]
    %v737 = vld [vmem:[%s2 + $0x238] sm:$0xf]
    %v738 = vld [vmem:[%s2 + $0x23c] sm:$0xf]
    %v739 = vld [vmem:[%s2 + $0x240] sm:$0xf]
    %v740 = vld [vmem:[%s2 + $0x244] sm:$0xf]
    %v741 = vld [vmem:[%s2 + $0x248] sm:$0xf]
    %v742 = vld [vmem:[%s2 + $0x24c] sm:$0xf]
    %v743 = vld [vmem:[%s2 + $0x250] sm:$0xf]
    %v744 = vld [vmem:[%s2 + $0x254] sm:$0xf]
    %v745 = vld [vmem:[%s2 + $0x258] sm:$0xf]
    %v746 = vld [vmem:[%s2 + $0x25c] sm:$0xf]
    %v747 = vld [vmem:[%s2 + $0x260] sm:$0xf]
    %v748 = vld [vmem:[%s2 + $0x264] sm:$0xf]
    %v749 = vld [vmem:[%s2 + $0x268] sm:$0xf]
    %v750 = vld [vmem:[%s2 + $0x26c] sm:$0xf]
    %v751 = vld [vmem:[%s2 + $0x270] sm:$0xf]
    %v752 = vld [vmem:[%s2 + $0x274] sm:$0xf]
    %v753 = vld [vmem:[%s2 + $0x278] sm:$0xf]
    %v754 = vld [vmem:[%s2 + $0x27c] sm:$0xf]
    %v755 = vld [vmem:[%s2 + $0x280] sm:$0xf]
    %v756 = vld [vmem:[%s2 + $0x284] sm:$0xf]
    %v757 = vld [vmem:[%s2 + $0x288] sm:$0xf]
    %v758 = vld [vmem:[%s2 + $0x28c] sm:$0xf]
    %v759 = vld [vmem:[%s2 + $0x290] sm:$0xf]
    %v760 = vld [vmem:[%s2 + $0x294] sm:$0xf]
    %v761 = vld [vmem:[%s2 + $0x298] sm:$0xf]
    %v762 = vld [vmem:[%s2 + $0x29c] sm:$0xf]
    %v763 = vld [vmem:[%s2 + $0x2a0] sm:$0xf]
    %v764 = vld [vmem:[%s2 + $0x2a4] sm:$0xf]
    %v765 = vld [vmem:[%s2 + $0x2a8] sm:$0xf]
    %v766 = vld [vmem:[%s2 + $0x2ac] sm:$0xf]
    %v767 = vld [vmem:[%s2 + $0x2b0] sm:$0xf]
    %v768 = vld [vmem:[%s2 + $0x2b4] sm:$0xf]
    %v769 = vld [vmem:[%s2 + $0x2b8] sm:$0xf]
    %v770 = vld [vmem:[%s2 + $0x2bc] sm:$0xf]
    %v771 = vld [vmem:[%s2 + $0x2c0] sm:$0xf]
    %v772 = vld [vmem:[%s2 + $0x2c4] sm:$0xf]
    %v773 = vld [vmem:[%s2 + $0x2c8] sm:$0xf]
    %v774 = vld [vmem:[%s2 + $0x2cc] sm:$0xf]
    %v775 = vld [vmem:[%s2 + $0x2d0] sm:$0xf]
    %v776 = vld [vmem:[%s2 + $0x2d4] sm:$0xf]
    %v777 = vld [vmem:[%s2 + $0x2d8] sm:$0xf]
    %v778 = vld [vmem:[%s2 + $0x2dc] sm:$0xf]
    %v779 = vld [vmem:[%s2 + $0x2e0] sm:$0xf]
    %v780 = vld [vmem:[%s2 + $0x2e4] sm:$0xf]
    %v781 = vld [vmem:[%s2 + $0x2e8] sm:$0xf]
    %v782 = vld [vmem:[%s2 + $0x2ec] sm:$0xf]
    %v783 = vld [vmem:[%s2 + $0x2f0] sm:$0xf]
    %v784 = vld [vmem:[%s2 + $0x2f4] sm:$0xf]
    %v785 = vld [vmem:[%s2 + $0x2f8] sm:$0xf]
    %v786 = vld [vmem:[%s2 + $0x2fc] sm:$0xf]
    %v787 = vld [vmem:[%s2 + $0x300] sm:$0xf]
    %v788 = vld [vmem:[%s2 + $0x304] sm:$0xf]
    %v789 = vld [vmem:[%s2 + $0x308] sm:$0xf]
    %v790 = vld [vmem:[%s2 + $0x30c] sm:$0xf]
    %v791 = vld [vmem:[%s2 + $0x310] sm:$0xf]
    %v792 = vld [vmem:[%s2 + $0x314] sm:$0xf]
    %v793 = vld [vmem:[%s2 + $0x318] sm:$0xf]
    %v794 = vld [vmem:[%s2 + $0x31c] sm:$0xf]
    %v795 = vld [vmem:[%s2 + $0x320] sm:$0xf]
    %v796 = vld [vmem:[%s2 + $0x324] sm:$0xf]
    %v797 = vld [vmem:[%s2 + $0x328] sm:$0xf]
    %v798 = vld [vmem:[%s2 + $0x32c] sm:$0xf]
    %v799 = vld [vmem:[%s2 + $0x330] sm:$0xf]
    %v800 = vld [vmem:[%s2 + $0x334] sm:$0xf]
    %v801 = vld [vmem:[%s2 + $0x338] sm:$0xf]
    %v802 = vld [vmem:[%s2 + $0x33c] sm:$0xf]
    %v803 = vld [vmem:[%s2 + $0x340] sm:$0xf]
    %v804 = vld [vmem:[%s2 + $0x344] sm:$0xf]
    %v805 = vld [vmem:[%s2 + $0x348] sm:$0xf]
    %v806 = vld [vmem:[%s2 + $0x34c] sm:$0xf]
    %v807 = vld [vmem:[%s2 + $0x350] sm:$0xf]
    %v808 = vld [vmem:[%s2 + $0x354] sm:$0xf]
    %v809 = vld [vmem:[%s2 + $0x358] sm:$0xf]
    %v810 = vld [vmem:[%s2 + $0x35c] sm:$0xf]
    %v811 = vld [vmem:[%s2 + $0x360] sm:$0xf]
    %v812 = vld [vmem:[%s2 + $0x364] sm:$0xf]
    %v813 = vld [vmem:[%s2 + $0x368] sm:$0xf]
    %v814 = vld [vmem:[%s2 + $0x36c] sm:$0xf]
    %v815 = vld [vmem:[%s2 + $0x370] sm:$0xf]
    %v816 = vld [vmem:[%s2 + $0x374] sm:$0xf]
    %v817 = vld [vmem:[%s2 + $0x378] sm:$0xf]
    %v818 = vld [vmem:[%s2 + $0x37c] sm:$0xf]
    %v819 = vld [vmem:[%s2 + $0x380] sm:$0xf]
    %v820 = vld [vmem:[%s2 + $0x384] sm:$0xf]
    %v821 = vld [vmem:[%s2 + $0x388] sm:$0xf]
    %v822 = vld [vmem:[%s2 + $0x38c] sm:$0xf]
    %v823 = vld [vmem:[%s2 + $0x390] sm:$0xf]
    %v824 = vld [vmem:[%s2 + $0x394] sm:$0xf]
    %v825 = vld [vmem:[%s2 + $0x398] sm:$0xf]
    %v826 = vld [vmem:[%s2 + $0x39c] sm:$0xf]
    %v827 = vld [vmem:[%s2 + $0x3a0] sm:$0xf]
    %v828 = vld [vmem:[%s2 + $0x3a4] sm:$0xf]
    %v829 = vld [vmem:[%s2 + $0x3a8] sm:$0xf]
    %v830 = vld [vmem:[%s2 + $0x3ac] sm:$0xf]
    %v831 = vld [vmem:[%s2 + $0x3b0] sm:$0xf]
    %v832 = vld [vmem:[%s2 + $0x3b4] sm:$0xf]
    %v833 = vld [vmem:[%s2 + $0x3b8] sm:$0xf]
    %v834 = vld [vmem:[%s2 + $0x3bc] sm:$0xf]
    %v835 = vld [vmem:[%s2 + $0x3c0] sm:$0xf]
    %v836 = vld [vmem:[%s2 + $0x3c4] sm:$0xf]
    %v837 = vld [vmem:[%s2 + $0x3c8] sm:$0xf]
    %v838 = vld [vmem:[%s2 + $0x3cc] sm:$0xf]
    %v839 = vld [vmem:[%s2 + $0x3d0] sm:$0xf]
    %v840 = vld [vmem:[%s2 + $0x3d4] sm:$0xf]
    %v841 = vld [vmem:[%s2 + $0x3d8] sm:$0xf]
    %v842 = vld [vmem:[%s2 + $0x3dc] sm:$0xf]
    %v843 = vld [vmem:[%s2 + $0x3e0] sm:$0xf]
    %v844 = vld [vmem:[%s2 + $0x3e4] sm:$0xf]
    %v845 = vld [vmem:[%s2 + $0x3e8] sm:$0xf]
    %v846 = vld [vmem:[%s2 + $0x3ec] sm:$0xf]
    %v847 = vld [vmem:[%s2 + $0x3f0] sm:$0xf]
    %v848 = vld [vmem:[%s2 + $0x3f4] sm:$0xf]
    %v849 = vld [vmem:[%s2 + $0x3f8] sm:$0xf]
    %v850 = vld [vmem:[%s2 + $0x3fc] sm:$0xf]
    %v851 = vld [vmem:[%s2 + $0x400] sm:$0xf]
    %v852 = vld [vmem:[%s2 + $0x404] sm:$0xf]
    %v853 = vld [vmem:[%s2 + $0x408] sm:$0xf]
    %v854 = vld [vmem:[%s2 + $0x40c] sm:$0xf]
    %v855 = vld [vmem:[%s2 + $0x410] sm:$0xf]
    %v856 = vld [vmem:[%s2 + $0x414] sm:$0xf]
    %v857 = vld [vmem:[%s2 + $0x418] sm:$0xf]
    %v858 = vld [vmem:[%s2 + $0x41c] sm:$0xf]
    %v859 = vld [vmem:[%s2 + $0x420] sm:$0xf]
    %v860 = vld [vmem:[%s2 + $0x424] sm:$0xf]
    %v861 = vld [vmem:[%s2 + $0x428] sm:$0xf]
    %v862 = vld [vmem:[%s2 + $0x42c] sm:$0xf]
    %v863 = vld [vmem:[%s2 + $0x430] sm:$0xf]
    %v864 = vld [vmem:[%s2 + $0x434] sm:$0xf]
    %v865 = vld [vmem:[%s2 + $0x438] sm:$0xf]
    %v866 = vld [vmem:[%s2 + $0x43c] sm:$0xf]
    %v867 = vld [vmem:[%s2 + $0x440] sm:$0xf]
    %v868 = vld [vmem:[%s2 + $0x444] sm:$0xf]
    %v869 = vld [vmem:[%s2 + $0x448] sm:$0xf]
    %v870 = vld [vmem:[%s2 + $0x44c] sm:$0xf]
    %v871 = vld [vmem:[%s2 + $0x450] sm:$0xf]
    %v872 = vld [vmem:[%s2 + $0x454] sm:$0xf]
    %v873 = vld [vmem:[%s2 + $0x458] sm:$0xf]
    %v874 = vld [vmem:[%s2 + $0x45c] sm:$0xf]
    %v875 = vld [vmem:[%s2 + $0x460] sm:$0xf]
    %v876 = vld [vmem:[%s2 + $0x464] sm:$0xf]
    %v877 = vld [vmem:[%s2 + $0x468] sm:$0xf]
    %v878 = vld [vmem:[%s2 + $0x46c] sm:$0xf]
    %v879 = vld [vmem:[%s2 + $0x470] sm:$0xf]
    %v880 = vld [vmem:[%s2 + $0x474] sm:$0xf]
    %v881 = vld [vmem:[%s2 + $0x478] sm:$0xf]
    %v882 = vld [vmem:[%s2 + $0x47c] sm:$0xf]
    %v883 = vld [vmem:[%s2 + $0x480] sm:$0xf]
    %v884 = vld [vmem:[%s2 + $0x484] sm:$0xf]
    %v885 = vld [vmem:[%s2 + $0x488] sm:$0xf]
    %v886 = vld [vmem:[%s2 + $0x48c] sm:$0xf]
    %v887 = vld [vmem:[%s2 + $0x490] sm:$0xf]
    %v888 = vld [vmem:[%s2 + $0x494] sm:$0xf]
    %v889 = vld [vmem:[%s2 + $0x498] sm:$0xf]
    %v890 = vld [vmem:[%s2 + $0x49c] sm:$0xf]
    %v891 = vld [vmem:[%s2 + $0x4a0] sm:$0xf]
    %v892 = vld [vmem:[%s2 + $0x4a4] sm:$0xf]
    %v893 = vld [vmem:[%s2 + $0x4a8] sm:$0xf]
    %v894 = vld [vmem:[%s2 + $0x4ac] sm:$0xf]
    %v895 = vld [vmem:[%s2 + $0x4b0] sm:$0xf]
    %v896 = vld [vmem:[%s2 + $0x4b4] sm:$0xf]
    %v897 = vld [vmem:[%s2 + $0x4b8] sm:$0xf]
    %v898 = vld [vmem:[%s2 + $0x4bc] sm:$0xf]
    %v899 = vld [vmem:[%s2 + $0x4c0] sm:$0xf]
    %v900 = vld [vmem:[%s2 + $0x4c4] sm:$0xf]
    %v901 = vld [vmem:[%s2 + $0x4c8] sm:$0xf]
    %v902 = vld [vmem:[%s2 + $0x4cc] sm:$0xf]
    %v903 = vld [vmem:[%s2 + $0x4d0] sm:$0xf]
    %v904 = vld [vmem:[%s2 + $0x4d4] sm:$0xf]
    %v905 = vld [vmem:[%s2 + $0x4d8] sm:$0xf]
    %v906 = vld [vmem:[%s2 + $0x4dc] sm:$0xf]
    %v907 = vld [vmem:[%s2 + $0x4e0] sm:$0xf]
    %v908 = vld [vmem:[%s2 + $0x4e4] sm:$0xf]
    %v909 = vld [vmem:[%s2 + $0x4e8] sm:$0xf]
    %v910 = vld [vmem:[%s2 + $0x4ec] sm:$0xf]
    %v911 = vld [vmem:[%s2 + $0x4f0] sm:$0xf]
    %v912 = vld [vmem:[%s2 + $0x4f4] sm:$0xf]
    %v913 = vld [vmem:[%s2 + $0x4f8] sm:$0xf]
    %v914 = vld [vmem:[%s2 + $0x4fc] sm:$0xf]
    %v915 = vld [vmem:[%s2 + $0x500] sm:$0xf]
    %v916 = vld [vmem:[%s2 + $0x504] sm:$0xf]
    %v917 = vld [vmem:[%s2 + $0x508] sm:$0xf]
    %v918 = vld [vmem:[%s2 + $0x50c] sm:$0xf]
    %v919 = vld [vmem:[%s2 + $0x510] sm:$0xf]
    %v920 = vld [vmem:[%s2 + $0x514] sm:$0xf]
    %v921 = vld [vmem:[%s2 + $0x518] sm:$0xf]
    %v922 = vld [vmem:[%s2 + $0x51c] sm:$0xf]
    %v923 = vld [vmem:[%s2 + $0x520] sm:$0xf]
    %v924 = vld [vmem:[%s2 + $0x524] sm:$0xf]
    %v925 = vld [vmem:[%s2 + $0x528] sm:$0xf]
    %v926 = vld [vmem:[%s2 + $0x52c] sm:$0xf]
    %v927 = vld [vmem:[%s2 + $0x530] sm:$0xf]
    %v928 = vld [vmem:[%s2 + $0x534] sm:$0xf]
    %v929 = vld [vmem:[%s2 + $0x538] sm:$0xf]
    %v930 = vld [vmem:[%s2 + $0x53c] sm:$0xf]
    %v931 = vld [vmem:[%s2 + $0x540] sm:$0xf]
    %v932 = vld [vmem:[%s2 + $0x544] sm:$0xf]
    %v933 = vld [vmem:[%s2 + $0x548] sm:$0xf]
    %v934 = vld [vmem:[%s2 + $0x54c] sm:$0xf]
    %v935 = vld [vmem:[%s2 + $0x550] sm:$0xf]
    %v936 = vld [vmem:[%s2 + $0x554] sm:$0xf]
    %v937 = vld [vmem:[%s2 + $0x558] sm:$0xf]
    %v938 = vld [vmem:[%s2 + $0x55c] sm:$0xf]
    %v939 = vld [vmem:[%s2 + $0x560] sm:$0xf]
    %v940 = vld [vmem:[%s2 + $0x564] sm:$0xf]
    %v941 = vld [vmem:[%s2 + $0x568] sm:$0xf]
    %v942 = vld [vmem:[%s2 + $0x56c] sm:$0xf]
    %v943 = vld [vmem:[%s2 + $0x570] sm:$0xf]
    %v944 = vld [vmem:[%s2 + $0x574] sm:$0xf]
    %v945 = vld [vmem:[%s2 + $0x578] sm:$0xf]
    %v946 = vld [vmem:[%s2 + $0x57c] sm:$0xf]
    %v947 = vld [vmem:[%s2 + $0x580] sm:$0xf]
    %v948 = vld [vmem:[%s2 + $0x584] sm:$0xf]
    %v949 = vld [vmem:[%s2 + $0x588] sm:$0xf]
    %v950 = vld [vmem:[%s2 + $0x58c] sm:$0xf]
    %v951 = vld [vmem:[%s2 + $0x590] sm:$0xf]
    %v952 = vld [vmem:[%s2 + $0x594] sm:$0xf]
    %v953 = vld [vmem:[%s2 + $0x598] sm:$0xf]
    %v954 = vld [vmem:[%s2 + $0x59c] sm:$0xf]
    %v955 = vld [vmem:[%s2 + $0x5a0] sm:$0xf]
    %v956 = vld [vmem:[%s2 + $0x5a4] sm:$0xf]
    %v957 = vld [vmem:[%s2 + $0x5a8] sm:$0xf]
    %v958 = vld [vmem:[%s2 + $0x5ac] sm:$0xf]
    %v959 = vld [vmem:[%s2 + $0x5b0] sm:$0xf]
    %v960 = vld [vmem:[%s2 + $0x5b4] sm:$0xf]
    %v961 = vld [vmem:[%s2 + $0x5b8] sm:$0xf]
    %v962 = vld [vmem:[%s2 + $0x5bc] sm:$0xf]
    %v963 = vld [vmem:[%s2 + $0x5c0] sm:$0xf]
    %v964 = vld [vmem:[%s2 + $0x5c4] sm:$0xf]
    %v965 = vld [vmem:[%s2 + $0x5c8] sm:$0xf]
    %v966 = vld [vmem:[%s2 + $0x5cc] sm:$0xf]
    %v967 = vld [vmem:[%s2 + $0x5d0] sm:$0xf]
    %v968 = vld [vmem:[%s2 + $0x5d4] sm:$0xf]
    %v969 = vld [vmem:[%s2 + $0x5d8] sm:$0xf]
    %v970 = vld [vmem:[%s2 + $0x5dc] sm:$0xf]
    %v971 = vld [vmem:[%s2 + $0x5e0] sm:$0xf]
    %v972 = vld [vmem:[%s2 + $0x5e4] sm:$0xf]
    %v973 = vld [vmem:[%s2 + $0x5e8] sm:$0xf]
    %v974 = vld [vmem:[%s2 + $0x5ec] sm:$0xf]
    %v975 = vld [vmem:[%s2 + $0x5f0] sm:$0xf]
    %v976 = vld [vmem:[%s2 + $0x5f4] sm:$0xf]
    %v977 = vld [vmem:[%s2 + $0x5f8] sm:$0xf]
    %v978 = vld [vmem:[%s2 + $0x5fc] sm:$0xf]
    %v979 = vld [vmem:[%s2 + $0x600] sm:$0xf]
    %v980 = vld [vmem:[%s2 + $0x604] sm:$0xf]
    %v981 = vld [vmem:[%s2 + $0x608] sm:$0xf]
    %v982 = vld [vmem:[%s2 + $0x60c] sm:$0xf]
    %v983 = vld [vmem:[%s2 + $0x610] sm:$0xf]
    %v984 = vld [vmem:[%s2 + $0x614] sm:$0xf]
    %v985 = vld [vmem:[%s2 + $0x618] sm:$0xf]
    %v986 = vld [vmem:[%s2 + $0x61c] sm:$0xf]
    %v987 = vld [vmem:[%s2 + $0x620] sm:$0xf]
    %v988 = vld [vmem:[%s2 + $0x624] sm:$0xf]
    %v989 = vld [vmem:[%s2 + $0x628] sm:$0xf]
    %v990 = vld [vmem:[%s2 + $0x62c] sm:$0xf]
    %v991 = vld [vmem:[%s2 + $0x630] sm:$0xf]
    %v992 = vld [vmem:[%s2 + $0x634] sm:$0xf]
    %v993 = vld [vmem:[%s2 + $0x638] sm:$0xf]
    %v994 = vld [vmem:[%s2 + $0x63c] sm:$0xf]
    %v995 = vld [vmem:[%s2 + $0x640] sm:$0xf]
    %v996 = vld [vmem:[%s2 + $0x644] sm:$0xf]
    %v997 = vld [vmem:[%s2 + $0x648] sm:$0xf]
    %v998 = vld [vmem:[%s2 + $0x64c] sm:$0xf]
    %v999 = vld [vmem:[%s2 + $0x650] sm:$0xf]
    %v1000 = vld [vmem:[%s2 + $0x654] sm:$0xf]
    %v1001 = vld [vmem:[%s2 + $0x658] sm:$0xf]
    %v1002 = vld [vmem:[%s2 + $0x65c] sm:$0xf]
    %v1003 = vld [vmem:[%s2 + $0x660] sm:$0xf]
    %v1004 = vld [vmem:[%s2 + $0x664] sm:$0xf]
    %v1005 = vld [vmem:[%s2 + $0x668] sm:$0xf]
    %v1006 = vld [vmem:[%s2 + $0x66c] sm:$0xf]
    %v1007 = vld [vmem:[%s2 + $0x670] sm:$0xf]
    %v1008 = vld [vmem:[%s2 + $0x674] sm:$0xf]
    %v1009 = vld [vmem:[%s2 + $0x678] sm:$0xf]
    %v1010 = vld [vmem:[%s2 + $0x67c] sm:$0xf]
    %v1011 = vld [vmem:[%s2 + $0x680] sm:$0xf]
    %v1012 = vld [vmem:[%s2 + $0x684] sm:$0xf]
    %v1013 = vld [vmem:[%s2 + $0x688] sm:$0xf]
    %v1014 = vld [vmem:[%s2 + $0x68c] sm:$0xf]
    %v1015 = vld [vmem:[%s2 + $0x690] sm:$0xf]
    %v1016 = vld [vmem:[%s2 + $0x694] sm:$0xf]
    %v1017 = vld [vmem:[%s2 + $0x698] sm:$0xf]
    %v1018 = vld [vmem:[%s2 + $0x69c] sm:$0xf]
    %v1019 = vld [vmem:[%s2 + $0x6a0] sm:$0xf]
    %v1020 = vld [vmem:[%s2 + $0x6a4] sm:$0xf]
    %v1021 = vld [vmem:[%s2 + $0x6a8] sm:$0xf]
    %v1022 = vld [vmem:[%s2 + $0x6ac] sm:$0xf]
    %v1023 = vld [vmem:[%s2 + $0x6b0] sm:$0xf]
    %v1024 = vld [vmem:[%s2 + $0x6b4] sm:$0xf]
    %v1025 = vld [vmem:[%s2 + $0x6b8] sm:$0xf]
    %v1026 = vld [vmem:[%s2 + $0x6bc] sm:$0xf]
    %v1027 = vld [vmem:[%s2 + $0x6c0] sm:$0xf]
    %v1028 = vld [vmem:[%s2 + $0x6c4] sm:$0xf]
    %v1029 = vld [vmem:[%s2 + $0x6c8] sm:$0xf]
    %v1030 = vld [vmem:[%s2 + $0x6cc] sm:$0xf]
    %v1031 = vld [vmem:[%s2 + $0x6d0] sm:$0xf]
    %v1032 = vld [vmem:[%s2 + $0x6d4] sm:$0xf]
    %v1033 = vld [vmem:[%s2 + $0x6d8] sm:$0xf]
    %v1034 = vld [vmem:[%s2 + $0x6dc] sm:$0xf]
    %v1035 = vld [vmem:[%s2 + $0x6e0] sm:$0xf]
    %v1036 = vld [vmem:[%s2 + $0x6e4] sm:$0xf]
    %v1037 = vld [vmem:[%s2 + $0x6e8] sm:$0xf]
    %v1038 = vld [vmem:[%s2 + $0x6ec] sm:$0xf]
    %v1039 = vld [vmem:[%s2 + $0x6f0] sm:$0xf]
    %v1040 = vld [vmem:[%s2 + $0x6f4] sm:$0xf]
    %v1041 = vld [vmem:[%s2 + $0x6f8] sm:$0xf]
    %v1042 = vld [vmem:[%s2 + $0x6fc] sm:$0xf]
    %v1043 = vld [vmem:[%s2 + $0x700] sm:$0xf]
    %v1044 = vld [vmem:[%s2 + $0x704] sm:$0xf]
    %v1045 = vld [vmem:[%s2 + $0x708] sm:$0xf]
    %v1046 = vld [vmem:[%s2 + $0x70c] sm:$0xf]
    %v1047 = vld [vmem:[%s2 + $0x710] sm:$0xf]
    %v1048 = vld [vmem:[%s2 + $0x714] sm:$0xf]
    %v1049 = vld [vmem:[%s2 + $0x718] sm:$0xf]
    %v1050 = vld [vmem:[%s2 + $0x71c] sm:$0xf]
    %v1051 = vld [vmem:[%s2 + $0x720] sm:$0xf]
    %v1052 = vld [vmem:[%s2 + $0x724] sm:$0xf]
    %v1053 = vld [vmem:[%s2 + $0x728] sm:$0xf]
    %v1054 = vld [vmem:[%s2 + $0x72c] sm:$0xf]
    %v1055 = vld [vmem:[%s2 + $0x730] sm:$0xf]
    %v1056 = vld [vmem:[%s2 + $0x734] sm:$0xf]
    %v1057 = vld [vmem:[%s2 + $0x738] sm:$0xf]
    %v1058 = vld [vmem:[%s2 + $0x73c] sm:$0xf]
    %v1059 = vld [vmem:[%s2 + $0x740] sm:$0xf]
    %v1060 = vld [vmem:[%s2 + $0x744] sm:$0xf]
    %v1061 = vld [vmem:[%s2 + $0x748] sm:$0xf]
    %v1062 = vld [vmem:[%s2 + $0x74c] sm:$0xf]
    %v1063 = vld [vmem:[%s2 + $0x750] sm:$0xf]
    %v1064 = vld [vmem:[%s2 + $0x754] sm:$0xf]
    %v1065 = vld [vmem:[%s2 + $0x758] sm:$0xf]
    %v1066 = vld [vmem:[%s2 + $0x75c] sm:$0xf]
    %v1067 = vld [vmem:[%s2 + $0x760] sm:$0xf]
    %v1068 = vld [vmem:[%s2 + $0x764] sm:$0xf]
    %v1069 = vld [vmem:[%s2 + $0x768] sm:$0xf]
    %v1070 = vld [vmem:[%s2 + $0x76c] sm:$0xf]
    %v1071 = vld [vmem:[%s2 + $0x770] sm:$0xf]
    %v1072 = vld [vmem:[%s2 + $0x774] sm:$0xf]
    %v1073 = vld [vmem:[%s2 + $0x778] sm:$0xf]
    %v1074 = vld [vmem:[%s2 + $0x77c] sm:$0xf]
    %v1075 = vld [vmem:[%s2 + $0x780] sm:$0xf]
    %v1076 = vld [vmem:[%s2 + $0x784] sm:$0xf]
    %v1077 = vld [vmem:[%s2 + $0x788] sm:$0xf]
    %v1078 = vld [vmem:[%s2 + $0x78c] sm:$0xf]
    %v1079 = vld [vmem:[%s2 + $0x790] sm:$0xf]
    %v1080 = vld [vmem:[%s2 + $0x794] sm:$0xf]
    %v1081 = vld [vmem:[%s2 + $0x798] sm:$0xf]
    %v1082 = vld [vmem:[%s2 + $0x79c] sm:$0xf]
    %v1083 = vld [vmem:[%s2 + $0x7a0] sm:$0xf]
    %v1084 = vld [vmem:[%s2 + $0x7a4] sm:$0xf]
    %v1085 = vld [vmem:[%s2 + $0x7a8] sm:$0xf]
    %v1086 = vld [vmem:[%s2 + $0x7ac] sm:$0xf]
    %v1087 = vld [vmem:[%s2 + $0x7b0] sm:$0xf]
    %v1088 = vld [vmem:[%s2 + $0x7b4] sm:$0xf]
    %v1089 = vld [vmem:[%s2 + $0x7b8] sm:$0xf]
    %v1090 = vld [vmem:[%s2 + $0x7bc] sm:$0xf]
    %v1091 = vld [vmem:[%s2 + $0x7c0] sm:$0xf]
    %v1092 = vld [vmem:[%s2 + $0x7c4] sm:$0xf]
    %v1093 = vld [vmem:[%s2 + $0x7c8] sm:$0xf]
    %v1094 = vld [vmem:[%s2 + $0x7cc] sm:$0xf]
    %v1095 = vld [vmem:[%s2 + $0x7d0] sm:$0xf]
    %v1096 = vld [vmem:[%s2 + $0x7d4] sm:$0xf]
    %v1097 = vld [vmem:[%s2 + $0x7d8] sm:$0xf]
    %v1098 = vld [vmem:[%s2 + $0x7dc] sm:$0xf]
    %v1099 = vld [vmem:[%s2 + $0x7e0] sm:$0xf]
    %v1100 = vld [vmem:[%s2 + $0x7e4] sm:$0xf]
    %v1101 = vld [vmem:[%s2 + $0x7e8] sm:$0xf]
    %v1102 = vld [vmem:[%s2 + $0x7ec] sm:$0xf]
    %v1103 = vld [vmem:[%s2 + $0x7f0] sm:$0xf]
    %v1104 = vld [vmem:[%s2 + $0x7f4] sm:$0xf]
    %v1105 = vld [vmem:[%s2 + $0x7f8] sm:$0xf]
    %v1106 = vld [vmem:[%s2 + $0x7fc] sm:$0xf]
    %v1107 = vld [vmem:[%s2 + $0x800] sm:$0xf]
    %v1108 = vld [vmem:[%s2 + $0x804] sm:$0xf]
    %v1109 = vld [vmem:[%s2 + $0x808] sm:$0xf]
    %v1110 = vld [vmem:[%s2 + $0x80c] sm:$0xf]
    %v1111 = vld [vmem:[%s2 + $0x810] sm:$0xf]
    %v1112 = vld [vmem:[%s2 + $0x814] sm:$0xf]
    %v1113 = vld [vmem:[%s2 + $0x818] sm:$0xf]
    %v1114 = vld [vmem:[%s2 + $0x81c] sm:$0xf]
    %v1115 = vld [vmem:[%s2 + $0x820] sm:$0xf]
    %v1116 = vld [vmem:[%s2 + $0x824] sm:$0xf]
    %v1117 = vld [vmem:[%s2 + $0x828] sm:$0xf]
    %v1118 = vld [vmem:[%s2 + $0x82c] sm:$0xf]
    %v1119 = vld [vmem:[%s2 + $0x830] sm:$0xf]
    %v1120 = vld [vmem:[%s2 + $0x834] sm:$0xf]
    %v1121 = vld [vmem:[%s2 + $0x838] sm:$0xf]
    %v1122 = vld [vmem:[%s2 + $0x83c] sm:$0xf]
    %v1123 = vld [vmem:[%s2 + $0x840] sm:$0xf]
    %v1124 = vld [vmem:[%s2 + $0x844] sm:$0xf]
    %v1125 = vld [vmem:[%s2 + $0x848] sm:$0xf]
    %v1126 = vld [vmem:[%s2 + $0x84c] sm:$0xf]
    %v1127 = vld [vmem:[%s2 + $0x850] sm:$0xf]
    %v1128 = vld [vmem:[%s2 + $0x854] sm:$0xf]
    %v1129 = vld [vmem:[%s2 + $0x858] sm:$0xf]
    %v1130 = vld [vmem:[%s2 + $0x85c] sm:$0xf]
    %v1131 = vld [vmem:[%s2 + $0x860] sm:$0xf]
    %v1132 = vld [vmem:[%s2 + $0x864] sm:$0xf]
    %v1133 = vld [vmem:[%s2 + $0x868] sm:$0xf]
    %v1134 = vld [vmem:[%s2 + $0x86c] sm:$0xf]
    %v1135 = vld [vmem:[%s2 + $0x870] sm:$0xf]
    %v1136 = vld [vmem:[%s2 + $0x874] sm:$0xf]
    %v1137 = vld [vmem:[%s2 + $0x878] sm:$0xf]
    %v1138 = vld [vmem:[%s2 + $0x87c] sm:$0xf]
    %v1139 = vld [vmem:[%s2 + $0x880] sm:$0xf]
    %v1140 = vld [vmem:[%s2 + $0x884] sm:$0xf]
    %v1141 = vld [vmem:[%s2 + $0x888] sm:$0xf]
    %v1142 = vld [vmem:[%s2 + $0x88c] sm:$0xf]
    %v1143 = vld [vmem:[%s2 + $0x890] sm:$0xf]
    %v1144 = vld [vmem:[%s2 + $0x894] sm:$0xf]
    %v1145 = vld [vmem:[%s2 + $0x898] sm:$0xf]
    %v1146 = vld [vmem:[%s2 + $0x89c] sm:$0xf]
    %v1147 = vld [vmem:[%s2 + $0x8a0] sm:$0xf]
    %v1148 = vld [vmem:[%s2 + $0x8a4] sm:$0xf]
    %v1149 = vld [vmem:[%s2 + $0x8a8] sm:$0xf]
    %v1150 = vld [vmem:[%s2 + $0x8ac] sm:$0xf]
    %v1151 = vld [vmem:[%s2 + $0x8b0] sm:$0xf]
    %v1152 = vld [vmem:[%s2 + $0x8b4] sm:$0xf]
    %v1153 = vld [vmem:[%s2 + $0x8b8] sm:$0xf]
    %v1154 = vld [vmem:[%s2 + $0x8bc] sm:$0xf]
    %v1155 = vld [vmem:[%s2 + $0x8c0] sm:$0xf]
    %v1156 = vld [vmem:[%s2 + $0x8c4] sm:$0xf]
    %v1157 = vld [vmem:[%s2 + $0x8c8] sm:$0xf]
    %v1158 = vld [vmem:[%s2 + $0x8cc] sm:$0xf]
    %v1159 = vld [vmem:[%s2 + $0x8d0] sm:$0xf]
    %v1160 = vld [vmem:[%s2 + $0x8d4] sm:$0xf]
    %v1161 = vld [vmem:[%s2 + $0x8d8] sm:$0xf]
    %v1162 = vld [vmem:[%s2 + $0x8dc] sm:$0xf]
    %v1163 = vld [vmem:[%s2 + $0x8e0] sm:$0xf]
    %v1164 = vld [vmem:[%s2 + $0x8e4] sm:$0xf]
    %v1165 = vld [vmem:[%s2 + $0x8e8] sm:$0xf]
    %v1166 = vld [vmem:[%s2 + $0x8ec] sm:$0xf]
    %v1167 = vld [vmem:[%s2 + $0x8f0] sm:$0xf]
    %v1168 = vld [vmem:[%s2 + $0x8f4] sm:$0xf]
    %v1169 = vld [vmem:[%s2 + $0x8f8] sm:$0xf]
    %v1170 = vld [vmem:[%s2 + $0x8fc] sm:$0xf]
    %v1171 = vld [vmem:[%s2 + $0x900] sm:$0xf]
    %v1172 = vld [vmem:[%s2 + $0x904] sm:$0xf]
    %v1173 = vld [vmem:[%s2 + $0x908] sm:$0xf]
    %v1174 = vld [vmem:[%s2 + $0x90c] sm:$0xf]
    %v1175 = vld [vmem:[%s2 + $0x910] sm:$0xf]
    %v1176 = vld [vmem:[%s2 + $0x914] sm:$0xf]
    %v1177 = vld [vmem:[%s2 + $0x918] sm:$0xf]
    %v1178 = vld [vmem:[%s2 + $0x91c] sm:$0xf]
    %v1179 = vld [vmem:[%s2 + $0x920] sm:$0xf]
    %v1180 = vld [vmem:[%s2 + $0x924] sm:$0xf]
    %v1181 = vld [vmem:[%s2 + $0x928] sm:$0xf]
    %v1182 = vld [vmem:[%s2 + $0x92c] sm:$0xf]
    %v1183 = vld [vmem:[%s2 + $0x930] sm:$0xf]
    %v1184 = vld [vmem:[%s2 + $0x934] sm:$0xf]
    %v1185 = vld [vmem:[%s2 + $0x938] sm:$0xf]
    %v1186 = vld [vmem:[%s2 + $0x93c] sm:$0xf]
    %v1187 = vld [vmem:[%s2 + $0x940] sm:$0xf]
    %v1188 = vld [vmem:[%s2 + $0x944] sm:$0xf]
    %v1189 = vld [vmem:[%s2 + $0x948] sm:$0xf]
    %v1190 = vld [vmem:[%s2 + $0x94c] sm:$0xf]
    %v1191 = vld [vmem:[%s2 + $0x950] sm:$0xf]
    %v1192 = vld [vmem:[%s2 + $0x954] sm:$0xf]
    %v1193 = vld [vmem:[%s2 + $0x958] sm:$0xf]
    %v1194 = vld [vmem:[%s2 + $0x95c] sm:$0xf]
    %v1195 = vld [vmem:[%s2 + $0x960] sm:$0xf]
    %v1196 = vld [vmem:[%s2 + $0x964] sm:$0xf]
    %v1197 = vld [vmem:[%s2 + $0x968] sm:$0xf]
    %v1198 = vld [vmem:[%s2 + $0x96c] sm:$0xf]
    %v1199 = vld [vmem:[%s2 + $0x970] sm:$0xf]
    %v1200 = vld [vmem:[%s2 + $0x974] sm:$0xf]
    %v1201 = vld [vmem:[%s2 + $0x978] sm:$0xf]
    %v1202 = vld [vmem:[%s2 + $0x97c] sm:$0xf]
    %v1203 = vld [vmem:[%s2 + $0x980] sm:$0xf]
    %v1204 = vld [vmem:[%s2 + $0x984] sm:$0xf]
    %v1205 = vld [vmem:[%s2 + $0x988] sm:$0xf]
    %v1206 = vld [vmem:[%s2 + $0x98c] sm:$0xf]
    %v1207 = vld [vmem:[%s2 + $0x990] sm:$0xf]
    %v1208 = vld [vmem:[%s2 + $0x994] sm:$0xf]
    %v1209 = vld [vmem:[%s2 + $0x998] sm:$0xf]
    %v1210 = vld [vmem:[%s2 + $0x99c] sm:$0xf]
    %v1211 = vld [vmem:[%s2 + $0x9a0] sm:$0xf]
    %v1212 = vld [vmem:[%s2 + $0x9a4] sm:$0xf]
    %v1213 = vld [vmem:[%s2 + $0x9a8] sm:$0xf]
    %v1214 = vld [vmem:[%s2 + $0x9ac] sm:$0xf]
    %v1215 = vld [vmem:[%s2 + $0x9b0] sm:$0xf]
    %v1216 = vld [vmem:[%s2 + $0x9b4] sm:$0xf]
    %v1217 = vld [vmem:[%s2 + $0x9b8] sm:$0xf]
    %v1218 = vld [vmem:[%s2 + $0x9bc] sm:$0xf]
    %v1219 = vld [vmem:[%s2 + $0x9c0] sm:$0xf]
    %v1220 = vld [vmem:[%s2 + $0x9c4] sm:$0xf]
    %v1221 = vld [vmem:[%s2 + $0x9c8] sm:$0xf]
    %v1222 = vld [vmem:[%s2 + $0x9cc] sm:$0xf]
    %v1223 = vld [vmem:[%s2 + $0x9d0] sm:$0xf]
    %v1224 = vld [vmem:[%s2 + $0x9d4] sm:$0xf]
    %v1225 = vld [vmem:[%s2 + $0x9d8] sm:$0xf]
    %v1226 = vld [vmem:[%s2 + $0x9dc] sm:$0xf]
    %v1227 = vld [vmem:[%s2 + $0x9e0] sm:$0xf]
    %v1228 = vld [vmem:[%s2 + $0x9e4] sm:$0xf]
    %v1229 = vld [vmem:[%s2 + $0x9e8] sm:$0xf]
    %v1230 = vld [vmem:[%s2 + $0x9ec] sm:$0xf]
    %v1231 = vld [vmem:[%s2 + $0x9f0] sm:$0xf]
    %v1232 = vld [vmem:[%s2 + $0x9f4] sm:$0xf]
    %v1233 = vld [vmem:[%s2 + $0x9f8] sm:$0xf]
    %v1234 = vld [vmem:[%s2 + $0x9fc] sm:$0xf]
    %v1235 = vld [vmem:[%s2 + $0xa00] sm:$0xf]
    %v1236 = vld [vmem:[%s2 + $0xa04] sm:$0xf]
    %v1237 = vld [vmem:[%s2 + $0xa08] sm:$0xf]
    %v1238 = vld [vmem:[%s2 + $0xa0c] sm:$0xf]
    %v1239 = vld [vmem:[%s2 + $0xa10] sm:$0xf]
    %v1240 = vld [vmem:[%s2 + $0xa14] sm:$0xf]
    %v1241 = vld [vmem:[%s2 + $0xa18] sm:$0xf]
    %v1242 = vld [vmem:[%s2 + $0xa1c] sm:$0xf]
    %v1243 = vld [vmem:[%s2 + $0xa20] sm:$0xf]
    %v1244 = vld [vmem:[%s2 + $0xa24] sm:$0xf]
    %v1245 = vld [vmem:[%s2 + $0xa28] sm:$0xf]
    %v1246 = vld [vmem:[%s2 + $0xa2c] sm:$0xf]
    %v1247 = vld [vmem:[%s2 + $0xa30] sm:$0xf]
    %v1248 = vld [vmem:[%s2 + $0xa34] sm:$0xf]
    %v1249 = vld [vmem:[%s2 + $0xa38] sm:$0xf]
    %v1250 = vld [vmem:[%s2 + $0xa3c] sm:$0xf]
    %v1251 = vld [vmem:[%s2 + $0xa40] sm:$0xf]
    %v1252 = vld [vmem:[%s2 + $0xa44] sm:$0xf]
    %v1253 = vld [vmem:[%s2 + $0xa48] sm:$0xf]
    %v1254 = vld [vmem:[%s2 + $0xa4c] sm:$0xf]
    %v1255 = vld [vmem:[%s2 + $0xa50] sm:$0xf]
    %v1256 = vld [vmem:[%s2 + $0xa54] sm:$0xf]
    %v1257 = vld [vmem:[%s2 + $0xa58] sm:$0xf]
    %v1258 = vld [vmem:[%s2 + $0xa5c] sm:$0xf]
    %v1259 = vld [vmem:[%s2 + $0xa60] sm:$0xf]
    %v1260 = vld [vmem:[%s2 + $0xa64] sm:$0xf]
    %v1261 = vld [vmem:[%s2 + $0xa68] sm:$0xf]
    %v1262 = vld [vmem:[%s2 + $0xa6c] sm:$0xf]
    %v1263 = vld [vmem:[%s2 + $0xa70] sm:$0xf]
    %v1264 = vld [vmem:[%s2 + $0xa74] sm:$0xf]
    %v1265 = vld [vmem:[%s2 + $0xa78] sm:$0xf]
    %v1266 = vld [vmem:[%s2 + $0xa7c] sm:$0xf]
    %v1267 = vld [vmem:[%s2 + $0xa80] sm:$0xf]
    %v1268 = vld [vmem:[%s2 + $0xa84] sm:$0xf]
    %v1269 = vld [vmem:[%s2 + $0xa88] sm:$0xf]
    %v1270 = vld [vmem:[%s2 + $0xa8c] sm:$0xf]
    %v1271 = vld [vmem:[%s2 + $0xa90] sm:$0xf]
    %v1272 = vld [vmem:[%s2 + $0xa94] sm:$0xf]
    %v1273 = vld [vmem:[%s2 + $0xa98] sm:$0xf]
    %v1274 = vld [vmem:[%s2 + $0xa9c] sm:$0xf]
    %v1275 = vld [vmem:[%s2 + $0xaa0] sm:$0xf]
    %v1276 = vld [vmem:[%s2 + $0xaa4] sm:$0xf]
    %v1277 = vld [vmem:[%s2 + $0xaa8] sm:$0xf]
    %v1278 = vld [vmem:[%s2 + $0xaac] sm:$0xf]
    %v1279 = vld [vmem:[%s2 + $0xab0] sm:$0xf]
    %v1280 = vld [vmem:[%s2 + $0xab4] sm:$0xf]
    %v1281 = vld [vmem:[%s2 + $0xab8] sm:$0xf]
    %v1282 = vld [vmem:[%s2 + $0xabc] sm:$0xf]
    %v1283 = vld [vmem:[%s2 + $0xac0] sm:$0xf]
    %v1284 = vld [vmem:[%s2 + $0xac4] sm:$0xf]
    %v1285 = vld [vmem:[%s2 + $0xac8] sm:$0xf]
    %v1286 = vld [vmem:[%s2 + $0xacc] sm:$0xf]
    %v1287 = vld [vmem:[%s2 + $0xad0] sm:$0xf]
    %v1288 = vld [vmem:[%s2 + $0xad4] sm:$0xf]
    %v1289 = vld [vmem:[%s2 + $0xad8] sm:$0xf]
    %v1290 = vld [vmem:[%s2 + $0xadc] sm:$0xf]
    %v1291 = vld [vmem:[%s2 + $0xae0] sm:$0xf]
    %v1292 = vld [vmem:[%s2 + $0xae4] sm:$0xf]
    %v1293 = vld [vmem:[%s2 + $0xae8] sm:$0xf]
    %v1294 = vld [vmem:[%s2 + $0xaec] sm:$0xf]
    %v1295 = vld [vmem:[%s2 + $0xaf0] sm:$0xf]
    %v1296 = vld [vmem:[%s2 + $0xaf4] sm:$0xf]
    %v1297 = vld [vmem:[%s2 + $0xaf8] sm:$0xf]
    %v1298 = vld [vmem:[%s2 + $0xafc] sm:$0xf]
    %v1299 = vld [vmem:[%s2 + $0xb00] sm:$0xf]
    %v1300 = vld [vmem:[%s2 + $0xb04] sm:$0xf]
    %v1301 = vld [vmem:[%s2 + $0xb08] sm:$0xf]
    %v1302 = vld [vmem:[%s2 + $0xb0c] sm:$0xf]
    %v1303 = vld [vmem:[%s2 + $0xb10] sm:$0xf]
    %v1304 = vld [vmem:[%s2 + $0xb14] sm:$0xf]
    %v1305 = vld [vmem:[%s2 + $0xb18] sm:$0xf]
    %v1306 = vld [vmem:[%s2 + $0xb1c] sm:$0xf]
    %v1307 = vld [vmem:[%s2 + $0xb20] sm:$0xf]
    %v1308 = vld [vmem:[%s2 + $0xb24] sm:$0xf]
    %v1309 = vld [vmem:[%s2 + $0xb28] sm:$0xf]
    %v1310 = vld [vmem:[%s2 + $0xb2c] sm:$0xf]
    %v1311 = vld [vmem:[%s2 + $0xb30] sm:$0xf]
    %v1312 = vld [vmem:[%s2 + $0xb34] sm:$0xf]
    %v1313 = vld [vmem:[%s2 + $0xb38] sm:$0xf]
    %v1314 = vld [vmem:[%s2 + $0xb3c] sm:$0xf]
    %v1315 = vld [vmem:[%s2 + $0xb40] sm:$0xf]
    %v1316 = vld [vmem:[%s2 + $0xb44] sm:$0xf]
    %v1317 = vld [vmem:[%s2 + $0xb48] sm:$0xf]
    %v1318 = vld [vmem:[%s2 + $0xb4c] sm:$0xf]
    %v1319 = vld [vmem:[%s2 + $0xb50] sm:$0xf]
    %v1320 = vld [vmem:[%s2 + $0xb54] sm:$0xf]
    %v1321 = vld [vmem:[%s2 + $0xb58] sm:$0xf]
    %v1322 = vld [vmem:[%s2 + $0xb5c] sm:$0xf]
    %v1323 = vld [vmem:[%s2 + $0xb60] sm:$0xf]
    %v1324 = vld [vmem:[%s2 + $0xb64] sm:$0xf]
    %v1325 = vld [vmem:[%s2 + $0xb68] sm:$0xf]
    %v1326 = vld [vmem:[%s2 + $0xb6c] sm:$0xf]
    %v1327 = vld [vmem:[%s2 + $0xb70] sm:$0xf]
    %v1328 = vld [vmem:[%s2 + $0xb74] sm:$0xf]
    %v1329 = vld [vmem:[%s2 + $0xb78] sm:$0xf]
    %v1330 = vld [vmem:[%s2 + $0xb7c] sm:$0xf]
    %v1331 = vld [vmem:[%s2 + $0xb80] sm:$0xf]
    %v1332 = vld [vmem:[%s2 + $0xb84] sm:$0xf]
    %v1333 = vld [vmem:[%s2 + $0xb88] sm:$0xf]
    %v1334 = vld [vmem:[%s2 + $0xb8c] sm:$0xf]
    %v1335 = vld [vmem:[%s2 + $0xb90] sm:$0xf]
    %v1336 = vld [vmem:[%s2 + $0xb94] sm:$0xf]
    %v1337 = vld [vmem:[%s2 + $0xb98] sm:$0xf]
    %v1338 = vld [vmem:[%s2 + $0xb9c] sm:$0xf]
    %v1339 = vld [vmem:[%s2 + $0xba0] sm:$0xf]
    %v1340 = vld [vmem:[%s2 + $0xba4] sm:$0xf]
    %v1341 = vld [vmem:[%s2 + $0xba8] sm:$0xf]
    %v1342 = vld [vmem:[%s2 + $0xbac] sm:$0xf]
    %v1343 = vld [vmem:[%s2 + $0xbb0] sm:$0xf]
    %v1344 = vld [vmem:[%s2 + $0xbb4] sm:$0xf]
    %v1345 = vld [vmem:[%s2 + $0xbb8] sm:$0xf]
    %v1346 = vld [vmem:[%s2 + $0xbbc] sm:$0xf]
    %v1347 = vld [vmem:[%s2 + $0xbc0] sm:$0xf]
    %v1348 = vld [vmem:[%s2 + $0xbc4] sm:$0xf]
    %v1349 = vld [vmem:[%s2 + $0xbc8] sm:$0xf]
    %v1350 = vld [vmem:[%s2 + $0xbcc] sm:$0xf]
    %v1351 = vld [vmem:[%s2 + $0xbd0] sm:$0xf]
    %v1352 = vld [vmem:[%s2 + $0xbd4] sm:$0xf]
    %v1353 = vld [vmem:[%s2 + $0xbd8] sm:$0xf]
    %v1354 = vld [vmem:[%s2 + $0xbdc] sm:$0xf]
    %v1355 = vld [vmem:[%s2 + $0xbe0] sm:$0xf]
    %v1356 = vld [vmem:[%s2 + $0xbe4] sm:$0xf]
    %v1357 = vld [vmem:[%s2 + $0xbe8] sm:$0xf]
    %v1358 = vld [vmem:[%s2 + $0xbec] sm:$0xf]
    %v1359 = vld [vmem:[%s2 + $0xbf0] sm:$0xf]
    %v1360 = vld [vmem:[%s2 + $0xbf4] sm:$0xf]
    %v1361 = vld [vmem:[%s2 + $0xbf8] sm:$0xf]
    %v1362 = vld [vmem:[%s2 + $0xbfc] sm:$0xf]
    %v1363 = vld [vmem:[%s2 + $0xc00] sm:$0xf]
    %v1364 = vld [vmem:[%s2 + $0xc04] sm:$0xf]
    %v1365 = vld [vmem:[%s2 + $0xc08] sm:$0xf]
    %v1366 = vld [vmem:[%s2 + $0xc0c] sm:$0xf]
    %v1367 = vld [vmem:[%s2 + $0xc10] sm:$0xf]
    %v1368 = vld [vmem:[%s2 + $0xc14] sm:$0xf]
    %v1369 = vld [vmem:[%s2 + $0xc18] sm:$0xf]
    %v1370 = vld [vmem:[%s2 + $0xc1c] sm:$0xf]
    %v1371 = vld [vmem:[%s2 + $0xc20] sm:$0xf]
    %v1372 = vld [vmem:[%s2 + $0xc24] sm:$0xf]
    %v1373 = vld [vmem:[%s2 + $0xc28] sm:$0xf]
    %v1374 = vld [vmem:[%s2 + $0xc2c] sm:$0xf]
    %v1375 = vld [vmem:[%s2 + $0xc30] sm:$0xf]
    %v1376 = vld [vmem:[%s2 + $0xc34] sm:$0xf]
    %v1377 = vld [vmem:[%s2 + $0xc38] sm:$0xf]
    %v1378 = vld [vmem:[%s2 + $0xc3c] sm:$0xf]
    %v1379 = vld [vmem:[%s2 + $0xc40] sm:$0xf]
    %v1380 = vld [vmem:[%s2 + $0xc44] sm:$0xf]
    %v1381 = vld [vmem:[%s2 + $0xc48] sm:$0xf]
    %v1382 = vld [vmem:[%s2 + $0xc4c] sm:$0xf]
    %v1383 = vld [vmem:[%s2 + $0xc50] sm:$0xf]
    %v1384 = vld [vmem:[%s2 + $0xc54] sm:$0xf]
    %v1385 = vld [vmem:[%s2 + $0xc58] sm:$0xf]
    %v1386 = vld [vmem:[%s2 + $0xc5c] sm:$0xf]
    %v1387 = vld [vmem:[%s2 + $0xc60] sm:$0xf]
    %v1388 = vld [vmem:[%s2 + $0xc64] sm:$0xf]
    %v1389 = vld [vmem:[%s2 + $0xc68] sm:$0xf]
    %v1390 = vld [vmem:[%s2 + $0xc6c] sm:$0xf]
    %v1391 = vld [vmem:[%s2 + $0xc70] sm:$0xf]
    %v1392 = vld [vmem:[%s2 + $0xc74] sm:$0xf]
    %v1393 = vld [vmem:[%s2 + $0xc78] sm:$0xf]
    %v1394 = vld [vmem:[%s2 + $0xc7c] sm:$0xf]
    %v1395 = vld [vmem:[%s2 + $0xc80] sm:$0xf]
    %v1396 = vld [vmem:[%s2 + $0xc84] sm:$0xf]
    %v1397 = vld [vmem:[%s2 + $0xc88] sm:$0xf]
    %v1398 = vld [vmem:[%s2 + $0xc8c] sm:$0xf]
    %v1399 = vld [vmem:[%s2 + $0xc90] sm:$0xf]
    %v1400 = vld [vmem:[%s2 + $0xc94] sm:$0xf]
    %v1401 = vld [vmem:[%s2 + $0xc98] sm:$0xf]
    %v1402 = vld [vmem:[%s2 + $0xc9c] sm:$0xf]
    %v1403 = vld [vmem:[%s2 + $0xca0] sm:$0xf]
    %v1404 = vld [vmem:[%s2 + $0xca4] sm:$0xf]
    %v1405 = vld [vmem:[%s2 + $0xca8] sm:$0xf]
    %v1406 = vld [vmem:[%s2 + $0xcac] sm:$0xf]
    %v1407 = vld [vmem:[%s2 + $0xcb0] sm:$0xf]
    %v1408 = vld [vmem:[%s2 + $0xcb4] sm:$0xf]
    %v1409 = vld [vmem:[%s2 + $0xcb8] sm:$0xf]
    %v1410 = vld [vmem:[%s2 + $0xcbc] sm:$0xf]
    %v1411 = vld [vmem:[%s2 + $0xcc0] sm:$0xf]
    %v1412 = vld [vmem:[%s2 + $0xcc4] sm:$0xf]
    %v1413 = vld [vmem:[%s2 + $0xcc8] sm:$0xf]
    %v1414 = vld [vmem:[%s2 + $0xccc] sm:$0xf]
    %v1415 = vld [vmem:[%s2 + $0xcd0] sm:$0xf]
    %v1416 = vld [vmem:[%s2 + $0xcd4] sm:$0xf]
    %v1417 = vld [vmem:[%s2 + $0xcd8] sm:$0xf]
    %v1418 = vld [vmem:[%s2 + $0xcdc] sm:$0xf]
    %v1419 = vld [vmem:[%s2 + $0xce0] sm:$0xf]
    %v1420 = vld [vmem:[%s2 + $0xce4] sm:$0xf]
    %v1421 = vld [vmem:[%s2 + $0xce8] sm:$0xf]
    %v1422 = vld [vmem:[%s2 + $0xcec] sm:$0xf]
    %v1423 = vld [vmem:[%s2 + $0xcf0] sm:$0xf]
    %v1424 = vld [vmem:[%s2 + $0xcf4] sm:$0xf]
    %v1425 = vld [vmem:[%s2 + $0xcf8] sm:$0xf]
    %v1426 = vld [vmem:[%s2 + $0xcfc] sm:$0xf]
    %v1427 = vld [vmem:[%s2 + $0xd00] sm:$0xf]
    %v1428 = vld [vmem:[%s2 + $0xd04] sm:$0xf]
    %v1429 = vld [vmem:[%s2 + $0xd08] sm:$0xf]
    %v1430 = vld [vmem:[%s2 + $0xd0c] sm:$0xf]
    %v1431 = vld [vmem:[%s2 + $0xd10] sm:$0xf]
    %v1432 = vld [vmem:[%s2 + $0xd14] sm:$0xf]
    %v1433 = vld [vmem:[%s2 + $0xd18] sm:$0xf]
    %v1434 = vld [vmem:[%s2 + $0xd1c] sm:$0xf]
    %v1435 = vld [vmem:[%s2 + $0xd20] sm:$0xf]
    %v1436 = vld [vmem:[%s2 + $0xd24] sm:$0xf]
    %v1437 = vld [vmem:[%s2 + $0xd28] sm:$0xf]
    %v1438 = vld [vmem:[%s2 + $0xd2c] sm:$0xf]
    %v1439 = vld [vmem:[%s2 + $0xd30] sm:$0xf]
    %v1440 = vld [vmem:[%s2 + $0xd34] sm:$0xf]
    %v1441 = vld [vmem:[%s2 + $0xd38] sm:$0xf]
    %v1442 = vld [vmem:[%s2 + $0xd3c] sm:$0xf]
    %v1443 = vld [vmem:[%s2 + $0xd40] sm:$0xf]
    %v1444 = vld [vmem:[%s2 + $0xd44] sm:$0xf]
    %v1445 = vld [vmem:[%s2 + $0xd48] sm:$0xf]
    %v1446 = vld [vmem:[%s2 + $0xd4c] sm:$0xf]
    %v1447 = vld [vmem:[%s2 + $0xd50] sm:$0xf]
    %v1448 = vld [vmem:[%s2 + $0xd54] sm:$0xf]
    %v1449 = vld [vmem:[%s2 + $0xd58] sm:$0xf]
    %v1450 = vld [vmem:[%s2 + $0xd5c] sm:$0xf]
    %v1451 = vld [vmem:[%s2 + $0xd60] sm:$0xf]
    %v1452 = vld [vmem:[%s2 + $0xd64] sm:$0xf]
    %v1453 = vld [vmem:[%s2 + $0xd68] sm:$0xf]
    %v1454 = vld [vmem:[%s2 + $0xd6c] sm:$0xf]
    %v1455 = vld [vmem:[%s2 + $0xd70] sm:$0xf]
    %v1456 = vld [vmem:[%s2 + $0xd74] sm:$0xf]
    %v1457 = vld [vmem:[%s2 + $0xd78] sm:$0xf]
    %v1458 = vld [vmem:[%s2 + $0xd7c] sm:$0xf]
    %v1459 = vld [vmem:[%s2 + $0xd80] sm:$0xf]
    %v1460 = vld [vmem:[%s2 + $0xd84] sm:$0xf]
    %v1461 = vld [vmem:[%s2 + $0xd88] sm:$0xf]
    %v1462 = vld [vmem:[%s2 + $0xd8c] sm:$0xf]
    %v1463 = vld [vmem:[%s2 + $0xd90] sm:$0xf]
    %v1464 = vld [vmem:[%s2 + $0xd94] sm:$0xf]
    %v1465 = vld [vmem:[%s2 + $0xd98] sm:$0xf]
    %v1466 = vld [vmem:[%s2 + $0xd9c] sm:$0xf]
    %v1467 = vld [vmem:[%s2 + $0xda0] sm:$0xf]
    %v1468 = vld [vmem:[%s2 + $0xda4] sm:$0xf]
    %v1469 = vld [vmem:[%s2 + $0xda8] sm:$0xf]
    %v1470 = vld [vmem:[%s2 + $0xdac] sm:$0xf]
    %v1471 = vld [vmem:[%s2 + $0xdb0] sm:$0xf]
    %v1472 = vld [vmem:[%s2 + $0xdb4] sm:$0xf]
    %v1473 = vld [vmem:[%s2 + $0xdb8] sm:$0xf]
    %v1474 = vld [vmem:[%s2 + $0xdbc] sm:$0xf]
    %v1475 = vld [vmem:[%s2 + $0xdc0] sm:$0xf]
    %v1476 = vld [vmem:[%s2 + $0xdc4] sm:$0xf]
    %v1477 = vld [vmem:[%s2 + $0xdc8] sm:$0xf]
    %v1478 = vld [vmem:[%s2 + $0xdcc] sm:$0xf]
    %v1479 = vld [vmem:[%s2 + $0xdd0] sm:$0xf]
    %v1480 = vld [vmem:[%s2 + $0xdd4] sm:$0xf]
    %v1481 = vld [vmem:[%s2 + $0xdd8] sm:$0xf]
    %v1482 = vld [vmem:[%s2 + $0xddc] sm:$0xf]
    %v1483 = vld [vmem:[%s2 + $0xde0] sm:$0xf]
    %v1484 = vld [vmem:[%s2 + $0xde4] sm:$0xf]
    %v1485 = vld [vmem:[%s2 + $0xde8] sm:$0xf]
    %v1486 = vld [vmem:[%s2 + $0xdec] sm:$0xf]
    %v1487 = vld [vmem:[%s2 + $0xdf0] sm:$0xf]
    %v1488 = vld [vmem:[%s2 + $0xdf4] sm:$0xf]
    %v1489 = vld [vmem:[%s2 + $0xdf8] sm:$0xf]
    %v1490 = vld [vmem:[%s2 + $0xdfc] sm:$0xf]
    %v1491 = vld [vmem:[%s2 + $0xe00] sm:$0xf]
    %v1492 = vld [vmem:[%s2 + $0xe04] sm:$0xf]
    %v1493 = vld [vmem:[%s2 + $0xe08] sm:$0xf]
    %v1494 = vld [vmem:[%s2 + $0xe0c] sm:$0xf]
    %v1495 = vld [vmem:[%s2 + $0xe10] sm:$0xf]
    %v1496 = vld [vmem:[%s2 + $0xe14] sm:$0xf]
    %v1497 = vld [vmem:[%s2 + $0xe18] sm:$0xf]
    %v1498 = vld [vmem:[%s2 + $0xe1c] sm:$0xf]
    %v1499 = vld [vmem:[%s2 + $0xe20] sm:$0xf]
    %v1500 = vld [vmem:[%s2 + $0xe24] sm:$0xf]
    %v1501 = vld [vmem:[%s2 + $0xe28] sm:$0xf]
    %v1502 = vld [vmem:[%s2 + $0xe2c] sm:$0xf]
    %v1503 = vld [vmem:[%s2 + $0xe30] sm:$0xf]
    %v1504 = vld [vmem:[%s2 + $0xe34] sm:$0xf]
    %v1505 = vld [vmem:[%s2 + $0xe38] sm:$0xf]
    %v1506 = vld [vmem:[%s2 + $0xe3c] sm:$0xf]
    %v1507 = vld [vmem:[%s2 + $0xe40] sm:$0xf]
    %v1508 = vld [vmem:[%s2 + $0xe44] sm:$0xf]
    %v1509 = vld [vmem:[%s2 + $0xe48] sm:$0xf]
    %v1510 = vld [vmem:[%s2 + $0xe4c] sm:$0xf]
    %v1511 = vld [vmem:[%s2 + $0xe50] sm:$0xf]
    %v1512 = vld [vmem:[%s2 + $0xe54] sm:$0xf]
    %v1513 = vld [vmem:[%s2 + $0xe58] sm:$0xf]
    %v1514 = vld [vmem:[%s2 + $0xe5c] sm:$0xf]
    %v1515 = vld [vmem:[%s2 + $0xe60] sm:$0xf]
    %v1516 = vld [vmem:[%s2 + $0xe64] sm:$0xf]
    %v1517 = vld [vmem:[%s2 + $0xe68] sm:$0xf]
    %v1518 = vld [vmem:[%s2 + $0xe6c] sm:$0xf]
    %v1519 = vld [vmem:[%s2 + $0xe70] sm:$0xf]
    %v1520 = vld [vmem:[%s2 + $0xe74] sm:$0xf]
    %v1521 = vld [vmem:[%s2 + $0xe78] sm:$0xf]
    %v1522 = vld [vmem:[%s2 + $0xe7c] sm:$0xf]
    %v1523 = vld [vmem:[%s2 + $0xe80] sm:$0xf]
    %v1524 = vld [vmem:[%s2 + $0xe84] sm:$0xf]
    %v1525 = vld [vmem:[%s2 + $0xe88] sm:$0xf]
    %v1526 = vld [vmem:[%s2 + $0xe8c] sm:$0xf]
    %v1527 = vld [vmem:[%s2 + $0xe90] sm:$0xf]
    %v1528 = vld [vmem:[%s2 + $0xe94] sm:$0xf]
    %v1529 = vld [vmem:[%s2 + $0xe98] sm:$0xf]
    %v1530 = vld [vmem:[%s2 + $0xe9c] sm:$0xf]
    %v1531 = vld [vmem:[%s2 + $0xea0] sm:$0xf]
    %v1532 = vld [vmem:[%s2 + $0xea4] sm:$0xf]
    %v1533 = vld [vmem:[%s2 + $0xea8] sm:$0xf]
    %v1534 = vld [vmem:[%s2 + $0xeac] sm:$0xf]
    %v1535 = vld [vmem:[%s2 + $0xeb0] sm:$0xf]
    %v1536 = vld [vmem:[%s2 + $0xeb4] sm:$0xf]
    %v1537 = vld [vmem:[%s2 + $0xeb8] sm:$0xf]
    %v1538 = vld [vmem:[%s2 + $0xebc] sm:$0xf]
    %v1539 = vld [vmem:[%s2 + $0xec0] sm:$0xf]
    %v1540 = vld [vmem:[%s2 + $0xec4] sm:$0xf]
    %v1541 = vld [vmem:[%s2 + $0xec8] sm:$0xf]
    %v1542 = vld [vmem:[%s2 + $0xecc] sm:$0xf]
    %v1543 = vld [vmem:[%s2 + $0xed0] sm:$0xf]
    %v1544 = vld [vmem:[%s2 + $0xed4] sm:$0xf]
    %v1545 = vld [vmem:[%s2 + $0xed8] sm:$0xf]
    %v1546 = vld [vmem:[%s2 + $0xedc] sm:$0xf]
    %v1547 = vld [vmem:[%s2 + $0xee0] sm:$0xf]
    %v1548 = vld [vmem:[%s2 + $0xee4] sm:$0xf]
    %v1549 = vld [vmem:[%s2 + $0xee8] sm:$0xf]
    %v1550 = vld [vmem:[%s2 + $0xeec] sm:$0xf]
    %v1551 = vld [vmem:[%s2 + $0xef0] sm:$0xf]
    %v1552 = vld [vmem:[%s2 + $0xef4] sm:$0xf]
    %v1553 = vld [vmem:[%s2 + $0xef8] sm:$0xf]
    %v1554 = vld [vmem:[%s2 + $0xefc] sm:$0xf]
    %v1555 = vld [vmem:[%s2 + $0xf00] sm:$0xf]
    %v1556 = vld [vmem:[%s2 + $0xf04] sm:$0xf]
    %v1557 = vld [vmem:[%s2 + $0xf08] sm:$0xf]
    %v1558 = vld [vmem:[%s2 + $0xf0c] sm:$0xf]
    %v1559 = vld [vmem:[%s2 + $0xf10] sm:$0xf]
    %v1560 = vld [vmem:[%s2 + $0xf14] sm:$0xf]
    %v1561 = vld [vmem:[%s2 + $0xf18] sm:$0xf]
    %v1562 = vld [vmem:[%s2 + $0xf1c] sm:$0xf]
    %v1563 = vld [vmem:[%s2 + $0xf20] sm:$0xf]
    %v1564 = vld [vmem:[%s2 + $0xf24] sm:$0xf]
    %v1565 = vld [vmem:[%s2 + $0xf28] sm:$0xf]
    %v1566 = vld [vmem:[%s2 + $0xf2c] sm:$0xf]
    %v1567 = vld [vmem:[%s2 + $0xf30] sm:$0xf]
    %v1568 = vld [vmem:[%s2 + $0xf34] sm:$0xf]
    %v1569 = vld [vmem:[%s2 + $0xf38] sm:$0xf]
    %v1570 = vld [vmem:[%s2 + $0xf3c] sm:$0xf]
    %v1571 = vld [vmem:[%s2 + $0xf40] sm:$0xf]
    %v1572 = vld [vmem:[%s2 + $0xf44] sm:$0xf]
    %v1573 = vld [vmem:[%s2 + $0xf48] sm:$0xf]
    %v1574 = vld [vmem:[%s2 + $0xf4c] sm:$0xf]
    %v1575 = vld [vmem:[%s2 + $0xf50] sm:$0xf]
    %v1576 = vld [vmem:[%s2 + $0xf54] sm:$0xf]
    %v1577 = vld [vmem:[%s2 + $0xf58] sm:$0xf]
    %v1578 = vld [vmem:[%s2 + $0xf5c] sm:$0xf]
    %v1579 = vld [vmem:[%s2 + $0xf60] sm:$0xf]
    %v1580 = vld [vmem:[%s2 + $0xf64] sm:$0xf]
    %v1581 = vld [vmem:[%s2 + $0xf68] sm:$0xf]
    %v1582 = vld [vmem:[%s2 + $0xf6c] sm:$0xf]
    %v1583 = vld [vmem:[%s2 + $0xf70] sm:$0xf]
    %v1584 = vld [vmem:[%s2 + $0xf74] sm:$0xf]
    %v1585 = vld [vmem:[%s2 + $0xf78] sm:$0xf]
    %v1586 = vld [vmem:[%s2 + $0xf7c] sm:$0xf]
    %v1587 = vld [vmem:[%s2 + $0xf80] sm:$0xf]
    %v1588 = vld [vmem:[%s2 + $0xf84] sm:$0xf]
    %v1589 = vld [vmem:[%s2 + $0xf88] sm:$0xf]
    %v1590 = vld [vmem:[%s2 + $0xf8c] sm:$0xf]
    %v1591 = vld [vmem:[%s2 + $0xf90] sm:$0xf]
    %v1592 = vld [vmem:[%s2 + $0xf94] sm:$0xf]
    %v1593 = vld [vmem:[%s2 + $0xf98] sm:$0xf]
    %v1594 = vld [vmem:[%s2 + $0xf9c] sm:$0xf]
    %v1595 = vld [vmem:[%s2 + $0xfa0] sm:$0xf]
    %v1596 = vld [vmem:[%s2 + $0xfa4] sm:$0xf]
    %v1597 = vld [vmem:[%s2 + $0xfa8] sm:$0xf]
    %v1598 = vld [vmem:[%s2 + $0xfac] sm:$0xf]
    %v1599 = vld [vmem:[%s2 + $0xfb0] sm:$0xf]
    %v1600 = vld [vmem:[%s2 + $0xfb4] sm:$0xf]
    %v1601 = vld [vmem:[%s2 + $0xfb8] sm:$0xf]
    %v1602 = vld [vmem:[%s2 + $0xfbc] sm:$0xf]
    %v1603 = vld [vmem:[%s2 + $0xfc0] sm:$0xf]
    %v1604 = vld [vmem:[%s2 + $0xfc4] sm:$0xf]
    %v1605 = vld [vmem:[%s2 + $0xfc8] sm:$0xf]
    %v1606 = vld [vmem:[%s2 + $0xfcc] sm:$0xf]
    %v1607 = vld [vmem:[%s2 + $0xfd0] sm:$0xf]
    %v1608 = vld [vmem:[%s2 + $0xfd4] sm:$0xf]
    %v1609 = vld [vmem:[%s2 + $0xfd8] sm:$0xf]
    %v1610 = vld [vmem:[%s2 + $0xfdc] sm:$0xf]
    %v1611 = vld [vmem:[%s2 + $0xfe0] sm:$0xf]
    %v1612 = vld [vmem:[%s2 + $0xfe4] sm:$0xf]
    %v1613 = vld [vmem:[%s2 + $0xfe8] sm:$0xf]
    %v1614 = vld [vmem:[%s2 + $0xfec] sm:$0xf]
    %v1615 = vld [vmem:[%s2 + $0xff0] sm:$0xf]
    %v1616 = vld [vmem:[%s2 + $0xff4] sm:$0xf]
    %v1617 = vld [vmem:[%s2 + $0xff8] sm:$0xf]
    %v1618 = vld [vmem:[%s2 + $0xffc] sm:$0xf]
    %v1619 = vld [vmem:[%s2 + $0x1000] sm:$0xf]
    %v1620 = vld [vmem:[%s2 + $0x1004] sm:$0xf]
    %v1621 = vld [vmem:[%s2 + $0x1008] sm:$0xf]
    %v1622 = vld [vmem:[%s2 + $0x100c] sm:$0xf]
    %v1623 = vld [vmem:[%s2 + $0x1010] sm:$0xf]
    %v1624 = vld [vmem:[%s2 + $0x1014] sm:$0xf]
    %v1625 = vld [vmem:[%s2 + $0x1018] sm:$0xf]
    %v1626 = vld [vmem:[%s2 + $0x101c] sm:$0xf]
    %v1627 = vld [vmem:[%s2 + $0x1020] sm:$0xf]
    %v1628 = vld [vmem:[%s2 + $0x1024] sm:$0xf]
    %v1629 = vld [vmem:[%s2 + $0x1028] sm:$0xf]
    %v1630 = vld [vmem:[%s2 + $0x102c] sm:$0xf]
    %v1631 = vld [vmem:[%s2 + $0x1030] sm:$0xf]
    %v1632 = vld [vmem:[%s2 + $0x1034] sm:$0xf]
    %v1633 = vld [vmem:[%s2 + $0x1038] sm:$0xf]
    %v1634 = vld [vmem:[%s2 + $0x103c] sm:$0xf]
    %v1635 = vld [vmem:[%s2 + $0x1040] sm:$0xf]
    %v1636 = vld [vmem:[%s2 + $0x1044] sm:$0xf]
    %v1637 = vld [vmem:[%s2 + $0x1048] sm:$0xf]
    %v1638 = vld [vmem:[%s2 + $0x104c] sm:$0xf]
    %v1639 = vld [vmem:[%s2 + $0x1050] sm:$0xf]
    %v1640 = vld [vmem:[%s2 + $0x1054] sm:$0xf]
    %v1641 = vld [vmem:[%s2 + $0x1058] sm:$0xf]
    %v1642 = vld [vmem:[%s2 + $0x105c] sm:$0xf]
    %v1643 = vld [vmem:[%s2 + $0x1060] sm:$0xf]
    %v1644 = vld [vmem:[%s2 + $0x1064] sm:$0xf]
    %v1645 = vld [vmem:[%s2 + $0x1068] sm:$0xf]
    %v1646 = vld [vmem:[%s2 + $0x106c] sm:$0xf]
    %v1647 = vld [vmem:[%s2 + $0x1070] sm:$0xf]
    %v1648 = vld [vmem:[%s2 + $0x1074] sm:$0xf]
    %v1649 = vld [vmem:[%s2 + $0x1078] sm:$0xf]
    %v1650 = vld [vmem:[%s2 + $0x107c] sm:$0xf]
    %v1651 = vld [vmem:[%s2 + $0x1080] sm:$0xf]
    %v1652 = vld [vmem:[%s2 + $0x1084] sm:$0xf]
    %v1653 = vld [vmem:[%s2 + $0x1088] sm:$0xf]
    %v1654 = vld [vmem:[%s2 + $0x108c] sm:$0xf]
    %v1655 = vld [vmem:[%s2 + $0x1090] sm:$0xf]
    %v1656 = vld [vmem:[%s2 + $0x1094] sm:$0xf]
    %v1657 = vld [vmem:[%s2 + $0x1098] sm:$0xf]
    %v1658 = vld [vmem:[%s2 + $0x109c] sm:$0xf]
    %v1659 = vld [vmem:[%s2 + $0x10a0] sm:$0xf]
    %v1660 = vld [vmem:[%s2 + $0x10a4] sm:$0xf]
    %v1661 = vld [vmem:[%s2 + $0x10a8] sm:$0xf]
    %v1662 = vld [vmem:[%s2 + $0x10ac] sm:$0xf]
    %v1663 = vld [vmem:[%s2 + $0x10b0] sm:$0xf]
    %v1664 = vld [vmem:[%s2 + $0x10b4] sm:$0xf]
    %v1665 = vld [vmem:[%s2 + $0x10b8] sm:$0xf]
    %v1666 = vld [vmem:[%s2 + $0x10bc] sm:$0xf]
    %v1667 = vld [vmem:[%s2 + $0x10c0] sm:$0xf]
    %v1668 = vld [vmem:[%s2 + $0x10c4] sm:$0xf]
    %v1669 = vld [vmem:[%s2 + $0x10c8] sm:$0xf]
    %v1670 = vld [vmem:[%s2 + $0x10cc] sm:$0xf]
    %v1671 = vld [vmem:[%s2 + $0x10d0] sm:$0xf]
    %v1672 = vld [vmem:[%s2 + $0x10d4] sm:$0xf]
    %v1673 = vld [vmem:[%s2 + $0x10d8] sm:$0xf]
    %v1674 = vld [vmem:[%s2 + $0x10dc] sm:$0xf]
    %v1675 = vld [vmem:[%s2 + $0x10e0] sm:$0xf]
    %v1676 = vld [vmem:[%s2 + $0x10e4] sm:$0xf]
    %v1677 = vld [vmem:[%s2 + $0x10e8] sm:$0xf]
    %v1678 = vld [vmem:[%s2 + $0x10ec] sm:$0xf]
    %v1679 = vld [vmem:[%s2 + $0x10f0] sm:$0xf]
    %v1680 = vld [vmem:[%s2 + $0x10f4] sm:$0xf]
    %v1681 = vld [vmem:[%s2 + $0x10f8] sm:$0xf]
    %v1682 = vld [vmem:[%s2 + $0x10fc] sm:$0xf]
    %v1683 = vld [vmem:[%s2 + $0x1100] sm:$0xf]
    %v1684 = vld [vmem:[%s2 + $0x1104] sm:$0xf]
    %v1685 = vld [vmem:[%s2 + $0x1108] sm:$0xf]
    %v1686 = vld [vmem:[%s2 + $0x110c] sm:$0xf]
    %v1687 = vld [vmem:[%s2 + $0x1110] sm:$0xf]
    %v1688 = vld [vmem:[%s2 + $0x1114] sm:$0xf]
    %v1689 = vld [vmem:[%s2 + $0x1118] sm:$0xf]
    %v1690 = vld [vmem:[%s2 + $0x111c] sm:$0xf]
    %v1691 = vld [vmem:[%s2 + $0x1120] sm:$0xf]
    %v1692 = vld [vmem:[%s2 + $0x1124] sm:$0xf]
    %v1693 = vld [vmem:[%s2 + $0x1128] sm:$0xf]
    %v1694 = vld [vmem:[%s2 + $0x112c] sm:$0xf]
    %v1695 = vld [vmem:[%s2 + $0x1130] sm:$0xf]
    %v1696 = vld [vmem:[%s2 + $0x1134] sm:$0xf]
    %v1697 = vld [vmem:[%s2 + $0x1138] sm:$0xf]
    %v1698 = vld [vmem:[%s2 + $0x113c] sm:$0xf]
    %v1699 = vld [vmem:[%s2 + $0x1140] sm:$0xf]
    %v1700 = vld [vmem:[%s2 + $0x1144] sm:$0xf]
    %v1701 = vld [vmem:[%s2 + $0x1148] sm:$0xf]
    %v1702 = vld [vmem:[%s2 + $0x114c] sm:$0xf]
    %v1703 = vld [vmem:[%s2 + $0x1150] sm:$0xf]
    %v1704 = vld [vmem:[%s2 + $0x1154] sm:$0xf]
    %v1705 = vld [vmem:[%s2 + $0x1158] sm:$0xf]
    %v1706 = vld [vmem:[%s2 + $0x115c] sm:$0xf]
    %v1707 = vld [vmem:[%s2 + $0x1160] sm:$0xf]
    %v1708 = vld [vmem:[%s2 + $0x1164] sm:$0xf]
    %v1709 = vld [vmem:[%s2 + $0x1168] sm:$0xf]
    %v1710 = vld [vmem:[%s2 + $0x116c] sm:$0xf]
    %v1711 = vld [vmem:[%s2 + $0x1170] sm:$0xf]
    %v1712 = vld [vmem:[%s2 + $0x1174] sm:$0xf]
    %v1713 = vld [vmem:[%s2 + $0x1178] sm:$0xf]
    %v1714 = vld [vmem:[%s2 + $0x117c] sm:$0xf]
    %v1715 = vld [vmem:[%s2 + $0x1180] sm:$0xf]
    %v1716 = vld [vmem:[%s2 + $0x1184] sm:$0xf]
    %v1717 = vld [vmem:[%s2 + $0x1188] sm:$0xf]
    %v1718 = vld [vmem:[%s2 + $0x118c] sm:$0xf]
    %v1719 = vld [vmem:[%s2 + $0x1190] sm:$0xf]
    %v1720 = vld [vmem:[%s2 + $0x1194] sm:$0xf]
    %v1721 = vld [vmem:[%s2 + $0x1198] sm:$0xf]
    %v1722 = vld [vmem:[%s2 + $0x119c] sm:$0xf]
    %v1723 = vld [vmem:[%s2 + $0x11a0] sm:$0xf]
    %v1724 = vld [vmem:[%s2 + $0x11a4] sm:$0xf]
    %v1725 = vld [vmem:[%s2 + $0x11a8] sm:$0xf]
    %v1726 = vld [vmem:[%s2 + $0x11ac] sm:$0xf]
    %v1727 = vld [vmem:[%s2 + $0x11b0] sm:$0xf]
    %v1728 = vld [vmem:[%s2 + $0x11b4] sm:$0xf]
    %v1729 = vld [vmem:[%s2 + $0x11b8] sm:$0xf]
    %v1730 = vld [vmem:[%s2 + $0x11bc] sm:$0xf]
    %v1731 = vld [vmem:[%s2 + $0x11c0] sm:$0xf]
    %v1732 = vld [vmem:[%s2 + $0x11c4] sm:$0xf]
    %v1733 = vld [vmem:[%s2 + $0x11c8] sm:$0xf]
    %v1734 = vld [vmem:[%s2 + $0x11cc] sm:$0xf]
    %v1735 = vld [vmem:[%s2 + $0x11d0] sm:$0xf]
    %v1736 = vld [vmem:[%s2 + $0x11d4] sm:$0xf]
    %v1737 = vld [vmem:[%s2 + $0x11d8] sm:$0xf]
    %v1738 = vld [vmem:[%s2 + $0x11dc] sm:$0xf]
    %v1739 = vld [vmem:[%s2 + $0x11e0] sm:$0xf]
    %v1740 = vld [vmem:[%s2 + $0x11e4] sm:$0xf]
    %v1741 = vld [vmem:[%s2 + $0x11e8] sm:$0xf]
    %v1742 = vld [vmem:[%s2 + $0x11ec] sm:$0xf]
    %v1743 = vld [vmem:[%s2 + $0x11f0] sm:$0xf]
    %v1744 = vld [vmem:[%s2 + $0x11f4] sm:$0xf]
    %v1745 = vld [vmem:[%s2 + $0x11f8] sm:$0xf]
    %v1746 = vld [vmem:[%s2 + $0x11fc] sm:$0xf]
    %v1747 = vld [vmem:[%s2 + $0x1200] sm:$0xf]
    %v1748 = vld [vmem:[%s2 + $0x1204] sm:$0xf]
    %v1749 = vld [vmem:[%s2 + $0x1208] sm:$0xf]
    %v1750 = vld [vmem:[%s2 + $0x120c] sm:$0xf]
    %v1751 = vld [vmem:[%s2 + $0x1210] sm:$0xf]
    %v1752 = vld [vmem:[%s2 + $0x1214] sm:$0xf]
    %v1753 = vld [vmem:[%s2 + $0x1218] sm:$0xf]
    %v1754 = vld [vmem:[%s2 + $0x121c] sm:$0xf]
    %v1755 = vld [vmem:[%s2 + $0x1220] sm:$0xf]
    %v1756 = vld [vmem:[%s2 + $0x1224] sm:$0xf]
    %v1757 = vld [vmem:[%s2 + $0x1228] sm:$0xf]
    %v1758 = vld [vmem:[%s2 + $0x122c] sm:$0xf]
    %v1759 = vld [vmem:[%s2 + $0x1230] sm:$0xf]
    %v1760 = vld [vmem:[%s2 + $0x1234] sm:$0xf]
    %v1761 = vld [vmem:[%s2 + $0x1238] sm:$0xf]
    %v1762 = vld [vmem:[%s2 + $0x123c] sm:$0xf]
    %v1763 = vld [vmem:[%s2 + $0x1240] sm:$0xf]
    %v1764 = vld [vmem:[%s2 + $0x1244] sm:$0xf]
    %v1765 = vld [vmem:[%s2 + $0x1248] sm:$0xf]
    %v1766 = vld [vmem:[%s2 + $0x124c] sm:$0xf]
    %v1767 = vld [vmem:[%s2 + $0x1250] sm:$0xf]
    %v1768 = vld [vmem:[%s2 + $0x1254] sm:$0xf]
    %v1769 = vld [vmem:[%s2 + $0x1258] sm:$0xf]
    %v1770 = vld [vmem:[%s2 + $0x125c] sm:$0xf]
    %v1771 = vld [vmem:[%s2 + $0x1260] sm:$0xf]
    %v1772 = vld [vmem:[%s2 + $0x1264] sm:$0xf]
    %v1773 = vld [vmem:[%s2 + $0x1268] sm:$0xf]
    %v1774 = vld [vmem:[%s2 + $0x126c] sm:$0xf]
    %v1775 = vld [vmem:[%s2 + $0x1270] sm:$0xf]
    %v1776 = vld [vmem:[%s2 + $0x1274] sm:$0xf]
    %v1777 = vld [vmem:[%s2 + $0x1278] sm:$0xf]
    %v1778 = vld [vmem:[%s2 + $0x127c] sm:$0xf]
    %v1779 = vld [vmem:[%s2 + $0x1280] sm:$0xf]
    %v1780 = vld [vmem:[%s2 + $0x1284] sm:$0xf]
    %v1781 = vld [vmem:[%s2 + $0x1288] sm:$0xf]
    %v1782 = vld [vmem:[%s2 + $0x128c] sm:$0xf]
    %v1783 = vld [vmem:[%s2 + $0x1290] sm:$0xf]
    %v1784 = vld [vmem:[%s2 + $0x1294] sm:$0xf]
    %v1785 = vld [vmem:[%s2 + $0x1298] sm:$0xf]
    %v1786 = vld [vmem:[%s2 + $0x129c] sm:$0xf]
    %v1787 = vld [vmem:[%s2 + $0x12a0] sm:$0xf]
    %v1788 = vld [vmem:[%s2 + $0x12a4] sm:$0xf]
    %v1789 = vld [vmem:[%s2 + $0x12a8] sm:$0xf]
    %v1790 = vld [vmem:[%s2 + $0x12ac] sm:$0xf]
    %v1791 = vld [vmem:[%s2 + $0x12b0] sm:$0xf]
    %v1792 = vld [vmem:[%s2 + $0x12b4] sm:$0xf]
    %v1793 = vld [vmem:[%s2 + $0x12b8] sm:$0xf]
    %v1794 = vld [vmem:[%s2 + $0x12bc] sm:$0xf]
    %v1795 = vld [vmem:[%s2 + $0x12c0] sm:$0xf]
    %v1796 = vld [vmem:[%s2 + $0x12c4] sm:$0xf]
    %v1797 = vld [vmem:[%s2 + $0x12c8] sm:$0xf]
    %v1798 = vld [vmem:[%s2 + $0x12cc] sm:$0xf]
    %v1799 = vld [vmem:[%s2 + $0x12d0] sm:$0xf]
    %v1800 = vld [vmem:[%s2 + $0x12d4] sm:$0xf]
    %v1801 = vld [vmem:[%s2 + $0x12d8] sm:$0xf]
    %v1802 = vld [vmem:[%s2 + $0x12dc] sm:$0xf]
    %v1803 = vld [vmem:[%s2 + $0x12e0] sm:$0xf]
    %v1804 = vld [vmem:[%s2 + $0x12e4] sm:$0xf]
    %v1805 = vld [vmem:[%s2 + $0x12e8] sm:$0xf]
    %v1806 = vld [vmem:[%s2 + $0x12ec] sm:$0xf]
    %v1807 = vld [vmem:[%s2 + $0x12f0] sm:$0xf]
    %v1808 = vld [vmem:[%s2 + $0x12f4] sm:$0xf]
    %v1809 = vld [vmem:[%s2 + $0x12f8] sm:$0xf]
    %v1810 = vld [vmem:[%s2 + $0x12fc] sm:$0xf]
    %v1811 = vld [vmem:[%s2 + $0x1300] sm:$0xf]
    %v1812 = vld [vmem:[%s2 + $0x1304] sm:$0xf]
    %v1813 = vld [vmem:[%s2 + $0x1308] sm:$0xf]
    %v1814 = vld [vmem:[%s2 + $0x130c] sm:$0xf]
    %v1815 = vld [vmem:[%s2 + $0x1310] sm:$0xf]
    %v1816 = vld [vmem:[%s2 + $0x1314] sm:$0xf]
    %v1817 = vld [vmem:[%s2 + $0x1318] sm:$0xf]
    %v1818 = vld [vmem:[%s2 + $0x131c] sm:$0xf]
    %v1819 = vld [vmem:[%s2 + $0x1320] sm:$0xf]
    %v1820 = vld [vmem:[%s2 + $0x1324] sm:$0xf]
    %v1821 = vld [vmem:[%s2 + $0x1328] sm:$0xf]
    %v1822 = vld [vmem:[%s2 + $0x132c] sm:$0xf]
    %v1823 = vld [vmem:[%s2 + $0x1330] sm:$0xf]
    %v1824 = vld [vmem:[%s2 + $0x1334] sm:$0xf]
    %v1825 = vld [vmem:[%s2 + $0x1338] sm:$0xf]
    %v1826 = vld [vmem:[%s2 + $0x133c] sm:$0xf]
    %v1827 = vld [vmem:[%s2 + $0x1340] sm:$0xf]
    %v1828 = vld [vmem:[%s2 + $0x1344] sm:$0xf]
    %v1829 = vld [vmem:[%s2 + $0x1348] sm:$0xf]
    %v1830 = vld [vmem:[%s2 + $0x134c] sm:$0xf]
    %v1831 = vld [vmem:[%s2 + $0x1350] sm:$0xf]
    %v1832 = vld [vmem:[%s2 + $0x1354] sm:$0xf]
    %v1833 = vld [vmem:[%s2 + $0x1358] sm:$0xf]
    %v1834 = vld [vmem:[%s2 + $0x135c] sm:$0xf]
    %v1835 = vld [vmem:[%s2 + $0x1360] sm:$0xf]
    %v1836 = vld [vmem:[%s2 + $0x1364] sm:$0xf]
    %v1837 = vld [vmem:[%s2 + $0x1368] sm:$0xf]
    %v1838 = vld [vmem:[%s2 + $0x136c] sm:$0xf]
    %v1839 = vld [vmem:[%s2 + $0x1370] sm:$0xf]
    %v1840 = vld [vmem:[%s2 + $0x1374] sm:$0xf]
    %v1841 = vld [vmem:[%s2 + $0x1378] sm:$0xf]
    %v1842 = vld [vmem:[%s2 + $0x137c] sm:$0xf]
    %v1843 = vld [vmem:[%s2 + $0x1380] sm:$0xf]
    %v1844 = vld [vmem:[%s2 + $0x1384] sm:$0xf]
    %v1845 = vld [vmem:[%s3] sm:$0x1]
    %v1847 = vlaneseq
    %v1848 = vshrl.u32 %v1847, 7
    %v1849 = vsub.s32 0, %v1848
    %v1850 = vrot.slane %v1845, %v1849
    %v3102 = vunpack.c.l.b16 %v595
    %v3103 = vunpack.c.l.b16 %v596
    %v3104 = vunpack.c.l.b16 %v597
    %v3105 = vunpack.c.l.b16 %v598
    %v3106 = vunpack.c.l.b16 %v599
    %v3107 = vunpack.c.l.b16 %v600
    %v3108 = vunpack.c.l.b16 %v601
    %v3109 = vunpack.c.l.b16 %v602
    %v3110 = vunpack.c.l.b16 %v603
    %v3111 = vunpack.c.l.b16 %v604
    %v3112 = vunpack.c.l.b16 %v605
    %v3113 = vunpack.c.l.b16 %v606
    %v3114 = vunpack.c.l.b16 %v607
    %v3115 = vunpack.c.l.b16 %v608
    %v3116 = vunpack.c.l.b16 %v609
    %v3117 = vunpack.c.l.b16 %v610
    %v3118 = vunpack.c.l.b16 %v611
    %v3119 = vunpack.c.l.b16 %v612
    %v3120 = vunpack.c.l.b16 %v613
    %v3121 = vunpack.c.l.b16 %v614
    %v3122 = vunpack.c.l.b16 %v615
    %v3123 = vunpack.c.l.b16 %v616
    %v3124 = vunpack.c.l.b16 %v617
    %v3125 = vunpack.c.l.b16 %v618
    %v3126 = vunpack.c.l.b16 %v619
    %v3127 = vunpack.c.l.b16 %v620
    %v3128 = vunpack.c.l.b16 %v621
    %v3129 = vunpack.c.l.b16 %v622
    %v3130 = vunpack.c.l.b16 %v623
    %v3131 = vunpack.c.l.b16 %v624
    %v3132 = vunpack.c.l.b16 %v625
    %v3133 = vunpack.c.l.b16 %v626
    %v3134 = vunpack.c.l.b16 %v627
    %v3135 = vunpack.c.l.b16 %v628
    %v3136 = vunpack.c.l.b16 %v629
    %v3137 = vunpack.c.l.b16 %v630
    %v3138 = vunpack.c.l.b16 %v631
    %v3139 = vunpack.c.l.b16 %v632
    %v3140 = vunpack.c.l.b16 %v633
    %v3141 = vunpack.c.l.b16 %v634
    %v3142 = vunpack.c.l.b16 %v635
    %v3143 = vunpack.c.l.b16 %v636
    %v3144 = vunpack.c.l.b16 %v637
    %v3145 = vunpack.c.l.b16 %v638
    %v3146 = vunpack.c.l.b16 %v639
    %v3147 = vunpack.c.l.b16 %v640
    %v3148 = vunpack.c.l.b16 %v641
    %v3149 = vunpack.c.l.b16 %v642
    %v3150 = vunpack.c.l.b16 %v643
    %v3151 = vunpack.c.l.b16 %v644
    %v3152 = vunpack.c.l.b16 %v645
    %v3153 = vunpack.c.l.b16 %v646
    %v3154 = vunpack.c.l.b16 %v647
    %v3155 = vunpack.c.l.b16 %v648
    %v3156 = vunpack.c.l.b16 %v649
    %v3157 = vunpack.c.l.b16 %v650
    %v3158 = vunpack.c.l.b16 %v651
    %v3159 = vunpack.c.l.b16 %v652
    %v3160 = vunpack.c.l.b16 %v653
    %v3161 = vunpack.c.l.b16 %v654
    %v3162 = vunpack.c.l.b16 %v655
    %v3163 = vunpack.c.l.b16 %v656
    %v3164 = vunpack.c.l.b16 %v657
    %v3165 = vunpack.c.l.b16 %v658
    %v3166 = vunpack.c.l.b16 %v659
    %v3167 = vunpack.c.l.b16 %v660
    %v3168 = vunpack.c.l.b16 %v661
    %v3169 = vunpack.c.l.b16 %v662
    %v3170 = vunpack.c.l.b16 %v663
    %v3171 = vunpack.c.l.b16 %v664
    %v3172 = vunpack.c.l.b16 %v665
    %v3173 = vunpack.c.l.b16 %v666
    %v3174 = vunpack.c.l.b16 %v667
    %v3175 = vunpack.c.l.b16 %v668
    %v3176 = vunpack.c.l.b16 %v669
    %v3177 = vunpack.c.l.b16 %v670
    %v3178 = vunpack.c.l.b16 %v671
    %v3179 = vunpack.c.l.b16 %v672
    %v3180 = vunpack.c.l.b16 %v673
    %v3181 = vunpack.c.l.b16 %v674
    %v3182 = vunpack.c.l.b16 %v675
    %v3183 = vunpack.c.l.b16 %v676
    %v3184 = vunpack.c.l.b16 %v677
    %v3185 = vunpack.c.l.b16 %v678
    %v3186 = vunpack.c.l.b16 %v679
    %v3187 = vunpack.c.l.b16 %v680
    %v3188 = vunpack.c.l.b16 %v681
    %v3189 = vunpack.c.l.b16 %v682
    %v3190 = vunpack.c.l.b16 %v683
    %v3191 = vunpack.c.l.b16 %v684
    %v3192 = vunpack.c.l.b16 %v685
    %v3193 = vunpack.c.l.b16 %v686
    %v3194 = vunpack.c.l.b16 %v687
    %v3195 = vunpack.c.l.b16 %v688
    %v3196 = vunpack.c.l.b16 %v689
    %v3197 = vunpack.c.l.b16 %v690
    %v3198 = vunpack.c.l.b16 %v691
    %v3199 = vunpack.c.l.b16 %v692
    %v3200 = vunpack.c.l.b16 %v693
    %v3201 = vunpack.c.l.b16 %v694
    %v3202 = vunpack.c.l.b16 %v695
    %v3203 = vunpack.c.l.b16 %v696
    %v3204 = vunpack.c.l.b16 %v697
    %v3205 = vunpack.c.l.b16 %v698
    %v3206 = vunpack.c.l.b16 %v699
    %v3207 = vunpack.c.l.b16 %v700
    %v3208 = vunpack.c.l.b16 %v701
    %v3209 = vunpack.c.l.b16 %v702
    %v3210 = vunpack.c.l.b16 %v703
    %v3211 = vunpack.c.l.b16 %v704
    %v3212 = vunpack.c.l.b16 %v705
    %v3213 = vunpack.c.l.b16 %v706
    %v3214 = vunpack.c.l.b16 %v707
    %v3215 = vunpack.c.l.b16 %v708
    %v3216 = vunpack.c.l.b16 %v709
    %v3217 = vunpack.c.l.b16 %v710
    %v3218 = vunpack.c.l.b16 %v711
    %v3219 = vunpack.c.l.b16 %v712
    %v3220 = vunpack.c.l.b16 %v713
    %v3221 = vunpack.c.l.b16 %v714
    %v3222 = vunpack.c.l.b16 %v715
    %v3223 = vunpack.c.l.b16 %v716
    %v3224 = vunpack.c.l.b16 %v717
    %v3225 = vunpack.c.l.b16 %v718
    %v3226 = vunpack.c.l.b16 %v719
    %v3227 = vunpack.c.l.b16 %v720
    %v3228 = vunpack.c.l.b16 %v721
    %v3229 = vunpack.c.l.b16 %v722
    %v3230 = vunpack.c.l.b16 %v723
    %v3231 = vunpack.c.l.b16 %v724
    %v3232 = vunpack.c.l.b16 %v725
    %v3233 = vunpack.c.l.b16 %v726
    %v3234 = vunpack.c.l.b16 %v727
    %v3235 = vunpack.c.l.b16 %v728
    %v3236 = vunpack.c.l.b16 %v729
    %v3237 = vunpack.c.l.b16 %v730
    %v3238 = vunpack.c.l.b16 %v731
    %v3239 = vunpack.c.l.b16 %v732
    %v3240 = vunpack.c.l.b16 %v733
    %v3241 = vunpack.c.l.b16 %v734
    %v3242 = vunpack.c.l.b16 %v735
    %v3243 = vunpack.c.l.b16 %v736
    %v3244 = vunpack.c.l.b16 %v737
    %v3245 = vunpack.c.l.b16 %v738
    %v3246 = vunpack.c.l.b16 %v739
    %v3247 = vunpack.c.l.b16 %v740
    %v3248 = vunpack.c.l.b16 %v741
    %v3249 = vunpack.c.l.b16 %v742
    %v3250 = vunpack.c.l.b16 %v743
    %v3251 = vunpack.c.l.b16 %v744
    %v3252 = vunpack.c.l.b16 %v745
    %v3253 = vunpack.c.l.b16 %v746
    %v3254 = vunpack.c.l.b16 %v747
    %v3255 = vunpack.c.l.b16 %v748
    %v3256 = vunpack.c.l.b16 %v749
    %v3257 = vunpack.c.l.b16 %v750
    %v3258 = vunpack.c.l.b16 %v751
    %v3259 = vunpack.c.l.b16 %v752
    %v3260 = vunpack.c.l.b16 %v753
    %v3261 = vunpack.c.l.b16 %v754
    %v3262 = vunpack.c.l.b16 %v755
    %v3263 = vunpack.c.l.b16 %v756
    %v3264 = vunpack.c.l.b16 %v757
    %v3265 = vunpack.c.l.b16 %v758
    %v3266 = vunpack.c.l.b16 %v759
    %v3267 = vunpack.c.l.b16 %v760
    %v3268 = vunpack.c.l.b16 %v761
    %v3269 = vunpack.c.l.b16 %v762
    %v3270 = vunpack.c.l.b16 %v763
    %v3271 = vunpack.c.l.b16 %v764
    %v3272 = vunpack.c.l.b16 %v765
    %v3273 = vunpack.c.l.b16 %v766
    %v3274 = vunpack.c.l.b16 %v767
    %v3275 = vunpack.c.l.b16 %v768
    %v3276 = vunpack.c.l.b16 %v769
    %v3277 = vunpack.c.l.b16 %v770
    %v3278 = vunpack.c.l.b16 %v771
    %v3279 = vunpack.c.l.b16 %v772
    %v3280 = vunpack.c.l.b16 %v773
    %v3281 = vunpack.c.l.b16 %v774
    %v3282 = vunpack.c.l.b16 %v775
    %v3283 = vunpack.c.l.b16 %v776
    %v3284 = vunpack.c.l.b16 %v777
    %v3285 = vunpack.c.l.b16 %v778
    %v3286 = vunpack.c.l.b16 %v779
    %v3287 = vunpack.c.l.b16 %v780
    %v3288 = vunpack.c.l.b16 %v781
    %v3289 = vunpack.c.l.b16 %v782
    %v3290 = vunpack.c.l.b16 %v783
    %v3291 = vunpack.c.l.b16 %v784
    %v3292 = vunpack.c.l.b16 %v785
    %v3293 = vunpack.c.l.b16 %v786
    %v3294 = vunpack.c.l.b16 %v787
    %v3295 = vunpack.c.l.b16 %v788
    %v3296 = vunpack.c.l.b16 %v789
    %v3297 = vunpack.c.l.b16 %v790
    %v3298 = vunpack.c.l.b16 %v791
    %v3299 = vunpack.c.l.b16 %v792
    %v3300 = vunpack.c.l.b16 %v793
    %v3301 = vunpack.c.l.b16 %v794
    %v3302 = vunpack.c.l.b16 %v795
    %v3303 = vunpack.c.l.b16 %v796
    %v3304 = vunpack.c.l.b16 %v797
    %v3305 = vunpack.c.l.b16 %v798
    %v3306 = vunpack.c.l.b16 %v799
    %v3307 = vunpack.c.l.b16 %v800
    %v3308 = vunpack.c.l.b16 %v801
    %v3309 = vunpack.c.l.b16 %v802
    %v3310 = vunpack.c.l.b16 %v803
    %v3311 = vunpack.c.l.b16 %v804
    %v3312 = vunpack.c.l.b16 %v805
    %v3313 = vunpack.c.l.b16 %v806
    %v3314 = vunpack.c.l.b16 %v807
    %v3315 = vunpack.c.l.b16 %v808
    %v3316 = vunpack.c.l.b16 %v809
    %v3317 = vunpack.c.l.b16 %v810
    %v3318 = vunpack.c.l.b16 %v811
    %v3319 = vunpack.c.l.b16 %v812
    %v3320 = vunpack.c.l.b16 %v813
    %v3321 = vunpack.c.l.b16 %v814
    %v3322 = vunpack.c.l.b16 %v815
    %v3323 = vunpack.c.l.b16 %v816
    %v3324 = vunpack.c.l.b16 %v817
    %v3325 = vunpack.c.l.b16 %v818
    %v3326 = vunpack.c.l.b16 %v819
    %v3327 = vunpack.c.l.b16 %v820
    %v3328 = vunpack.c.l.b16 %v821
    %v3329 = vunpack.c.l.b16 %v822
    %v3330 = vunpack.c.l.b16 %v823
    %v3331 = vunpack.c.l.b16 %v824
    %v3332 = vunpack.c.l.b16 %v825
    %v3333 = vunpack.c.l.b16 %v826
    %v3334 = vunpack.c.l.b16 %v827
    %v3335 = vunpack.c.l.b16 %v828
    %v3336 = vunpack.c.l.b16 %v829
    %v3337 = vunpack.c.l.b16 %v830
    %v3338 = vunpack.c.l.b16 %v831
    %v3339 = vunpack.c.l.b16 %v832
    %v3340 = vunpack.c.l.b16 %v833
    %v3341 = vunpack.c.l.b16 %v834
    %v3342 = vunpack.c.l.b16 %v835
    %v3343 = vunpack.c.l.b16 %v836
    %v3344 = vunpack.c.l.b16 %v837
    %v3345 = vunpack.c.l.b16 %v838
    %v3346 = vunpack.c.l.b16 %v839
    %v3347 = vunpack.c.l.b16 %v840
    %v3348 = vunpack.c.l.b16 %v841
    %v3349 = vunpack.c.l.b16 %v842
    %v3350 = vunpack.c.l.b16 %v843
    %v3351 = vunpack.c.l.b16 %v844
    %v3352 = vunpack.c.l.b16 %v845
    %v3353 = vunpack.c.l.b16 %v846
    %v3354 = vunpack.c.l.b16 %v847
    %v3355 = vunpack.c.l.b16 %v848
    %v3356 = vunpack.c.l.b16 %v849
    %v3357 = vunpack.c.l.b16 %v850
    %v3358 = vunpack.c.l.b16 %v851
    %v3359 = vunpack.c.l.b16 %v852
    %v3360 = vunpack.c.l.b16 %v853
    %v3361 = vunpack.c.l.b16 %v854
    %v3362 = vunpack.c.l.b16 %v855
    %v3363 = vunpack.c.l.b16 %v856
    %v3364 = vunpack.c.l.b16 %v857
    %v3365 = vunpack.c.l.b16 %v858
    %v3366 = vunpack.c.l.b16 %v859
    %v3367 = vunpack.c.l.b16 %v860
    %v3368 = vunpack.c.l.b16 %v861
    %v3369 = vunpack.c.l.b16 %v862
    %v3370 = vunpack.c.l.b16 %v863
    %v3371 = vunpack.c.l.b16 %v864
    %v3372 = vunpack.c.l.b16 %v865
    %v3373 = vunpack.c.l.b16 %v866
    %v3374 = vunpack.c.l.b16 %v867
    %v3375 = vunpack.c.l.b16 %v868
    %v3376 = vunpack.c.l.b16 %v869
    %v3377 = vunpack.c.l.b16 %v870
    %v3378 = vunpack.c.l.b16 %v871
    %v3379 = vunpack.c.l.b16 %v872
    %v3380 = vunpack.c.l.b16 %v873
    %v3381 = vunpack.c.l.b16 %v874
    %v3382 = vunpack.c.l.b16 %v875
    %v3383 = vunpack.c.l.b16 %v876
    %v3384 = vunpack.c.l.b16 %v877
    %v3385 = vunpack.c.l.b16 %v878
    %v3386 = vunpack.c.l.b16 %v879
    %v3387 = vunpack.c.l.b16 %v880
    %v3388 = vunpack.c.l.b16 %v881
    %v3389 = vunpack.c.l.b16 %v882
    %v3390 = vunpack.c.l.b16 %v883
    %v3391 = vunpack.c.l.b16 %v884
    %v3392 = vunpack.c.l.b16 %v885
    %v3393 = vunpack.c.l.b16 %v886
    %v3394 = vunpack.c.l.b16 %v887
    %v3395 = vunpack.c.l.b16 %v888
    %v3396 = vunpack.c.l.b16 %v889
    %v3397 = vunpack.c.l.b16 %v890
    %v3398 = vunpack.c.l.b16 %v891
    %v3399 = vunpack.c.l.b16 %v892
    %v3400 = vunpack.c.l.b16 %v893
    %v3401 = vunpack.c.l.b16 %v894
    %v3402 = vunpack.c.l.b16 %v895
    %v3403 = vunpack.c.l.b16 %v896
    %v3404 = vunpack.c.l.b16 %v897
    %v3405 = vunpack.c.l.b16 %v898
    %v3406 = vunpack.c.l.b16 %v899
    %v3407 = vunpack.c.l.b16 %v900
    %v3408 = vunpack.c.l.b16 %v901
    %v3409 = vunpack.c.l.b16 %v902
    %v3410 = vunpack.c.l.b16 %v903
    %v3411 = vunpack.c.l.b16 %v904
    %v3412 = vunpack.c.l.b16 %v905
    %v3413 = vunpack.c.l.b16 %v906
    %v3414 = vunpack.c.l.b16 %v907
    %v3415 = vunpack.c.l.b16 %v908
    %v3416 = vunpack.c.l.b16 %v909
    %v3417 = vunpack.c.l.b16 %v910
    %v3418 = vunpack.c.l.b16 %v911
    %v3419 = vunpack.c.l.b16 %v912
    %v3420 = vunpack.c.l.b16 %v913
    %v3421 = vunpack.c.l.b16 %v914
    %v3422 = vunpack.c.l.b16 %v915
    %v3423 = vunpack.c.l.b16 %v916
    %v3424 = vunpack.c.l.b16 %v917
    %v3425 = vunpack.c.l.b16 %v918
    %v3426 = vunpack.c.l.b16 %v919
    %v3427 = vunpack.c.l.b16 %v920
    %v3428 = vunpack.c.l.b16 %v921
    %v3429 = vunpack.c.l.b16 %v922
    %v3430 = vunpack.c.l.b16 %v923
    %v3431 = vunpack.c.l.b16 %v924
    %v3432 = vunpack.c.l.b16 %v925
    %v3433 = vunpack.c.l.b16 %v926
    %v3434 = vunpack.c.l.b16 %v927
    %v3435 = vunpack.c.l.b16 %v928
    %v3436 = vunpack.c.l.b16 %v929
    %v3437 = vunpack.c.l.b16 %v930
    %v3438 = vunpack.c.l.b16 %v931
    %v3439 = vunpack.c.l.b16 %v932
    %v3440 = vunpack.c.l.b16 %v933
    %v3441 = vunpack.c.l.b16 %v934
    %v3442 = vunpack.c.l.b16 %v935
    %v3443 = vunpack.c.l.b16 %v936
    %v3444 = vunpack.c.l.b16 %v937
    %v3445 = vunpack.c.l.b16 %v938
    %v3446 = vunpack.c.l.b16 %v939
    %v3447 = vunpack.c.l.b16 %v940
    %v3448 = vunpack.c.l.b16 %v941
    %v3449 = vunpack.c.l.b16 %v942
    %v3450 = vunpack.c.l.b16 %v943
    %v3451 = vunpack.c.l.b16 %v944
    %v3452 = vunpack.c.l.b16 %v945
    %v3453 = vunpack.c.l.b16 %v946
    %v3454 = vunpack.c.l.b16 %v947
    %v3455 = vunpack.c.l.b16 %v948
    %v3456 = vunpack.c.l.b16 %v949
    %v3457 = vunpack.c.l.b16 %v950
    %v3458 = vunpack.c.l.b16 %v951
    %v3459 = vunpack.c.l.b16 %v952
    %v3460 = vunpack.c.l.b16 %v953
    %v3461 = vunpack.c.l.b16 %v954
    %v3462 = vunpack.c.l.b16 %v955
    %v3463 = vunpack.c.l.b16 %v956
    %v3464 = vunpack.c.l.b16 %v957
    %v3465 = vunpack.c.l.b16 %v958
    %v3466 = vunpack.c.l.b16 %v959
    %v3467 = vunpack.c.l.b16 %v960
    %v3468 = vunpack.c.l.b16 %v961
    %v3469 = vunpack.c.l.b16 %v962
    %v3470 = vunpack.c.l.b16 %v963
    %v3471 = vunpack.c.l.b16 %v964
    %v3472 = vunpack.c.l.b16 %v965
    %v3473 = vunpack.c.l.b16 %v966
    %v3474 = vunpack.c.l.b16 %v967
    %v3475 = vunpack.c.l.b16 %v968
    %v3476 = vunpack.c.l.b16 %v969
    %v3477 = vunpack.c.l.b16 %v970
    %v3478 = vunpack.c.l.b16 %v971
    %v3479 = vunpack.c.l.b16 %v972
    %v3480 = vunpack.c.l.b16 %v973
    %v3481 = vunpack.c.l.b16 %v974
    %v3482 = vunpack.c.l.b16 %v975
    %v3483 = vunpack.c.l.b16 %v976
    %v3484 = vunpack.c.l.b16 %v977
    %v3485 = vunpack.c.l.b16 %v978
    %v3486 = vunpack.c.l.b16 %v979
    %v3487 = vunpack.c.l.b16 %v980
    %v3488 = vunpack.c.l.b16 %v981
    %v3489 = vunpack.c.l.b16 %v982
    %v3490 = vunpack.c.l.b16 %v983
    %v3491 = vunpack.c.l.b16 %v984
    %v3492 = vunpack.c.l.b16 %v985
    %v3493 = vunpack.c.l.b16 %v986
    %v3494 = vunpack.c.l.b16 %v987
    %v3495 = vunpack.c.l.b16 %v988
    %v3496 = vunpack.c.l.b16 %v989
    %v3497 = vunpack.c.l.b16 %v990
    %v3498 = vunpack.c.l.b16 %v991
    %v3499 = vunpack.c.l.b16 %v992
    %v3500 = vunpack.c.l.b16 %v993
    %v3501 = vunpack.c.l.b16 %v994
    %v3502 = vunpack.c.l.b16 %v995
    %v3503 = vunpack.c.l.b16 %v996
    %v3504 = vunpack.c.l.b16 %v997
    %v3505 = vunpack.c.l.b16 %v998
    %v3506 = vunpack.c.l.b16 %v999
    %v3507 = vunpack.c.l.b16 %v1000
    %v3508 = vunpack.c.l.b16 %v1001
    %v3509 = vunpack.c.l.b16 %v1002
    %v3510 = vunpack.c.l.b16 %v1003
    %v3511 = vunpack.c.l.b16 %v1004
    %v3512 = vunpack.c.l.b16 %v1005
    %v3513 = vunpack.c.l.b16 %v1006
    %v3514 = vunpack.c.l.b16 %v1007
    %v3515 = vunpack.c.l.b16 %v1008
    %v3516 = vunpack.c.l.b16 %v1009
    %v3517 = vunpack.c.l.b16 %v1010
    %v3518 = vunpack.c.l.b16 %v1011
    %v3519 = vunpack.c.l.b16 %v1012
    %v3520 = vunpack.c.l.b16 %v1013
    %v3521 = vunpack.c.l.b16 %v1014
    %v3522 = vunpack.c.l.b16 %v1015
    %v3523 = vunpack.c.l.b16 %v1016
    %v3524 = vunpack.c.l.b16 %v1017
    %v3525 = vunpack.c.l.b16 %v1018
    %v3526 = vunpack.c.l.b16 %v1019
    %v3527 = vunpack.c.l.b16 %v1020
    %v3528 = vunpack.c.l.b16 %v1021
    %v3529 = vunpack.c.l.b16 %v1022
    %v3530 = vunpack.c.l.b16 %v1023
    %v3531 = vunpack.c.l.b16 %v1024
    %v3532 = vunpack.c.l.b16 %v1025
    %v3533 = vunpack.c.l.b16 %v1026
    %v3534 = vunpack.c.l.b16 %v1027
    %v3535 = vunpack.c.l.b16 %v1028
    %v3536 = vunpack.c.l.b16 %v1029
    %v3537 = vunpack.c.l.b16 %v1030
    %v3538 = vunpack.c.l.b16 %v1031
    %v3539 = vunpack.c.l.b16 %v1032
    %v3540 = vunpack.c.l.b16 %v1033
    %v3541 = vunpack.c.l.b16 %v1034
    %v3542 = vunpack.c.l.b16 %v1035
    %v3543 = vunpack.c.l.b16 %v1036
    %v3544 = vunpack.c.l.b16 %v1037
    %v3545 = vunpack.c.l.b16 %v1038
    %v3546 = vunpack.c.l.b16 %v1039
    %v3547 = vunpack.c.l.b16 %v1040
    %v3548 = vunpack.c.l.b16 %v1041
    %v3549 = vunpack.c.l.b16 %v1042
    %v3550 = vunpack.c.l.b16 %v1043
    %v3551 = vunpack.c.l.b16 %v1044
    %v3552 = vunpack.c.l.b16 %v1045
    %v3553 = vunpack.c.l.b16 %v1046
    %v3554 = vunpack.c.l.b16 %v1047
    %v3555 = vunpack.c.l.b16 %v1048
    %v3556 = vunpack.c.l.b16 %v1049
    %v3557 = vunpack.c.l.b16 %v1050
    %v3558 = vunpack.c.l.b16 %v1051
    %v3559 = vunpack.c.l.b16 %v1052
    %v3560 = vunpack.c.l.b16 %v1053
    %v3561 = vunpack.c.l.b16 %v1054
    %v3562 = vunpack.c.l.b16 %v1055
    %v3563 = vunpack.c.l.b16 %v1056
    %v3564 = vunpack.c.l.b16 %v1057
    %v3565 = vunpack.c.l.b16 %v1058
    %v3566 = vunpack.c.l.b16 %v1059
    %v3567 = vunpack.c.l.b16 %v1060
    %v3568 = vunpack.c.l.b16 %v1061
    %v3569 = vunpack.c.l.b16 %v1062
    %v3570 = vunpack.c.l.b16 %v1063
    %v3571 = vunpack.c.l.b16 %v1064
    %v3572 = vunpack.c.l.b16 %v1065
    %v3573 = vunpack.c.l.b16 %v1066
    %v3574 = vunpack.c.l.b16 %v1067
    %v3575 = vunpack.c.l.b16 %v1068
    %v3576 = vunpack.c.l.b16 %v1069
    %v3577 = vunpack.c.l.b16 %v1070
    %v3578 = vunpack.c.l.b16 %v1071
    %v3579 = vunpack.c.l.b16 %v1072
    %v3580 = vunpack.c.l.b16 %v1073
    %v3581 = vunpack.c.l.b16 %v1074
    %v3582 = vunpack.c.l.b16 %v1075
    %v3583 = vunpack.c.l.b16 %v1076
    %v3584 = vunpack.c.l.b16 %v1077
    %v3585 = vunpack.c.l.b16 %v1078
    %v3586 = vunpack.c.l.b16 %v1079
    %v3587 = vunpack.c.l.b16 %v1080
    %v3588 = vunpack.c.l.b16 %v1081
    %v3589 = vunpack.c.l.b16 %v1082
    %v3590 = vunpack.c.l.b16 %v1083
    %v3591 = vunpack.c.l.b16 %v1084
    %v3592 = vunpack.c.l.b16 %v1085
    %v3593 = vunpack.c.l.b16 %v1086
    %v3594 = vunpack.c.l.b16 %v1087
    %v3595 = vunpack.c.l.b16 %v1088
    %v3596 = vunpack.c.l.b16 %v1089
    %v3597 = vunpack.c.l.b16 %v1090
    %v3598 = vunpack.c.l.b16 %v1091
    %v3599 = vunpack.c.l.b16 %v1092
    %v3600 = vunpack.c.l.b16 %v1093
    %v3601 = vunpack.c.l.b16 %v1094
    %v3602 = vunpack.c.l.b16 %v1095
    %v3603 = vunpack.c.l.b16 %v1096
    %v3604 = vunpack.c.l.b16 %v1097
    %v3605 = vunpack.c.l.b16 %v1098
    %v3606 = vunpack.c.l.b16 %v1099
    %v3607 = vunpack.c.l.b16 %v1100
    %v3608 = vunpack.c.l.b16 %v1101
    %v3609 = vunpack.c.l.b16 %v1102
    %v3610 = vunpack.c.l.b16 %v1103
    %v3611 = vunpack.c.l.b16 %v1104
    %v3612 = vunpack.c.l.b16 %v1105
    %v3613 = vunpack.c.l.b16 %v1106
    %v3614 = vunpack.c.l.b16 %v1107
    %v3615 = vunpack.c.l.b16 %v1108
    %v3616 = vunpack.c.l.b16 %v1109
    %v3617 = vunpack.c.l.b16 %v1110
    %v3618 = vunpack.c.l.b16 %v1111
    %v3619 = vunpack.c.l.b16 %v1112
    %v3620 = vunpack.c.l.b16 %v1113
    %v3621 = vunpack.c.l.b16 %v1114
    %v3622 = vunpack.c.l.b16 %v1115
    %v3623 = vunpack.c.l.b16 %v1116
    %v3624 = vunpack.c.l.b16 %v1117
    %v3625 = vunpack.c.l.b16 %v1118
    %v3626 = vunpack.c.l.b16 %v1119
    %v3627 = vunpack.c.l.b16 %v1120
    %v3628 = vunpack.c.l.b16 %v1121
    %v3629 = vunpack.c.l.b16 %v1122
    %v3630 = vunpack.c.l.b16 %v1123
    %v3631 = vunpack.c.l.b16 %v1124
    %v3632 = vunpack.c.l.b16 %v1125
    %v3633 = vunpack.c.l.b16 %v1126
    %v3634 = vunpack.c.l.b16 %v1127
    %v3635 = vunpack.c.l.b16 %v1128
    %v3636 = vunpack.c.l.b16 %v1129
    %v3637 = vunpack.c.l.b16 %v1130
    %v3638 = vunpack.c.l.b16 %v1131
    %v3639 = vunpack.c.l.b16 %v1132
    %v3640 = vunpack.c.l.b16 %v1133
    %v3641 = vunpack.c.l.b16 %v1134
    %v3642 = vunpack.c.l.b16 %v1135
    %v3643 = vunpack.c.l.b16 %v1136
    %v3644 = vunpack.c.l.b16 %v1137
    %v3645 = vunpack.c.l.b16 %v1138
    %v3646 = vunpack.c.l.b16 %v1139
    %v3647 = vunpack.c.l.b16 %v1140
    %v3648 = vunpack.c.l.b16 %v1141
    %v3649 = vunpack.c.l.b16 %v1142
    %v3650 = vunpack.c.l.b16 %v1143
    %v3651 = vunpack.c.l.b16 %v1144
    %v3652 = vunpack.c.l.b16 %v1145
    %v3653 = vunpack.c.l.b16 %v1146
    %v3654 = vunpack.c.l.b16 %v1147
    %v3655 = vunpack.c.l.b16 %v1148
    %v3656 = vunpack.c.l.b16 %v1149
    %v3657 = vunpack.c.l.b16 %v1150
    %v3658 = vunpack.c.l.b16 %v1151
    %v3659 = vunpack.c.l.b16 %v1152
    %v3660 = vunpack.c.l.b16 %v1153
    %v3661 = vunpack.c.l.b16 %v1154
    %v3662 = vunpack.c.l.b16 %v1155
    %v3663 = vunpack.c.l.b16 %v1156
    %v3664 = vunpack.c.l.b16 %v1157
    %v3665 = vunpack.c.l.b16 %v1158
    %v3666 = vunpack.c.l.b16 %v1159
    %v3667 = vunpack.c.l.b16 %v1160
    %v3668 = vunpack.c.l.b16 %v1161
    %v3669 = vunpack.c.l.b16 %v1162
    %v3670 = vunpack.c.l.b16 %v1163
    %v3671 = vunpack.c.l.b16 %v1164
    %v3672 = vunpack.c.l.b16 %v1165
    %v3673 = vunpack.c.l.b16 %v1166
    %v3674 = vunpack.c.l.b16 %v1167
    %v3675 = vunpack.c.l.b16 %v1168
    %v3676 = vunpack.c.l.b16 %v1169
    %v3677 = vunpack.c.l.b16 %v1170
    %v3678 = vunpack.c.l.b16 %v1171
    %v3679 = vunpack.c.l.b16 %v1172
    %v3680 = vunpack.c.l.b16 %v1173
    %v3681 = vunpack.c.l.b16 %v1174
    %v3682 = vunpack.c.l.b16 %v1175
    %v3683 = vunpack.c.l.b16 %v1176
    %v3684 = vunpack.c.l.b16 %v1177
    %v3685 = vunpack.c.l.b16 %v1178
    %v3686 = vunpack.c.l.b16 %v1179
    %v3687 = vunpack.c.l.b16 %v1180
    %v3688 = vunpack.c.l.b16 %v1181
    %v3689 = vunpack.c.l.b16 %v1182
    %v3690 = vunpack.c.l.b16 %v1183
    %v3691 = vunpack.c.l.b16 %v1184
    %v3692 = vunpack.c.l.b16 %v1185
    %v3693 = vunpack.c.l.b16 %v1186
    %v3694 = vunpack.c.l.b16 %v1187
    %v3695 = vunpack.c.l.b16 %v1188
    %v3696 = vunpack.c.l.b16 %v1189
    %v3697 = vunpack.c.l.b16 %v1190
    %v3698 = vunpack.c.l.b16 %v1191
    %v3699 = vunpack.c.l.b16 %v1192
    %v3700 = vunpack.c.l.b16 %v1193
    %v3701 = vunpack.c.l.b16 %v1194
    %v3702 = vunpack.c.l.b16 %v1195
    %v3703 = vunpack.c.l.b16 %v1196
    %v3704 = vunpack.c.l.b16 %v1197
    %v3705 = vunpack.c.l.b16 %v1198
    %v3706 = vunpack.c.l.b16 %v1199
    %v3707 = vunpack.c.l.b16 %v1200
    %v3708 = vunpack.c.l.b16 %v1201
    %v3709 = vunpack.c.l.b16 %v1202
    %v3710 = vunpack.c.l.b16 %v1203
    %v3711 = vunpack.c.l.b16 %v1204
    %v3712 = vunpack.c.l.b16 %v1205
    %v3713 = vunpack.c.l.b16 %v1206
    %v3714 = vunpack.c.l.b16 %v1207
    %v3715 = vunpack.c.l.b16 %v1208
    %v3716 = vunpack.c.l.b16 %v1209
    %v3717 = vunpack.c.l.b16 %v1210
    %v3718 = vunpack.c.l.b16 %v1211
    %v3719 = vunpack.c.l.b16 %v1212
    %v3720 = vunpack.c.l.b16 %v1213
    %v3721 = vunpack.c.l.b16 %v1214
    %v3722 = vunpack.c.l.b16 %v1215
    %v3723 = vunpack.c.l.b16 %v1216
    %v3724 = vunpack.c.l.b16 %v1217
    %v3725 = vunpack.c.l.b16 %v1218
    %v3726 = vunpack.c.l.b16 %v1219
    %v3727 = vunpack.c.l.b16 %v1220
    %v3728 = vunpack.c.l.b16 %v1221
    %v3729 = vunpack.c.l.b16 %v1222
    %v3730 = vunpack.c.l.b16 %v1223
    %v3731 = vunpack.c.l.b16 %v1224
    %v3732 = vunpack.c.l.b16 %v1225
    %v3733 = vunpack.c.l.b16 %v1226
    %v3734 = vunpack.c.l.b16 %v1227
    %v3735 = vunpack.c.l.b16 %v1228
    %v3736 = vunpack.c.l.b16 %v1229
    %v3737 = vunpack.c.l.b16 %v1230
    %v3738 = vunpack.c.l.b16 %v1231
    %v3739 = vunpack.c.l.b16 %v1232
    %v3740 = vunpack.c.l.b16 %v1233
    %v3741 = vunpack.c.l.b16 %v1234
    %v3742 = vunpack.c.l.b16 %v1235
    %v3743 = vunpack.c.l.b16 %v1236
    %v3744 = vunpack.c.l.b16 %v1237
    %v3745 = vunpack.c.l.b16 %v1238
    %v3746 = vunpack.c.l.b16 %v1239
    %v3747 = vunpack.c.l.b16 %v1240
    %v3748 = vunpack.c.l.b16 %v1241
    %v3749 = vunpack.c.l.b16 %v1242
    %v3750 = vunpack.c.l.b16 %v1243
    %v3751 = vunpack.c.l.b16 %v1244
    %v3752 = vunpack.c.l.b16 %v1245
    %v3753 = vunpack.c.l.b16 %v1246
    %v3754 = vunpack.c.l.b16 %v1247
    %v3755 = vunpack.c.l.b16 %v1248
    %v3756 = vunpack.c.l.b16 %v1249
    %v3757 = vunpack.c.l.b16 %v1250
    %v3758 = vunpack.c.l.b16 %v1251
    %v3759 = vunpack.c.l.b16 %v1252
    %v3760 = vunpack.c.l.b16 %v1253
    %v3761 = vunpack.c.l.b16 %v1254
    %v3762 = vunpack.c.l.b16 %v1255
    %v3763 = vunpack.c.l.b16 %v1256
    %v3764 = vunpack.c.l.b16 %v1257
    %v3765 = vunpack.c.l.b16 %v1258
    %v3766 = vunpack.c.l.b16 %v1259
    %v3767 = vunpack.c.l.b16 %v1260
    %v3768 = vunpack.c.l.b16 %v1261
    %v3769 = vunpack.c.l.b16 %v1262
    %v3770 = vunpack.c.l.b16 %v1263
    %v3771 = vunpack.c.l.b16 %v1264
    %v3772 = vunpack.c.l.b16 %v1265
    %v3773 = vunpack.c.l.b16 %v1266
    %v3774 = vunpack.c.l.b16 %v1267
    %v3775 = vunpack.c.l.b16 %v1268
    %v3776 = vunpack.c.l.b16 %v1269
    %v3777 = vunpack.c.l.b16 %v1270
    %v3778 = vunpack.c.l.b16 %v1271
    %v3779 = vunpack.c.l.b16 %v1272
    %v3780 = vunpack.c.l.b16 %v1273
    %v3781 = vunpack.c.l.b16 %v1274
    %v3782 = vunpack.c.l.b16 %v1275
    %v3783 = vunpack.c.l.b16 %v1276
    %v3784 = vunpack.c.l.b16 %v1277
    %v3785 = vunpack.c.l.b16 %v1278
    %v3786 = vunpack.c.l.b16 %v1279
    %v3787 = vunpack.c.l.b16 %v1280
    %v3788 = vunpack.c.l.b16 %v1281
    %v3789 = vunpack.c.l.b16 %v1282
    %v3790 = vunpack.c.l.b16 %v1283
    %v3791 = vunpack.c.l.b16 %v1284
    %v3792 = vunpack.c.l.b16 %v1285
    %v3793 = vunpack.c.l.b16 %v1286
    %v3794 = vunpack.c.l.b16 %v1287
    %v3795 = vunpack.c.l.b16 %v1288
    %v3796 = vunpack.c.l.b16 %v1289
    %v3797 = vunpack.c.l.b16 %v1290
    %v3798 = vunpack.c.l.b16 %v1291
    %v3799 = vunpack.c.l.b16 %v1292
    %v3800 = vunpack.c.l.b16 %v1293
    %v3801 = vunpack.c.l.b16 %v1294
    %v3802 = vunpack.c.l.b16 %v1295
    %v3803 = vunpack.c.l.b16 %v1296
    %v3804 = vunpack.c.l.b16 %v1297
    %v3805 = vunpack.c.l.b16 %v1298
    %v3806 = vunpack.c.l.b16 %v1299
    %v3807 = vunpack.c.l.b16 %v1300
    %v3808 = vunpack.c.l.b16 %v1301
    %v3809 = vunpack.c.l.b16 %v1302
    %v3810 = vunpack.c.l.b16 %v1303
    %v3811 = vunpack.c.l.b16 %v1304
    %v3812 = vunpack.c.l.b16 %v1305
    %v3813 = vunpack.c.l.b16 %v1306
    %v3814 = vunpack.c.l.b16 %v1307
    %v3815 = vunpack.c.l.b16 %v1308
    %v3816 = vunpack.c.l.b16 %v1309
    %v3817 = vunpack.c.l.b16 %v1310
    %v3818 = vunpack.c.l.b16 %v1311
    %v3819 = vunpack.c.l.b16 %v1312
    %v3820 = vunpack.c.l.b16 %v1313
    %v3821 = vunpack.c.l.b16 %v1314
    %v3822 = vunpack.c.l.b16 %v1315
    %v3823 = vunpack.c.l.b16 %v1316
    %v3824 = vunpack.c.l.b16 %v1317
    %v3825 = vunpack.c.l.b16 %v1318
    %v3826 = vunpack.c.l.b16 %v1319
    %v3827 = vunpack.c.l.b16 %v1320
    %v3828 = vunpack.c.l.b16 %v1321
    %v3829 = vunpack.c.l.b16 %v1322
    %v3830 = vunpack.c.l.b16 %v1323
    %v3831 = vunpack.c.l.b16 %v1324
    %v3832 = vunpack.c.l.b16 %v1325
    %v3833 = vunpack.c.l.b16 %v1326
    %v3834 = vunpack.c.l.b16 %v1327
    %v3835 = vunpack.c.l.b16 %v1328
    %v3836 = vunpack.c.l.b16 %v1329
    %v3837 = vunpack.c.l.b16 %v1330
    %v3838 = vunpack.c.l.b16 %v1331
    %v3839 = vunpack.c.l.b16 %v1332
    %v3840 = vunpack.c.l.b16 %v1333
    %v3841 = vunpack.c.l.b16 %v1334
    %v3842 = vunpack.c.l.b16 %v1335
    %v3843 = vunpack.c.l.b16 %v1336
    %v3844 = vunpack.c.l.b16 %v1337
    %v3845 = vunpack.c.l.b16 %v1338
    %v3846 = vunpack.c.l.b16 %v1339
    %v3847 = vunpack.c.l.b16 %v1340
    %v3848 = vunpack.c.l.b16 %v1341
    %v3849 = vunpack.c.l.b16 %v1342
    %v3850 = vunpack.c.l.b16 %v1343
    %v3851 = vunpack.c.l.b16 %v1344
    %v3852 = vunpack.c.l.b16 %v1345
    %v3853 = vunpack.c.l.b16 %v1346
    %v3854 = vunpack.c.l.b16 %v1347
    %v3855 = vunpack.c.l.b16 %v1348
    %v3856 = vunpack.c.l.b16 %v1349
    %v3857 = vunpack.c.l.b16 %v1350
    %v3858 = vunpack.c.l.b16 %v1351
    %v3859 = vunpack.c.l.b16 %v1352
    %v3860 = vunpack.c.l.b16 %v1353
    %v3861 = vunpack.c.l.b16 %v1354
    %v3862 = vunpack.c.l.b16 %v1355
    %v3863 = vunpack.c.l.b16 %v1356
    %v3864 = vunpack.c.l.b16 %v1357
    %v3865 = vunpack.c.l.b16 %v1358
    %v3866 = vunpack.c.l.b16 %v1359
    %v3867 = vunpack.c.l.b16 %v1360
    %v3868 = vunpack.c.l.b16 %v1361
    %v3869 = vunpack.c.l.b16 %v1362
    %v3870 = vunpack.c.l.b16 %v1363
    %v3871 = vunpack.c.l.b16 %v1364
    %v3872 = vunpack.c.l.b16 %v1365
    %v3873 = vunpack.c.l.b16 %v1366
    %v3874 = vunpack.c.l.b16 %v1367
    %v3875 = vunpack.c.l.b16 %v1368
    %v3876 = vunpack.c.l.b16 %v1369
    %v3877 = vunpack.c.l.b16 %v1370
    %v3878 = vunpack.c.l.b16 %v1371
    %v3879 = vunpack.c.l.b16 %v1372
    %v3880 = vunpack.c.l.b16 %v1373
    %v3881 = vunpack.c.l.b16 %v1374
    %v3882 = vunpack.c.l.b16 %v1375
    %v3883 = vunpack.c.l.b16 %v1376
    %v3884 = vunpack.c.l.b16 %v1377
    %v3885 = vunpack.c.l.b16 %v1378
    %v3886 = vunpack.c.l.b16 %v1379
    %v3887 = vunpack.c.l.b16 %v1380
    %v3888 = vunpack.c.l.b16 %v1381
    %v3889 = vunpack.c.l.b16 %v1382
    %v3890 = vunpack.c.l.b16 %v1383
    %v3891 = vunpack.c.l.b16 %v1384
    %v3892 = vunpack.c.l.b16 %v1385
    %v3893 = vunpack.c.l.b16 %v1386
    %v3894 = vunpack.c.l.b16 %v1387
    %v3895 = vunpack.c.l.b16 %v1388
    %v3896 = vunpack.c.l.b16 %v1389
    %v3897 = vunpack.c.l.b16 %v1390
    %v3898 = vunpack.c.l.b16 %v1391
    %v3899 = vunpack.c.l.b16 %v1392
    %v3900 = vunpack.c.l.b16 %v1393
    %v3901 = vunpack.c.l.b16 %v1394
    %v3902 = vunpack.c.l.b16 %v1395
    %v3903 = vunpack.c.l.b16 %v1396
    %v3904 = vunpack.c.l.b16 %v1397
    %v3905 = vunpack.c.l.b16 %v1398
    %v3906 = vunpack.c.l.b16 %v1399
    %v3907 = vunpack.c.l.b16 %v1400
    %v3908 = vunpack.c.l.b16 %v1401
    %v3909 = vunpack.c.l.b16 %v1402
    %v3910 = vunpack.c.l.b16 %v1403
    %v3911 = vunpack.c.l.b16 %v1404
    %v3912 = vunpack.c.l.b16 %v1405
    %v3913 = vunpack.c.l.b16 %v1406
    %v3914 = vunpack.c.l.b16 %v1407
    %v3915 = vunpack.c.l.b16 %v1408
    %v3916 = vunpack.c.l.b16 %v1409
    %v3917 = vunpack.c.l.b16 %v1410
    %v3918 = vunpack.c.l.b16 %v1411
    %v3919 = vunpack.c.l.b16 %v1412
    %v3920 = vunpack.c.l.b16 %v1413
    %v3921 = vunpack.c.l.b16 %v1414
    %v3922 = vunpack.c.l.b16 %v1415
    %v3923 = vunpack.c.l.b16 %v1416
    %v3924 = vunpack.c.l.b16 %v1417
    %v3925 = vunpack.c.l.b16 %v1418
    %v3926 = vunpack.c.l.b16 %v1419
    %v3927 = vunpack.c.l.b16 %v1420
    %v3928 = vunpack.c.l.b16 %v1421
    %v3929 = vunpack.c.l.b16 %v1422
    %v3930 = vunpack.c.l.b16 %v1423
    %v3931 = vunpack.c.l.b16 %v1424
    %v3932 = vunpack.c.l.b16 %v1425
    %v3933 = vunpack.c.l.b16 %v1426
    %v3934 = vunpack.c.l.b16 %v1427
    %v3935 = vunpack.c.l.b16 %v1428
    %v3936 = vunpack.c.l.b16 %v1429
    %v3937 = vunpack.c.l.b16 %v1430
    %v3938 = vunpack.c.l.b16 %v1431
    %v3939 = vunpack.c.l.b16 %v1432
    %v3940 = vunpack.c.l.b16 %v1433
    %v3941 = vunpack.c.l.b16 %v1434
    %v3942 = vunpack.c.l.b16 %v1435
    %v3943 = vunpack.c.l.b16 %v1436
    %v3944 = vunpack.c.l.b16 %v1437
    %v3945 = vunpack.c.l.b16 %v1438
    %v3946 = vunpack.c.l.b16 %v1439
    %v3947 = vunpack.c.l.b16 %v1440
    %v3948 = vunpack.c.l.b16 %v1441
    %v3949 = vunpack.c.l.b16 %v1442
    %v3950 = vunpack.c.l.b16 %v1443
    %v3951 = vunpack.c.l.b16 %v1444
    %v3952 = vunpack.c.l.b16 %v1445
    %v3953 = vunpack.c.l.b16 %v1446
    %v3954 = vunpack.c.l.b16 %v1447
    %v3955 = vunpack.c.l.b16 %v1448
    %v3956 = vunpack.c.l.b16 %v1449
    %v3957 = vunpack.c.l.b16 %v1450
    %v3958 = vunpack.c.l.b16 %v1451
    %v3959 = vunpack.c.l.b16 %v1452
    %v3960 = vunpack.c.l.b16 %v1453
    %v3961 = vunpack.c.l.b16 %v1454
    %v3962 = vunpack.c.l.b16 %v1455
    %v3963 = vunpack.c.l.b16 %v1456
    %v3964 = vunpack.c.l.b16 %v1457
    %v3965 = vunpack.c.l.b16 %v1458
    %v3966 = vunpack.c.l.b16 %v1459
    %v3967 = vunpack.c.l.b16 %v1460
    %v3968 = vunpack.c.l.b16 %v1461
    %v3969 = vunpack.c.l.b16 %v1462
    %v3970 = vunpack.c.l.b16 %v1463
    %v3971 = vunpack.c.l.b16 %v1464
    %v3972 = vunpack.c.l.b16 %v1465
    %v3973 = vunpack.c.l.b16 %v1466
    %v3974 = vunpack.c.l.b16 %v1467
    %v3975 = vunpack.c.l.b16 %v1468
    %v3976 = vunpack.c.l.b16 %v1469
    %v3977 = vunpack.c.l.b16 %v1470
    %v3978 = vunpack.c.l.b16 %v1471
    %v3979 = vunpack.c.l.b16 %v1472
    %v3980 = vunpack.c.l.b16 %v1473
    %v3981 = vunpack.c.l.b16 %v1474
    %v3982 = vunpack.c.l.b16 %v1475
    %v3983 = vunpack.c.l.b16 %v1476
    %v3984 = vunpack.c.l.b16 %v1477
    %v3985 = vunpack.c.l.b16 %v1478
    %v3986 = vunpack.c.l.b16 %v1479
    %v3987 = vunpack.c.l.b16 %v1480
    %v3988 = vunpack.c.l.b16 %v1481
    %v3989 = vunpack.c.l.b16 %v1482
    %v3990 = vunpack.c.l.b16 %v1483
    %v3991 = vunpack.c.l.b16 %v1484
    %v3992 = vunpack.c.l.b16 %v1485
    %v3993 = vunpack.c.l.b16 %v1486
    %v3994 = vunpack.c.l.b16 %v1487
    %v3995 = vunpack.c.l.b16 %v1488
    %v3996 = vunpack.c.l.b16 %v1489
    %v3997 = vunpack.c.l.b16 %v1490
    %v3998 = vunpack.c.l.b16 %v1491
    %v3999 = vunpack.c.l.b16 %v1492
    %v4000 = vunpack.c.l.b16 %v1493
    %v4001 = vunpack.c.l.b16 %v1494
    %v4002 = vunpack.c.l.b16 %v1495
    %v4003 = vunpack.c.l.b16 %v1496
    %v4004 = vunpack.c.l.b16 %v1497
    %v4005 = vunpack.c.l.b16 %v1498
    %v4006 = vunpack.c.l.b16 %v1499
    %v4007 = vunpack.c.l.b16 %v1500
    %v4008 = vunpack.c.l.b16 %v1501
    %v4009 = vunpack.c.l.b16 %v1502
    %v4010 = vunpack.c.l.b16 %v1503
    %v4011 = vunpack.c.l.b16 %v1504
    %v4012 = vunpack.c.l.b16 %v1505
    %v4013 = vunpack.c.l.b16 %v1506
    %v4014 = vunpack.c.l.b16 %v1507
    %v4015 = vunpack.c.l.b16 %v1508
    %v4016 = vunpack.c.l.b16 %v1509
    %v4017 = vunpack.c.l.b16 %v1510
    %v4018 = vunpack.c.l.b16 %v1511
    %v4019 = vunpack.c.l.b16 %v1512
    %v4020 = vunpack.c.l.b16 %v1513
    %v4021 = vunpack.c.l.b16 %v1514
    %v4022 = vunpack.c.l.b16 %v1515
    %v4023 = vunpack.c.l.b16 %v1516
    %v4024 = vunpack.c.l.b16 %v1517
    %v4025 = vunpack.c.l.b16 %v1518
    %v4026 = vunpack.c.l.b16 %v1519
    %v4027 = vunpack.c.l.b16 %v1520
    %v4028 = vunpack.c.l.b16 %v1521
    %v4029 = vunpack.c.l.b16 %v1522
    %v4030 = vunpack.c.l.b16 %v1523
    %v4031 = vunpack.c.l.b16 %v1524
    %v4032 = vunpack.c.l.b16 %v1525
    %v4033 = vunpack.c.l.b16 %v1526
    %v4034 = vunpack.c.l.b16 %v1527
    %v4035 = vunpack.c.l.b16 %v1528
    %v4036 = vunpack.c.l.b16 %v1529
    %v4037 = vunpack.c.l.b16 %v1530
    %v4038 = vunpack.c.l.b16 %v1531
    %v4039 = vunpack.c.l.b16 %v1532
    %v4040 = vunpack.c.l.b16 %v1533
    %v4041 = vunpack.c.l.b16 %v1534
    %v4042 = vunpack.c.l.b16 %v1535
    %v4043 = vunpack.c.l.b16 %v1536
    %v4044 = vunpack.c.l.b16 %v1537
    %v4045 = vunpack.c.l.b16 %v1538
    %v4046 = vunpack.c.l.b16 %v1539
    %v4047 = vunpack.c.l.b16 %v1540
    %v4048 = vunpack.c.l.b16 %v1541
    %v4049 = vunpack.c.l.b16 %v1542
    %v4050 = vunpack.c.l.b16 %v1543
    %v4051 = vunpack.c.l.b16 %v1544
    %v4052 = vunpack.c.l.b16 %v1545
    %v4053 = vunpack.c.l.b16 %v1546
    %v4054 = vunpack.c.l.b16 %v1547
    %v4055 = vunpack.c.l.b16 %v1548
    %v4056 = vunpack.c.l.b16 %v1549
    %v4057 = vunpack.c.l.b16 %v1550
    %v4058 = vunpack.c.l.b16 %v1551
    %v4059 = vunpack.c.l.b16 %v1552
    %v4060 = vunpack.c.l.b16 %v1553
    %v4061 = vunpack.c.l.b16 %v1554
    %v4062 = vunpack.c.l.b16 %v1555
    %v4063 = vunpack.c.l.b16 %v1556
    %v4064 = vunpack.c.l.b16 %v1557
    %v4065 = vunpack.c.l.b16 %v1558
    %v4066 = vunpack.c.l.b16 %v1559
    %v4067 = vunpack.c.l.b16 %v1560
    %v4068 = vunpack.c.l.b16 %v1561
    %v4069 = vunpack.c.l.b16 %v1562
    %v4070 = vunpack.c.l.b16 %v1563
    %v4071 = vunpack.c.l.b16 %v1564
    %v4072 = vunpack.c.l.b16 %v1565
    %v4073 = vunpack.c.l.b16 %v1566
    %v4074 = vunpack.c.l.b16 %v1567
    %v4075 = vunpack.c.l.b16 %v1568
    %v4076 = vunpack.c.l.b16 %v1569
    %v4077 = vunpack.c.l.b16 %v1570
    %v4078 = vunpack.c.l.b16 %v1571
    %v4079 = vunpack.c.l.b16 %v1572
    %v4080 = vunpack.c.l.b16 %v1573
    %v4081 = vunpack.c.l.b16 %v1574
    %v4082 = vunpack.c.l.b16 %v1575
    %v4083 = vunpack.c.l.b16 %v1576
    %v4084 = vunpack.c.l.b16 %v1577
    %v4085 = vunpack.c.l.b16 %v1578
    %v4086 = vunpack.c.l.b16 %v1579
    %v4087 = vunpack.c.l.b16 %v1580
    %v4088 = vunpack.c.l.b16 %v1581
    %v4089 = vunpack.c.l.b16 %v1582
    %v4090 = vunpack.c.l.b16 %v1583
    %v4091 = vunpack.c.l.b16 %v1584
    %v4092 = vunpack.c.l.b16 %v1585
    %v4093 = vunpack.c.l.b16 %v1586
    %v4094 = vunpack.c.l.b16 %v1587
    %v4095 = vunpack.c.l.b16 %v1588
    %v4096 = vunpack.c.l.b16 %v1589
    %v4097 = vunpack.c.l.b16 %v1590
    %v4098 = vunpack.c.l.b16 %v1591
    %v4099 = vunpack.c.l.b16 %v1592
    %v4100 = vunpack.c.l.b16 %v1593
    %v4101 = vunpack.c.l.b16 %v1594
    %v4102 = vunpack.c.l.b16 %v1595
    %v4103 = vunpack.c.l.b16 %v1596
    %v4104 = vunpack.c.l.b16 %v1597
    %v4105 = vunpack.c.l.b16 %v1598
    %v4106 = vunpack.c.l.b16 %v1599
    %v4107 = vunpack.c.l.b16 %v1600
    %v4108 = vunpack.c.l.b16 %v1601
    %v4109 = vunpack.c.l.b16 %v1602
    %v4110 = vunpack.c.l.b16 %v1603
    %v4111 = vunpack.c.l.b16 %v1604
    %v4112 = vunpack.c.l.b16 %v1605
    %v4113 = vunpack.c.l.b16 %v1606
    %v4114 = vunpack.c.l.b16 %v1607
    %v4115 = vunpack.c.l.b16 %v1608
    %v4116 = vunpack.c.l.b16 %v1609
    %v4117 = vunpack.c.l.b16 %v1610
    %v4118 = vunpack.c.l.b16 %v1611
    %v4119 = vunpack.c.l.b16 %v1612
    %v4120 = vunpack.c.l.b16 %v1613
    %v4121 = vunpack.c.l.b16 %v1614
    %v4122 = vunpack.c.l.b16 %v1615
    %v4123 = vunpack.c.l.b16 %v1616
    %v4124 = vunpack.c.l.b16 %v1617
    %v4125 = vunpack.c.l.b16 %v1618
    %v4126 = vunpack.c.l.b16 %v1619
    %v4127 = vunpack.c.l.b16 %v1620
    %v4128 = vunpack.c.l.b16 %v1621
    %v4129 = vunpack.c.l.b16 %v1622
    %v4130 = vunpack.c.l.b16 %v1623
    %v4131 = vunpack.c.l.b16 %v1624
    %v4132 = vunpack.c.l.b16 %v1625
    %v4133 = vunpack.c.l.b16 %v1626
    %v4134 = vunpack.c.l.b16 %v1627
    %v4135 = vunpack.c.l.b16 %v1628
    %v4136 = vunpack.c.l.b16 %v1629
    %v4137 = vunpack.c.l.b16 %v1630
    %v4138 = vunpack.c.l.b16 %v1631
    %v4139 = vunpack.c.l.b16 %v1632
    %v4140 = vunpack.c.l.b16 %v1633
    %v4141 = vunpack.c.l.b16 %v1634
    %v4142 = vunpack.c.l.b16 %v1635
    %v4143 = vunpack.c.l.b16 %v1636
    %v4144 = vunpack.c.l.b16 %v1637
    %v4145 = vunpack.c.l.b16 %v1638
    %v4146 = vunpack.c.l.b16 %v1639
    %v4147 = vunpack.c.l.b16 %v1640
    %v4148 = vunpack.c.l.b16 %v1641
    %v4149 = vunpack.c.l.b16 %v1642
    %v4150 = vunpack.c.l.b16 %v1643
    %v4151 = vunpack.c.l.b16 %v1644
    %v4152 = vunpack.c.l.b16 %v1645
    %v4153 = vunpack.c.l.b16 %v1646
    %v4154 = vunpack.c.l.b16 %v1647
    %v4155 = vunpack.c.l.b16 %v1648
    %v4156 = vunpack.c.l.b16 %v1649
    %v4157 = vunpack.c.l.b16 %v1650
    %v4158 = vunpack.c.l.b16 %v1651
    %v4159 = vunpack.c.l.b16 %v1652
    %v4160 = vunpack.c.l.b16 %v1653
    %v4161 = vunpack.c.l.b16 %v1654
    %v4162 = vunpack.c.l.b16 %v1655
    %v4163 = vunpack.c.l.b16 %v1656
    %v4164 = vunpack.c.l.b16 %v1657
    %v4165 = vunpack.c.l.b16 %v1658
    %v4166 = vunpack.c.l.b16 %v1659
    %v4167 = vunpack.c.l.b16 %v1660
    %v4168 = vunpack.c.l.b16 %v1661
    %v4169 = vunpack.c.l.b16 %v1662
    %v4170 = vunpack.c.l.b16 %v1663
    %v4171 = vunpack.c.l.b16 %v1664
    %v4172 = vunpack.c.l.b16 %v1665
    %v4173 = vunpack.c.l.b16 %v1666
    %v4174 = vunpack.c.l.b16 %v1667
    %v4175 = vunpack.c.l.b16 %v1668
    %v4176 = vunpack.c.l.b16 %v1669
    %v4177 = vunpack.c.l.b16 %v1670
    %v4178 = vunpack.c.l.b16 %v1671
    %v4179 = vunpack.c.l.b16 %v1672
    %v4180 = vunpack.c.l.b16 %v1673
    %v4181 = vunpack.c.l.b16 %v1674
    %v4182 = vunpack.c.l.b16 %v1675
    %v4183 = vunpack.c.l.b16 %v1676
    %v4184 = vunpack.c.l.b16 %v1677
    %v4185 = vunpack.c.l.b16 %v1678
    %v4186 = vunpack.c.l.b16 %v1679
    %v4187 = vunpack.c.l.b16 %v1680
    %v4188 = vunpack.c.l.b16 %v1681
    %v4189 = vunpack.c.l.b16 %v1682
    %v4190 = vunpack.c.l.b16 %v1683
    %v4191 = vunpack.c.l.b16 %v1684
    %v4192 = vunpack.c.l.b16 %v1685
    %v4193 = vunpack.c.l.b16 %v1686
    %v4194 = vunpack.c.l.b16 %v1687
    %v4195 = vunpack.c.l.b16 %v1688
    %v4196 = vunpack.c.l.b16 %v1689
    %v4197 = vunpack.c.l.b16 %v1690
    %v4198 = vunpack.c.l.b16 %v1691
    %v4199 = vunpack.c.l.b16 %v1692
    %v4200 = vunpack.c.l.b16 %v1693
    %v4201 = vunpack.c.l.b16 %v1694
    %v4202 = vunpack.c.l.b16 %v1695
    %v4203 = vunpack.c.l.b16 %v1696
    %v4204 = vunpack.c.l.b16 %v1697
    %v4205 = vunpack.c.l.b16 %v1698
    %v4206 = vunpack.c.l.b16 %v1699
    %v4207 = vunpack.c.l.b16 %v1700
    %v4208 = vunpack.c.l.b16 %v1701
    %v4209 = vunpack.c.l.b16 %v1702
    %v4210 = vunpack.c.l.b16 %v1703
    %v4211 = vunpack.c.l.b16 %v1704
    %v4212 = vunpack.c.l.b16 %v1705
    %v4213 = vunpack.c.l.b16 %v1706
    %v4214 = vunpack.c.l.b16 %v1707
    %v4215 = vunpack.c.l.b16 %v1708
    %v4216 = vunpack.c.l.b16 %v1709
    %v4217 = vunpack.c.l.b16 %v1710
    %v4218 = vunpack.c.l.b16 %v1711
    %v4219 = vunpack.c.l.b16 %v1712
    %v4220 = vunpack.c.l.b16 %v1713
    %v4221 = vunpack.c.l.b16 %v1714
    %v4222 = vunpack.c.l.b16 %v1715
    %v4223 = vunpack.c.l.b16 %v1716
    %v4224 = vunpack.c.l.b16 %v1717
    %v4225 = vunpack.c.l.b16 %v1718
    %v4226 = vunpack.c.l.b16 %v1719
    %v4227 = vunpack.c.l.b16 %v1720
    %v4228 = vunpack.c.l.b16 %v1721
    %v4229 = vunpack.c.l.b16 %v1722
    %v4230 = vunpack.c.l.b16 %v1723
    %v4231 = vunpack.c.l.b16 %v1724
    %v4232 = vunpack.c.l.b16 %v1725
    %v4233 = vunpack.c.l.b16 %v1726
    %v4234 = vunpack.c.l.b16 %v1727
    %v4235 = vunpack.c.l.b16 %v1728
    %v4236 = vunpack.c.l.b16 %v1729
    %v4237 = vunpack.c.l.b16 %v1730
    %v4238 = vunpack.c.l.b16 %v1731
    %v4239 = vunpack.c.l.b16 %v1732
    %v4240 = vunpack.c.l.b16 %v1733
    %v4241 = vunpack.c.l.b16 %v1734
    %v4242 = vunpack.c.l.b16 %v1735
    %v4243 = vunpack.c.l.b16 %v1736
    %v4244 = vunpack.c.l.b16 %v1737
    %v4245 = vunpack.c.l.b16 %v1738
    %v4246 = vunpack.c.l.b16 %v1739
    %v4247 = vunpack.c.l.b16 %v1740
    %v4248 = vunpack.c.l.b16 %v1741
    %v4249 = vunpack.c.l.b16 %v1742
    %v4250 = vunpack.c.l.b16 %v1743
    %v4251 = vunpack.c.l.b16 %v1744
    %v4252 = vunpack.c.l.b16 %v1745
    %v4253 = vunpack.c.l.b16 %v1746
    %v4254 = vunpack.c.l.b16 %v1747
    %v4255 = vunpack.c.l.b16 %v1748
    %v4256 = vunpack.c.l.b16 %v1749
    %v4257 = vunpack.c.l.b16 %v1750
    %v4258 = vunpack.c.l.b16 %v1751
    %v4259 = vunpack.c.l.b16 %v1752
    %v4260 = vunpack.c.l.b16 %v1753
    %v4261 = vunpack.c.l.b16 %v1754
    %v4262 = vunpack.c.l.b16 %v1755
    %v4263 = vunpack.c.l.b16 %v1756
    %v4264 = vunpack.c.l.b16 %v1757
    %v4265 = vunpack.c.l.b16 %v1758
    %v4266 = vunpack.c.l.b16 %v1759
    %v4267 = vunpack.c.l.b16 %v1760
    %v4268 = vunpack.c.l.b16 %v1761
    %v4269 = vunpack.c.l.b16 %v1762
    %v4270 = vunpack.c.l.b16 %v1763
    %v4271 = vunpack.c.l.b16 %v1764
    %v4272 = vunpack.c.l.b16 %v1765
    %v4273 = vunpack.c.l.b16 %v1766
    %v4274 = vunpack.c.l.b16 %v1767
    %v4275 = vunpack.c.l.b16 %v1768
    %v4276 = vunpack.c.l.b16 %v1769
    %v4277 = vunpack.c.l.b16 %v1770
    %v4278 = vunpack.c.l.b16 %v1771
    %v4279 = vunpack.c.l.b16 %v1772
    %v4280 = vunpack.c.l.b16 %v1773
    %v4281 = vunpack.c.l.b16 %v1774
    %v4282 = vunpack.c.l.b16 %v1775
    %v4283 = vunpack.c.l.b16 %v1776
    %v4284 = vunpack.c.l.b16 %v1777
    %v4285 = vunpack.c.l.b16 %v1778
    %v4286 = vunpack.c.l.b16 %v1779
    %v4287 = vunpack.c.l.b16 %v1780
    %v4288 = vunpack.c.l.b16 %v1781
    %v4289 = vunpack.c.l.b16 %v1782
    %v4290 = vunpack.c.l.b16 %v1783
    %v4291 = vunpack.c.l.b16 %v1784
    %v4292 = vunpack.c.l.b16 %v1785
    %v4293 = vunpack.c.l.b16 %v1786
    %v4294 = vunpack.c.l.b16 %v1787
    %v4295 = vunpack.c.l.b16 %v1788
    %v4296 = vunpack.c.l.b16 %v1789
    %v4297 = vunpack.c.l.b16 %v1790
    %v4298 = vunpack.c.l.b16 %v1791
    %v4299 = vunpack.c.l.b16 %v1792
    %v4300 = vunpack.c.l.b16 %v1793
    %v4301 = vunpack.c.l.b16 %v1794
    %v4302 = vunpack.c.l.b16 %v1795
    %v4303 = vunpack.c.l.b16 %v1796
    %v4304 = vunpack.c.l.b16 %v1797
    %v4305 = vunpack.c.l.b16 %v1798
    %v4306 = vunpack.c.l.b16 %v1799
    %v4307 = vunpack.c.l.b16 %v1800
    %v4308 = vunpack.c.l.b16 %v1801
    %v4309 = vunpack.c.l.b16 %v1802
    %v4310 = vunpack.c.l.b16 %v1803
    %v4311 = vunpack.c.l.b16 %v1804
    %v4312 = vunpack.c.l.b16 %v1805
    %v4313 = vunpack.c.l.b16 %v1806
    %v4314 = vunpack.c.l.b16 %v1807
    %v4315 = vunpack.c.l.b16 %v1808
    %v4316 = vunpack.c.l.b16 %v1809
    %v4317 = vunpack.c.l.b16 %v1810
    %v4318 = vunpack.c.l.b16 %v1811
    %v4319 = vunpack.c.l.b16 %v1812
    %v4320 = vunpack.c.l.b16 %v1813
    %v4321 = vunpack.c.l.b16 %v1814
    %v4322 = vunpack.c.l.b16 %v1815
    %v4323 = vunpack.c.l.b16 %v1816
    %v4324 = vunpack.c.l.b16 %v1817
    %v4325 = vunpack.c.l.b16 %v1818
    %v4326 = vunpack.c.l.b16 %v1819
    %v4327 = vunpack.c.l.b16 %v1820
    %v4328 = vunpack.c.l.b16 %v1821
    %v4329 = vunpack.c.l.b16 %v1822
    %v4330 = vunpack.c.l.b16 %v1823
    %v4331 = vunpack.c.l.b16 %v1824
    %v4332 = vunpack.c.l.b16 %v1825
    %v4333 = vunpack.c.l.b16 %v1826
    %v4334 = vunpack.c.l.b16 %v1827
    %v4335 = vunpack.c.l.b16 %v1828
    %v4336 = vunpack.c.l.b16 %v1829
    %v4337 = vunpack.c.l.b16 %v1830
    %v4338 = vunpack.c.l.b16 %v1831
    %v4339 = vunpack.c.l.b16 %v1832
    %v4340 = vunpack.c.l.b16 %v1833
    %v4341 = vunpack.c.l.b16 %v1834
    %v4342 = vunpack.c.l.b16 %v1835
    %v4343 = vunpack.c.l.b16 %v1836
    %v4344 = vunpack.c.l.b16 %v1837
    %v4345 = vunpack.c.l.b16 %v1838
    %v4346 = vunpack.c.l.b16 %v1839
    %v4347 = vunpack.c.l.b16 %v1840
    %v4348 = vunpack.c.l.b16 %v1841
    %v4349 = vunpack.c.l.b16 %v1842
    %v4350 = vunpack.c.l.b16 %v1843
    %v4351 = vunpack.c.l.b16 %v1844
    %v4352 = vpack.c.b16 %v3103, %v3102
    %v4353 = vpack.c.b16 %v3105, %v3104
    %v4354 = vpack.c.b16 %v3107, %v3106
    %v4355 = vpack.c.b16 %v3109, %v3108
    %v4356 = vpack.c.b16 %v3111, %v3110
    %v4357 = vpack.c.b16 %v3113, %v3112
    %v4358 = vpack.c.b16 %v3115, %v3114
    %v4359 = vpack.c.b16 %v3117, %v3116
    %v4360 = vpack.c.b16 %v3119, %v3118
    %v4361 = vpack.c.b16 %v3121, %v3120
    %v4362 = vpack.c.b16 %v3123, %v3122
    %v4363 = vpack.c.b16 %v3125, %v3124
    %v4364 = vpack.c.b16 %v3127, %v3126
    %v4365 = vpack.c.b16 %v3129, %v3128
    %v4366 = vpack.c.b16 %v3131, %v3130
    %v4367 = vpack.c.b16 %v3133, %v3132
    %v4368 = vpack.c.b16 %v3135, %v3134
    %v4369 = vpack.c.b16 %v3137, %v3136
    %v4370 = vpack.c.b16 %v3139, %v3138
    %v4371 = vpack.c.b16 %v3141, %v3140
    %v4372 = vpack.c.b16 %v3143, %v3142
    %v4373 = vpack.c.b16 %v3145, %v3144
    %v4374 = vpack.c.b16 %v3147, %v3146
    %v4375 = vpack.c.b16 %v3149, %v3148
    %v4376 = vpack.c.b16 %v3151, %v3150
    %v4377 = vpack.c.b16 %v3153, %v3152
    %v4378 = vpack.c.b16 %v3155, %v3154
    %v4379 = vpack.c.b16 %v3157, %v3156
    %v4380 = vpack.c.b16 %v3159, %v3158
    %v4381 = vpack.c.b16 %v3161, %v3160
    %v4382 = vpack.c.b16 %v3163, %v3162
    %v4383 = vpack.c.b16 %v3165, %v3164
    %v4384 = vpack.c.b16 %v3167, %v3166
    %v4385 = vpack.c.b16 %v3169, %v3168
    %v4386 = vpack.c.b16 %v3171, %v3170
    %v4387 = vpack.c.b16 %v3173, %v3172
    %v4388 = vpack.c.b16 %v3175, %v3174
    %v4389 = vpack.c.b16 %v3177, %v3176
    %v4390 = vpack.c.b16 %v3179, %v3178
    %v4391 = vpack.c.b16 %v3181, %v3180
    %v4392 = vpack.c.b16 %v3183, %v3182
    %v4393 = vpack.c.b16 %v3185, %v3184
    %v4394 = vpack.c.b16 %v3187, %v3186
    %v4395 = vpack.c.b16 %v3189, %v3188
    %v4396 = vpack.c.b16 %v3191, %v3190
    %v4397 = vpack.c.b16 %v3193, %v3192
    %v4398 = vpack.c.b16 %v3195, %v3194
    %v4399 = vpack.c.b16 %v3197, %v3196
    %v4400 = vpack.c.b16 %v3199, %v3198
    %v4401 = vpack.c.b16 %v3201, %v3200
    %v4402 = vpack.c.b16 %v3203, %v3202
    %v4403 = vpack.c.b16 %v3205, %v3204
    %v4404 = vpack.c.b16 %v3207, %v3206
    %v4405 = vpack.c.b16 %v3209, %v3208
    %v4406 = vpack.c.b16 %v3211, %v3210
    %v4407 = vpack.c.b16 %v3213, %v3212
    %v4408 = vpack.c.b16 %v3215, %v3214
    %v4409 = vpack.c.b16 %v3217, %v3216
    %v4410 = vpack.c.b16 %v3219, %v3218
    %v4411 = vpack.c.b16 %v3221, %v3220
    %v4412 = vpack.c.b16 %v3223, %v3222
    %v4413 = vpack.c.b16 %v3225, %v3224
    %v4414 = vpack.c.b16 %v3227, %v3226
    %v4415 = vpack.c.b16 %v3229, %v3228
    %v4416 = vpack.c.b16 %v3231, %v3230
    %v4417 = vpack.c.b16 %v3233, %v3232
    %v4418 = vpack.c.b16 %v3235, %v3234
    %v4419 = vpack.c.b16 %v3237, %v3236
    %v4420 = vpack.c.b16 %v3239, %v3238
    %v4421 = vpack.c.b16 %v3241, %v3240
    %v4422 = vpack.c.b16 %v3243, %v3242
    %v4423 = vpack.c.b16 %v3245, %v3244
    %v4424 = vpack.c.b16 %v3247, %v3246
    %v4425 = vpack.c.b16 %v3249, %v3248
    %v4426 = vpack.c.b16 %v3251, %v3250
    %v4427 = vpack.c.b16 %v3253, %v3252
    %v4428 = vpack.c.b16 %v3255, %v3254
    %v4429 = vpack.c.b16 %v3257, %v3256
    %v4430 = vpack.c.b16 %v3259, %v3258
    %v4431 = vpack.c.b16 %v3261, %v3260
    %v4432 = vpack.c.b16 %v3263, %v3262
    %v4433 = vpack.c.b16 %v3265, %v3264
    %v4434 = vpack.c.b16 %v3267, %v3266
    %v4435 = vpack.c.b16 %v3269, %v3268
    %v4436 = vpack.c.b16 %v3271, %v3270
    %v4437 = vpack.c.b16 %v3273, %v3272
    %v4438 = vpack.c.b16 %v3275, %v3274
    %v4439 = vpack.c.b16 %v3277, %v3276
    %v4440 = vpack.c.b16 %v3279, %v3278
    %v4441 = vpack.c.b16 %v3281, %v3280
    %v4442 = vpack.c.b16 %v3283, %v3282
    %v4443 = vpack.c.b16 %v3285, %v3284
    %v4444 = vpack.c.b16 %v3287, %v3286
    %v4445 = vpack.c.b16 %v3289, %v3288
    %v4446 = vpack.c.b16 %v3291, %v3290
    %v4447 = vpack.c.b16 %v3293, %v3292
    %v4448 = vpack.c.b16 %v3295, %v3294
    %v4449 = vpack.c.b16 %v3297, %v3296
    %v4450 = vpack.c.b16 %v3299, %v3298
    %v4451 = vpack.c.b16 %v3301, %v3300
    %v4452 = vpack.c.b16 %v3303, %v3302
    %v4453 = vpack.c.b16 %v3305, %v3304
    %v4454 = vpack.c.b16 %v3307, %v3306
    %v4455 = vpack.c.b16 %v3309, %v3308
    %v4456 = vpack.c.b16 %v3311, %v3310
    %v4457 = vpack.c.b16 %v3313, %v3312
    %v4458 = vpack.c.b16 %v3315, %v3314
    %v4459 = vpack.c.b16 %v3317, %v3316
    %v4460 = vpack.c.b16 %v3319, %v3318
    %v4461 = vpack.c.b16 %v3321, %v3320
    %v4462 = vpack.c.b16 %v3323, %v3322
    %v4463 = vpack.c.b16 %v3325, %v3324
    %v4464 = vpack.c.b16 %v3327, %v3326
    %v4465 = vpack.c.b16 %v3329, %v3328
    %v4466 = vpack.c.b16 %v3331, %v3330
    %v4467 = vpack.c.b16 %v3333, %v3332
    %v4468 = vpack.c.b16 %v3335, %v3334
    %v4469 = vpack.c.b16 %v3337, %v3336
    %v4470 = vpack.c.b16 %v3339, %v3338
    %v4471 = vpack.c.b16 %v3341, %v3340
    %v4472 = vpack.c.b16 %v3343, %v3342
    %v4473 = vpack.c.b16 %v3345, %v3344
    %v4474 = vpack.c.b16 %v3347, %v3346
    %v4475 = vpack.c.b16 %v3349, %v3348
    %v4476 = vpack.c.b16 %v3351, %v3350
    %v4477 = vpack.c.b16 %v3353, %v3352
    %v4478 = vpack.c.b16 %v3355, %v3354
    %v4479 = vpack.c.b16 %v3357, %v3356
    %v4480 = vpack.c.b16 %v3359, %v3358
    %v4481 = vpack.c.b16 %v3361, %v3360
    %v4482 = vpack.c.b16 %v3363, %v3362
    %v4483 = vpack.c.b16 %v3365, %v3364
    %v4484 = vpack.c.b16 %v3367, %v3366
    %v4485 = vpack.c.b16 %v3369, %v3368
    %v4486 = vpack.c.b16 %v3371, %v3370
    %v4487 = vpack.c.b16 %v3373, %v3372
    %v4488 = vpack.c.b16 %v3375, %v3374
    %v4489 = vpack.c.b16 %v3377, %v3376
    %v4490 = vpack.c.b16 %v3379, %v3378
    %v4491 = vpack.c.b16 %v3381, %v3380
    %v4492 = vpack.c.b16 %v3383, %v3382
    %v4493 = vpack.c.b16 %v3385, %v3384
    %v4494 = vpack.c.b16 %v3387, %v3386
    %v4495 = vpack.c.b16 %v3389, %v3388
    %v4496 = vpack.c.b16 %v3391, %v3390
    %v4497 = vpack.c.b16 %v3393, %v3392
    %v4498 = vpack.c.b16 %v3395, %v3394
    %v4499 = vpack.c.b16 %v3397, %v3396
    %v4500 = vpack.c.b16 %v3399, %v3398
    %v4501 = vpack.c.b16 %v3401, %v3400
    %v4502 = vpack.c.b16 %v3403, %v3402
    %v4503 = vpack.c.b16 %v3405, %v3404
    %v4504 = vpack.c.b16 %v3407, %v3406
    %v4505 = vpack.c.b16 %v3409, %v3408
    %v4506 = vpack.c.b16 %v3411, %v3410
    %v4507 = vpack.c.b16 %v3413, %v3412
    %v4508 = vpack.c.b16 %v3415, %v3414
    %v4509 = vpack.c.b16 %v3417, %v3416
    %v4510 = vpack.c.b16 %v3419, %v3418
    %v4511 = vpack.c.b16 %v3421, %v3420
    %v4512 = vpack.c.b16 %v3423, %v3422
    %v4513 = vpack.c.b16 %v3425, %v3424
    %v4514 = vpack.c.b16 %v3427, %v3426
    %v4515 = vpack.c.b16 %v3429, %v3428
    %v4516 = vpack.c.b16 %v3431, %v3430
    %v4517 = vpack.c.b16 %v3433, %v3432
    %v4518 = vpack.c.b16 %v3435, %v3434
    %v4519 = vpack.c.b16 %v3437, %v3436
    %v4520 = vpack.c.b16 %v3439, %v3438
    %v4521 = vpack.c.b16 %v3441, %v3440
    %v4522 = vpack.c.b16 %v3443, %v3442
    %v4523 = vpack.c.b16 %v3445, %v3444
    %v4524 = vpack.c.b16 %v3447, %v3446
    %v4525 = vpack.c.b16 %v3449, %v3448
    %v4526 = vpack.c.b16 %v3451, %v3450
    %v4527 = vpack.c.b16 %v3453, %v3452
    %v4528 = vpack.c.b16 %v3455, %v3454
    %v4529 = vpack.c.b16 %v3457, %v3456
    %v4530 = vpack.c.b16 %v3459, %v3458
    %v4531 = vpack.c.b16 %v3461, %v3460
    %v4532 = vpack.c.b16 %v3463, %v3462
    %v4533 = vpack.c.b16 %v3465, %v3464
    %v4534 = vpack.c.b16 %v3467, %v3466
    %v4535 = vpack.c.b16 %v3469, %v3468
    %v4536 = vpack.c.b16 %v3471, %v3470
    %v4537 = vpack.c.b16 %v3473, %v3472
    %v4538 = vpack.c.b16 %v3475, %v3474
    %v4539 = vpack.c.b16 %v3477, %v3476
    %v4540 = vpack.c.b16 %v3479, %v3478
    %v4541 = vpack.c.b16 %v3481, %v3480
    %v4542 = vpack.c.b16 %v3483, %v3482
    %v4543 = vpack.c.b16 %v3485, %v3484
    %v4544 = vpack.c.b16 %v3487, %v3486
    %v4545 = vpack.c.b16 %v3489, %v3488
    %v4546 = vpack.c.b16 %v3491, %v3490
    %v4547 = vpack.c.b16 %v3493, %v3492
    %v4548 = vpack.c.b16 %v3495, %v3494
    %v4549 = vpack.c.b16 %v3497, %v3496
    %v4550 = vpack.c.b16 %v3499, %v3498
    %v4551 = vpack.c.b16 %v3501, %v3500
    %v4552 = vpack.c.b16 %v3503, %v3502
    %v4553 = vpack.c.b16 %v3505, %v3504
    %v4554 = vpack.c.b16 %v3507, %v3506
    %v4555 = vpack.c.b16 %v3509, %v3508
    %v4556 = vpack.c.b16 %v3511, %v3510
    %v4557 = vpack.c.b16 %v3513, %v3512
    %v4558 = vpack.c.b16 %v3515, %v3514
    %v4559 = vpack.c.b16 %v3517, %v3516
    %v4560 = vpack.c.b16 %v3519, %v3518
    %v4561 = vpack.c.b16 %v3521, %v3520
    %v4562 = vpack.c.b16 %v3523, %v3522
    %v4563 = vpack.c.b16 %v3525, %v3524
    %v4564 = vpack.c.b16 %v3527, %v3526
    %v4565 = vpack.c.b16 %v3529, %v3528
    %v4566 = vpack.c.b16 %v3531, %v3530
    %v4567 = vpack.c.b16 %v3533, %v3532
    %v4568 = vpack.c.b16 %v3535, %v3534
    %v4569 = vpack.c.b16 %v3537, %v3536
    %v4570 = vpack.c.b16 %v3539, %v3538
    %v4571 = vpack.c.b16 %v3541, %v3540
    %v4572 = vpack.c.b16 %v3543, %v3542
    %v4573 = vpack.c.b16 %v3545, %v3544
    %v4574 = vpack.c.b16 %v3547, %v3546
    %v4575 = vpack.c.b16 %v3549, %v3548
    %v4576 = vpack.c.b16 %v3551, %v3550
    %v4577 = vpack.c.b16 %v3553, %v3552
    %v4578 = vpack.c.b16 %v3555, %v3554
    %v4579 = vpack.c.b16 %v3557, %v3556
    %v4580 = vpack.c.b16 %v3559, %v3558
    %v4581 = vpack.c.b16 %v3561, %v3560
    %v4582 = vpack.c.b16 %v3563, %v3562
    %v4583 = vpack.c.b16 %v3565, %v3564
    %v4584 = vpack.c.b16 %v3567, %v3566
    %v4585 = vpack.c.b16 %v3569, %v3568
    %v4586 = vpack.c.b16 %v3571, %v3570
    %v4587 = vpack.c.b16 %v3573, %v3572
    %v4588 = vpack.c.b16 %v3575, %v3574
    %v4589 = vpack.c.b16 %v3577, %v3576
    %v4590 = vpack.c.b16 %v3579, %v3578
    %v4591 = vpack.c.b16 %v3581, %v3580
    %v4592 = vpack.c.b16 %v3583, %v3582
    %v4593 = vpack.c.b16 %v3585, %v3584
    %v4594 = vpack.c.b16 %v3587, %v3586
    %v4595 = vpack.c.b16 %v3589, %v3588
    %v4596 = vpack.c.b16 %v3591, %v3590
    %v4597 = vpack.c.b16 %v3593, %v3592
    %v4598 = vpack.c.b16 %v3595, %v3594
    %v4599 = vpack.c.b16 %v3597, %v3596
    %v4600 = vpack.c.b16 %v3599, %v3598
    %v4601 = vpack.c.b16 %v3601, %v3600
    %v4602 = vpack.c.b16 %v3603, %v3602
    %v4603 = vpack.c.b16 %v3605, %v3604
    %v4604 = vpack.c.b16 %v3607, %v3606
    %v4605 = vpack.c.b16 %v3609, %v3608
    %v4606 = vpack.c.b16 %v3611, %v3610
    %v4607 = vpack.c.b16 %v3613, %v3612
    %v4608 = vpack.c.b16 %v3615, %v3614
    %v4609 = vpack.c.b16 %v3617, %v3616
    %v4610 = vpack.c.b16 %v3619, %v3618
    %v4611 = vpack.c.b16 %v3621, %v3620
    %v4612 = vpack.c.b16 %v3623, %v3622
    %v4613 = vpack.c.b16 %v3625, %v3624
    %v4614 = vpack.c.b16 %v3627, %v3626
    %v4615 = vpack.c.b16 %v3629, %v3628
    %v4616 = vpack.c.b16 %v3631, %v3630
    %v4617 = vpack.c.b16 %v3633, %v3632
    %v4618 = vpack.c.b16 %v3635, %v3634
    %v4619 = vpack.c.b16 %v3637, %v3636
    %v4620 = vpack.c.b16 %v3639, %v3638
    %v4621 = vpack.c.b16 %v3641, %v3640
    %v4622 = vpack.c.b16 %v3643, %v3642
    %v4623 = vpack.c.b16 %v3645, %v3644
    %v4624 = vpack.c.b16 %v3647, %v3646
    %v4625 = vpack.c.b16 %v3649, %v3648
    %v4626 = vpack.c.b16 %v3651, %v3650
    %v4627 = vpack.c.b16 %v3653, %v3652
    %v4628 = vpack.c.b16 %v3655, %v3654
    %v4629 = vpack.c.b16 %v3657, %v3656
    %v4630 = vpack.c.b16 %v3659, %v3658
    %v4631 = vpack.c.b16 %v3661, %v3660
    %v4632 = vpack.c.b16 %v3663, %v3662
    %v4633 = vpack.c.b16 %v3665, %v3664
    %v4634 = vpack.c.b16 %v3667, %v3666
    %v4635 = vpack.c.b16 %v3669, %v3668
    %v4636 = vpack.c.b16 %v3671, %v3670
    %v4637 = vpack.c.b16 %v3673, %v3672
    %v4638 = vpack.c.b16 %v3675, %v3674
    %v4639 = vpack.c.b16 %v3677, %v3676
    %v4640 = vpack.c.b16 %v3679, %v3678
    %v4641 = vpack.c.b16 %v3681, %v3680
    %v4642 = vpack.c.b16 %v3683, %v3682
    %v4643 = vpack.c.b16 %v3685, %v3684
    %v4644 = vpack.c.b16 %v3687, %v3686
    %v4645 = vpack.c.b16 %v3689, %v3688
    %v4646 = vpack.c.b16 %v3691, %v3690
    %v4647 = vpack.c.b16 %v3693, %v3692
    %v4648 = vpack.c.b16 %v3695, %v3694
    %v4649 = vpack.c.b16 %v3697, %v3696
    %v4650 = vpack.c.b16 %v3699, %v3698
    %v4651 = vpack.c.b16 %v3701, %v3700
    %v4652 = vpack.c.b16 %v3703, %v3702
    %v4653 = vpack.c.b16 %v3705, %v3704
    %v4654 = vpack.c.b16 %v3707, %v3706
    %v4655 = vpack.c.b16 %v3709, %v3708
    %v4656 = vpack.c.b16 %v3711, %v3710
    %v4657 = vpack.c.b16 %v3713, %v3712
    %v4658 = vpack.c.b16 %v3715, %v3714
    %v4659 = vpack.c.b16 %v3717, %v3716
    %v4660 = vpack.c.b16 %v3719, %v3718
    %v4661 = vpack.c.b16 %v3721, %v3720
    %v4662 = vpack.c.b16 %v3723, %v3722
    %v4663 = vpack.c.b16 %v3725, %v3724
    %v4664 = vpack.c.b16 %v3727, %v3726
    %v4665 = vpack.c.b16 %v3729, %v3728
    %v4666 = vpack.c.b16 %v3731, %v3730
    %v4667 = vpack.c.b16 %v3733, %v3732
    %v4668 = vpack.c.b16 %v3735, %v3734
    %v4669 = vpack.c.b16 %v3737, %v3736
    %v4670 = vpack.c.b16 %v3739, %v3738
    %v4671 = vpack.c.b16 %v3741, %v3740
    %v4672 = vpack.c.b16 %v3743, %v3742
    %v4673 = vpack.c.b16 %v3745, %v3744
    %v4674 = vpack.c.b16 %v3747, %v3746
    %v4675 = vpack.c.b16 %v3749, %v3748
    %v4676 = vpack.c.b16 %v3751, %v3750
    %v4677 = vpack.c.b16 %v3753, %v3752
    %v4678 = vpack.c.b16 %v3755, %v3754
    %v4679 = vpack.c.b16 %v3757, %v3756
    %v4680 = vpack.c.b16 %v3759, %v3758
    %v4681 = vpack.c.b16 %v3761, %v3760
    %v4682 = vpack.c.b16 %v3763, %v3762
    %v4683 = vpack.c.b16 %v3765, %v3764
    %v4684 = vpack.c.b16 %v3767, %v3766
    %v4685 = vpack.c.b16 %v3769, %v3768
    %v4686 = vpack.c.b16 %v3771, %v3770
    %v4687 = vpack.c.b16 %v3773, %v3772
    %v4688 = vpack.c.b16 %v3775, %v3774
    %v4689 = vpack.c.b16 %v3777, %v3776
    %v4690 = vpack.c.b16 %v3779, %v3778
    %v4691 = vpack.c.b16 %v3781, %v3780
    %v4692 = vpack.c.b16 %v3783, %v3782
    %v4693 = vpack.c.b16 %v3785, %v3784
    %v4694 = vpack.c.b16 %v3787, %v3786
    %v4695 = vpack.c.b16 %v3789, %v3788
    %v4696 = vpack.c.b16 %v3791, %v3790
    %v4697 = vpack.c.b16 %v3793, %v3792
    %v4698 = vpack.c.b16 %v3795, %v3794
    %v4699 = vpack.c.b16 %v3797, %v3796
    %v4700 = vpack.c.b16 %v3799, %v3798
    %v4701 = vpack.c.b16 %v3801, %v3800
    %v4702 = vpack.c.b16 %v3803, %v3802
    %v4703 = vpack.c.b16 %v3805, %v3804
    %v4704 = vpack.c.b16 %v3807, %v3806
    %v4705 = vpack.c.b16 %v3809, %v3808
    %v4706 = vpack.c.b16 %v3811, %v3810
    %v4707 = vpack.c.b16 %v3813, %v3812
    %v4708 = vpack.c.b16 %v3815, %v3814
    %v4709 = vpack.c.b16 %v3817, %v3816
    %v4710 = vpack.c.b16 %v3819, %v3818
    %v4711 = vpack.c.b16 %v3821, %v3820
    %v4712 = vpack.c.b16 %v3823, %v3822
    %v4713 = vpack.c.b16 %v3825, %v3824
    %v4714 = vpack.c.b16 %v3827, %v3826
    %v4715 = vpack.c.b16 %v3829, %v3828
    %v4716 = vpack.c.b16 %v3831, %v3830
    %v4717 = vpack.c.b16 %v3833, %v3832
    %v4718 = vpack.c.b16 %v3835, %v3834
    %v4719 = vpack.c.b16 %v3837, %v3836
    %v4720 = vpack.c.b16 %v3839, %v3838
    %v4721 = vpack.c.b16 %v3841, %v3840
    %v4722 = vpack.c.b16 %v3843, %v3842
    %v4723 = vpack.c.b16 %v3845, %v3844
    %v4724 = vpack.c.b16 %v3847, %v3846
    %v4725 = vpack.c.b16 %v3849, %v3848
    %v4726 = vpack.c.b16 %v3851, %v3850
    %v4727 = vpack.c.b16 %v3853, %v3852
    %v4728 = vpack.c.b16 %v3855, %v3854
    %v4729 = vpack.c.b16 %v3857, %v3856
    %v4730 = vpack.c.b16 %v3859, %v3858
    %v4731 = vpack.c.b16 %v3861, %v3860
    %v4732 = vpack.c.b16 %v3863, %v3862
    %v4733 = vpack.c.b16 %v3865, %v3864
    %v4734 = vpack.c.b16 %v3867, %v3866
    %v4735 = vpack.c.b16 %v3869, %v3868
    %v4736 = vpack.c.b16 %v3871, %v3870
    %v4737 = vpack.c.b16 %v3873, %v3872
    %v4738 = vpack.c.b16 %v3875, %v3874
    %v4739 = vpack.c.b16 %v3877, %v3876
    %v4740 = vpack.c.b16 %v3879, %v3878
    %v4741 = vpack.c.b16 %v3881, %v3880
    %v4742 = vpack.c.b16 %v3883, %v3882
    %v4743 = vpack.c.b16 %v3885, %v3884
    %v4744 = vpack.c.b16 %v3887, %v3886
    %v4745 = vpack.c.b16 %v3889, %v3888
    %v4746 = vpack.c.b16 %v3891, %v3890
    %v4747 = vpack.c.b16 %v3893, %v3892
    %v4748 = vpack.c.b16 %v3895, %v3894
    %v4749 = vpack.c.b16 %v3897, %v3896
    %v4750 = vpack.c.b16 %v3899, %v3898
    %v4751 = vpack.c.b16 %v3901, %v3900
    %v4752 = vpack.c.b16 %v3903, %v3902
    %v4753 = vpack.c.b16 %v3905, %v3904
    %v4754 = vpack.c.b16 %v3907, %v3906
    %v4755 = vpack.c.b16 %v3909, %v3908
    %v4756 = vpack.c.b16 %v3911, %v3910
    %v4757 = vpack.c.b16 %v3913, %v3912
    %v4758 = vpack.c.b16 %v3915, %v3914
    %v4759 = vpack.c.b16 %v3917, %v3916
    %v4760 = vpack.c.b16 %v3919, %v3918
    %v4761 = vpack.c.b16 %v3921, %v3920
    %v4762 = vpack.c.b16 %v3923, %v3922
    %v4763 = vpack.c.b16 %v3925, %v3924
    %v4764 = vpack.c.b16 %v3927, %v3926
    %v4765 = vpack.c.b16 %v3929, %v3928
    %v4766 = vpack.c.b16 %v3931, %v3930
    %v4767 = vpack.c.b16 %v3933, %v3932
    %v4768 = vpack.c.b16 %v3935, %v3934
    %v4769 = vpack.c.b16 %v3937, %v3936
    %v4770 = vpack.c.b16 %v3939, %v3938
    %v4771 = vpack.c.b16 %v3941, %v3940
    %v4772 = vpack.c.b16 %v3943, %v3942
    %v4773 = vpack.c.b16 %v3945, %v3944
    %v4774 = vpack.c.b16 %v3947, %v3946
    %v4775 = vpack.c.b16 %v3949, %v3948
    %v4776 = vpack.c.b16 %v3951, %v3950
    %v4777 = vpack.c.b16 %v3953, %v3952
    %v4778 = vpack.c.b16 %v3955, %v3954
    %v4779 = vpack.c.b16 %v3957, %v3956
    %v4780 = vpack.c.b16 %v3959, %v3958
    %v4781 = vpack.c.b16 %v3961, %v3960
    %v4782 = vpack.c.b16 %v3963, %v3962
    %v4783 = vpack.c.b16 %v3965, %v3964
    %v4784 = vpack.c.b16 %v3967, %v3966
    %v4785 = vpack.c.b16 %v3969, %v3968
    %v4786 = vpack.c.b16 %v3971, %v3970
    %v4787 = vpack.c.b16 %v3973, %v3972
    %v4788 = vpack.c.b16 %v3975, %v3974
    %v4789 = vpack.c.b16 %v3977, %v3976
    %v4790 = vpack.c.b16 %v3979, %v3978
    %v4791 = vpack.c.b16 %v3981, %v3980
    %v4792 = vpack.c.b16 %v3983, %v3982
    %v4793 = vpack.c.b16 %v3985, %v3984
    %v4794 = vpack.c.b16 %v3987, %v3986
    %v4795 = vpack.c.b16 %v3989, %v3988
    %v4796 = vpack.c.b16 %v3991, %v3990
    %v4797 = vpack.c.b16 %v3993, %v3992
    %v4798 = vpack.c.b16 %v3995, %v3994
    %v4799 = vpack.c.b16 %v3997, %v3996
    %v4800 = vpack.c.b16 %v3999, %v3998
    %v4801 = vpack.c.b16 %v4001, %v4000
    %v4802 = vpack.c.b16 %v4003, %v4002
    %v4803 = vpack.c.b16 %v4005, %v4004
    %v4804 = vpack.c.b16 %v4007, %v4006
    %v4805 = vpack.c.b16 %v4009, %v4008
    %v4806 = vpack.c.b16 %v4011, %v4010
    %v4807 = vpack.c.b16 %v4013, %v4012
    %v4808 = vpack.c.b16 %v4015, %v4014
    %v4809 = vpack.c.b16 %v4017, %v4016
    %v4810 = vpack.c.b16 %v4019, %v4018
    %v4811 = vpack.c.b16 %v4021, %v4020
    %v4812 = vpack.c.b16 %v4023, %v4022
    %v4813 = vpack.c.b16 %v4025, %v4024
    %v4814 = vpack.c.b16 %v4027, %v4026
    %v4815 = vpack.c.b16 %v4029, %v4028
    %v4816 = vpack.c.b16 %v4031, %v4030
    %v4817 = vpack.c.b16 %v4033, %v4032
    %v4818 = vpack.c.b16 %v4035, %v4034
    %v4819 = vpack.c.b16 %v4037, %v4036
    %v4820 = vpack.c.b16 %v4039, %v4038
    %v4821 = vpack.c.b16 %v4041, %v4040
    %v4822 = vpack.c.b16 %v4043, %v4042
    %v4823 = vpack.c.b16 %v4045, %v4044
    %v4824 = vpack.c.b16 %v4047, %v4046
    %v4825 = vpack.c.b16 %v4049, %v4048
    %v4826 = vpack.c.b16 %v4051, %v4050
    %v4827 = vpack.c.b16 %v4053, %v4052
    %v4828 = vpack.c.b16 %v4055, %v4054
    %v4829 = vpack.c.b16 %v4057, %v4056
    %v4830 = vpack.c.b16 %v4059, %v4058
    %v4831 = vpack.c.b16 %v4061, %v4060
    %v4832 = vpack.c.b16 %v4063, %v4062
    %v4833 = vpack.c.b16 %v4065, %v4064
    %v4834 = vpack.c.b16 %v4067, %v4066
    %v4835 = vpack.c.b16 %v4069, %v4068
    %v4836 = vpack.c.b16 %v4071, %v4070
    %v4837 = vpack.c.b16 %v4073, %v4072
    %v4838 = vpack.c.b16 %v4075, %v4074
    %v4839 = vpack.c.b16 %v4077, %v4076
    %v4840 = vpack.c.b16 %v4079, %v4078
    %v4841 = vpack.c.b16 %v4081, %v4080
    %v4842 = vpack.c.b16 %v4083, %v4082
    %v4843 = vpack.c.b16 %v4085, %v4084
    %v4844 = vpack.c.b16 %v4087, %v4086
    %v4845 = vpack.c.b16 %v4089, %v4088
    %v4846 = vpack.c.b16 %v4091, %v4090
    %v4847 = vpack.c.b16 %v4093, %v4092
    %v4848 = vpack.c.b16 %v4095, %v4094
    %v4849 = vpack.c.b16 %v4097, %v4096
    %v4850 = vpack.c.b16 %v4099, %v4098
    %v4851 = vpack.c.b16 %v4101, %v4100
    %v4852 = vpack.c.b16 %v4103, %v4102
    %v4853 = vpack.c.b16 %v4105, %v4104
    %v4854 = vpack.c.b16 %v4107, %v4106
    %v4855 = vpack.c.b16 %v4109, %v4108
    %v4856 = vpack.c.b16 %v4111, %v4110
    %v4857 = vpack.c.b16 %v4113, %v4112
    %v4858 = vpack.c.b16 %v4115, %v4114
    %v4859 = vpack.c.b16 %v4117, %v4116
    %v4860 = vpack.c.b16 %v4119, %v4118
    %v4861 = vpack.c.b16 %v4121, %v4120
    %v4862 = vpack.c.b16 %v4123, %v4122
    %v4863 = vpack.c.b16 %v4125, %v4124
    %v4864 = vpack.c.b16 %v4127, %v4126
    %v4865 = vpack.c.b16 %v4129, %v4128
    %v4866 = vpack.c.b16 %v4131, %v4130
    %v4867 = vpack.c.b16 %v4133, %v4132
    %v4868 = vpack.c.b16 %v4135, %v4134
    %v4869 = vpack.c.b16 %v4137, %v4136
    %v4870 = vpack.c.b16 %v4139, %v4138
    %v4871 = vpack.c.b16 %v4141, %v4140
    %v4872 = vpack.c.b16 %v4143, %v4142
    %v4873 = vpack.c.b16 %v4145, %v4144
    %v4874 = vpack.c.b16 %v4147, %v4146
    %v4875 = vpack.c.b16 %v4149, %v4148
    %v4876 = vpack.c.b16 %v4151, %v4150
    %v4877 = vpack.c.b16 %v4153, %v4152
    %v4878 = vpack.c.b16 %v4155, %v4154
    %v4879 = vpack.c.b16 %v4157, %v4156
    %v4880 = vpack.c.b16 %v4159, %v4158
    %v4881 = vpack.c.b16 %v4161, %v4160
    %v4882 = vpack.c.b16 %v4163, %v4162
    %v4883 = vpack.c.b16 %v4165, %v4164
    %v4884 = vpack.c.b16 %v4167, %v4166
    %v4885 = vpack.c.b16 %v4169, %v4168
    %v4886 = vpack.c.b16 %v4171, %v4170
    %v4887 = vpack.c.b16 %v4173, %v4172
    %v4888 = vpack.c.b16 %v4175, %v4174
    %v4889 = vpack.c.b16 %v4177, %v4176
    %v4890 = vpack.c.b16 %v4179, %v4178
    %v4891 = vpack.c.b16 %v4181, %v4180
    %v4892 = vpack.c.b16 %v4183, %v4182
    %v4893 = vpack.c.b16 %v4185, %v4184
    %v4894 = vpack.c.b16 %v4187, %v4186
    %v4895 = vpack.c.b16 %v4189, %v4188
    %v4896 = vpack.c.b16 %v4191, %v4190
    %v4897 = vpack.c.b16 %v4193, %v4192
    %v4898 = vpack.c.b16 %v4195, %v4194
    %v4899 = vpack.c.b16 %v4197, %v4196
    %v4900 = vpack.c.b16 %v4199, %v4198
    %v4901 = vpack.c.b16 %v4201, %v4200
    %v4902 = vpack.c.b16 %v4203, %v4202
    %v4903 = vpack.c.b16 %v4205, %v4204
    %v4904 = vpack.c.b16 %v4207, %v4206
    %v4905 = vpack.c.b16 %v4209, %v4208
    %v4906 = vpack.c.b16 %v4211, %v4210
    %v4907 = vpack.c.b16 %v4213, %v4212
    %v4908 = vpack.c.b16 %v4215, %v4214
    %v4909 = vpack.c.b16 %v4217, %v4216
    %v4910 = vpack.c.b16 %v4219, %v4218
    %v4911 = vpack.c.b16 %v4221, %v4220
    %v4912 = vpack.c.b16 %v4223, %v4222
    %v4913 = vpack.c.b16 %v4225, %v4224
    %v4914 = vpack.c.b16 %v4227, %v4226
    %v4915 = vpack.c.b16 %v4229, %v4228
    %v4916 = vpack.c.b16 %v4231, %v4230
    %v4917 = vpack.c.b16 %v4233, %v4232
    %v4918 = vpack.c.b16 %v4235, %v4234
    %v4919 = vpack.c.b16 %v4237, %v4236
    %v4920 = vpack.c.b16 %v4239, %v4238
    %v4921 = vpack.c.b16 %v4241, %v4240
    %v4922 = vpack.c.b16 %v4243, %v4242
    %v4923 = vpack.c.b16 %v4245, %v4244
    %v4924 = vpack.c.b16 %v4247, %v4246
    %v4925 = vpack.c.b16 %v4249, %v4248
    %v4926 = vpack.c.b16 %v4251, %v4250
    %v4927 = vpack.c.b16 %v4253, %v4252
    %v4928 = vpack.c.b16 %v4255, %v4254
    %v4929 = vpack.c.b16 %v4257, %v4256
    %v4930 = vpack.c.b16 %v4259, %v4258
    %v4931 = vpack.c.b16 %v4261, %v4260
    %v4932 = vpack.c.b16 %v4263, %v4262
    %v4933 = vpack.c.b16 %v4265, %v4264
    %v4934 = vpack.c.b16 %v4267, %v4266
    %v4935 = vpack.c.b16 %v4269, %v4268
    %v4936 = vpack.c.b16 %v4271, %v4270
    %v4937 = vpack.c.b16 %v4273, %v4272
    %v4938 = vpack.c.b16 %v4275, %v4274
    %v4939 = vpack.c.b16 %v4277, %v4276
    %v4940 = vpack.c.b16 %v4279, %v4278
    %v4941 = vpack.c.b16 %v4281, %v4280
    %v4942 = vpack.c.b16 %v4283, %v4282
    %v4943 = vpack.c.b16 %v4285, %v4284
    %v4944 = vpack.c.b16 %v4287, %v4286
    %v4945 = vpack.c.b16 %v4289, %v4288
    %v4946 = vpack.c.b16 %v4291, %v4290
    %v4947 = vpack.c.b16 %v4293, %v4292
    %v4948 = vpack.c.b16 %v4295, %v4294
    %v4949 = vpack.c.b16 %v4297, %v4296
    %v4950 = vpack.c.b16 %v4299, %v4298
    %v4951 = vpack.c.b16 %v4301, %v4300
    %v4952 = vpack.c.b16 %v4303, %v4302
    %v4953 = vpack.c.b16 %v4305, %v4304
    %v4954 = vpack.c.b16 %v4307, %v4306
    %v4955 = vpack.c.b16 %v4309, %v4308
    %v4956 = vpack.c.b16 %v4311, %v4310
    %v4957 = vpack.c.b16 %v4313, %v4312
    %v4958 = vpack.c.b16 %v4315, %v4314
    %v4959 = vpack.c.b16 %v4317, %v4316
    %v4960 = vpack.c.b16 %v4319, %v4318
    %v4961 = vpack.c.b16 %v4321, %v4320
    %v4962 = vpack.c.b16 %v4323, %v4322
    %v4963 = vpack.c.b16 %v4325, %v4324
    %v4964 = vpack.c.b16 %v4327, %v4326
    %v4965 = vpack.c.b16 %v4329, %v4328
    %v4966 = vpack.c.b16 %v4331, %v4330
    %v4967 = vpack.c.b16 %v4333, %v4332
    %v4968 = vpack.c.b16 %v4335, %v4334
    %v4969 = vpack.c.b16 %v4337, %v4336
    %v4970 = vpack.c.b16 %v4339, %v4338
    %v4971 = vpack.c.b16 %v4341, %v4340
    %v4972 = vpack.c.b16 %v4343, %v4342
    %v4973 = vpack.c.b16 %v4345, %v4344
    %v4974 = vpack.c.b16 %v4347, %v4346
    %v4975 = vpack.c.b16 %v4349, %v4348
    %v4976 = vpack.c.b16 %v4351, %v4350
    %vm5602 = vcmask 130048
    %v5604 = vsel %vm5602, %v594, 0
    %5606 = vmatprep.subr.bf16.mxu0 0
    %5607 = vmatpush1.bf16.msra.mxu0 %v4352
    %5608 = vmatprep.subr.bf16.mxu0 0
    %5609 = vmatpush1.bf16.msra.mxu0 %v4353
    %5610 = vmatprep.subr.bf16.mxu0 0
    %5611 = vmatpush1.bf16.msra.mxu0 %v4354
    %5612 = vmatprep.subr.bf16.mxu0 0
    %5613 = vmatpush1.bf16.msra.mxu0 %v4355
    %5614 = vmatprep.subr.bf16.mxu0 0
    %5615 = vmatpush1.bf16.msra.mxu0 %v4356
    %5616 = vmatprep.subr.bf16.mxu0 0
    %5617 = vmatpush1.bf16.msra.mxu0 %v4357
    %5618 = vmatprep.subr.bf16.mxu0 0
    %5619 = vmatpush1.bf16.msra.mxu0 %v4358
    %5620 = vmatprep.subr.bf16.mxu0 0
    %5621 = vmatpush1.bf16.msra.mxu0 %v4359
    %5622 = vmatprep.subr.bf16.mxu0 0
    %5623 = vmatpush1.bf16.msra.mxu0 %v4360
    %5624 = vmatprep.subr.bf16.mxu0 0
    %5625 = vmatpush1.bf16.msra.mxu0 %v4361
    %5626 = vmatprep.subr.bf16.mxu0 0
    %5627 = vmatpush1.bf16.msra.mxu0 %v4362
    %5628 = vmatprep.subr.bf16.mxu0 0
    %5629 = vmatpush1.bf16.msra.mxu0 %v4363
    %5630 = vmatprep.subr.bf16.mxu0 0
    %5631 = vmatpush1.bf16.msra.mxu0 %v4364
    %5632 = vmatprep.subr.bf16.mxu0 0
    %5633 = vmatpush1.bf16.msra.mxu0 %v4365
    %5634 = vmatprep.subr.bf16.mxu0 0
    %5635 = vmatpush1.bf16.msra.mxu0 %v4366
    %5636 = vmatprep.subr.bf16.mxu0 0
    %5637 = vmatpush1.bf16.msra.mxu0 %v4367
    %5638 = vmatprep.mubr.bf16.mxu0 %v517
    %5639 = vmatmul.mubr.bf16.gmra.mrb[0].mxu0 %v516
    %v5640 = vpop.f32.mrb[0].mxu0
    %v5641 = vadd.f32 %v1850, %v5640
    %v5642 = vpop.f32.mrb[0].mxu0
    %v5643 = vpop.f32.mrb[0].mxu0
    %v5644 = vpop.f32.mrb[0].mxu0
    %5645 = vdwg.mxu0
    %5646 = vmatprep.subr.bf16.mxu0 0
    %5647 = vmatpush1.bf16.msra.mxu0 %v4368
    %5648 = vmatprep.subr.bf16.mxu0 0
    %5649 = vmatpush1.bf16.msra.mxu0 %v4369
    %5650 = vmatprep.subr.bf16.mxu0 0
    %5651 = vmatpush1.bf16.msra.mxu0 %v4370
    %5652 = vmatprep.subr.bf16.mxu0 0
    %5653 = vmatpush1.bf16.msra.mxu0 %v4371
    %5654 = vmatprep.subr.bf16.mxu0 0
    %5655 = vmatpush1.bf16.msra.mxu0 %v4372
    %5656 = vmatprep.subr.bf16.mxu0 0
    %5657 = vmatpush1.bf16.msra.mxu0 %v4373
    %5658 = vmatprep.subr.bf16.mxu0 0
    %5659 = vmatpush1.bf16.msra.mxu0 %v4374
    %5660 = vmatprep.subr.bf16.mxu0 0
    %5661 = vmatpush1.bf16.msra.mxu0 %v4375
    %5662 = vmatprep.subr.bf16.mxu0 0
    %5663 = vmatpush1.bf16.msra.mxu0 %v4376
    %5664 = vmatprep.subr.bf16.mxu0 0
    %5665 = vmatpush1.bf16.msra.mxu0 %v4377
    %5666 = vmatprep.subr.bf16.mxu0 0
    %5667 = vmatpush1.bf16.msra.mxu0 %v4378
    %5668 = vmatprep.subr.bf16.mxu0 0
    %5669 = vmatpush1.bf16.msra.mxu0 %v4379
    %5670 = vmatprep.subr.bf16.mxu0 0
    %5671 = vmatpush1.bf16.msra.mxu0 %v4380
    %5672 = vmatprep.subr.bf16.mxu0 0
    %5673 = vmatpush1.bf16.msra.mxu0 %v4381
    %5674 = vmatprep.subr.bf16.mxu0 0
    %5675 = vmatpush1.bf16.msra.mxu0 %v4382
    %5676 = vmatprep.subr.bf16.mxu0 0
    %5677 = vmatpush1.bf16.msra.mxu0 %v4383
    %5678 = vmatprep.mubr.bf16.mxu0 %v519
    %5679 = vmatmul.mubr.bf16.gmra.mrb[0].mxu0 %v518
    %v5680 = vpop.f32.mrb[0].mxu0
    %v5681 = vadd.f32 %v5641, %v5680
    %v5682 = vpop.f32.mrb[0].mxu0
    %v5683 = vpop.f32.mrb[0].mxu0
    %v5684 = vpop.f32.mrb[0].mxu0
    %5685 = vdwg.mxu0
    %5686 = vmatprep.subr.bf16.mxu0 0
    %5687 = vmatpush1.bf16.msra.mxu0 %v4384
    %5688 = vmatprep.subr.bf16.mxu0 0
    %5689 = vmatpush1.bf16.msra.mxu0 %v4385
    %5690 = vmatprep.subr.bf16.mxu0 0
    %5691 = vmatpush1.bf16.msra.mxu0 %v4386
    %5692 = vmatprep.subr.bf16.mxu0 0
    %5693 = vmatpush1.bf16.msra.mxu0 %v4387
    %5694 = vmatprep.subr.bf16.mxu0 0
    %5695 = vmatpush1.bf16.msra.mxu0 %v4388
    %5696 = vmatprep.subr.bf16.mxu0 0
    %5697 = vmatpush1.bf16.msra.mxu0 %v4389
    %5698 = vmatprep.subr.bf16.mxu0 0
    %5699 = vmatpush1.bf16.msra.mxu0 %v4390
    %5700 = vmatprep.subr.bf16.mxu0 0
    %5701 = vmatpush1.bf16.msra.mxu0 %v4391
    %5702 = vmatprep.subr.bf16.mxu0 0
    %5703 = vmatpush1.bf16.msra.mxu0 %v4392
    %5704 = vmatprep.subr.bf16.mxu0 0
    %5705 = vmatpush1.bf16.msra.mxu0 %v4393
    %5706 = vmatprep.subr.bf16.mxu0 0
    %5707 = vmatpush1.bf16.msra.mxu0 %v4394
    %5708 = vmatprep.subr.bf16.mxu0 0
    %5709 = vmatpush1.bf16.msra.mxu0 %v4395
    %5710 = vmatprep.subr.bf16.mxu0 0
    %5711 = vmatpush1.bf16.msra.mxu0 %v4396
    %5712 = vmatprep.subr.bf16.mxu0 0
    %5713 = vmatpush1.bf16.msra.mxu0 %v4397
    %5714 = vmatprep.subr.bf16.mxu0 0
    %5715 = vmatpush1.bf16.msra.mxu0 %v4398
    %5716 = vmatprep.subr.bf16.mxu0 0
    %5717 = vmatpush1.bf16.msra.mxu0 %v4399
    %5718 = vmatprep.mubr.bf16.mxu0 %v521
    %5719 = vmatmul.mubr.bf16.gmra.mrb[0].mxu0 %v520
    %v5720 = vpop.f32.mrb[0].mxu0
    %v5721 = vadd.f32 %v5681, %v5720
    %v5722 = vpop.f32.mrb[0].mxu0
    %v5723 = vpop.f32.mrb[0].mxu0
    %v5724 = vpop.f32.mrb[0].mxu0
    %5725 = vdwg.mxu0
    %5726 = vmatprep.subr.bf16.mxu0 0
    %5727 = vmatpush1.bf16.msra.mxu0 %v4400
    %5728 = vmatprep.subr.bf16.mxu0 0
    %5729 = vmatpush1.bf16.msra.mxu0 %v4401
    %5730 = vmatprep.subr.bf16.mxu0 0
    %5731 = vmatpush1.bf16.msra.mxu0 %v4402
    %5732 = vmatprep.subr.bf16.mxu0 0
    %5733 = vmatpush1.bf16.msra.mxu0 %v4403
    %5734 = vmatprep.subr.bf16.mxu0 0
    %5735 = vmatpush1.bf16.msra.mxu0 %v4404
    %5736 = vmatprep.subr.bf16.mxu0 0
    %5737 = vmatpush1.bf16.msra.mxu0 %v4405
    %5738 = vmatprep.subr.bf16.mxu0 0
    %5739 = vmatpush1.bf16.msra.mxu0 %v4406
    %5740 = vmatprep.subr.bf16.mxu0 0
    %5741 = vmatpush1.bf16.msra.mxu0 %v4407
    %5742 = vmatprep.subr.bf16.mxu0 0
    %5743 = vmatpush1.bf16.msra.mxu0 %v4408
    %5744 = vmatprep.subr.bf16.mxu0 0
    %5745 = vmatpush1.bf16.msra.mxu0 %v4409
    %5746 = vmatprep.subr.bf16.mxu0 0
    %5747 = vmatpush1.bf16.msra.mxu0 %v4410
    %5748 = vmatprep.subr.bf16.mxu0 0
    %5749 = vmatpush1.bf16.msra.mxu0 %v4411
    %5750 = vmatprep.subr.bf16.mxu0 0
    %5751 = vmatpush1.bf16.msra.mxu0 %v4412
    %5752 = vmatprep.subr.bf16.mxu0 0
    %5753 = vmatpush1.bf16.msra.mxu0 %v4413
    %5754 = vmatprep.subr.bf16.mxu0 0
    %5755 = vmatpush1.bf16.msra.mxu0 %v4414
    %5756 = vmatprep.subr.bf16.mxu0 0
    %5757 = vmatpush1.bf16.msra.mxu0 %v4415
    %5758 = vmatprep.mubr.bf16.mxu0 %v523
    %5759 = vmatmul.mubr.bf16.gmra.mrb[0].mxu0 %v522
    %v5760 = vpop.f32.mrb[0].mxu0
    %v5761 = vadd.f32 %v5721, %v5760
    %v5762 = vpop.f32.mrb[0].mxu0
    %v5763 = vpop.f32.mrb[0].mxu0
    %v5764 = vpop.f32.mrb[0].mxu0
    %5765 = vdwg.mxu0
    %5766 = vmatprep.subr.bf16.mxu0 0
    %5767 = vmatpush1.bf16.msra.mxu0 %v4416
    %5768 = vmatprep.subr.bf16.mxu0 0
    %5769 = vmatpush1.bf16.msra.mxu0 %v4417
    %5770 = vmatprep.subr.bf16.mxu0 0
    %5771 = vmatpush1.bf16.msra.mxu0 %v4418
    %5772 = vmatprep.subr.bf16.mxu0 0
    %5773 = vmatpush1.bf16.msra.mxu0 %v4419
    %5774 = vmatprep.subr.bf16.mxu0 0
    %5775 = vmatpush1.bf16.msra.mxu0 %v4420
    %5776 = vmatprep.subr.bf16.mxu0 0
    %5777 = vmatpush1.bf16.msra.mxu0 %v4421
    %5778 = vmatprep.subr.bf16.mxu0 0
    %5779 = vmatpush1.bf16.msra.mxu0 %v4422
    %5780 = vmatprep.subr.bf16.mxu0 0
    %5781 = vmatpush1.bf16.msra.mxu0 %v4423
    %5782 = vmatprep.subr.bf16.mxu0 0
    %5783 = vmatpush1.bf16.msra.mxu0 %v4424
    %5784 = vmatprep.subr.bf16.mxu0 0
    %5785 = vmatpush1.bf16.msra.mxu0 %v4425
    %5786 = vmatprep.subr.bf16.mxu0 0
    %5787 = vmatpush1.bf16.msra.mxu0 %v4426
    %5788 = vmatprep.subr.bf16.mxu0 0
    %5789 = vmatpush1.bf16.msra.mxu0 %v4427
    %5790 = vmatprep.subr.bf16.mxu0 0
    %5791 = vmatpush1.bf16.msra.mxu0 %v4428
    %5792 = vmatprep.subr.bf16.mxu0 0
    %5793 = vmatpush1.bf16.msra.mxu0 %v4429
    %5794 = vmatprep.subr.bf16.mxu0 0
    %5795 = vmatpush1.bf16.msra.mxu0 %v4430
    %5796 = vmatprep.subr.bf16.mxu0 0
    %5797 = vmatpush1.bf16.msra.mxu0 %v4431
    %5798 = vmatprep.mubr.bf16.mxu0 %v525
    %5799 = vmatmul.mubr.bf16.gmra.mrb[0].mxu0 %v524
    %v5800 = vpop.f32.mrb[0].mxu0
    %v5801 = vadd.f32 %v5761, %v5800
    %v5802 = vpop.f32.mrb[0].mxu0
    %v5803 = vpop.f32.mrb[0].mxu0
    %v5804 = vpop.f32.mrb[0].mxu0
    %5805 = vdwg.mxu0
    %5806 = vmatprep.subr.bf16.mxu0 0
    %5807 = vmatpush1.bf16.msra.mxu0 %v4432
    %5808 = vmatprep.subr.bf16.mxu0 0
    %5809 = vmatpush1.bf16.msra.mxu0 %v4433
    %5810 = vmatprep.subr.bf16.mxu0 0
    %5811 = vmatpush1.bf16.msra.mxu0 %v4434
    %5812 = vmatprep.subr.bf16.mxu0 0
    %5813 = vmatpush1.bf16.msra.mxu0 %v4435
    %5814 = vmatprep.subr.bf16.mxu0 0
    %5815 = vmatpush1.bf16.msra.mxu0 %v4436
    %5816 = vmatprep.subr.bf16.mxu0 0
    %5817 = vmatpush1.bf16.msra.mxu0 %v4437
    %5818 = vmatprep.subr.bf16.mxu0 0
    %5819 = vmatpush1.bf16.msra.mxu0 %v4438
    %5820 = vmatprep.subr.bf16.mxu0 0
    %5821 = vmatpush1.bf16.msra.mxu0 %v4439
    %5822 = vmatprep.subr.bf16.mxu0 0
    %5823 = vmatpush1.bf16.msra.mxu0 %v4440
    %5824 = vmatprep.subr.bf16.mxu0 0
    %5825 = vmatpush1.bf16.msra.mxu0 %v4441
    %5826 = vmatprep.subr.bf16.mxu0 0
    %5827 = vmatpush1.bf16.msra.mxu0 %v4442
    %5828 = vmatprep.subr.bf16.mxu0 0
    %5829 = vmatpush1.bf16.msra.mxu0 %v4443
    %5830 = vmatprep.subr.bf16.mxu0 0
    %5831 = vmatpush1.bf16.msra.mxu0 %v4444
    %5832 = vmatprep.subr.bf16.mxu0 0
    %5833 = vmatpush1.bf16.msra.mxu0 %v4445
    %5834 = vmatprep.subr.bf16.mxu0 0
    %5835 = vmatpush1.bf16.msra.mxu0 %v4446
    %5836 = vmatprep.subr.bf16.mxu0 0
    %5837 = vmatpush1.bf16.msra.mxu0 %v4447
    %5838 = vmatprep.mubr.bf16.mxu0 %v527
    %5839 = vmatmul.mubr.bf16.gmra.mrb[0].mxu0 %v526
    %v5840 = vpop.f32.mrb[0].mxu0
    %v5841 = vadd.f32 %v5801, %v5840
    %v5842 = vpop.f32.mrb[0].mxu0
    %v5843 = vpop.f32.mrb[0].mxu0
    %v5844 = vpop.f32.mrb[0].mxu0
    %5845 = vdwg.mxu0
    %5846 = vmatprep.subr.bf16.mxu0 0
    %5847 = vmatpush1.bf16.msra.mxu0 %v4448
    %5848 = vmatprep.subr.bf16.mxu0 0
    %5849 = vmatpush1.bf16.msra.mxu0 %v4449
    %5850 = vmatprep.subr.bf16.mxu0 0
    %5851 = vmatpush1.bf16.msra.mxu0 %v4450
    %5852 = vmatprep.subr.bf16.mxu0 0
    %5853 = vmatpush1.bf16.msra.mxu0 %v4451
    %5854 = vmatprep.subr.bf16.mxu0 0
    %5855 = vmatpush1.bf16.msra.mxu0 %v4452
    %5856 = vmatprep.subr.bf16.mxu0 0
    %5857 = vmatpush1.bf16.msra.mxu0 %v4453
    %5858 = vmatprep.subr.bf16.mxu0 0
    %5859 = vmatpush1.bf16.msra.mxu0 %v4454
    %5860 = vmatprep.subr.bf16.mxu0 0
    %5861 = vmatpush1.bf16.msra.mxu0 %v4455
    %5862 = vmatprep.subr.bf16.mxu0 0
    %5863 = vmatpush1.bf16.msra.mxu0 %v4456
    %5864 = vmatprep.subr.bf16.mxu0 0
    %5865 = vmatpush1.bf16.msra.mxu0 %v4457
    %5866 = vmatprep.subr.bf16.mxu0 0
    %5867 = vmatpush1.bf16.msra.mxu0 %v4458
    %5868 = vmatprep.subr.bf16.mxu0 0
    %5869 = vmatpush1.bf16.msra.mxu0 %v4459
    %5870 = vmatprep.subr.bf16.mxu0 0
    %5871 = vmatpush1.bf16.msra.mxu0 %v4460
    %5872 = vmatprep.subr.bf16.mxu0 0
    %5873 = vmatpush1.bf16.msra.mxu0 %v4461
    %5874 = vmatprep.subr.bf16.mxu0 0
    %5875 = vmatpush1.bf16.msra.mxu0 %v4462
    %5876 = vmatprep.subr.bf16.mxu0 0
    %5877 = vmatpush1.bf16.msra.mxu0 %v4463
    %5878 = vmatprep.mubr.bf16.mxu0 %v529
    %5879 = vmatmul.mubr.bf16.gmra.mrb[0].mxu0 %v528
    %v5880 = vpop.f32.mrb[0].mxu0
    %v5881 = vadd.f32 %v5841, %v5880
    %v5882 = vpop.f32.mrb[0].mxu0
    %v5883 = vpop.f32.mrb[0].mxu0
    %v5884 = vpop.f32.mrb[0].mxu0
    %5885 = vdwg.mxu0
    %5886 = vmatprep.subr.bf16.mxu0 0
    %5887 = vmatpush1.bf16.msra.mxu0 %v4464
    %5888 = vmatprep.subr.bf16.mxu0 0
    %5889 = vmatpush1.bf16.msra.mxu0 %v4465
    %5890 = vmatprep.subr.bf16.mxu0 0
    %5891 = vmatpush1.bf16.msra.mxu0 %v4466
    %5892 = vmatprep.subr.bf16.mxu0 0
    %5893 = vmatpush1.bf16.msra.mxu0 %v4467
    %5894 = vmatprep.subr.bf16.mxu0 0
    %5895 = vmatpush1.bf16.msra.mxu0 %v4468
    %5896 = vmatprep.subr.bf16.mxu0 0
    %5897 = vmatpush1.bf16.msra.mxu0 %v4469
    %5898 = vmatprep.subr.bf16.mxu0 0
    %5899 = vmatpush1.bf16.msra.mxu0 %v4470
    %5900 = vmatprep.subr.bf16.mxu0 0
    %5901 = vmatpush1.bf16.msra.mxu0 %v4471
    %5902 = vmatprep.subr.bf16.mxu0 0
    %5903 = vmatpush1.bf16.msra.mxu0 %v4472
    %5904 = vmatprep.subr.bf16.mxu0 0
    %5905 = vmatpush1.bf16.msra.mxu0 %v4473
    %5906 = vmatprep.subr.bf16.mxu0 0
    %5907 = vmatpush1.bf16.msra.mxu0 %v4474
    %5908 = vmatprep.subr.bf16.mxu0 0
    %5909 = vmatpush1.bf16.msra.mxu0 %v4475
    %5910 = vmatprep.subr.bf16.mxu0 0
    %5911 = vmatpush1.bf16.msra.mxu0 %v4476
    %5912 = vmatprep.subr.bf16.mxu0 0
    %5913 = vmatpush1.bf16.msra.mxu0 %v4477
    %5914 = vmatprep.subr.bf16.mxu0 0
    %5915 = vmatpush1.bf16.msra.mxu0 %v4478
    %5916 = vmatprep.subr.bf16.mxu0 0
    %5917 = vmatpush1.bf16.msra.mxu0 %v4479
    %5918 = vmatprep.mubr.bf16.mxu0 %v531
    %5919 = vmatmul.mubr.bf16.gmra.mrb[0].mxu0 %v530
    %v5920 = vpop.f32.mrb[0].mxu0
    %v5921 = vadd.f32 %v5881, %v5920
    %v5922 = vpop.f32.mrb[0].mxu0
    %v5923 = vpop.f32.mrb[0].mxu0
    %v5924 = vpop.f32.mrb[0].mxu0
    %5925 = vdwg.mxu0
    %5926 = vmatprep.subr.bf16.mxu0 0
    %5927 = vmatpush1.bf16.msra.mxu0 %v4480
    %5928 = vmatprep.subr.bf16.mxu0 0
    %5929 = vmatpush1.bf16.msra.mxu0 %v4481
    %5930 = vmatprep.subr.bf16.mxu0 0
    %5931 = vmatpush1.bf16.msra.mxu0 %v4482
    %5932 = vmatprep.subr.bf16.mxu0 0
    %5933 = vmatpush1.bf16.msra.mxu0 %v4483
    %5934 = vmatprep.subr.bf16.mxu0 0
    %5935 = vmatpush1.bf16.msra.mxu0 %v4484
    %5936 = vmatprep.subr.bf16.mxu0 0
    %5937 = vmatpush1.bf16.msra.mxu0 %v4485
    %5938 = vmatprep.subr.bf16.mxu0 0
    %5939 = vmatpush1.bf16.msra.mxu0 %v4486
    %5940 = vmatprep.subr.bf16.mxu0 0
    %5941 = vmatpush1.bf16.msra.mxu0 %v4487
    %5942 = vmatprep.subr.bf16.mxu0 0
    %5943 = vmatpush1.bf16.msra.mxu0 %v4488
    %5944 = vmatprep.subr.bf16.mxu0 0
    %5945 = vmatpush1.bf16.msra.mxu0 %v4489
    %5946 = vmatprep.subr.bf16.mxu0 0
    %5947 = vmatpush1.bf16.msra.mxu0 %v4490
    %5948 = vmatprep.subr.bf16.mxu0 0
    %5949 = vmatpush1.bf16.msra.mxu0 %v4491
    %5950 = vmatprep.subr.bf16.mxu0 0
    %5951 = vmatpush1.bf16.msra.mxu0 %v4492
    %5952 = vmatprep.subr.bf16.mxu0 0
    %5953 = vmatpush1.bf16.msra.mxu0 %v4493
    %5954 = vmatprep.subr.bf16.mxu0 0
    %5955 = vmatpush1.bf16.msra.mxu0 %v4494
    %5956 = vmatprep.subr.bf16.mxu0 0
    %5957 = vmatpush1.bf16.msra.mxu0 %v4495
    %5958 = vmatprep.mubr.bf16.mxu0 %v533
    %5959 = vmatmul.mubr.bf16.gmra.mrb[0].mxu0 %v532
    %v5960 = vpop.f32.mrb[0].mxu0
    %v5961 = vadd.f32 %v5921, %v5960
    %v5962 = vpop.f32.mrb[0].mxu0
    %v5963 = vpop.f32.mrb[0].mxu0
    %v5964 = vpop.f32.mrb[0].mxu0
    %5965 = vdwg.mxu0
    %5966 = vmatprep.subr.bf16.mxu0 0
    %5967 = vmatpush1.bf16.msra.mxu0 %v4496
    %5968 = vmatprep.subr.bf16.mxu0 0
    %5969 = vmatpush1.bf16.msra.mxu0 %v4497
    %5970 = vmatprep.subr.bf16.mxu0 0
    %5971 = vmatpush1.bf16.msra.mxu0 %v4498
    %5972 = vmatprep.subr.bf16.mxu0 0
    %5973 = vmatpush1.bf16.msra.mxu0 %v4499
    %5974 = vmatprep.subr.bf16.mxu0 0
    %5975 = vmatpush1.bf16.msra.mxu0 %v4500
    %5976 = vmatprep.subr.bf16.mxu0 0
    %5977 = vmatpush1.bf16.msra.mxu0 %v4501
    %5978 = vmatprep.subr.bf16.mxu0 0
    %5979 = vmatpush1.bf16.msra.mxu0 %v4502
    %5980 = vmatprep.subr.bf16.mxu0 0
    %5981 = vmatpush1.bf16.msra.mxu0 %v4503
    %5982 = vmatprep.subr.bf16.mxu0 0
    %5983 = vmatpush1.bf16.msra.mxu0 %v4504
    %5984 = vmatprep.subr.bf16.mxu0 0
    %5985 = vmatpush1.bf16.msra.mxu0 %v4505
    %5986 = vmatprep.subr.bf16.mxu0 0
    %5987 = vmatpush1.bf16.msra.mxu0 %v4506
    %5988 = vmatprep.subr.bf16.mxu0 0
    %5989 = vmatpush1.bf16.msra.mxu0 %v4507
    %5990 = vmatprep.subr.bf16.mxu0 0
    %5991 = vmatpush1.bf16.msra.mxu0 %v4508
    %5992 = vmatprep.subr.bf16.mxu0 0
    %5993 = vmatpush1.bf16.msra.mxu0 %v4509
    %5994 = vmatprep.subr.bf16.mxu0 0
    %5995 = vmatpush1.bf16.msra.mxu0 %v4510
    %5996 = vmatprep.subr.bf16.mxu0 0
    %5997 = vmatpush1.bf16.msra.mxu0 %v4511
    %5998 = vmatprep.mubr.bf16.mxu0 %v535
    %5999 = vmatmul.mubr.bf16.gmra.mrb[0].mxu0 %v534
    %v6000 = vpop.f32.mrb[0].mxu0
    %v6001 = vadd.f32 %v5961, %v6000
    %v6002 = vpop.f32.mrb[0].mxu0
    %v6003 = vpop.f32.mrb[0].mxu0
    %v6004 = vpop.f32.mrb[0].mxu0
    %6005 = vdwg.mxu0
    %6006 = vmatprep.subr.bf16.mxu0 0
    %6007 = vmatpush1.bf16.msra.mxu0 %v4512
    %6008 = vmatprep.subr.bf16.mxu0 0
    %6009 = vmatpush1.bf16.msra.mxu0 %v4513
    %6010 = vmatprep.subr.bf16.mxu0 0
    %6011 = vmatpush1.bf16.msra.mxu0 %v4514
    %6012 = vmatprep.subr.bf16.mxu0 0
    %6013 = vmatpush1.bf16.msra.mxu0 %v4515
    %6014 = vmatprep.subr.bf16.mxu0 0
    %6015 = vmatpush1.bf16.msra.mxu0 %v4516
    %6016 = vmatprep.subr.bf16.mxu0 0
    %6017 = vmatpush1.bf16.msra.mxu0 %v4517
    %6018 = vmatprep.subr.bf16.mxu0 0
    %6019 = vmatpush1.bf16.msra.mxu0 %v4518
    %6020 = vmatprep.subr.bf16.mxu0 0
    %6021 = vmatpush1.bf16.msra.mxu0 %v4519
    %6022 = vmatprep.subr.bf16.mxu0 0
    %6023 = vmatpush1.bf16.msra.mxu0 %v4520
    %6024 = vmatprep.subr.bf16.mxu0 0
    %6025 = vmatpush1.bf16.msra.mxu0 %v4521
    %6026 = vmatprep.subr.bf16.mxu0 0
    %6027 = vmatpush1.bf16.msra.mxu0 %v4522
    %6028 = vmatprep.subr.bf16.mxu0 0
    %6029 = vmatpush1.bf16.msra.mxu0 %v4523
    %6030 = vmatprep.subr.bf16.mxu0 0
    %6031 = vmatpush1.bf16.msra.mxu0 %v4524
    %6032 = vmatprep.subr.bf16.mxu0 0
    %6033 = vmatpush1.bf16.msra.mxu0 %v4525
    %6034 = vmatprep.subr.bf16.mxu0 0
    %6035 = vmatpush1.bf16.msra.mxu0 %v4526
    %6036 = vmatprep.subr.bf16.mxu0 0
    %6037 = vmatpush1.bf16.msra.mxu0 %v4527
    %6038 = vmatprep.mubr.bf16.mxu0 %v537
    %6039 = vmatmul.mubr.bf16.gmra.mrb[0].mxu0 %v536
    %v6040 = vpop.f32.mrb[0].mxu0
    %v6041 = vadd.f32 %v6001, %v6040
    %v6042 = vpop.f32.mrb[0].mxu0
    %v6043 = vpop.f32.mrb[0].mxu0
    %v6044 = vpop.f32.mrb[0].mxu0
    %6045 = vdwg.mxu0
    %6046 = vmatprep.subr.bf16.mxu0 0
    %6047 = vmatpush1.bf16.msra.mxu0 %v4528
    %6048 = vmatprep.subr.bf16.mxu0 0
    %6049 = vmatpush1.bf16.msra.mxu0 %v4529
    %6050 = vmatprep.subr.bf16.mxu0 0
    %6051 = vmatpush1.bf16.msra.mxu0 %v4530
    %6052 = vmatprep.subr.bf16.mxu0 0
    %6053 = vmatpush1.bf16.msra.mxu0 %v4531
    %6054 = vmatprep.subr.bf16.mxu0 0
    %6055 = vmatpush1.bf16.msra.mxu0 %v4532
    %6056 = vmatprep.subr.bf16.mxu0 0
    %6057 = vmatpush1.bf16.msra.mxu0 %v4533
    %6058 = vmatprep.subr.bf16.mxu0 0
    %6059 = vmatpush1.bf16.msra.mxu0 %v4534
    %6060 = vmatprep.subr.bf16.mxu0 0
    %6061 = vmatpush1.bf16.msra.mxu0 %v4535
    %6062 = vmatprep.subr.bf16.mxu0 0
    %6063 = vmatpush1.bf16.msra.mxu0 %v4536
    %6064 = vmatprep.subr.bf16.mxu0 0
    %6065 = vmatpush1.bf16.msra.mxu0 %v4537
    %6066 = vmatprep.subr.bf16.mxu0 0
    %6067 = vmatpush1.bf16.msra.mxu0 %v4538
    %6068 = vmatprep.subr.bf16.mxu0 0
    %6069 = vmatpush1.bf16.msra.mxu0 %v4539
    %6070 = vmatprep.subr.bf16.mxu0 0
    %6071 = vmatpush1.bf16.msra.mxu0 %v4540
    %6072 = vmatprep.subr.bf16.mxu0 0
    %6073 = vmatpush1.bf16.msra.mxu0 %v4541
    %6074 = vmatprep.subr.bf16.mxu0 0
    %6075 = vmatpush1.bf16.msra.mxu0 %v4542
    %6076 = vmatprep.subr.bf16.mxu0 0
    %6077 = vmatpush1.bf16.msra.mxu0 %v4543
    %6078 = vmatprep.mubr.bf16.mxu0 %v539
    %6079 = vmatmul.mubr.bf16.gmra.mrb[0].mxu0 %v538
    %v6080 = vpop.f32.mrb[0].mxu0
    %v6081 = vadd.f32 %v6041, %v6080
    %v6082 = vpop.f32.mrb[0].mxu0
    %v6083 = vpop.f32.mrb[0].mxu0
    %v6084 = vpop.f32.mrb[0].mxu0
    %6085 = vdwg.mxu0
    %6086 = vmatprep.subr.bf16.mxu0 0
    %6087 = vmatpush1.bf16.msra.mxu0 %v4544
    %6088 = vmatprep.subr.bf16.mxu0 0
    %6089 = vmatpush1.bf16.msra.mxu0 %v4545
    %6090 = vmatprep.subr.bf16.mxu0 0
    %6091 = vmatpush1.bf16.msra.mxu0 %v4546
    %6092 = vmatprep.subr.bf16.mxu0 0
    %6093 = vmatpush1.bf16.msra.mxu0 %v4547
    %6094 = vmatprep.subr.bf16.mxu0 0
    %6095 = vmatpush1.bf16.msra.mxu0 %v4548
    %6096 = vmatprep.subr.bf16.mxu0 0
    %6097 = vmatpush1.bf16.msra.mxu0 %v4549
    %6098 = vmatprep.subr.bf16.mxu0 0
    %6099 = vmatpush1.bf16.msra.mxu0 %v4550
    %6100 = vmatprep.subr.bf16.mxu0 0
    %6101 = vmatpush1.bf16.msra.mxu0 %v4551
    %6102 = vmatprep.subr.bf16.mxu0 0
    %6103 = vmatpush1.bf16.msra.mxu0 %v4552
    %6104 = vmatprep.subr.bf16.mxu0 0
    %6105 = vmatpush1.bf16.msra.mxu0 %v4553
    %6106 = vmatprep.subr.bf16.mxu0 0
    %6107 = vmatpush1.bf16.msra.mxu0 %v4554
    %6108 = vmatprep.subr.bf16.mxu0 0
    %6109 = vmatpush1.bf16.msra.mxu0 %v4555
    %6110 = vmatprep.subr.bf16.mxu0 0
    %6111 = vmatpush1.bf16.msra.mxu0 %v4556
    %6112 = vmatprep.subr.bf16.mxu0 0
    %6113 = vmatpush1.bf16.msra.mxu0 %v4557
    %6114 = vmatprep.subr.bf16.mxu0 0
    %6115 = vmatpush1.bf16.msra.mxu0 %v4558
    %6116 = vmatprep.subr.bf16.mxu0 0
    %6117 = vmatpush1.bf16.msra.mxu0 %v4559
    %6118 = vmatprep.mubr.bf16.mxu0 %v541
    %6119 = vmatmul.mubr.bf16.gmra.mrb[0].mxu0 %v540
    %v6120 = vpop.f32.mrb[0].mxu0
    %v6121 = vadd.f32 %v6081, %v6120
    %v6122 = vpop.f32.mrb[0].mxu0
    %v6123 = vpop.f32.mrb[0].mxu0
    %v6124 = vpop.f32.mrb[0].mxu0
    %6125 = vdwg.mxu0
    %6126 = vmatprep.subr.bf16.mxu0 0
    %6127 = vmatpush1.bf16.msra.mxu0 %v4560
    %6128 = vmatprep.subr.bf16.mxu0 0
    %6129 = vmatpush1.bf16.msra.mxu0 %v4561
    %6130 = vmatprep.subr.bf16.mxu0 0
    %6131 = vmatpush1.bf16.msra.mxu0 %v4562
    %6132 = vmatprep.subr.bf16.mxu0 0
    %6133 = vmatpush1.bf16.msra.mxu0 %v4563
    %6134 = vmatprep.subr.bf16.mxu0 0
    %6135 = vmatpush1.bf16.msra.mxu0 %v4564
    %6136 = vmatprep.subr.bf16.mxu0 0
    %6137 = vmatpush1.bf16.msra.mxu0 %v4565
    %6138 = vmatprep.subr.bf16.mxu0 0
    %6139 = vmatpush1.bf16.msra.mxu0 %v4566
    %6140 = vmatprep.subr.bf16.mxu0 0
    %6141 = vmatpush1.bf16.msra.mxu0 %v4567
    %6142 = vmatprep.subr.bf16.mxu0 0
    %6143 = vmatpush1.bf16.msra.mxu0 %v4568
    %6144 = vmatprep.subr.bf16.mxu0 0
    %6145 = vmatpush1.bf16.msra.mxu0 %v4569
    %6146 = vmatprep.subr.bf16.mxu0 0
    %6147 = vmatpush1.bf16.msra.mxu0 %v4570
    %6148 = vmatprep.subr.bf16.mxu0 0
    %6149 = vmatpush1.bf16.msra.mxu0 %v4571
    %6150 = vmatprep.subr.bf16.mxu0 0
    %6151 = vmatpush1.bf16.msra.mxu0 %v4572
    %6152 = vmatprep.subr.bf16.mxu0 0
    %6153 = vmatpush1.bf16.msra.mxu0 %v4573
    %6154 = vmatprep.subr.bf16.mxu0 0
    %6155 = vmatpush1.bf16.msra.mxu0 %v4574
    %6156 = vmatprep.subr.bf16.mxu0 0
    %6157 = vmatpush1.bf16.msra.mxu0 %v4575
    %6158 = vmatprep.mubr.bf16.mxu0 %v543
    %6159 = vmatmul.mubr.bf16.gmra.mrb[0].mxu0 %v542
    %v6160 = vpop.f32.mrb[0].mxu0
    %v6161 = vadd.f32 %v6121, %v6160
    %v6162 = vpop.f32.mrb[0].mxu0
    %v6163 = vpop.f32.mrb[0].mxu0
    %v6164 = vpop.f32.mrb[0].mxu0
    %6165 = vdwg.mxu0
    %6166 = vmatprep.subr.bf16.mxu0 0
    %6167 = vmatpush1.bf16.msra.mxu0 %v4576
    %6168 = vmatprep.subr.bf16.mxu0 0
    %6169 = vmatpush1.bf16.msra.mxu0 %v4577
    %6170 = vmatprep.subr.bf16.mxu0 0
    %6171 = vmatpush1.bf16.msra.mxu0 %v4578
    %6172 = vmatprep.subr.bf16.mxu0 0
    %6173 = vmatpush1.bf16.msra.mxu0 %v4579
    %6174 = vmatprep.subr.bf16.mxu0 0
    %6175 = vmatpush1.bf16.msra.mxu0 %v4580
    %6176 = vmatprep.subr.bf16.mxu0 0
    %6177 = vmatpush1.bf16.msra.mxu0 %v4581
    %6178 = vmatprep.subr.bf16.mxu0 0
    %6179 = vmatpush1.bf16.msra.mxu0 %v4582
    %6180 = vmatprep.subr.bf16.mxu0 0
    %6181 = vmatpush1.bf16.msra.mxu0 %v4583
    %6182 = vmatprep.subr.bf16.mxu0 0
    %6183 = vmatpush1.bf16.msra.mxu0 %v4584
    %6184 = vmatprep.subr.bf16.mxu0 0
    %6185 = vmatpush1.bf16.msra.mxu0 %v4585
    %6186 = vmatprep.subr.bf16.mxu0 0
    %6187 = vmatpush1.bf16.msra.mxu0 %v4586
    %6188 = vmatprep.subr.bf16.mxu0 0
    %6189 = vmatpush1.bf16.msra.mxu0 %v4587
    %6190 = vmatprep.subr.bf16.mxu0 0
    %6191 = vmatpush1.bf16.msra.mxu0 %v4588
    %6192 = vmatprep.subr.bf16.mxu0 0
    %6193 = vmatpush1.bf16.msra.mxu0 %v4589
    %6194 = vmatprep.subr.bf16.mxu0 0
    %6195 = vmatpush1.bf16.msra.mxu0 %v4590
    %6196 = vmatprep.subr.bf16.mxu0 0
    %6197 = vmatpush1.bf16.msra.mxu0 %v4591
    %6198 = vmatprep.mubr.bf16.mxu0 %v545
    %6199 = vmatmul.mubr.bf16.gmra.mrb[0].mxu0 %v544
    %v6200 = vpop.f32.mrb[0].mxu0
    %v6201 = vadd.f32 %v6161, %v6200
    %v6202 = vpop.f32.mrb[0].mxu0
    %v6203 = vpop.f32.mrb[0].mxu0
    %v6204 = vpop.f32.mrb[0].mxu0
    %6205 = vdwg.mxu0
    %6206 = vmatprep.subr.bf16.mxu0 0
    %6207 = vmatpush1.bf16.msra.mxu0 %v4592
    %6208 = vmatprep.subr.bf16.mxu0 0
    %6209 = vmatpush1.bf16.msra.mxu0 %v4593
    %6210 = vmatprep.subr.bf16.mxu0 0
    %6211 = vmatpush1.bf16.msra.mxu0 %v4594
    %6212 = vmatprep.subr.bf16.mxu0 0
    %6213 = vmatpush1.bf16.msra.mxu0 %v4595
    %6214 = vmatprep.subr.bf16.mxu0 0
    %6215 = vmatpush1.bf16.msra.mxu0 %v4596
    %6216 = vmatprep.subr.bf16.mxu0 0
    %6217 = vmatpush1.bf16.msra.mxu0 %v4597
    %6218 = vmatprep.subr.bf16.mxu0 0
    %6219 = vmatpush1.bf16.msra.mxu0 %v4598
    %6220 = vmatprep.subr.bf16.mxu0 0
    %6221 = vmatpush1.bf16.msra.mxu0 %v4599
    %6222 = vmatprep.subr.bf16.mxu0 0
    %6223 = vmatpush1.bf16.msra.mxu0 %v4600
    %6224 = vmatprep.subr.bf16.mxu0 0
    %6225 = vmatpush1.bf16.msra.mxu0 %v4601
    %6226 = vmatprep.subr.bf16.mxu0 0
    %6227 = vmatpush1.bf16.msra.mxu0 %v4602
    %6228 = vmatprep.subr.bf16.mxu0 0
    %6229 = vmatpush1.bf16.msra.mxu0 %v4603
    %6230 = vmatprep.subr.bf16.mxu0 0
    %6231 = vmatpush1.bf16.msra.mxu0 %v4604
    %6232 = vmatprep.subr.bf16.mxu0 0
    %6233 = vmatpush1.bf16.msra.mxu0 %v4605
    %6234 = vmatprep.subr.bf16.mxu0 0
    %6235 = vmatpush1.bf16.msra.mxu0 %v4606
    %6236 = vmatprep.subr.bf16.mxu0 0
    %6237 = vmatpush1.bf16.msra.mxu0 %v4607
    %6238 = vmatprep.mubr.bf16.mxu0 %v547
    %6239 = vmatmul.mubr.bf16.gmra.mrb[0].mxu0 %v546
    %v6240 = vpop.f32.mrb[0].mxu0
    %v6241 = vadd.f32 %v6201, %v6240
    %v6242 = vpop.f32.mrb[0].mxu0
    %v6243 = vpop.f32.mrb[0].mxu0
    %v6244 = vpop.f32.mrb[0].mxu0
    %6245 = vdwg.mxu0
    %6246 = vmatprep.subr.bf16.mxu0 0
    %6247 = vmatpush1.bf16.msra.mxu0 %v4608
    %6248 = vmatprep.subr.bf16.mxu0 0
    %6249 = vmatpush1.bf16.msra.mxu0 %v4609
    %6250 = vmatprep.subr.bf16.mxu0 0
    %6251 = vmatpush1.bf16.msra.mxu0 %v4610
    %6252 = vmatprep.subr.bf16.mxu0 0
    %6253 = vmatpush1.bf16.msra.mxu0 %v4611
    %6254 = vmatprep.subr.bf16.mxu0 0
    %6255 = vmatpush1.bf16.msra.mxu0 %v4612
    %6256 = vmatprep.subr.bf16.mxu0 0
    %6257 = vmatpush1.bf16.msra.mxu0 %v4613
    %6258 = vmatprep.subr.bf16.mxu0 0
    %6259 = vmatpush1.bf16.msra.mxu0 %v4614
    %6260 = vmatprep.subr.bf16.mxu0 0
    %6261 = vmatpush1.bf16.msra.mxu0 %v4615
    %6262 = vmatprep.subr.bf16.mxu0 0
    %6263 = vmatpush1.bf16.msra.mxu0 %v4616
    %6264 = vmatprep.subr.bf16.mxu0 0
    %6265 = vmatpush1.bf16.msra.mxu0 %v4617
    %6266 = vmatprep.subr.bf16.mxu0 0
    %6267 = vmatpush1.bf16.msra.mxu0 %v4618
    %6268 = vmatprep.subr.bf16.mxu0 0
    %6269 = vmatpush1.bf16.msra.mxu0 %v4619
    %6270 = vmatprep.subr.bf16.mxu0 0
    %6271 = vmatpush1.bf16.msra.mxu0 %v4620
    %6272 = vmatprep.subr.bf16.mxu0 0
    %6273 = vmatpush1.bf16.msra.mxu0 %v4621
    %6274 = vmatprep.subr.bf16.mxu0 0
    %6275 = vmatpush1.bf16.msra.mxu0 %v4622
    %6276 = vmatprep.subr.bf16.mxu0 0
    %6277 = vmatpush1.bf16.msra.mxu0 %v4623
    %6278 = vmatprep.mubr.bf16.mxu0 %v549
    %6279 = vmatmul.mubr.bf16.gmra.mrb[0].mxu0 %v548
    %v6280 = vpop.f32.mrb[0].mxu0
    %v6281 = vadd.f32 %v6241, %v6280
    %v6282 = vpop.f32.mrb[0].mxu0
    %v6283 = vpop.f32.mrb[0].mxu0
    %v6284 = vpop.f32.mrb[0].mxu0
    %6285 = vdwg.mxu0
    %6286 = vmatprep.subr.bf16.mxu0 0
    %6287 = vmatpush1.bf16.msra.mxu0 %v4624
    %6288 = vmatprep.subr.bf16.mxu0 0
    %6289 = vmatpush1.bf16.msra.mxu0 %v4625
    %6290 = vmatprep.subr.bf16.mxu0 0
    %6291 = vmatpush1.bf16.msra.mxu0 %v4626
    %6292 = vmatprep.subr.bf16.mxu0 0
    %6293 = vmatpush1.bf16.msra.mxu0 %v4627
    %6294 = vmatprep.subr.bf16.mxu0 0
    %6295 = vmatpush1.bf16.msra.mxu0 %v4628
    %6296 = vmatprep.subr.bf16.mxu0 0
    %6297 = vmatpush1.bf16.msra.mxu0 %v4629
    %6298 = vmatprep.subr.bf16.mxu0 0
    %6299 = vmatpush1.bf16.msra.mxu0 %v4630
    %6300 = vmatprep.subr.bf16.mxu0 0
    %6301 = vmatpush1.bf16.msra.mxu0 %v4631
    %6302 = vmatprep.subr.bf16.mxu0 0
    %6303 = vmatpush1.bf16.msra.mxu0 %v4632
    %6304 = vmatprep.subr.bf16.mxu0 0
    %6305 = vmatpush1.bf16.msra.mxu0 %v4633
    %6306 = vmatprep.subr.bf16.mxu0 0
    %6307 = vmatpush1.bf16.msra.mxu0 %v4634
    %6308 = vmatprep.subr.bf16.mxu0 0
    %6309 = vmatpush1.bf16.msra.mxu0 %v4635
    %6310 = vmatprep.subr.bf16.mxu0 0
    %6311 = vmatpush1.bf16.msra.mxu0 %v4636
    %6312 = vmatprep.subr.bf16.mxu0 0
    %6313 = vmatpush1.bf16.msra.mxu0 %v4637
    %6314 = vmatprep.subr.bf16.mxu0 0
    %6315 = vmatpush1.bf16.msra.mxu0 %v4638
    %6316 = vmatprep.subr.bf16.mxu0 0
    %6317 = vmatpush1.bf16.msra.mxu0 %v4639
    %6318 = vmatprep.mubr.bf16.mxu0 %v551
    %6319 = vmatmul.mubr.bf16.gmra.mrb[0].mxu0 %v550
    %v6320 = vpop.f32.mrb[0].mxu0
    %v6321 = vadd.f32 %v6281, %v6320
    %v6322 = vpop.f32.mrb[0].mxu0
    %v6323 = vpop.f32.mrb[0].mxu0
    %v6324 = vpop.f32.mrb[0].mxu0
    %6325 = vdwg.mxu0
    %6326 = vmatprep.subr.bf16.mxu0 0
    %6327 = vmatpush1.bf16.msra.mxu0 %v4640
    %6328 = vmatprep.subr.bf16.mxu0 0
    %6329 = vmatpush1.bf16.msra.mxu0 %v4641
    %6330 = vmatprep.subr.bf16.mxu0 0
    %6331 = vmatpush1.bf16.msra.mxu0 %v4642
    %6332 = vmatprep.subr.bf16.mxu0 0
    %6333 = vmatpush1.bf16.msra.mxu0 %v4643
    %6334 = vmatprep.subr.bf16.mxu0 0
    %6335 = vmatpush1.bf16.msra.mxu0 %v4644
    %6336 = vmatprep.subr.bf16.mxu0 0
    %6337 = vmatpush1.bf16.msra.mxu0 %v4645
    %6338 = vmatprep.subr.bf16.mxu0 0
    %6339 = vmatpush1.bf16.msra.mxu0 %v4646
    %6340 = vmatprep.subr.bf16.mxu0 0
    %6341 = vmatpush1.bf16.msra.mxu0 %v4647
    %6342 = vmatprep.subr.bf16.mxu0 0
    %6343 = vmatpush1.bf16.msra.mxu0 %v4648
    %6344 = vmatprep.subr.bf16.mxu0 0
    %6345 = vmatpush1.bf16.msra.mxu0 %v4649
    %6346 = vmatprep.subr.bf16.mxu0 0
    %6347 = vmatpush1.bf16.msra.mxu0 %v4650
    %6348 = vmatprep.subr.bf16.mxu0 0
    %6349 = vmatpush1.bf16.msra.mxu0 %v4651
    %6350 = vmatprep.subr.bf16.mxu0 0
    %6351 = vmatpush1.bf16.msra.mxu0 %v4652
    %6352 = vmatprep.subr.bf16.mxu0 0
    %6353 = vmatpush1.bf16.msra.mxu0 %v4653
    %6354 = vmatprep.subr.bf16.mxu0 0
    %6355 = vmatpush1.bf16.msra.mxu0 %v4654
    %6356 = vmatprep.subr.bf16.mxu0 0
    %6357 = vmatpush1.bf16.msra.mxu0 %v4655
    %6358 = vmatprep.mubr.bf16.mxu0 %v553
    %6359 = vmatmul.mubr.bf16.gmra.mrb[0].mxu0 %v552
    %v6360 = vpop.f32.mrb[0].mxu0
    %v6361 = vadd.f32 %v6321, %v6360
    %v6362 = vpop.f32.mrb[0].mxu0
    %v6363 = vpop.f32.mrb[0].mxu0
    %v6364 = vpop.f32.mrb[0].mxu0
    %6365 = vdwg.mxu0
    %6366 = vmatprep.subr.bf16.mxu0 0
    %6367 = vmatpush1.bf16.msra.mxu0 %v4656
    %6368 = vmatprep.subr.bf16.mxu0 0
    %6369 = vmatpush1.bf16.msra.mxu0 %v4657
    %6370 = vmatprep.subr.bf16.mxu0 0
    %6371 = vmatpush1.bf16.msra.mxu0 %v4658
    %6372 = vmatprep.subr.bf16.mxu0 0
    %6373 = vmatpush1.bf16.msra.mxu0 %v4659
    %6374 = vmatprep.subr.bf16.mxu0 0
    %6375 = vmatpush1.bf16.msra.mxu0 %v4660
    %6376 = vmatprep.subr.bf16.mxu0 0
    %6377 = vmatpush1.bf16.msra.mxu0 %v4661
    %6378 = vmatprep.subr.bf16.mxu0 0
    %6379 = vmatpush1.bf16.msra.mxu0 %v4662
    %6380 = vmatprep.subr.bf16.mxu0 0
    %6381 = vmatpush1.bf16.msra.mxu0 %v4663
    %6382 = vmatprep.subr.bf16.mxu0 0
    %6383 = vmatpush1.bf16.msra.mxu0 %v4664
    %6384 = vmatprep.subr.bf16.mxu0 0
    %6385 = vmatpush1.bf16.msra.mxu0 %v4665
    %6386 = vmatprep.subr.bf16.mxu0 0
    %6387 = vmatpush1.bf16.msra.mxu0 %v4666
    %6388 = vmatprep.subr.bf16.mxu0 0
    %6389 = vmatpush1.bf16.msra.mxu0 %v4667
    %6390 = vmatprep.subr.bf16.mxu0 0
    %6391 = vmatpush1.bf16.msra.mxu0 %v4668
    %6392 = vmatprep.subr.bf16.mxu0 0
    %6393 = vmatpush1.bf16.msra.mxu0 %v4669
    %6394 = vmatprep.subr.bf16.mxu0 0
    %6395 = vmatpush1.bf16.msra.mxu0 %v4670
    %6396 = vmatprep.subr.bf16.mxu0 0
    %6397 = vmatpush1.bf16.msra.mxu0 %v4671
    %6398 = vmatprep.mubr.bf16.mxu0 %v555
    %6399 = vmatmul.mubr.bf16.gmra.mrb[0].mxu0 %v554
    %v6400 = vpop.f32.mrb[0].mxu0
    %v6401 = vadd.f32 %v6361, %v6400
    %v6402 = vpop.f32.mrb[0].mxu0
    %v6403 = vpop.f32.mrb[0].mxu0
    %v6404 = vpop.f32.mrb[0].mxu0
    %6405 = vdwg.mxu0
    %6406 = vmatprep.subr.bf16.mxu0 0
    %6407 = vmatpush1.bf16.msra.mxu0 %v4672
    %6408 = vmatprep.subr.bf16.mxu0 0
    %6409 = vmatpush1.bf16.msra.mxu0 %v4673
    %6410 = vmatprep.subr.bf16.mxu0 0
    %6411 = vmatpush1.bf16.msra.mxu0 %v4674
    %6412 = vmatprep.subr.bf16.mxu0 0
    %6413 = vmatpush1.bf16.msra.mxu0 %v4675
    %6414 = vmatprep.subr.bf16.mxu0 0
    %6415 = vmatpush1.bf16.msra.mxu0 %v4676
    %6416 = vmatprep.subr.bf16.mxu0 0
    %6417 = vmatpush1.bf16.msra.mxu0 %v4677
    %6418 = vmatprep.subr.bf16.mxu0 0
    %6419 = vmatpush1.bf16.msra.mxu0 %v4678
    %6420 = vmatprep.subr.bf16.mxu0 0
    %6421 = vmatpush1.bf16.msra.mxu0 %v4679
    %6422 = vmatprep.subr.bf16.mxu0 0
    %6423 = vmatpush1.bf16.msra.mxu0 %v4680
    %6424 = vmatprep.subr.bf16.mxu0 0
    %6425 = vmatpush1.bf16.msra.mxu0 %v4681
    %6426 = vmatprep.subr.bf16.mxu0 0
    %6427 = vmatpush1.bf16.msra.mxu0 %v4682
    %6428 = vmatprep.subr.bf16.mxu0 0
    %6429 = vmatpush1.bf16.msra.mxu0 %v4683
    %6430 = vmatprep.subr.bf16.mxu0 0
    %6431 = vmatpush1.bf16.msra.mxu0 %v4684
    %6432 = vmatprep.subr.bf16.mxu0 0
    %6433 = vmatpush1.bf16.msra.mxu0 %v4685
    %6434 = vmatprep.subr.bf16.mxu0 0
    %6435 = vmatpush1.bf16.msra.mxu0 %v4686
    %6436 = vmatprep.subr.bf16.mxu0 0
    %6437 = vmatpush1.bf16.msra.mxu0 %v4687
    %6438 = vmatprep.mubr.bf16.mxu0 %v557
    %6439 = vmatmul.mubr.bf16.gmra.mrb[0].mxu0 %v556
    %v6440 = vpop.f32.mrb[0].mxu0
    %v6441 = vadd.f32 %v6401, %v6440
    %v6442 = vpop.f32.mrb[0].mxu0
    %v6443 = vpop.f32.mrb[0].mxu0
    %v6444 = vpop.f32.mrb[0].mxu0
    %6445 = vdwg.mxu0
    %6446 = vmatprep.subr.bf16.mxu0 0
    %6447 = vmatpush1.bf16.msra.mxu0 %v4688
    %6448 = vmatprep.subr.bf16.mxu0 0
    %6449 = vmatpush1.bf16.msra.mxu0 %v4689
    %6450 = vmatprep.subr.bf16.mxu0 0
    %6451 = vmatpush1.bf16.msra.mxu0 %v4690
    %6452 = vmatprep.subr.bf16.mxu0 0
    %6453 = vmatpush1.bf16.msra.mxu0 %v4691
    %6454 = vmatprep.subr.bf16.mxu0 0
    %6455 = vmatpush1.bf16.msra.mxu0 %v4692
    %6456 = vmatprep.subr.bf16.mxu0 0
    %6457 = vmatpush1.bf16.msra.mxu0 %v4693
    %6458 = vmatprep.subr.bf16.mxu0 0
    %6459 = vmatpush1.bf16.msra.mxu0 %v4694
    %6460 = vmatprep.subr.bf16.mxu0 0
    %6461 = vmatpush1.bf16.msra.mxu0 %v4695
    %6462 = vmatprep.subr.bf16.mxu0 0
    %6463 = vmatpush1.bf16.msra.mxu0 %v4696
    %6464 = vmatprep.subr.bf16.mxu0 0
    %6465 = vmatpush1.bf16.msra.mxu0 %v4697
    %6466 = vmatprep.subr.bf16.mxu0 0
    %6467 = vmatpush1.bf16.msra.mxu0 %v4698
    %6468 = vmatprep.subr.bf16.mxu0 0
    %6469 = vmatpush1.bf16.msra.mxu0 %v4699
    %6470 = vmatprep.subr.bf16.mxu0 0
    %6471 = vmatpush1.bf16.msra.mxu0 %v4700
    %6472 = vmatprep.subr.bf16.mxu0 0
    %6473 = vmatpush1.bf16.msra.mxu0 %v4701
    %6474 = vmatprep.subr.bf16.mxu0 0
    %6475 = vmatpush1.bf16.msra.mxu0 %v4702
    %6476 = vmatprep.subr.bf16.mxu0 0
    %6477 = vmatpush1.bf16.msra.mxu0 %v4703
    %6478 = vmatprep.mubr.bf16.mxu0 %v559
    %6479 = vmatmul.mubr.bf16.gmra.mrb[0].mxu0 %v558
    %v6480 = vpop.f32.mrb[0].mxu0
    %v6481 = vadd.f32 %v6441, %v6480
    %v6482 = vpop.f32.mrb[0].mxu0
    %v6483 = vpop.f32.mrb[0].mxu0
    %v6484 = vpop.f32.mrb[0].mxu0
    %6485 = vdwg.mxu0
    %6486 = vmatprep.subr.bf16.mxu0 0
    %6487 = vmatpush1.bf16.msra.mxu0 %v4704
    %6488 = vmatprep.subr.bf16.mxu0 0
    %6489 = vmatpush1.bf16.msra.mxu0 %v4705
    %6490 = vmatprep.subr.bf16.mxu0 0
    %6491 = vmatpush1.bf16.msra.mxu0 %v4706
    %6492 = vmatprep.subr.bf16.mxu0 0
    %6493 = vmatpush1.bf16.msra.mxu0 %v4707
    %6494 = vmatprep.subr.bf16.mxu0 0
    %6495 = vmatpush1.bf16.msra.mxu0 %v4708
    %6496 = vmatprep.subr.bf16.mxu0 0
    %6497 = vmatpush1.bf16.msra.mxu0 %v4709
    %6498 = vmatprep.subr.bf16.mxu0 0
    %6499 = vmatpush1.bf16.msra.mxu0 %v4710
    %6500 = vmatprep.subr.bf16.mxu0 0
    %6501 = vmatpush1.bf16.msra.mxu0 %v4711
    %6502 = vmatprep.subr.bf16.mxu0 0
    %6503 = vmatpush1.bf16.msra.mxu0 %v4712
    %6504 = vmatprep.subr.bf16.mxu0 0
    %6505 = vmatpush1.bf16.msra.mxu0 %v4713
    %6506 = vmatprep.subr.bf16.mxu0 0
    %6507 = vmatpush1.bf16.msra.mxu0 %v4714
    %6508 = vmatprep.subr.bf16.mxu0 0
    %6509 = vmatpush1.bf16.msra.mxu0 %v4715
    %6510 = vmatprep.subr.bf16.mxu0 0
    %6511 = vmatpush1.bf16.msra.mxu0 %v4716
    %6512 = vmatprep.subr.bf16.mxu0 0
    %6513 = vmatpush1.bf16.msra.mxu0 %v4717
    %6514 = vmatprep.subr.bf16.mxu0 0
    %6515 = vmatpush1.bf16.msra.mxu0 %v4718
    %6516 = vmatprep.subr.bf16.mxu0 0
    %6517 = vmatpush1.bf16.msra.mxu0 %v4719
    %6518 = vmatprep.mubr.bf16.mxu0 %v561
    %6519 = vmatmul.mubr.bf16.gmra.mrb[0].mxu0 %v560
    %v6520 = vpop.f32.mrb[0].mxu0
    %v6521 = vadd.f32 %v6481, %v6520
    %v6522 = vpop.f32.mrb[0].mxu0
    %v6523 = vpop.f32.mrb[0].mxu0
    %v6524 = vpop.f32.mrb[0].mxu0
    %6525 = vdwg.mxu0
    %6526 = vmatprep.subr.bf16.mxu0 0
    %6527 = vmatpush1.bf16.msra.mxu0 %v4720
    %6528 = vmatprep.subr.bf16.mxu0 0
    %6529 = vmatpush1.bf16.msra.mxu0 %v4721
    %6530 = vmatprep.subr.bf16.mxu0 0
    %6531 = vmatpush1.bf16.msra.mxu0 %v4722
    %6532 = vmatprep.subr.bf16.mxu0 0
    %6533 = vmatpush1.bf16.msra.mxu0 %v4723
    %6534 = vmatprep.subr.bf16.mxu0 0
    %6535 = vmatpush1.bf16.msra.mxu0 %v4724
    %6536 = vmatprep.subr.bf16.mxu0 0
    %6537 = vmatpush1.bf16.msra.mxu0 %v4725
    %6538 = vmatprep.subr.bf16.mxu0 0
    %6539 = vmatpush1.bf16.msra.mxu0 %v4726
    %6540 = vmatprep.subr.bf16.mxu0 0
    %6541 = vmatpush1.bf16.msra.mxu0 %v4727
    %6542 = vmatprep.subr.bf16.mxu0 0
    %6543 = vmatpush1.bf16.msra.mxu0 %v4728
    %6544 = vmatprep.subr.bf16.mxu0 0
    %6545 = vmatpush1.bf16.msra.mxu0 %v4729
    %6546 = vmatprep.subr.bf16.mxu0 0
    %6547 = vmatpush1.bf16.msra.mxu0 %v4730
    %6548 = vmatprep.subr.bf16.mxu0 0
    %6549 = vmatpush1.bf16.msra.mxu0 %v4731
    %6550 = vmatprep.subr.bf16.mxu0 0
    %6551 = vmatpush1.bf16.msra.mxu0 %v4732
    %6552 = vmatprep.subr.bf16.mxu0 0
    %6553 = vmatpush1.bf16.msra.mxu0 %v4733
    %6554 = vmatprep.subr.bf16.mxu0 0
    %6555 = vmatpush1.bf16.msra.mxu0 %v4734
    %6556 = vmatprep.subr.bf16.mxu0 0
    %6557 = vmatpush1.bf16.msra.mxu0 %v4735
    %6558 = vmatprep.mubr.bf16.mxu0 %v563
    %6559 = vmatmul.mubr.bf16.gmra.mrb[0].mxu0 %v562
    %v6560 = vpop.f32.mrb[0].mxu0
    %v6561 = vadd.f32 %v6521, %v6560
    %v6562 = vpop.f32.mrb[0].mxu0
    %v6563 = vpop.f32.mrb[0].mxu0
    %v6564 = vpop.f32.mrb[0].mxu0
    %6565 = vdwg.mxu0
    %6566 = vmatprep.subr.bf16.mxu0 0
    %6567 = vmatpush1.bf16.msra.mxu0 %v4736
    %6568 = vmatprep.subr.bf16.mxu0 0
    %6569 = vmatpush1.bf16.msra.mxu0 %v4737
    %6570 = vmatprep.subr.bf16.mxu0 0
    %6571 = vmatpush1.bf16.msra.mxu0 %v4738
    %6572 = vmatprep.subr.bf16.mxu0 0
    %6573 = vmatpush1.bf16.msra.mxu0 %v4739
    %6574 = vmatprep.subr.bf16.mxu0 0
    %6575 = vmatpush1.bf16.msra.mxu0 %v4740
    %6576 = vmatprep.subr.bf16.mxu0 0
    %6577 = vmatpush1.bf16.msra.mxu0 %v4741
    %6578 = vmatprep.subr.bf16.mxu0 0
    %6579 = vmatpush1.bf16.msra.mxu0 %v4742
    %6580 = vmatprep.subr.bf16.mxu0 0
    %6581 = vmatpush1.bf16.msra.mxu0 %v4743
    %6582 = vmatprep.subr.bf16.mxu0 0
    %6583 = vmatpush1.bf16.msra.mxu0 %v4744
    %6584 = vmatprep.subr.bf16.mxu0 0
    %6585 = vmatpush1.bf16.msra.mxu0 %v4745
    %6586 = vmatprep.subr.bf16.mxu0 0
    %6587 = vmatpush1.bf16.msra.mxu0 %v4746
    %6588 = vmatprep.subr.bf16.mxu0 0
    %6589 = vmatpush1.bf16.msra.mxu0 %v4747
    %6590 = vmatprep.subr.bf16.mxu0 0
    %6591 = vmatpush1.bf16.msra.mxu0 %v4748
    %6592 = vmatprep.subr.bf16.mxu0 0
    %6593 = vmatpush1.bf16.msra.mxu0 %v4749
    %6594 = vmatprep.subr.bf16.mxu0 0
    %6595 = vmatpush1.bf16.msra.mxu0 %v4750
    %6596 = vmatprep.subr.bf16.mxu0 0
    %6597 = vmatpush1.bf16.msra.mxu0 %v4751
    %6598 = vmatprep.mubr.bf16.mxu0 %v565
    %6599 = vmatmul.mubr.bf16.gmra.mrb[0].mxu0 %v564
    %v6600 = vpop.f32.mrb[0].mxu0
    %v6601 = vadd.f32 %v6561, %v6600
    %v6602 = vpop.f32.mrb[0].mxu0
    %v6603 = vpop.f32.mrb[0].mxu0
    %v6604 = vpop.f32.mrb[0].mxu0
    %6605 = vdwg.mxu0
    %6606 = vmatprep.subr.bf16.mxu0 0
    %6607 = vmatpush1.bf16.msra.mxu0 %v4752
    %6608 = vmatprep.subr.bf16.mxu0 0
    %6609 = vmatpush1.bf16.msra.mxu0 %v4753
    %6610 = vmatprep.subr.bf16.mxu0 0
    %6611 = vmatpush1.bf16.msra.mxu0 %v4754
    %6612 = vmatprep.subr.bf16.mxu0 0
    %6613 = vmatpush1.bf16.msra.mxu0 %v4755
    %6614 = vmatprep.subr.bf16.mxu0 0
    %6615 = vmatpush1.bf16.msra.mxu0 %v4756
    %6616 = vmatprep.subr.bf16.mxu0 0
    %6617 = vmatpush1.bf16.msra.mxu0 %v4757
    %6618 = vmatprep.subr.bf16.mxu0 0
    %6619 = vmatpush1.bf16.msra.mxu0 %v4758
    %6620 = vmatprep.subr.bf16.mxu0 0
    %6621 = vmatpush1.bf16.msra.mxu0 %v4759
    %6622 = vmatprep.subr.bf16.mxu0 0
    %6623 = vmatpush1.bf16.msra.mxu0 %v4760
    %6624 = vmatprep.subr.bf16.mxu0 0
    %6625 = vmatpush1.bf16.msra.mxu0 %v4761
    %6626 = vmatprep.subr.bf16.mxu0 0
    %6627 = vmatpush1.bf16.msra.mxu0 %v4762
    %6628 = vmatprep.subr.bf16.mxu0 0
    %6629 = vmatpush1.bf16.msra.mxu0 %v4763
    %6630 = vmatprep.subr.bf16.mxu0 0
    %6631 = vmatpush1.bf16.msra.mxu0 %v4764
    %6632 = vmatprep.subr.bf16.mxu0 0
    %6633 = vmatpush1.bf16.msra.mxu0 %v4765
    %6634 = vmatprep.subr.bf16.mxu0 0
    %6635 = vmatpush1.bf16.msra.mxu0 %v4766
    %6636 = vmatprep.subr.bf16.mxu0 0
    %6637 = vmatpush1.bf16.msra.mxu0 %v4767
    %6638 = vmatprep.mubr.bf16.mxu0 %v567
    %6639 = vmatmul.mubr.bf16.gmra.mrb[0].mxu0 %v566
    %v6640 = vpop.f32.mrb[0].mxu0
    %v6641 = vadd.f32 %v6601, %v6640
    %v6642 = vpop.f32.mrb[0].mxu0
    %v6643 = vpop.f32.mrb[0].mxu0
    %v6644 = vpop.f32.mrb[0].mxu0
    %6645 = vdwg.mxu0
    %6646 = vmatprep.subr.bf16.mxu0 0
    %6647 = vmatpush1.bf16.msra.mxu0 %v4768
    %6648 = vmatprep.subr.bf16.mxu0 0
    %6649 = vmatpush1.bf16.msra.mxu0 %v4769
    %6650 = vmatprep.subr.bf16.mxu0 0
    %6651 = vmatpush1.bf16.msra.mxu0 %v4770
    %6652 = vmatprep.subr.bf16.mxu0 0
    %6653 = vmatpush1.bf16.msra.mxu0 %v4771
    %6654 = vmatprep.subr.bf16.mxu0 0
    %6655 = vmatpush1.bf16.msra.mxu0 %v4772
    %6656 = vmatprep.subr.bf16.mxu0 0
    %6657 = vmatpush1.bf16.msra.mxu0 %v4773
    %6658 = vmatprep.subr.bf16.mxu0 0
    %6659 = vmatpush1.bf16.msra.mxu0 %v4774
    %6660 = vmatprep.subr.bf16.mxu0 0
    %6661 = vmatpush1.bf16.msra.mxu0 %v4775
    %6662 = vmatprep.subr.bf16.mxu0 0
    %6663 = vmatpush1.bf16.msra.mxu0 %v4776
    %6664 = vmatprep.subr.bf16.mxu0 0
    %6665 = vmatpush1.bf16.msra.mxu0 %v4777
    %6666 = vmatprep.subr.bf16.mxu0 0
    %6667 = vmatpush1.bf16.msra.mxu0 %v4778
    %6668 = vmatprep.subr.bf16.mxu0 0
    %6669 = vmatpush1.bf16.msra.mxu0 %v4779
    %6670 = vmatprep.subr.bf16.mxu0 0
    %6671 = vmatpush1.bf16.msra.mxu0 %v4780
    %6672 = vmatprep.subr.bf16.mxu0 0
    %6673 = vmatpush1.bf16.msra.mxu0 %v4781
    %6674 = vmatprep.subr.bf16.mxu0 0
    %6675 = vmatpush1.bf16.msra.mxu0 %v4782
    %6676 = vmatprep.subr.bf16.mxu0 0
    %6677 = vmatpush1.bf16.msra.mxu0 %v4783
    %6678 = vmatprep.mubr.bf16.mxu0 %v569
    %6679 = vmatmul.mubr.bf16.gmra.mrb[0].mxu0 %v568
    %v6680 = vpop.f32.mrb[0].mxu0
    %v6681 = vadd.f32 %v6641, %v6680
    %v6682 = vpop.f32.mrb[0].mxu0
    %v6683 = vpop.f32.mrb[0].mxu0
    %v6684 = vpop.f32.mrb[0].mxu0
    %6685 = vdwg.mxu0
    %6686 = vmatprep.subr.bf16.mxu0 0
    %6687 = vmatpush1.bf16.msra.mxu0 %v4784
    %6688 = vmatprep.subr.bf16.mxu0 0
    %6689 = vmatpush1.bf16.msra.mxu0 %v4785
    %6690 = vmatprep.subr.bf16.mxu0 0
    %6691 = vmatpush1.bf16.msra.mxu0 %v4786
    %6692 = vmatprep.subr.bf16.mxu0 0
    %6693 = vmatpush1.bf16.msra.mxu0 %v4787
    %6694 = vmatprep.subr.bf16.mxu0 0
    %6695 = vmatpush1.bf16.msra.mxu0 %v4788
    %6696 = vmatprep.subr.bf16.mxu0 0
    %6697 = vmatpush1.bf16.msra.mxu0 %v4789
    %6698 = vmatprep.subr.bf16.mxu0 0
    %6699 = vmatpush1.bf16.msra.mxu0 %v4790
    %6700 = vmatprep.subr.bf16.mxu0 0
    %6701 = vmatpush1.bf16.msra.mxu0 %v4791
    %6702 = vmatprep.subr.bf16.mxu0 0
    %6703 = vmatpush1.bf16.msra.mxu0 %v4792
    %6704 = vmatprep.subr.bf16.mxu0 0
    %6705 = vmatpush1.bf16.msra.mxu0 %v4793
    %6706 = vmatprep.subr.bf16.mxu0 0
    %6707 = vmatpush1.bf16.msra.mxu0 %v4794
    %6708 = vmatprep.subr.bf16.mxu0 0
    %6709 = vmatpush1.bf16.msra.mxu0 %v4795
    %6710 = vmatprep.subr.bf16.mxu0 0
    %6711 = vmatpush1.bf16.msra.mxu0 %v4796
    %6712 = vmatprep.subr.bf16.mxu0 0
    %6713 = vmatpush1.bf16.msra.mxu0 %v4797
    %6714 = vmatprep.subr.bf16.mxu0 0
    %6715 = vmatpush1.bf16.msra.mxu0 %v4798
    %6716 = vmatprep.subr.bf16.mxu0 0
    %6717 = vmatpush1.bf16.msra.mxu0 %v4799
    %6718 = vmatprep.mubr.bf16.mxu0 %v571
    %6719 = vmatmul.mubr.bf16.gmra.mrb[0].mxu0 %v570
    %v6720 = vpop.f32.mrb[0].mxu0
    %v6721 = vadd.f32 %v6681, %v6720
    %v6722 = vpop.f32.mrb[0].mxu0
    %v6723 = vpop.f32.mrb[0].mxu0
    %v6724 = vpop.f32.mrb[0].mxu0
    %6725 = vdwg.mxu0
    %6726 = vmatprep.subr.bf16.mxu0 0
    %6727 = vmatpush1.bf16.msra.mxu0 %v4800
    %6728 = vmatprep.subr.bf16.mxu0 0
    %6729 = vmatpush1.bf16.msra.mxu0 %v4801
    %6730 = vmatprep.subr.bf16.mxu0 0
    %6731 = vmatpush1.bf16.msra.mxu0 %v4802
    %6732 = vmatprep.subr.bf16.mxu0 0
    %6733 = vmatpush1.bf16.msra.mxu0 %v4803
    %6734 = vmatprep.subr.bf16.mxu0 0
    %6735 = vmatpush1.bf16.msra.mxu0 %v4804
    %6736 = vmatprep.subr.bf16.mxu0 0
    %6737 = vmatpush1.bf16.msra.mxu0 %v4805
    %6738 = vmatprep.subr.bf16.mxu0 0
    %6739 = vmatpush1.bf16.msra.mxu0 %v4806
    %6740 = vmatprep.subr.bf16.mxu0 0
    %6741 = vmatpush1.bf16.msra.mxu0 %v4807
    %6742 = vmatprep.subr.bf16.mxu0 0
    %6743 = vmatpush1.bf16.msra.mxu0 %v4808
    %6744 = vmatprep.subr.bf16.mxu0 0
    %6745 = vmatpush1.bf16.msra.mxu0 %v4809
    %6746 = vmatprep.subr.bf16.mxu0 0
    %6747 = vmatpush1.bf16.msra.mxu0 %v4810
    %6748 = vmatprep.subr.bf16.mxu0 0
    %6749 = vmatpush1.bf16.msra.mxu0 %v4811
    %6750 = vmatprep.subr.bf16.mxu0 0
    %6751 = vmatpush1.bf16.msra.mxu0 %v4812
    %6752 = vmatprep.subr.bf16.mxu0 0
    %6753 = vmatpush1.bf16.msra.mxu0 %v4813
    %6754 = vmatprep.subr.bf16.mxu0 0
    %6755 = vmatpush1.bf16.msra.mxu0 %v4814
    %6756 = vmatprep.subr.bf16.mxu0 0
    %6757 = vmatpush1.bf16.msra.mxu0 %v4815
    %6758 = vmatprep.mubr.bf16.mxu0 %v573
    %6759 = vmatmul.mubr.bf16.gmra.mrb[0].mxu0 %v572
    %v6760 = vpop.f32.mrb[0].mxu0
    %v6761 = vadd.f32 %v6721, %v6760
    %v6762 = vpop.f32.mrb[0].mxu0
    %v6763 = vpop.f32.mrb[0].mxu0
    %v6764 = vpop.f32.mrb[0].mxu0
    %6765 = vdwg.mxu0
    %6766 = vmatprep.subr.bf16.mxu0 0
    %6767 = vmatpush1.bf16.msra.mxu0 %v4816
    %6768 = vmatprep.subr.bf16.mxu0 0
    %6769 = vmatpush1.bf16.msra.mxu0 %v4817
    %6770 = vmatprep.subr.bf16.mxu0 0
    %6771 = vmatpush1.bf16.msra.mxu0 %v4818
    %6772 = vmatprep.subr.bf16.mxu0 0
    %6773 = vmatpush1.bf16.msra.mxu0 %v4819
    %6774 = vmatprep.subr.bf16.mxu0 0
    %6775 = vmatpush1.bf16.msra.mxu0 %v4820
    %6776 = vmatprep.subr.bf16.mxu0 0
    %6777 = vmatpush1.bf16.msra.mxu0 %v4821
    %6778 = vmatprep.subr.bf16.mxu0 0
    %6779 = vmatpush1.bf16.msra.mxu0 %v4822
    %6780 = vmatprep.subr.bf16.mxu0 0
    %6781 = vmatpush1.bf16.msra.mxu0 %v4823
    %6782 = vmatprep.subr.bf16.mxu0 0
    %6783 = vmatpush1.bf16.msra.mxu0 %v4824
    %6784 = vmatprep.subr.bf16.mxu0 0
    %6785 = vmatpush1.bf16.msra.mxu0 %v4825
    %6786 = vmatprep.subr.bf16.mxu0 0
    %6787 = vmatpush1.bf16.msra.mxu0 %v4826
    %6788 = vmatprep.subr.bf16.mxu0 0
    %6789 = vmatpush1.bf16.msra.mxu0 %v4827
    %6790 = vmatprep.subr.bf16.mxu0 0
    %6791 = vmatpush1.bf16.msra.mxu0 %v4828
    %6792 = vmatprep.subr.bf16.mxu0 0
    %6793 = vmatpush1.bf16.msra.mxu0 %v4829
    %6794 = vmatprep.subr.bf16.mxu0 0
    %6795 = vmatpush1.bf16.msra.mxu0 %v4830
    %6796 = vmatprep.subr.bf16.mxu0 0
    %6797 = vmatpush1.bf16.msra.mxu0 %v4831
    %6798 = vmatprep.mubr.bf16.mxu0 %v575
    %6799 = vmatmul.mubr.bf16.gmra.mrb[0].mxu0 %v574
    %v6800 = vpop.f32.mrb[0].mxu0
    %v6801 = vadd.f32 %v6761, %v6800
    %v6802 = vpop.f32.mrb[0].mxu0
    %v6803 = vpop.f32.mrb[0].mxu0
    %v6804 = vpop.f32.mrb[0].mxu0
    %6805 = vdwg.mxu0
    %6806 = vmatprep.subr.bf16.mxu0 0
    %6807 = vmatpush1.bf16.msra.mxu0 %v4832
    %6808 = vmatprep.subr.bf16.mxu0 0
    %6809 = vmatpush1.bf16.msra.mxu0 %v4833
    %6810 = vmatprep.subr.bf16.mxu0 0
    %6811 = vmatpush1.bf16.msra.mxu0 %v4834
    %6812 = vmatprep.subr.bf16.mxu0 0
    %6813 = vmatpush1.bf16.msra.mxu0 %v4835
    %6814 = vmatprep.subr.bf16.mxu0 0
    %6815 = vmatpush1.bf16.msra.mxu0 %v4836
    %6816 = vmatprep.subr.bf16.mxu0 0
    %6817 = vmatpush1.bf16.msra.mxu0 %v4837
    %6818 = vmatprep.subr.bf16.mxu0 0
    %6819 = vmatpush1.bf16.msra.mxu0 %v4838
    %6820 = vmatprep.subr.bf16.mxu0 0
    %6821 = vmatpush1.bf16.msra.mxu0 %v4839
    %6822 = vmatprep.subr.bf16.mxu0 0
    %6823 = vmatpush1.bf16.msra.mxu0 %v4840
    %6824 = vmatprep.subr.bf16.mxu0 0
    %6825 = vmatpush1.bf16.msra.mxu0 %v4841
    %6826 = vmatprep.subr.bf16.mxu0 0
    %6827 = vmatpush1.bf16.msra.mxu0 %v4842
    %6828 = vmatprep.subr.bf16.mxu0 0
    %6829 = vmatpush1.bf16.msra.mxu0 %v4843
    %6830 = vmatprep.subr.bf16.mxu0 0
    %6831 = vmatpush1.bf16.msra.mxu0 %v4844
    %6832 = vmatprep.subr.bf16.mxu0 0
    %6833 = vmatpush1.bf16.msra.mxu0 %v4845
    %6834 = vmatprep.subr.bf16.mxu0 0
    %6835 = vmatpush1.bf16.msra.mxu0 %v4846
    %6836 = vmatprep.subr.bf16.mxu0 0
    %6837 = vmatpush1.bf16.msra.mxu0 %v4847
    %6838 = vmatprep.mubr.bf16.mxu0 %v577
    %6839 = vmatmul.mubr.bf16.gmra.mrb[0].mxu0 %v576
    %v6840 = vpop.f32.mrb[0].mxu0
    %v6841 = vadd.f32 %v6801, %v6840
    %v6842 = vpop.f32.mrb[0].mxu0
    %v6843 = vpop.f32.mrb[0].mxu0
    %v6844 = vpop.f32.mrb[0].mxu0
    %6845 = vdwg.mxu0
    %6846 = vmatprep.subr.bf16.mxu0 0
    %6847 = vmatpush1.bf16.msra.mxu0 %v4848
    %6848 = vmatprep.subr.bf16.mxu0 0
    %6849 = vmatpush1.bf16.msra.mxu0 %v4849
    %6850 = vmatprep.subr.bf16.mxu0 0
    %6851 = vmatpush1.bf16.msra.mxu0 %v4850
    %6852 = vmatprep.subr.bf16.mxu0 0
    %6853 = vmatpush1.bf16.msra.mxu0 %v4851
    %6854 = vmatprep.subr.bf16.mxu0 0
    %6855 = vmatpush1.bf16.msra.mxu0 %v4852
    %6856 = vmatprep.subr.bf16.mxu0 0
    %6857 = vmatpush1.bf16.msra.mxu0 %v4853
    %6858 = vmatprep.subr.bf16.mxu0 0
    %6859 = vmatpush1.bf16.msra.mxu0 %v4854
    %6860 = vmatprep.subr.bf16.mxu0 0
    %6861 = vmatpush1.bf16.msra.mxu0 %v4855
    %6862 = vmatprep.subr.bf16.mxu0 0
    %6863 = vmatpush1.bf16.msra.mxu0 %v4856
    %6864 = vmatprep.subr.bf16.mxu0 0
    %6865 = vmatpush1.bf16.msra.mxu0 %v4857
    %6866 = vmatprep.subr.bf16.mxu0 0
    %6867 = vmatpush1.bf16.msra.mxu0 %v4858
    %6868 = vmatprep.subr.bf16.mxu0 0
    %6869 = vmatpush1.bf16.msra.mxu0 %v4859
    %6870 = vmatprep.subr.bf16.mxu0 0
    %6871 = vmatpush1.bf16.msra.mxu0 %v4860
    %6872 = vmatprep.subr.bf16.mxu0 0
    %6873 = vmatpush1.bf16.msra.mxu0 %v4861
    %6874 = vmatprep.subr.bf16.mxu0 0
    %6875 = vmatpush1.bf16.msra.mxu0 %v4862
    %6876 = vmatprep.subr.bf16.mxu0 0
    %6877 = vmatpush1.bf16.msra.mxu0 %v4863
    %6878 = vmatprep.mubr.bf16.mxu0 %v579
    %6879 = vmatmul.mubr.bf16.gmra.mrb[0].mxu0 %v578
    %v6880 = vpop.f32.mrb[0].mxu0
    %v6881 = vadd.f32 %v6841, %v6880
    %v6882 = vpop.f32.mrb[0].mxu0
    %v6883 = vpop.f32.mrb[0].mxu0
    %v6884 = vpop.f32.mrb[0].mxu0
    %6885 = vdwg.mxu0
    %6886 = vmatprep.subr.bf16.mxu0 0
    %6887 = vmatpush1.bf16.msra.mxu0 %v4864
    %6888 = vmatprep.subr.bf16.mxu0 0
    %6889 = vmatpush1.bf16.msra.mxu0 %v4865
    %6890 = vmatprep.subr.bf16.mxu0 0
    %6891 = vmatpush1.bf16.msra.mxu0 %v4866
    %6892 = vmatprep.subr.bf16.mxu0 0
    %6893 = vmatpush1.bf16.msra.mxu0 %v4867
    %6894 = vmatprep.subr.bf16.mxu0 0
    %6895 = vmatpush1.bf16.msra.mxu0 %v4868
    %6896 = vmatprep.subr.bf16.mxu0 0
    %6897 = vmatpush1.bf16.msra.mxu0 %v4869
    %6898 = vmatprep.subr.bf16.mxu0 0
    %6899 = vmatpush1.bf16.msra.mxu0 %v4870
    %6900 = vmatprep.subr.bf16.mxu0 0
    %6901 = vmatpush1.bf16.msra.mxu0 %v4871
    %6902 = vmatprep.subr.bf16.mxu0 0
    %6903 = vmatpush1.bf16.msra.mxu0 %v4872
    %6904 = vmatprep.subr.bf16.mxu0 0
    %6905 = vmatpush1.bf16.msra.mxu0 %v4873
    %6906 = vmatprep.subr.bf16.mxu0 0
    %6907 = vmatpush1.bf16.msra.mxu0 %v4874
    %6908 = vmatprep.subr.bf16.mxu0 0
    %6909 = vmatpush1.bf16.msra.mxu0 %v4875
    %6910 = vmatprep.subr.bf16.mxu0 0
    %6911 = vmatpush1.bf16.msra.mxu0 %v4876
    %6912 = vmatprep.subr.bf16.mxu0 0
    %6913 = vmatpush1.bf16.msra.mxu0 %v4877
    %6914 = vmatprep.subr.bf16.mxu0 0
    %6915 = vmatpush1.bf16.msra.mxu0 %v4878
    %6916 = vmatprep.subr.bf16.mxu0 0
    %6917 = vmatpush1.bf16.msra.mxu0 %v4879
    %6918 = vmatprep.mubr.bf16.mxu0 %v581
    %6919 = vmatmul.mubr.bf16.gmra.mrb[0].mxu0 %v580
    %v6920 = vpop.f32.mrb[0].mxu0
    %v6921 = vadd.f32 %v6881, %v6920
    %v6922 = vpop.f32.mrb[0].mxu0
    %v6923 = vpop.f32.mrb[0].mxu0
    %v6924 = vpop.f32.mrb[0].mxu0
    %6925 = vdwg.mxu0
    %6926 = vmatprep.subr.bf16.mxu0 0
    %6927 = vmatpush1.bf16.msra.mxu0 %v4880
    %6928 = vmatprep.subr.bf16.mxu0 0
    %6929 = vmatpush1.bf16.msra.mxu0 %v4881
    %6930 = vmatprep.subr.bf16.mxu0 0
    %6931 = vmatpush1.bf16.msra.mxu0 %v4882
    %6932 = vmatprep.subr.bf16.mxu0 0
    %6933 = vmatpush1.bf16.msra.mxu0 %v4883
    %6934 = vmatprep.subr.bf16.mxu0 0
    %6935 = vmatpush1.bf16.msra.mxu0 %v4884
    %6936 = vmatprep.subr.bf16.mxu0 0
    %6937 = vmatpush1.bf16.msra.mxu0 %v4885
    %6938 = vmatprep.subr.bf16.mxu0 0
    %6939 = vmatpush1.bf16.msra.mxu0 %v4886
    %6940 = vmatprep.subr.bf16.mxu0 0
    %6941 = vmatpush1.bf16.msra.mxu0 %v4887
    %6942 = vmatprep.subr.bf16.mxu0 0
    %6943 = vmatpush1.bf16.msra.mxu0 %v4888
    %6944 = vmatprep.subr.bf16.mxu0 0
    %6945 = vmatpush1.bf16.msra.mxu0 %v4889
    %6946 = vmatprep.subr.bf16.mxu0 0
    %6947 = vmatpush1.bf16.msra.mxu0 %v4890
    %6948 = vmatprep.subr.bf16.mxu0 0
    %6949 = vmatpush1.bf16.msra.mxu0 %v4891
    %6950 = vmatprep.subr.bf16.mxu0 0
    %6951 = vmatpush1.bf16.msra.mxu0 %v4892
    %6952 = vmatprep.subr.bf16.mxu0 0
    %6953 = vmatpush1.bf16.msra.mxu0 %v4893
    %6954 = vmatprep.subr.bf16.mxu0 0
    %6955 = vmatpush1.bf16.msra.mxu0 %v4894
    %6956 = vmatprep.subr.bf16.mxu0 0
    %6957 = vmatpush1.bf16.msra.mxu0 %v4895
    %6958 = vmatprep.mubr.bf16.mxu0 %v583
    %6959 = vmatmul.mubr.bf16.gmra.mrb[0].mxu0 %v582
    %v6960 = vpop.f32.mrb[0].mxu0
    %v6961 = vadd.f32 %v6921, %v6960
    %v6962 = vpop.f32.mrb[0].mxu0
    %v6963 = vpop.f32.mrb[0].mxu0
    %v6964 = vpop.f32.mrb[0].mxu0
    %6965 = vdwg.mxu0
    %6966 = vmatprep.subr.bf16.mxu0 0
    %6967 = vmatpush1.bf16.msra.mxu0 %v4896
    %6968 = vmatprep.subr.bf16.mxu0 0
    %6969 = vmatpush1.bf16.msra.mxu0 %v4897
    %6970 = vmatprep.subr.bf16.mxu0 0
    %6971 = vmatpush1.bf16.msra.mxu0 %v4898
    %6972 = vmatprep.subr.bf16.mxu0 0
    %6973 = vmatpush1.bf16.msra.mxu0 %v4899
    %6974 = vmatprep.subr.bf16.mxu0 0
    %6975 = vmatpush1.bf16.msra.mxu0 %v4900
    %6976 = vmatprep.subr.bf16.mxu0 0
    %6977 = vmatpush1.bf16.msra.mxu0 %v4901
    %6978 = vmatprep.subr.bf16.mxu0 0
    %6979 = vmatpush1.bf16.msra.mxu0 %v4902
    %6980 = vmatprep.subr.bf16.mxu0 0
    %6981 = vmatpush1.bf16.msra.mxu0 %v4903
    %6982 = vmatprep.subr.bf16.mxu0 0
    %6983 = vmatpush1.bf16.msra.mxu0 %v4904
    %6984 = vmatprep.subr.bf16.mxu0 0
    %6985 = vmatpush1.bf16.msra.mxu0 %v4905
    %6986 = vmatprep.subr.bf16.mxu0 0
    %6987 = vmatpush1.bf16.msra.mxu0 %v4906
    %6988 = vmatprep.subr.bf16.mxu0 0
    %6989 = vmatpush1.bf16.msra.mxu0 %v4907
    %6990 = vmatprep.subr.bf16.mxu0 0
    %6991 = vmatpush1.bf16.msra.mxu0 %v4908
    %6992 = vmatprep.subr.bf16.mxu0 0
    %6993 = vmatpush1.bf16.msra.mxu0 %v4909
    %6994 = vmatprep.subr.bf16.mxu0 0
    %6995 = vmatpush1.bf16.msra.mxu0 %v4910
    %6996 = vmatprep.subr.bf16.mxu0 0
    %6997 = vmatpush1.bf16.msra.mxu0 %v4911
    %6998 = vmatprep.mubr.bf16.mxu0 %v585
    %6999 = vmatmul.mubr.bf16.gmra.mrb[0].mxu0 %v584
    %v7000 = vpop.f32.mrb[0].mxu0
    %v7001 = vadd.f32 %v6961, %v7000
    %v7002 = vpop.f32.mrb[0].mxu0
    %v7003 = vpop.f32.mrb[0].mxu0
    %v7004 = vpop.f32.mrb[0].mxu0
    %7005 = vdwg.mxu0
    %7006 = vmatprep.subr.bf16.mxu0 0
    %7007 = vmatpush1.bf16.msra.mxu0 %v4912
    %7008 = vmatprep.subr.bf16.mxu0 0
    %7009 = vmatpush1.bf16.msra.mxu0 %v4913
    %7010 = vmatprep.subr.bf16.mxu0 0
    %7011 = vmatpush1.bf16.msra.mxu0 %v4914
    %7012 = vmatprep.subr.bf16.mxu0 0
    %7013 = vmatpush1.bf16.msra.mxu0 %v4915
    %7014 = vmatprep.subr.bf16.mxu0 0
    %7015 = vmatpush1.bf16.msra.mxu0 %v4916
    %7016 = vmatprep.subr.bf16.mxu0 0
    %7017 = vmatpush1.bf16.msra.mxu0 %v4917
    %7018 = vmatprep.subr.bf16.mxu0 0
    %7019 = vmatpush1.bf16.msra.mxu0 %v4918
    %7020 = vmatprep.subr.bf16.mxu0 0
    %7021 = vmatpush1.bf16.msra.mxu0 %v4919
    %7022 = vmatprep.subr.bf16.mxu0 0
    %7023 = vmatpush1.bf16.msra.mxu0 %v4920
    %7024 = vmatprep.subr.bf16.mxu0 0
    %7025 = vmatpush1.bf16.msra.mxu0 %v4921
    %7026 = vmatprep.subr.bf16.mxu0 0
    %7027 = vmatpush1.bf16.msra.mxu0 %v4922
    %7028 = vmatprep.subr.bf16.mxu0 0
    %7029 = vmatpush1.bf16.msra.mxu0 %v4923
    %7030 = vmatprep.subr.bf16.mxu0 0
    %7031 = vmatpush1.bf16.msra.mxu0 %v4924
    %7032 = vmatprep.subr.bf16.mxu0 0
    %7033 = vmatpush1.bf16.msra.mxu0 %v4925
    %7034 = vmatprep.subr.bf16.mxu0 0
    %7035 = vmatpush1.bf16.msra.mxu0 %v4926
    %7036 = vmatprep.subr.bf16.mxu0 0
    %7037 = vmatpush1.bf16.msra.mxu0 %v4927
    %7038 = vmatprep.mubr.bf16.mxu0 %v587
    %7039 = vmatmul.mubr.bf16.gmra.mrb[0].mxu0 %v586
    %v7040 = vpop.f32.mrb[0].mxu0
    %v7041 = vadd.f32 %v7001, %v7040
    %v7042 = vpop.f32.mrb[0].mxu0
    %v7043 = vpop.f32.mrb[0].mxu0
    %v7044 = vpop.f32.mrb[0].mxu0
    %7045 = vdwg.mxu0
    %7046 = vmatprep.subr.bf16.mxu0 0
    %7047 = vmatpush1.bf16.msra.mxu0 %v4928
    %7048 = vmatprep.subr.bf16.mxu0 0
    %7049 = vmatpush1.bf16.msra.mxu0 %v4929
    %7050 = vmatprep.subr.bf16.mxu0 0
    %7051 = vmatpush1.bf16.msra.mxu0 %v4930
    %7052 = vmatprep.subr.bf16.mxu0 0
    %7053 = vmatpush1.bf16.msra.mxu0 %v4931
    %7054 = vmatprep.subr.bf16.mxu0 0
    %7055 = vmatpush1.bf16.msra.mxu0 %v4932
    %7056 = vmatprep.subr.bf16.mxu0 0
    %7057 = vmatpush1.bf16.msra.mxu0 %v4933
    %7058 = vmatprep.subr.bf16.mxu0 0
    %7059 = vmatpush1.bf16.msra.mxu0 %v4934
    %7060 = vmatprep.subr.bf16.mxu0 0
    %7061 = vmatpush1.bf16.msra.mxu0 %v4935
    %7062 = vmatprep.subr.bf16.mxu0 0
    %7063 = vmatpush1.bf16.msra.mxu0 %v4936
    %7064 = vmatprep.subr.bf16.mxu0 0
    %7065 = vmatpush1.bf16.msra.mxu0 %v4937
    %7066 = vmatprep.subr.bf16.mxu0 0
    %7067 = vmatpush1.bf16.msra.mxu0 %v4938
    %7068 = vmatprep.subr.bf16.mxu0 0
    %7069 = vmatpush1.bf16.msra.mxu0 %v4939
    %7070 = vmatprep.subr.bf16.mxu0 0
    %7071 = vmatpush1.bf16.msra.mxu0 %v4940
    %7072 = vmatprep.subr.bf16.mxu0 0
    %7073 = vmatpush1.bf16.msra.mxu0 %v4941
    %7074 = vmatprep.subr.bf16.mxu0 0
    %7075 = vmatpush1.bf16.msra.mxu0 %v4942
    %7076 = vmatprep.subr.bf16.mxu0 0
    %7077 = vmatpush1.bf16.msra.mxu0 %v4943
    %7078 = vmatprep.mubr.bf16.mxu0 %v589
    %7079 = vmatmul.mubr.bf16.gmra.mrb[0].mxu0 %v588
    %v7080 = vpop.f32.mrb[0].mxu0
    %v7081 = vadd.f32 %v7041, %v7080
    %v7082 = vpop.f32.mrb[0].mxu0
    %v7083 = vpop.f32.mrb[0].mxu0
    %v7084 = vpop.f32.mrb[0].mxu0
    %7085 = vdwg.mxu0
    %7086 = vmatprep.subr.bf16.mxu0 0
    %7087 = vmatpush1.bf16.msra.mxu0 %v4944
    %7088 = vmatprep.subr.bf16.mxu0 0
    %7089 = vmatpush1.bf16.msra.mxu0 %v4945
    %7090 = vmatprep.subr.bf16.mxu0 0
    %7091 = vmatpush1.bf16.msra.mxu0 %v4946
    %7092 = vmatprep.subr.bf16.mxu0 0
    %7093 = vmatpush1.bf16.msra.mxu0 %v4947
    %7094 = vmatprep.subr.bf16.mxu0 0
    %7095 = vmatpush1.bf16.msra.mxu0 %v4948
    %7096 = vmatprep.subr.bf16.mxu0 0
    %7097 = vmatpush1.bf16.msra.mxu0 %v4949
    %7098 = vmatprep.subr.bf16.mxu0 0
    %7099 = vmatpush1.bf16.msra.mxu0 %v4950
    %7100 = vmatprep.subr.bf16.mxu0 0
    %7101 = vmatpush1.bf16.msra.mxu0 %v4951
    %7102 = vmatprep.subr.bf16.mxu0 0
    %7103 = vmatpush1.bf16.msra.mxu0 %v4952
    %7104 = vmatprep.subr.bf16.mxu0 0
    %7105 = vmatpush1.bf16.msra.mxu0 %v4953
    %7106 = vmatprep.subr.bf16.mxu0 0
    %7107 = vmatpush1.bf16.msra.mxu0 %v4954
    %7108 = vmatprep.subr.bf16.mxu0 0
    %7109 = vmatpush1.bf16.msra.mxu0 %v4955
    %7110 = vmatprep.subr.bf16.mxu0 0
    %7111 = vmatpush1.bf16.msra.mxu0 %v4956
    %7112 = vmatprep.subr.bf16.mxu0 0
    %7113 = vmatpush1.bf16.msra.mxu0 %v4957
    %7114 = vmatprep.subr.bf16.mxu0 0
    %7115 = vmatpush1.bf16.msra.mxu0 %v4958
    %7116 = vmatprep.subr.bf16.mxu0 0
    %7117 = vmatpush1.bf16.msra.mxu0 %v4959
    %7118 = vmatprep.mubr.bf16.mxu0 %v591
    %7119 = vmatmul.mubr.bf16.gmra.mrb[0].mxu0 %v590
    %v7120 = vpop.f32.mrb[0].mxu0
    %v7121 = vadd.f32 %v7081, %v7120
    %v7122 = vpop.f32.mrb[0].mxu0
    %v7123 = vpop.f32.mrb[0].mxu0
    %v7124 = vpop.f32.mrb[0].mxu0
    %7125 = vdwg.mxu0
    %7126 = vmatprep.subr.bf16.mxu0 0
    %7127 = vmatpush1.bf16.msra.mxu0 %v4960
    %7128 = vmatprep.subr.bf16.mxu0 0
    %7129 = vmatpush1.bf16.msra.mxu0 %v4961
    %7130 = vmatprep.subr.bf16.mxu0 0
    %7131 = vmatpush1.bf16.msra.mxu0 %v4962
    %7132 = vmatprep.subr.bf16.mxu0 0
    %7133 = vmatpush1.bf16.msra.mxu0 %v4963
    %7134 = vmatprep.subr.bf16.mxu0 0
    %7135 = vmatpush1.bf16.msra.mxu0 %v4964
    %7136 = vmatprep.subr.bf16.mxu0 0
    %7137 = vmatpush1.bf16.msra.mxu0 %v4965
    %7138 = vmatprep.subr.bf16.mxu0 0
    %7139 = vmatpush1.bf16.msra.mxu0 %v4966
    %7140 = vmatprep.subr.bf16.mxu0 0
    %7141 = vmatpush1.bf16.msra.mxu0 %v4967
    %7142 = vmatprep.subr.bf16.mxu0 0
    %7143 = vmatpush1.bf16.msra.mxu0 %v4968
    %7144 = vmatprep.subr.bf16.mxu0 0
    %7145 = vmatpush1.bf16.msra.mxu0 %v4969
    %7146 = vmatprep.subr.bf16.mxu0 0
    %7147 = vmatpush1.bf16.msra.mxu0 %v4970
    %7148 = vmatprep.subr.bf16.mxu0 0
    %7149 = vmatpush1.bf16.msra.mxu0 %v4971
    %7150 = vmatprep.subr.bf16.mxu0 0
    %7151 = vmatpush1.bf16.msra.mxu0 %v4972
    %7152 = vmatprep.subr.bf16.mxu0 0
    %7153 = vmatpush1.bf16.msra.mxu0 %v4973
    %7154 = vmatprep.subr.bf16.mxu0 0
    %7155 = vmatpush1.bf16.msra.mxu0 %v4974
    %7156 = vmatprep.subr.bf16.mxu0 0
    %7157 = vmatpush1.bf16.msra.mxu0 %v4975
    %7158 = vmatprep.mubr.bf16.mxu0 %v593
    %7159 = vmatmul.mubr.bf16.gmra.mrb[0].mxu0 %v592
    %v7160 = vpop.f32.mrb[0].mxu0
    %v7161 = vadd.f32 %v7121, %v7160
    %v7162 = vpop.f32.mrb[0].mxu0
    %v7163 = vpop.f32.mrb[0].mxu0
    %v7164 = vpop.f32.mrb[0].mxu0
    %7165 = vdwg.mxu0
    %7166 = vmatprep.subr.bf16.mxu0 0
    %7167 = vmatpush1.bf16.msra.mxu0 %v4976
    %7168 = vmatprep.subr.bf16.mxu0 0
    %7169 = vmatpush1.bf16.msra.mxu0 0
    %7170 = vmatprep.subr.bf16.mxu0 0
    %7171 = vmatpush1.bf16.msra.mxu0 0
    %7172 = vmatprep.subr.bf16.mxu0 0
    %7173 = vmatpush1.bf16.msra.mxu0 0
    %7174 = vmatprep.subr.bf16.mxu0 0
    %7175 = vmatpush1.bf16.msra.mxu0 0
    %7176 = vmatprep.subr.bf16.mxu0 0
    %7177 = vmatpush1.bf16.msra.mxu0 0
    %7178 = vmatprep.subr.bf16.mxu0 0
    %7179 = vmatpush1.bf16.msra.mxu0 0
    %7180 = vmatprep.subr.bf16.mxu0 0
    %7181 = vmatpush1.bf16.msra.mxu0 0
    %7182 = vmatprep.subr.bf16.mxu0 0
    %7183 = vmatpush1.bf16.msra.mxu0 0
    %7184 = vmatprep.subr.bf16.mxu0 0
    %7185 = vmatpush1.bf16.msra.mxu0 0
    %7186 = vmatprep.subr.bf16.mxu0 0
    %7187 = vmatpush1.bf16.msra.mxu0 0
    %7188 = vmatprep.subr.bf16.mxu0 0
    %7189 = vmatpush1.bf16.msra.mxu0 0
    %7190 = vmatprep.subr.bf16.mxu0 0
    %7191 = vmatpush1.bf16.msra.mxu0 0
    %7192 = vmatprep.subr.bf16.mxu0 0
    %7193 = vmatpush1.bf16.msra.mxu0 0
    %7194 = vmatprep.subr.bf16.mxu0 0
    %7195 = vmatpush1.bf16.msra.mxu0 0
    %7196 = vmatprep.subr.bf16.mxu0 0
    %7197 = vmatpush1.bf16.msra.mxu0 0
    %7198 = vmatprep.mubr.bf16.mxu0 0
    %7199 = vmatmul.mubr.bf16.gmra.mrb[0].mxu0 %v5604
    %v7200 = vpop.f32.mrb[0].mxu0
    %v7201 = vadd.f32 %v7161, %v7200
    %v7202 = vpop.f32.mrb[0].mxu0
    %v7203 = vpop.f32.mrb[0].mxu0
    %v7204 = vpop.f32.mrb[0].mxu0
    %7205 = vdwg.mxu0
    %v7206 = vld [vmem:[%s4] sm:$0x1]
    %v7208 = vlaneseq
    %v7209 = vshrl.u32 %v7208, 7
    %v7210 = vsub.s32 0, %v7209
    %v7211 = vrot.slane %v7206, %v7210
    %v7213 = vmul.f32 %v7201, %v7211
    %v7214 = vld [vmem:[%s5] sm:$0x1]
    %v7216 = vlaneseq
    %v7217 = vshrl.u32 %v7216, 7
    %v7218 = vsub.s32 0, %v7217
    %v7219 = vrot.slane %v7214, %v7218
    %v7221 = vadd.f32 %v7213, %v7219
    %v7222 = vmax.f32 %v7221, 0.0
    %v7223 = vpack.c.bf16 %v7222, %v7222
    %v7224 = vld [vmem:[%s6] sm:$0xf]
    %v7225 = vld [vmem:[%s6 + $0x4] sm:$0xf]
    %v7226 = vld [vmem:[%s6 + $0x8] sm:$0xf]
    %v7227 = vld [vmem:[%s6 + $0xc] sm:$0xf]
    %v7228 = vld [vmem:[%s6 + $0x10] sm:$0xf]
    %v7229 = vld [vmem:[%s6 + $0x14] sm:$0xf]
    %v7230 = vld [vmem:[%s6 + $0x18] sm:$0xf]
    %v7231 = vld [vmem:[%s6 + $0x1c] sm:$0xf]
    %v7232 = vld [vmem:[%s6 + $0x20] sm:$0xf]
    %v7233 = vld [vmem:[%s6 + $0x24] sm:$0xf]
    %v7234 = vld [vmem:[%s6 + $0x28] sm:$0xf]
    %v7235 = vld [vmem:[%s6 + $0x2c] sm:$0xf]
    %v7236 = vld [vmem:[%s6 + $0x30] sm:$0x3]
    %v7237 = vld [vmem:[%s7] sm:$0x1]
    %v7239 = vlaneseq
    %v7240 = vshrl.u32 %v7239, 7
    %v7241 = vsub.s32 0, %v7240
    %v7242 = vrot.slane %v7237, %v7241
    %v7257 = vunpack.c.l.b16 %v7224
    %v7258 = vunpack.c.l.b16 %v7225
    %v7259 = vunpack.c.l.b16 %v7226
    %v7260 = vunpack.c.l.b16 %v7227
    %v7261 = vunpack.c.l.b16 %v7228
    %v7262 = vunpack.c.l.b16 %v7229
    %v7263 = vunpack.c.l.b16 %v7230
    %v7264 = vunpack.c.l.b16 %v7231
    %v7265 = vunpack.c.l.b16 %v7232
    %v7266 = vunpack.c.l.b16 %v7233
    %v7267 = vunpack.c.l.b16 %v7234
    %v7268 = vunpack.c.l.b16 %v7235
    %v7269 = vunpack.c.l.b16 %v7236
    %v7270 = vpack.c.b16 %v7258, %v7257
    %v7271 = vpack.c.b16 %v7260, %v7259
    %v7272 = vpack.c.b16 %v7262, %v7261
    %v7273 = vpack.c.b16 %v7264, %v7263
    %v7274 = vpack.c.b16 %v7266, %v7265
    %v7275 = vpack.c.b16 %v7268, %v7267
    %v7276 = vpack.c.b16 %v7269, %v7269
    %vm7283 = vcmask 818176
    %v7285 = vsel %vm7283, %v7223, 0
    %vm7287 = vcmask 1041408
    %v7289 = vsel %vm7287, %v7276, 0
    %7291 = vmatprep.subr.bf16.mxu0 0
    %7292 = vmatpush1.bf16.msra.mxu0 %v7270
    %7293 = vmatprep.subr.bf16.mxu0 0
    %7294 = vmatpush1.bf16.msra.mxu0 %v7271
    %7295 = vmatprep.subr.bf16.mxu0 0
    %7296 = vmatpush1.bf16.msra.mxu0 %v7272
    %7297 = vmatprep.subr.bf16.mxu0 0
    %7298 = vmatpush1.bf16.msra.mxu0 %v7273
    %7299 = vmatprep.subr.bf16.mxu0 0
    %7300 = vmatpush1.bf16.msra.mxu0 %v7274
    %7301 = vmatprep.subr.bf16.mxu0 0
    %7302 = vmatpush1.bf16.msra.mxu0 %v7275
    %7303 = vmatprep.subr.bf16.mxu0 0
    %7304 = vmatpush1.bf16.msra.mxu0 %v7289
    %7305 = vmatprep.subr.bf16.mxu0 0
    %7306 = vmatpush1.bf16.msra.mxu0 0
    %7307 = vmatprep.subr.bf16.mxu0 0
    %7308 = vmatpush1.bf16.msra.mxu0 0
    %7309 = vmatprep.subr.bf16.mxu0 0
    %7310 = vmatpush1.bf16.msra.mxu0 0
    %7311 = vmatprep.subr.bf16.mxu0 0
    %7312 = vmatpush1.bf16.msra.mxu0 0
    %7313 = vmatprep.subr.bf16.mxu0 0
    %7314 = vmatpush1.bf16.msra.mxu0 0
    %7315 = vmatprep.subr.bf16.mxu0 0
    %7316 = vmatpush1.bf16.msra.mxu0 0
    %7317 = vmatprep.subr.bf16.mxu0 0
    %7318 = vmatpush1.bf16.msra.mxu0 0
    %7319 = vmatprep.subr.bf16.mxu0 0
    %7320 = vmatpush1.bf16.msra.mxu0 0
    %7321 = vmatprep.subr.bf16.mxu0 0
    %7322 = vmatpush1.bf16.msra.mxu0 0
    %7323 = vmatprep.mubr.bf16.mxu0 0
    %7324 = vmatmul.mubr.bf16.gmra.mrb[0].mxu0 %v7285
    %v7325 = vpop.f32.mrb[0].mxu0
    %v7326 = vadd.f32 %v7242, %v7325
    %v7327 = vpop.f32.mrb[0].mxu0
    %v7328 = vpop.f32.mrb[0].mxu0
    %v7329 = vpop.f32.mrb[0].mxu0
    %7330 = vdwg.mxu0
    %v7331 = vld [vmem:[%s8] sm:$0x1]
    %v7333 = vlaneseq
    %v7334 = vshrl.u32 %v7333, 7
    %v7335 = vsub.s32 0, %v7334
    %v7336 = vrot.slane %v7331, %v7335
    %v7338 = vmul.f32 %v7326, %v7336
    %v7339 = vld [vmem:[%s9] sm:$0x1]
    %v7341 = vlaneseq
    %v7342 = vshrl.u32 %v7341, 7
    %v7343 = vsub.s32 0, %v7342
    %v7344 = vrot.slane %v7339, %v7343
    %v7346 = vadd.f32 %v7338, %v7344
    %v7347 = vmax.f32 %v7346, 0.0
    %v7348 = vld [vmem:[%s1] sm:$0x3]
    %v7349 = vpack.c.bf16 %v7348, %v7348
    %v7350 = vld [vmem:[%s10] sm:$0xf]
    %v7351 = vld [vmem:[%s10 + $0x4] sm:$0xf]
    %v7352 = vld [vmem:[%s10 + $0x8] sm:$0xf]
    %v7353 = vld [vmem:[%s10 + $0xc] sm:$0xf]
    %v7354 = vld [vmem:[%s10 + $0x10] sm:$0xf]
    %v7355 = vld [vmem:[%s10 + $0x14] sm:$0xf]
    %v7356 = vld [vmem:[%s10 + $0x18] sm:$0xf]
    %v7357 = vld [vmem:[%s10 + $0x1c] sm:$0xf]
    %v7358 = vld [vmem:[%s10 + $0x20] sm:$0xf]
    %v7359 = vld [vmem:[%s10 + $0x24] sm:$0xf]
    %v7360 = vld [vmem:[%s10 + $0x28] sm:$0x3]
    %v7361 = vld [vmem:[%s11] sm:$0x1]
    %v7363 = vlaneseq
    %v7364 = vshrl.u32 %v7363, 7
    %v7365 = vsub.s32 0, %v7364
    %v7366 = vrot.slane %v7361, %v7365
    %v7379 = vunpack.c.l.b16 %v7350
    %v7380 = vunpack.c.l.b16 %v7351
    %v7381 = vunpack.c.l.b16 %v7352
    %v7382 = vunpack.c.l.b16 %v7353
    %v7383 = vunpack.c.l.b16 %v7354
    %v7384 = vunpack.c.l.b16 %v7355
    %v7385 = vunpack.c.l.b16 %v7356
    %v7386 = vunpack.c.l.b16 %v7357
    %v7387 = vunpack.c.l.b16 %v7358
    %v7388 = vunpack.c.l.b16 %v7359
    %v7389 = vunpack.c.l.b16 %v7360
    %v7390 = vpack.c.b16 %v7380, %v7379
    %v7391 = vpack.c.b16 %v7382, %v7381
    %v7392 = vpack.c.b16 %v7384, %v7383
    %v7393 = vpack.c.b16 %v7386, %v7385
    %v7394 = vpack.c.b16 %v7388, %v7387
    %v7395 = vpack.c.b16 %v7389, %v7389
    %vm7401 = vcmask 678912
    %v7403 = vsel %vm7401, %v7349, 0
    %vm7405 = vcmask 1040384
    %v7406 = vsel %vm7405, 4294967295, 65535
    %v7407 = vsel %vm7287, %v7406, 0
    %v7409 = vand.u32 %v7395, %v7407
    %7411 = vmatprep.subr.bf16.mxu0 0
    %7412 = vmatpush1.bf16.msra.mxu0 %v7390
    %7413 = vmatprep.subr.bf16.mxu0 0
    %7414 = vmatpush1.bf16.msra.mxu0 %v7391
    %7415 = vmatprep.subr.bf16.mxu0 0
    %7416 = vmatpush1.bf16.msra.mxu0 %v7392
    %7417 = vmatprep.subr.bf16.mxu0 0
    %7418 = vmatpush1.bf16.msra.mxu0 %v7393
    %7419 = vmatprep.subr.bf16.mxu0 0
    %7420 = vmatpush1.bf16.msra.mxu0 %v7394
    %7421 = vmatprep.subr.bf16.mxu0 0
    %7422 = vmatpush1.bf16.msra.mxu0 %v7409
    %7423 = vmatprep.subr.bf16.mxu0 0
    %7424 = vmatpush1.bf16.msra.mxu0 0
    %7425 = vmatprep.subr.bf16.mxu0 0
    %7426 = vmatpush1.bf16.msra.mxu0 0
    %7427 = vmatprep.subr.bf16.mxu0 0
    %7428 = vmatpush1.bf16.msra.mxu0 0
    %7429 = vmatprep.subr.bf16.mxu0 0
    %7430 = vmatpush1.bf16.msra.mxu0 0
    %7431 = vmatprep.subr.bf16.mxu0 0
    %7432 = vmatpush1.bf16.msra.mxu0 0
    %7433 = vmatprep.subr.bf16.mxu0 0
    %7434 = vmatpush1.bf16.msra.mxu0 0
    %7435 = vmatprep.subr.bf16.mxu0 0
    %7436 = vmatpush1.bf16.msra.mxu0 0
    %7437 = vmatprep.subr.bf16.mxu0 0
    %7438 = vmatpush1.bf16.msra.mxu0 0
    %7439 = vmatprep.subr.bf16.mxu0 0
    %7440 = vmatpush1.bf16.msra.mxu0 0
    %7441 = vmatprep.subr.bf16.mxu0 0
    %7442 = vmatpush1.bf16.msra.mxu0 0
    %7443 = vmatprep.mubr.bf16.mxu0 0
    %7444 = vmatmul.mubr.bf16.gmra.mrb[0].mxu0 %v7403
    %v7445 = vpop.f32.mrb[0].mxu0
    %v7446 = vadd.f32 %v7366, %v7445
    %v7447 = vpop.f32.mrb[0].mxu0
    %v7448 = vpop.f32.mrb[0].mxu0
    %v7449 = vpop.f32.mrb[0].mxu0
    %7450 = vdwg.mxu0
    %v7451 = vld [vmem:[%s12] sm:$0x1]
    %v7453 = vlaneseq
    %v7454 = vshrl.u32 %v7453, 7
    %v7455 = vsub.s32 0, %v7454
    %v7456 = vrot.slane %v7451, %v7455
    %v7458 = vmul.f32 %v7446, %v7456
    %v7459 = vld [vmem:[%s13] sm:$0x1]
    %v7461 = vlaneseq
    %v7462 = vshrl.u32 %v7461, 7
    %v7463 = vsub.s32 0, %v7462
    %v7464 = vrot.slane %v7459, %v7463
    %v7466 = vadd.f32 %v7458, %v7464
    %v7467 = vmax.f32 %v7466, 0.0
    %v7468 = vpack.c.bf16 %v7347, %v7347
    %v7469 = vld [vmem:[%s14] sm:$0xf]
    %v7470 = vld [vmem:[%s14 + $0x4] sm:$0xf]
    %v7471 = vld [vmem:[%s14 + $0x8] sm:$0xf]
    %v7472 = vld [vmem:[%s14 + $0xc] sm:$0xf]
    %v7473 = vld [vmem:[%s14 + $0x10] sm:$0xf]
    %v7474 = vld [vmem:[%s14 + $0x14] sm:$0xf]
    %v7475 = vld [vmem:[%s14 + $0x18] sm:$0x1]
    %v7476 = vpack.c.bf16 %v7467, %v7467
    %v7477 = vld [vmem:[%s15] sm:$0xf]
    %v7478 = vld [vmem:[%s15 + $0x4] sm:$0xf]
    %v7479 = vld [vmem:[%s15 + $0x8] sm:$0xf]
    %v7480 = vld [vmem:[%s15 + $0xc] sm:$0xf]
    %v7481 = vld [vmem:[%s15 + $0x10] sm:$0xf]
    %v7482 = vld [vmem:[%s15 + $0x14] sm:$0xf]
    %v7483 = vld [vmem:[%s15 + $0x18] sm:$0x1]
    %v7491 = vunpack.c.l.b16 %v7477
    %v7492 = vunpack.c.l.b16 %v7478
    %v7493 = vunpack.c.l.b16 %v7479
    %v7494 = vunpack.c.l.b16 %v7480
    %v7495 = vunpack.c.l.b16 %v7481
    %v7496 = vunpack.c.l.b16 %v7482
    %v7497 = vunpack.c.l.b16 %v7483
    %v7498 = vpack.c.b16 %v7492, %v7491
    %v7499 = vpack.c.b16 %v7494, %v7493
    %v7500 = vpack.c.b16 %v7496, %v7495
    %v7501 = vpack.c.b16 %v7497, %v7497
    %vm7505 = vcmask 408576
    %v7507 = vsel %vm7505, %v7476, 0
    %v7510 = vsel %vm7405, %v7501, 0
    %7512 = vmatprep.subr.bf16.mxu0 0
    %7513 = vmatpush1.bf16.msra.mxu0 %v7498
    %7514 = vmatprep.subr.bf16.mxu0 0
    %7515 = vmatpush1.bf16.msra.mxu0 %v7499
    %7516 = vmatprep.subr.bf16.mxu0 0
    %7517 = vmatpush1.bf16.msra.mxu0 %v7500
    %7518 = vmatprep.subr.bf16.mxu0 0
    %7519 = vmatpush1.bf16.msra.mxu0 %v7510
    %7520 = vmatprep.subr.bf16.mxu0 0
    %7521 = vmatpush1.bf16.msra.mxu0 0
    %7522 = vmatprep.subr.bf16.mxu0 0
    %7523 = vmatpush1.bf16.msra.mxu0 0
    %7524 = vmatprep.subr.bf16.mxu0 0
    %7525 = vmatpush1.bf16.msra.mxu0 0
    %7526 = vmatprep.subr.bf16.mxu0 0
    %7527 = vmatpush1.bf16.msra.mxu0 0
    %7528 = vmatprep.subr.bf16.mxu0 0
    %7529 = vmatpush1.bf16.msra.mxu0 0
    %7530 = vmatprep.subr.bf16.mxu0 0
    %7531 = vmatpush1.bf16.msra.mxu0 0
    %7532 = vmatprep.subr.bf16.mxu0 0
    %7533 = vmatpush1.bf16.msra.mxu0 0
    %7534 = vmatprep.subr.bf16.mxu0 0
    %7535 = vmatpush1.bf16.msra.mxu0 0
    %7536 = vmatprep.subr.bf16.mxu0 0
    %7537 = vmatpush1.bf16.msra.mxu0 0
    %7538 = vmatprep.subr.bf16.mxu0 0
    %7539 = vmatpush1.bf16.msra.mxu0 0
    %7540 = vmatprep.subr.bf16.mxu0 0
    %7541 = vmatpush1.bf16.msra.mxu0 0
    %7542 = vmatprep.subr.bf16.mxu0 0
    %7543 = vmatpush1.bf16.msra.mxu0 0
    %7544 = vmatprep.mubr.bf16.mxu0 0
    %7545 = vmatmul.mubr.bf16.gmra.mrb[0].mxu0 %v7507
    %v7546 = vpop.f32.mrb[0].mxu0
    %v7547 = vadd.f32 0.0, %v7546
    %v7548 = vpop.f32.mrb[0].mxu0
    %v7549 = vpop.f32.mrb[0].mxu0
    %v7550 = vpop.f32.mrb[0].mxu0
    %7551 = vdwg.mxu0
    %v7559 = vunpack.c.l.b16 %v7469
    %v7560 = vunpack.c.l.b16 %v7470
    %v7561 = vunpack.c.l.b16 %v7471
    %v7562 = vunpack.c.l.b16 %v7472
    %v7563 = vunpack.c.l.b16 %v7473
    %v7564 = vunpack.c.l.b16 %v7474
    %v7565 = vunpack.c.l.b16 %v7475
    %v7566 = vpack.c.b16 %v7560, %v7559
    %v7567 = vpack.c.b16 %v7562, %v7561
    %v7568 = vpack.c.b16 %v7564, %v7563
    %v7569 = vpack.c.b16 %v7565, %v7565
    %v7574 = vsel %vm7505, %v7468, 0
    %v7577 = vsel %vm7405, %v7569, 0
    %7579 = vmatprep.subr.bf16.mxu0 0
    %7580 = vmatpush1.bf16.msra.mxu0 %v7566
    %7581 = vmatprep.subr.bf16.mxu0 0
    %7582 = vmatpush1.bf16.msra.mxu0 %v7567
    %7583 = vmatprep.subr.bf16.mxu0 0
    %7584 = vmatpush1.bf16.msra.mxu0 %v7568
    %7585 = vmatprep.subr.bf16.mxu0 0
    %7586 = vmatpush1.bf16.msra.mxu0 %v7577
    %7587 = vmatprep.subr.bf16.mxu0 0
    %7588 = vmatpush1.bf16.msra.mxu0 0
    %7589 = vmatprep.subr.bf16.mxu0 0
    %7590 = vmatpush1.bf16.msra.mxu0 0
    %7591 = vmatprep.subr.bf16.mxu0 0
    %7592 = vmatpush1.bf16.msra.mxu0 0
    %7593 = vmatprep.subr.bf16.mxu0 0
    %7594 = vmatpush1.bf16.msra.mxu0 0
    %7595 = vmatprep.subr.bf16.mxu0 0
    %7596 = vmatpush1.bf16.msra.mxu0 0
    %7597 = vmatprep.subr.bf16.mxu0 0
    %7598 = vmatpush1.bf16.msra.mxu0 0
    %7599 = vmatprep.subr.bf16.mxu0 0
    %7600 = vmatpush1.bf16.msra.mxu0 0
    %7601 = vmatprep.subr.bf16.mxu0 0
    %7602 = vmatpush1.bf16.msra.mxu0 0
    %7603 = vmatprep.subr.bf16.mxu0 0
    %7604 = vmatpush1.bf16.msra.mxu0 0
    %7605 = vmatprep.subr.bf16.mxu0 0
    %7606 = vmatpush1.bf16.msra.mxu0 0
    %7607 = vmatprep.subr.bf16.mxu0 0
    %7608 = vmatpush1.bf16.msra.mxu0 0
    %7609 = vmatprep.subr.bf16.mxu0 0
    %7610 = vmatpush1.bf16.msra.mxu0 0
    %7611 = vmatprep.mubr.bf16.mxu0 0
    %7612 = vmatmul.mubr.bf16.gmra.mrb[0].mxu0 %v7574
    %v7613 = vpop.f32.mrb[0].mxu0
    %v7614 = vadd.f32 %v7547, %v7613
    %v7615 = vpop.f32.mrb[0].mxu0
    %v7616 = vpop.f32.mrb[0].mxu0
    %v7617 = vpop.f32.mrb[0].mxu0
    %7618 = vdwg.mxu0
    %v7619 = vld [vmem:[%s16] sm:$0x1]
    %v7621 = vlaneseq
    %v7622 = vshrl.u32 %v7621, 7
    %v7623 = vsub.s32 0, %v7622
    %v7624 = vrot.slane %v7619, %v7623
    %v7626 = vadd.f32 %v7614, %v7624
    %vm7627 = vcmask 9216
    %v7628 = vsel %vm7627, %v7626, -inf
    %7629 = vmax.xlane.f32.xlu0 %v7628
    %v7630 = vpop.xlane.xlu0 %7629
    %v7631 = vsub.f32 %v7626, %v7630
    %v7632 = vmul.f32 %v7631, 1.442695
    %v7633 = vpow.pop %v7632
    %v7634 = vsel %vm7627, %v7633, 0.0
    %7635 = vadd.xlane.f32.xlu0 %v7634
    %v7636 = vpop.xlane.xlu0 %7635
    %v7637 = vrcp.pop %v7636
    %v7638 = vmul.f32 %v7633, %v7637
    %7639 = vst.msk [vmem:[#allocation2] sm:$0x3] %vm7627, %v7638
    // Predicated region
    $region70: #{bert_net_forward.3} parent=1 // pred_check
      _
    $region71: #{bert_net_forward.3} parent=1 // pred_check_branch
      %7641 = sbr.rel (0) target = $region73
    $region72: #{bert_net_forward.3} parent=1 // pred_region
      %s7643 = ssub.s32 32, 32
      %7644 = vsyncadd [#allocation3], %s7643
      %s7646 = sshll.u32 [#allocation2], 4
      %s7647 = int_to_ptr.vmem [resolvable:$true] %s7646
      %7649 = dma.vmem_to_hbm [thread:$0]  %s7647, 32, %s17, [#allocation3]
    $region73: #{bert_net_forward.3} parent=1 // pred_fallthru
      _
    // Predicated region
    $region74: #{bert_net_forward.3} parent=1 // pred_check
      _
    $region75: #{bert_net_forward.3} parent=1 // pred_check_branch
      %7651 = sbr.rel (0) target = $region77
    $region76: #{bert_net_forward.3} parent=1 // pred_region
      %7652 = dma.done [#allocation3], 32
    $region77: #{bert_net_forward.3} parent=1 // pred_fallthru
      _
    %7653 = vsyncpa [#allocation3], 1

</llo_original>
